<compile_context>
chip_gen: v5e
topology: v5e:2x2
jax: 0.10.0
libtpu: 0.0.40
codegen_flags: <defaults>
</compile_context>

<pallas_src>
from functools import partial

import numpy as np
import jax
import jax.numpy as jnp
from jax.experimental import pallas as pl
from jax.experimental.pallas import tpu as pltpu

# ---- PredNet channel plan (same constants as the PyTorch module) ------------
OUT_LAYER_SIZE = (1,) + tuple(2 ** p for p in range(4, 10))
ERR_LAYER_SIZE = tuple(s * 2 for s in OUT_LAYER_SIZE)
IN_LAYER_SIZE = (1,) + ERR_LAYER_SIZE

LANE = 128
VMEM_LIMIT = 32 * 1024 * 1024           # explicit scoped-VMEM budget (safe on v5e/v6e/v7x)
WEIGHT_BLOCK_BUDGET = 8 * 1024 * 1024   # bf16 bytes of one resident (TK, Cout) weight block


def _rup(x, m):
    return ((x + m - 1) // m) * m


def cpad(c):
    """Pad a channel count up to a multiple of 128 lanes."""
    return _rup(c, LANE)


# =========================== Pallas kernels ==================================

def _conv_mm_kernel(a_ref, w_ref, b_ref, o_ref, acc_ref, *, act):
    """K-tiled im2col conv: f32 accumulation, bias (+relu) fused at k==last."""
    k = pl.program_id(1)

    @pl.when(k == 0)
    def _():
        acc_ref[...] = jnp.zeros_like(acc_ref)

    acc_ref[...] += jnp.dot(a_ref[...], w_ref[...],
                            preferred_element_type=jnp.float32)

    @pl.when(k == pl.num_programs(1) - 1)
    def _():
        y = acc_ref[...] + b_ref[...]
        if act == "relu":
            y = jnp.maximum(y, 0.0)
        o_ref[...] = y


def _convlstm_kernel(a_ref, w_ref, b_ref, cprev_ref, h_ref, c_ref, acc_ref, *, hid):
    """ConvLSTM gates matmul (K-tiled) with the LSTM update fused at k==last.
    `hid` is the lane-padded hidden size (multiple of 128) so gate slices are
    lane-tile aligned (free views)."""
    k = pl.program_id(1)

    @pl.when(k == 0)
    def _():
        acc_ref[...] = jnp.zeros_like(acc_ref)

    acc_ref[...] += jnp.dot(a_ref[...], w_ref[...],
                            preferred_element_type=jnp.float32)

    @pl.when(k == pl.num_programs(1) - 1)
    def _():
        gates = acc_ref[...] + b_ref[...]
        in_gate = jax.nn.sigmoid(gates[:, 0 * hid:1 * hid])
        remember_gate = jax.nn.sigmoid(gates[:, 1 * hid:2 * hid])
        out_gate = jax.nn.sigmoid(gates[:, 2 * hid:3 * hid])
        cell_gate = jnp.tanh(gates[:, 3 * hid:4 * hid])
        cell = remember_gate * cprev_ref[...] + in_gate * cell_gate
        h_ref[...] = out_gate * jnp.tanh(cell)
        c_ref[...] = cell


def _discrim_kernel(a_ref, w_ref, b_ref, inproj_ref, err_ref, pred_ref, acc_ref, *, hid):
    """DiscriminativeCell: sp = relu(conv(state)); error = relu(cat(in-sp, sp-in)).
    Error halves written as two lane-aligned sliced stores (no concatenate)."""
    k = pl.program_id(1)

    @pl.when(k == 0)
    def _():
        acc_ref[...] = jnp.zeros_like(acc_ref)

    acc_ref[...] += jnp.dot(a_ref[...], w_ref[...],
                            preferred_element_type=jnp.float32)

    @pl.when(k == pl.num_programs(1) - 1)
    def _():
        sp = jnp.maximum(acc_ref[...] + b_ref[...], 0.0)
        d = inproj_ref[...] - sp
        err_ref[:, 0:hid] = jnp.maximum(d, 0.0)
        err_ref[:, hid:2 * hid] = jnp.maximum(-d, 0.0)
        pred_ref[...] = sp


# =========================== pallas_call wrappers =============================

def _choose_tiles(M, K, cin_p, n_out):
    """TM = 256 rows (fills the 256-wide MXU on v6e/v7x); TK chosen so the
    resident (TK, n_out) bf16 weight block stays under the VMEM budget.
    TK always divides K = 9 * cin_p exactly (full K, 3 taps, or 1 tap)."""
    TM = min(256, _rup(M, 8))
    M_pad = _rup(M, TM)
    TK = cin_p                                   # fallback: one 3x3 tap per K step
    for cand in (K, 3 * cin_p):
        if cand * n_out * 2 <= WEIGHT_BLOCK_BUDGET:
            TK = cand
            break
    return TM, M_pad, TK


def _pad_rows(x, M_pad):
    M = x.shape[0]
    if M_pad == M:
        return x
    return jnp.pad(x, ((0, M_pad - M), (0, 0)))


def _compiler_params():
    return pltpu.CompilerParams(
        dimension_semantics=("parallel", "arbitrary"),
        vmem_limit_bytes=VMEM_LIMIT)


def conv_mm_call(a, w, b, act="none"):
    M, K = a.shape
    n_out = w.shape[1]
    cin_p = K // 9
    TM, M_pad, TK = _choose_tiles(M, K, cin_p, n_out)
    a = _pad_rows(a, M_pad)
    cost = pl.CostEstimate(
        flops=2 * M_pad * K * n_out, transcendentals=0,
        bytes_accessed=M_pad * K * 2 + K * n_out * 2 + M_pad * n_out * 4)
    out = pl.pallas_call(
        partial(_conv_mm_kernel, act=act),
        out_shape=jax.ShapeDtypeStruct((M_pad, n_out), jnp.float32),
        grid=(M_pad // TM, K // TK),
        in_specs=[
            pl.BlockSpec((TM, TK), lambda i, k: (i, k)),
            pl.BlockSpec((TK, n_out), lambda i, k: (k, 0)),
            pl.BlockSpec((1, n_out), lambda i, k: (0, 0)),
        ],
        out_specs=pl.BlockSpec((TM, n_out), lambda i, k: (i, 0)),
        scratch_shapes=[pltpu.VMEM((TM, n_out), jnp.float32)],
        compiler_params=_compiler_params(),
        cost_estimate=cost,
    )(a, w, b)
    return out[:M] if M_pad != M else out


def convlstm_call(a, w, b, c_prev, hid_p):
    M, K = a.shape
    n_out = 4 * hid_p
    cin_p = K // 9
    TM, M_pad, TK = _choose_tiles(M, K, cin_p, n_out)
    a = _pad_rows(a, M_pad)
    c_prev = _pad_rows(c_prev, M_pad)
    cost = pl.CostEstimate(
        flops=2 * M_pad * K * n_out,
        transcendentals=5 * M_pad * hid_p,          # 3 sigmoid + 2 tanh per element
        bytes_accessed=(M_pad * K * 2 + K * n_out * 2 + M_pad * hid_p * 4
                        + 2 * M_pad * hid_p * 4))
    h, c = pl.pallas_call(
        partial(_convlstm_kernel, hid=hid_p),
        out_shape=(jax.ShapeDtypeStruct((M_pad, hid_p), jnp.float32),
                   jax.ShapeDtypeStruct((M_pad, hid_p), jnp.float32)),
        grid=(M_pad // TM, K // TK),
        in_specs=[
            pl.BlockSpec((TM, TK), lambda i, k: (i, k)),
            pl.BlockSpec((TK, n_out), lambda i, k: (k, 0)),
            pl.BlockSpec((1, n_out), lambda i, k: (0, 0)),
            pl.BlockSpec((TM, hid_p), lambda i, k: (i, 0)),
        ],
        out_specs=(pl.BlockSpec((TM, hid_p), lambda i, k: (i, 0)),
                   pl.BlockSpec((TM, hid_p), lambda i, k: (i, 0))),
        scratch_shapes=[pltpu.VMEM((TM, n_out), jnp.float32)],
        input_output_aliases={3: 1},                # c_prev buffer -> c output
        compiler_params=_compiler_params(),
        cost_estimate=cost,
    )(a, w, b, c_prev)
    if M_pad != M:
        h, c = h[:M], c[:M]
    return h, c


def discrim_call(a, w, b, in_proj, hid_p):
    M, K = a.shape
    n_out = hid_p
    cin_p = K // 9
    TM, M_pad, TK = _choose_tiles(M, K, cin_p, n_out)
    a = _pad_rows(a, M_pad)
    in_proj = _pad_rows(in_proj, M_pad)
    cost = pl.CostEstimate(
        flops=2 * M_pad * K * n_out, transcendentals=0,
        bytes_accessed=(M_pad * K * 2 + K * n_out * 2 + M_pad * hid_p * 4
                        + 3 * M_pad * hid_p * 4))
    err, pred = pl.pallas_call(
        partial(_discrim_kernel, hid=hid_p),
        out_shape=(jax.ShapeDtypeStruct((M_pad, 2 * hid_p), jnp.float32),
                   jax.ShapeDtypeStruct((M_pad, hid_p), jnp.float32)),
        grid=(M_pad // TM, K // TK),
        in_specs=[
            pl.BlockSpec((TM, TK), lambda i, k: (i, k)),
            pl.BlockSpec((TK, n_out), lambda i, k: (k, 0)),
            pl.BlockSpec((1, n_out), lambda i, k: (0, 0)),
            pl.BlockSpec((TM, hid_p), lambda i, k: (i, 0)),
        ],
        out_specs=(pl.BlockSpec((TM, 2 * hid_p), lambda i, k: (i, 0)),
                   pl.BlockSpec((TM, hid_p), lambda i, k: (i, 0))),
        scratch_shapes=[pltpu.VMEM((TM, n_out), jnp.float32)],
        compiler_params=_compiler_params(),
        cost_estimate=cost,
    )(a, w, b, in_proj)
    if M_pad != M:
        err, pred = err[:M], pred[:M]
    return err, pred


# =========================== JAX glue (layout plumbing) =======================

def im2col3x3(x_nhwc):
    """(N,H,W,C) -> (N*H*W, 9*C) bf16 patches for a 3x3 conv, padding=1, stride=1.
    # TODO(synk): move the 9-tap accumulation into the kernel to avoid the 9x
    # activation HBM blow-up (per-tap K blocks over a (N,H+2,W+2,C) buffer).
    """
    N, H, W, C = x_nhwc.shape
    xp = jnp.pad(x_nhwc.astype(jnp.bfloat16), ((0, 0), (1, 1), (1, 1), (0, 0)))
    cols = [xp[:, dy:dy + H, dx:dx + W, :] for dy in range(3) for dx in range(3)]
    return jnp.concatenate(cols, axis=-1).reshape(N * H * W, 9 * C)


def upsample_nearest_2x(x_nhwc):
    return jnp.repeat(jnp.repeat(x_nhwc, 2, axis=1), 2, axis=2)


def maxpool_2x2(x_nhwc):
    N, H, W, C = x_nhwc.shape
    return x_nhwc.reshape(N, H // 2, 2, W // 2, 2, C).max(axis=(2, 4))


def _seg_real_index(segments):
    """segments: list of (real_channels, padded_channels). Returns the padded
    positions of the real channels and the total padded channel count."""
    idx, off = [], 0
    for real, padded in segments:
        idx.append(np.arange(real, dtype=np.int32) + off)
        off += padded
    return np.concatenate(idx), off


def make_conv_params(key, in_segments, out_segments):
    """Deterministic synthetic Conv2d(cin, cout, 3, padding=1) parameters stored
    in padded im2col layout: (9 * cin_pad, cout_pad) bf16 weight (zero rows/cols
    at padded channel positions) + (1, cout_pad) f32 bias."""
    in_idx, cin_p = _seg_real_index(in_segments)
    out_idx, cout_p = _seg_real_index(out_segments)
    cin_r, cout_r = int(in_idx.size), int(out_idx.size)
    kw, kb = jax.random.split(key)
    w_real = jax.random.normal(kw, (3, 3, cin_r, cout_r), jnp.float32)
    w_real = w_real * (1.0 / np.sqrt(9.0 * cin_r))
    b_real = jax.random.normal(kb, (cout_r,), jnp.float32) * 0.01
    w_pad = jnp.zeros((3, 3, cin_p, cout_p), jnp.float32)
    w_pad = w_pad.at[:, :, in_idx[:, None], out_idx[None, :]].set(w_real)
    b_pad = jnp.zeros((cout_p,), jnp.float32).at[out_idx].set(b_real)
    # tap-major im2col layout; bf16 operands for the MXU, f32 bias for the VPU.
    return w_pad.reshape(9 * cin_p, cout_p).astype(jnp.bfloat16), b_pad.reshape(1, cout_p)


# =========================== PredNet model ===================================

class PrednetPallas:
    """Pallas port of PrednetModel (DiscriminativeCell + GenerativeCell/ConvLSTM)."""

    def __init__(self, error_size_list, key):
        # error_size_list holds NCHW shapes, exactly like the PyTorch module.
        self.L = len(error_size_list)
        self.error_size_list = [tuple(s) for s in error_size_list]
        self.hid = [OUT_LAYER_SIZE[l] for l in range(self.L)]
        self.hid_pad = [cpad(h) for h in self.hid]

        keys = jax.random.split(key, 3 * self.L)
        self.disc_from_bottom = []
        self.disc_from_state = []
        self.gen_gates = []
        for l in range(self.L):
            h, hp = self.hid[l], self.hid_pad[l]
            if l:
                err_segs = [(self.hid[l - 1], self.hid_pad[l - 1])] * 2
                self.disc_from_bottom.append(
                    make_conv_params(keys[3 * l + 0], err_segs, [(h, hp)]))
            else:
                self.disc_from_bottom.append(None)     # first layer: identity input proj
            self.disc_from_state.append(
                make_conv_params(keys[3 * l + 1], [(h, hp)], [(h, hp)]))
            in_segs = [(h, hp), (h, hp)]               # error (two padded halves)
            if l != self.L - 1:
                in_segs.append((self.hid[l + 1], self.hid_pad[l + 1]))  # upsampled up_state
            in_segs.append((h, hp))                    # previous hidden
            self.gen_gates.append(
                make_conv_params(keys[3 * l + 2], in_segs, [(h, hp)] * 4))

    # ---- boundary padding helpers (NCHW real <-> NHWC lane-padded) ----------
    def _pad_error_in(self, l, e_nchw):
        h, hp = self.hid[l], self.hid_pad[l]
        e = jnp.transpose(e_nchw, (0, 2, 3, 1)).astype(jnp.float32)
        pos, neg = e[..., :h], e[..., h:]
        padw = ((0, 0), (0, 0), (0, 0), (0, hp - h))
        return jnp.concatenate([jnp.pad(pos, padw), jnp.pad(neg, padw)], axis=-1)

    def _unpad_error_out(self, l, e_pad):
        h, hp = self.hid[l], self.hid_pad[l]
        e = jnp.concatenate([e_pad[..., :h], e_pad[..., hp:hp + h]], axis=-1)
        return jnp.transpose(e, (0, 3, 1, 2))

    def _pad_state_in(self, l, t_nchw):
        h, hp = self.hid[l], self.hid_pad[l]
        t = jnp.transpose(t_nchw, (0, 2, 3, 1)).astype(jnp.float32)
        return jnp.pad(t, ((0, 0), (0, 0), (0, 0), (0, hp - h)))

    def _unpad_state_out(self, l, t_pad):
        return jnp.transpose(t_pad[..., :self.hid[l]], (0, 3, 1, 2))

    # ---- GenerativeCell: ConvLSTM over cat(error, upsample(up_state), h) -----
    def _generative(self, layer, err_pad, up_state, state):
        N, _, H, W = self.error_size_list[layer]
        hp = self.hid_pad[layer]
        if err_pad is None:
            err_pad = jnp.zeros((N, H, W, 2 * hp), jnp.float32)
        model_input = err_pad
        if up_state is not None:
            model_input = jnp.concatenate(
                [err_pad, upsample_nearest_2x(up_state)], axis=-1)
        if state is None:
            h_prev = jnp.zeros((N, H, W, hp), jnp.float32)
            c_prev = jnp.zeros((N, H, W, hp), jnp.float32)
        else:
            h_prev, c_prev = state
        stacked = jnp.concatenate([model_input, h_prev], axis=-1)
        a = im2col3x3(stacked)
        w, b = self.gen_gates[layer]
        h_new, c_new = convlstm_call(a, w, b, c_prev.reshape(N * H * W, hp), hp)
        return h_new.reshape(N, H, W, hp), c_new.reshape(N, H, W, hp)

    # ---- DiscriminativeCell --------------------------------------------------
    def _discriminative(self, layer, bottom_up_pad, state_h):
        hp = self.hid_pad[layer]
        N, H, W, _ = state_h.shape
        if layer == 0:
            in_proj = bottom_up_pad          # first layer: raw input projection
        else:
            wfb, bfb = self.disc_from_bottom[layer]
            Nb, Hb, Wb = bottom_up_pad.shape[:3]
            # relu fused into the conv kernel; relu/maxpool commute.
            conv_out = conv_mm_call(im2col3x3(bottom_up_pad), wfb, bfb, act="relu")
            in_proj = maxpool_2x2(conv_out.reshape(Nb, Hb, Wb, hp))
        ws, bs = self.disc_from_state[layer]
        err_flat, pred_flat = discrim_call(
            im2col3x3(state_h), ws, bs, in_proj.reshape(N * H * W, hp), hp)
        return (err_flat.reshape(N, H, W, 2 * hp),
                pred_flat.reshape(N, H, W, hp))

    # ---- full forward (matches PrednetModel.forward) -------------------------
    def __call__(self, bottom_up_input, error, state):
        # bottom_up_input: NCHW; error/state: lists of NCHW arrays (or None).
        hp0 = self.hid_pad[0]
        x = jnp.transpose(bottom_up_input, (0, 2, 3, 1)).astype(jnp.float32)
        x = jnp.pad(x, ((0, 0), (0, 0), (0, 0), (0, hp0 - x.shape[-1])))

        err = [None if e is None else self._pad_error_in(l, e)
               for l, e in enumerate(error)]
        st = [None if s is None else tuple(self._pad_state_in(l, t) for t in s)
              for l, s in enumerate(state)]

        # top-down generative pass
        up_state = None
        for layer in reversed(range(self.L)):
            st[layer] = self._generative(layer, err[layer], up_state, st[layer])
            up_state = st[layer][0]

        # bottom-up discriminative pass
        prediction = None
        for layer in range(self.L):
            if layer:
                err[layer], _ = self._discriminative(layer, err[layer - 1],
                                                     st[layer][0])
            else:
                err[0], prediction = self._discriminative(0, x, st[0][0])

        error_out = [self._unpad_error_out(l, err[l]) for l in range(self.L)]
        state_out = [tuple(self._unpad_state_out(l, t) for t in st[l])
                     for l in range(self.L)]
        pred_out = jnp.transpose(prediction[..., :self.hid[0]], (0, 3, 1, 2))
        return error_out, state_out, pred_out


# =========================== demo ============================================

if __name__ == "__main__":
    N, H, W = 2, 16, 16
    L = 2
    # NCHW error buffer shapes per layer, as in the PyTorch module.
    error_size_list = [(N, ERR_LAYER_SIZE[l], H // (2 ** l), W // (2 ** l))
                       for l in range(L)]

    model = PrednetPallas(error_size_list, jax.random.PRNGKey(0))

    bottom_up_input = jax.random.normal(
        jax.random.PRNGKey(1), (N, IN_LAYER_SIZE[0], H, W), jnp.float32)

    error = [None] * L
    state = [None] * L
    # Two timesteps: first exercises the zero-init paths, second the recurrent paths.
    for _ in range(2):
        error, state, prediction = model(bottom_up_input, error, state)

    jax.block_until_ready(prediction)
    for e in error:
        jax.block_until_ready(e)
    for h, c in state:
        jax.block_until_ready(h)
        jax.block_until_ready(c)

    assert prediction.shape == (N, OUT_LAYER_SIZE[0], H, W)
    assert error[0].shape == error_size_list[0]
    assert error[1].shape == error_size_list[1]
    assert state[0][0].shape == (N, OUT_LAYER_SIZE[0], H, W)
    assert state[1][0].shape == (N, OUT_LAYER_SIZE[1], H // 2, W // 2)
    assert bool(jnp.all(jnp.isfinite(prediction)))
    print("KERNEL_OK")
</pallas_src>

<mosaic_0001>
module attributes {stable_mosaic.version = 11 : i64} {
  func.func @_convlstm_kernel(%arg0: i32, %arg1: i32, %arg2: memref<128x3456xbf16, #tpu.memory_space<vmem>>, %arg3: memref<3456x512xbf16, #tpu.memory_space<vmem>>, %arg4: memref<1x512xf32, #tpu.memory_space<vmem>>, %arg5: memref<128x128xf32, #tpu.memory_space<vmem>>, %arg6: memref<128x128xf32, #tpu.memory_space<vmem>>, %arg7: memref<128x128xf32, #tpu.memory_space<vmem>>, %arg8: memref<128x512xf32, #tpu.memory_space<vmem>>) attributes {dimension_semantics = [#tpu.dimension_semantics<parallel>, #tpu.dimension_semantics<arbitrary>], iteration_bounds = array<i64: 1, 1>, scalar_prefetch = 0 : i64, scratch_operands = 1 : i64, tpu.core_type = #tpu.core_type<tc>, window_params = [{transform_indices = @transform_0, window_bounds = array<i64: 128, 3456>}, {transform_indices = @transform_1, window_bounds = array<i64: 3456, 512>}, {pipeline_mode = #tpu.pipeline_mode<synchronous>, transform_indices = @transform_2, window_bounds = array<i64: 1, 512>}, {transform_indices = @transform_3, window_bounds = array<i64: 128, 128>}, {transform_indices = @transform_4, window_bounds = array<i64: 128, 128>}, {transform_indices = @transform_5, window_bounds = array<i64: 128, 128>}]} {
    %c0_i32 = arith.constant 0 : i32
    %0 = arith.cmpi eq, %arg1, %c0_i32 : i32
    %1 = arith.extui %0 : i1 to i32
    %c0_i32_0 = arith.constant 0 : i32
    %2 = arith.cmpi ne, %1, %c0_i32_0 : i32
    scf.if %2 {
      %cst_10 = arith.constant 0.000000e+00 : f32
      %12 = vector.broadcast %cst_10 : f32 to vector<128x512xf32>
      %c0_11 = arith.constant 0 : index
      %c0_12 = arith.constant 0 : index
      %13 = vector.load %arg8[%c0_11, %c0_12] : memref<128x512xf32, #tpu.memory_space<vmem>>, vector<128x512xf32>
      tpu.vector_store %arg8[%c0_11, %c0_12], %12 {strides = array<i32>} : memref<128x512xf32, #tpu.memory_space<vmem>>, vector<128x512xf32>,
    } else {
    }
    %c0 = arith.constant 0 : index
    %c0_1 = arith.constant 0 : index
    %3 = vector.load %arg8[%c0, %c0_1] : memref<128x512xf32, #tpu.memory_space<vmem>>, vector<128x512xf32>
    %c0_2 = arith.constant 0 : index
    %c0_3 = arith.constant 0 : index
    %4 = vector.load %arg2[%c0_2, %c0_3] : memref<128x3456xbf16, #tpu.memory_space<vmem>>, vector<128x3456xbf16>
    %c0_4 = arith.constant 0 : index
    %c0_5 = arith.constant 0 : index
    %5 = vector.load %arg3[%c0_4, %c0_5] : memref<3456x512xbf16, #tpu.memory_space<vmem>>, vector<3456x512xbf16>
    %cst = arith.constant dense<0.000000e+00> : vector<128x512xf32>
    %6 = tpu.matmul %4, %5, %cst {dimension_numbers = #tpu.dot_dimension_numbers<[1], [0], [0], [1], [0, 0, 1, 1], [], []>} : vector<128x3456xbf16>, vector<3456x512xbf16>, vector<128x512xf32> -> vector<128x512xf32>
    %7 = arith.addf %3, %6 : vector<128x512xf32>
    %c0_6 = arith.constant 0 : index
    %c0_7 = arith.constant 0 : index
    %8 = vector.load %arg8[%c0_6, %c0_7] : memref<128x512xf32, #tpu.memory_space<vmem>>, vector<128x512xf32>
    tpu.vector_store %arg8[%c0_6, %c0_7], %7 {strides = array<i32>} : memref<128x512xf32, #tpu.memory_space<vmem>>, vector<128x512xf32>,
    %c0_i32_8 = arith.constant 0 : i32
    %9 = arith.cmpi eq, %arg1, %c0_i32_8 : i32
    %10 = arith.extui %9 : i1 to i32
    %c0_i32_9 = arith.constant 0 : i32
    %11 = arith.cmpi ne, %10, %c0_i32_9 : i32
    scf.if %11 {
      %c0_10 = arith.constant 0 : index
      %c0_11 = arith.constant 0 : index
      %12 = vector.load %arg8[%c0_10, %c0_11] : memref<128x512xf32, #tpu.memory_space<vmem>>, vector<128x512xf32>
      %c0_12 = arith.constant 0 : index
      %c0_13 = arith.constant 0 : index
      %13 = vector.load %arg4[%c0_12, %c0_13] : memref<1x512xf32, #tpu.memory_space<vmem>>, vector<1x512xf32>
      %14 = vector.broadcast %13 : vector<1x512xf32> to vector<128x512xf32>
      %15 = arith.addf %12, %14 : vector<128x512xf32>
      %16 = vector.extract_strided_slice %15 {offsets = [0, 0], sizes = [128, 128], strides = [1, 1]} : vector<128x512xf32> to vector<128x128xf32>
      %17 = arith.negf %16 : vector<128x128xf32>
      %18 = math.exp %17 : vector<128x128xf32>
      %cst_14 = arith.constant 1.000000e+00 : f32
      %19 = vector.broadcast %cst_14 : f32 to vector<128x128xf32>
      %20 = arith.addf %19, %18 : vector<128x128xf32>
      %21 = arith.divf %19, %20 : vector<128x128xf32>
      %22 = vector.extract_strided_slice %15 {offsets = [0, 128], sizes = [128, 128], strides = [1, 1]} : vector<128x512xf32> to vector<128x128xf32>
      %23 = arith.negf %22 : vector<128x128xf32>
      %24 = math.exp %23 : vector<128x128xf32>
      %cst_15 = arith.constant 1.000000e+00 : f32
      %25 = vector.broadcast %cst_15 : f32 to vector<128x128xf32>
      %26 = arith.addf %25, %24 : vector<128x128xf32>
      %27 = arith.divf %25, %26 : vector<128x128xf32>
      %28 = vector.extract_strided_slice %15 {offsets = [0, 256], sizes = [128, 128], strides = [1, 1]} : vector<128x512xf32> to vector<128x128xf32>
      %29 = arith.negf %28 : vector<128x128xf32>
      %30 = math.exp %29 : vector<128x128xf32>
      %cst_16 = arith.constant 1.000000e+00 : f32
      %31 = vector.broadcast %cst_16 : f32 to vector<128x128xf32>
      %32 = arith.addf %31, %30 : vector<128x128xf32>
      %33 = arith.divf %31, %32 : vector<128x128xf32>
      %34 = vector.extract_strided_slice %15 {offsets = [0, 384], sizes = [128, 128], strides = [1, 1]} : vector<128x512xf32> to vector<128x128xf32>
      %35 = math.tanh %34 : vector<128x128xf32>
      %c0_17 = arith.constant 0 : index
      %c0_18 = arith.constant 0 : index
      %36 = vector.load %arg5[%c0_17, %c0_18] : memref<128x128xf32, #tpu.memory_space<vmem>>, vector<128x128xf32>
      %37 = arith.mulf %27, %36 : vector<128x128xf32>
      %38 = arith.mulf %21, %35 : vector<128x128xf32>
      %39 = arith.addf %37, %38 : vector<128x128xf32>
      %40 = math.tanh %39 : vector<128x128xf32>
      %41 = arith.mulf %33, %40 : vector<128x128xf32>
      %c0_19 = arith.constant 0 : index
      %c0_20 = arith.constant 0 : index
      %42 = vector.load %arg6[%c0_19, %c0_20] : memref<128x128xf32, #tpu.memory_space<vmem>>, vector<128x128xf32>
      tpu.vector_store %arg6[%c0_19, %c0_20], %41 {strides = array<i32>} : memref<128x128xf32, #tpu.memory_space<vmem>>, vector<128x128xf32>,
      %c0_21 = arith.constant 0 : index
      %c0_22 = arith.constant 0 : index
      %43 = vector.load %arg7[%c0_21, %c0_22] : memref<128x128xf32, #tpu.memory_space<vmem>>, vector<128x128xf32>
      tpu.vector_store %arg7[%c0_21, %c0_22], %39 {strides = array<i32>} : memref<128x128xf32, #tpu.memory_space<vmem>>, vector<128x128xf32>,
    } else {
    }
    return
  }
  func.func @transform_0(%arg0: i32, %arg1: i32) -> (i32, i32) {
    %c0_i32 = arith.constant 0 : i32
    return %arg0, %arg1 : i32, i32
  }
  func.func @transform_1(%arg0: i32, %arg1: i32) -> (i32, i32) {
    %c0_i32 = arith.constant 0 : i32
    %c0_i32_0 = arith.constant 0 : i32
    return %arg1, %c0_i32 : i32, i32
  }
  func.func @transform_2(%arg0: i32, %arg1: i32) -> (i32, i32) {
    %c0_i32 = arith.constant 0 : i32
    %c0_i32_0 = arith.constant 0 : i32
    %c0_i32_1 = arith.constant 0 : i32
    return %c0_i32, %c0_i32_0 : i32, i32
  }
  func.func @transform_3(%arg0: i32, %arg1: i32) -> (i32, i32) {
    %c0_i32 = arith.constant 0 : i32
    %c0_i32_0 = arith.constant 0 : i32
    return %arg0, %c0_i32 : i32, i32
  }
  func.func @transform_4(%arg0: i32, %arg1: i32) -> (i32, i32) {
    %c0_i32 = arith.constant 0 : i32
    %c0_i32_0 = arith.constant 0 : i32
    return %arg0, %c0_i32 : i32, i32
  }
  func.func @transform_5(%arg0: i32, %arg1: i32) -> (i32, i32) {
    %c0_i32 = arith.constant 0 : i32
    %c0_i32_0 = arith.constant 0 : i32
    return %arg0, %c0_i32 : i32, i32
  }
}

</mosaic_0001>

<llo_original>
// kernel: tpu_custom_call.1
$region0: #{tpu_custom_call.1}
  #allocation0 [shape = 'u32[]', space=smem, size = 0x4, offset = 0x4, fixed_abs, tag = 'smem constant byte address 0x4 - core index']
  #allocation1 [shape = 'u32[72,128]{1,0:T(1,128)}', space=vmem, size = 0x9000, scoped, tag = 'internal scratch']
  #allocation2 [shape = 'f32[128,512]{1,0:T(8,128)}', space=vmem, size = 0x40000, scoped, tag = 'scratch operand']
  %s0 = inlined_call_operand.hbm [shape: bf16[128,3456], index: 0, kind: input, shape index: {}]
  %s1 = inlined_call_operand.hbm [shape: bf16[3456,512], index: 1, kind: input, shape index: {}]
  %s2 = inlined_call_operand.hbm [shape: f32[1,512], index: 2, kind: input, shape index: {}]
  %s3 = inlined_call_operand.hbm [shape: f32[128,128], index: 3, kind: input, shape index: {}, may-alias: {3,5}]
  %s4 = inlined_call_operand.hbm [shape: f32[128,128], index: 4, kind: output, shape index: {0}]
  %s5 = inlined_call_operand.hbm [shape: f32[128,128], index: 5, kind: output, shape index: {1}, may-alias: {3,5}]
  %6 = xla_tuple %s4, %s5
  %s7 = sld [smem:[#allocation0]]
  $region58: #{tpu_custom_call.1} parent=0
    _
  %s9 = ssub.s32 1, %s7
  %s10 = scalar_select 0, %s9, %s7
  $region1: #{tpu_custom_call.1} parent=0
    #allocation3 [shape = 'u8[884736]{0}', space=vmem, size = 0xd8000, scoped, tag = 'input window, operand 0, single buffered']
    #allocation4 [shape = 's32[1]{0}', space=sflag, size = 0x4, scoped, tag = 'scoped memory for tpu_custom_call.1']
    #allocation5 [shape = 's32[1]{0}', space=sflag, size = 0x4, scoped, tag = 'scoped memory for tpu_custom_call.1']
    #allocation6 [shape = 'u8[3538944]{0}', space=vmem, size = 0x360000, scoped, tag = 'input window, operand 1, single buffered']
    #allocation7 [shape = 's32[1]{0}', space=sflag, size = 0x4, scoped, tag = 'scoped memory for tpu_custom_call.1']
    #allocation8 [shape = 'u8[2048]{0}', space=vmem, size = 0x800, scoped, tag = 'input window, operand 2, single buffered']
    #allocation9 [shape = 'u8[65536]{0}', space=vmem, size = 0x10000, scoped, tag = 'input window, operand 3, single buffered']
    #allocation10 [shape = 's32[1]{0}', space=sflag, size = 0x4, scoped, tag = 'scoped memory for tpu_custom_call.1']
    #allocation11 [shape = 'u8[65536]{0}', space=vmem, size = 0x10000, scoped, tag = 'output window, operand 0, single buffered']
    #allocation12 [shape = 'u8[65536]{0}', space=vmem, size = 0x10000, scoped, tag = 'output window, operand 1, single buffered']
    #allocation13 [shape = 's32[1]{0}', space=sflag, size = 0x4, scoped, tag = 'scoped memory for tpu_custom_call.1']
    %11 = vsyncpa [#allocation4], 0
    %12 = vsyncpa [#allocation7], 0
    %13 = vsyncpa [#allocation10], 0
    %14 = vsyncpa [#allocation5], 0
    %15 = vsyncpa [#allocation13], 0
    // Predicated region
    $region2: #{tpu_custom_call.1} parent=1 // pred_check
      _
    $region3: #{tpu_custom_call.1} parent=1 // pred_check_branch
      %17 = sbr.rel (0) target = $region5
    $region4: #{tpu_custom_call.1} parent=1 // pred_region
      %19 = vsyncadd [#allocation4], 0
      %s20 = sshll.u32 %s0, 4
      %s21 = int_to_ptr.hbm [resolvable:$true] %s20
      %s22 = sshll.u32 [#allocation3], 4
      %s23 = int_to_ptr.vmem [resolvable:$true] %s22
      %28 = dma.hbm_to_vmem [thread:$0]  %s21, 27648, %s23, [#allocation4], 1728, 1728, 108
    $region5: #{tpu_custom_call.1} parent=1 // pred_fallthru
      _
    // Predicated region
    $region6: #{tpu_custom_call.1} parent=1 // pred_check
      _
    $region7: #{tpu_custom_call.1} parent=1 // pred_check_branch
      %30 = sbr.rel (0) target = $region9
    $region8: #{tpu_custom_call.1} parent=1 // pred_region
      %32 = vsyncadd [#allocation7], 0
      %s33 = sshll.u32 %s1, 4
      %s34 = int_to_ptr.hbm [resolvable:$true] %s33
      %s35 = sshll.u32 [#allocation6], 4
      %s36 = int_to_ptr.vmem [resolvable:$true] %s35
      %41 = dma.hbm_to_vmem [thread:$0]  %s34, 110592, %s36, [#allocation7], 256, 256, 16
    $region9: #{tpu_custom_call.1} parent=1 // pred_fallthru
      _
    // Predicated region
    $region10: #{tpu_custom_call.1} parent=1 // pred_check
      _
    $region11: #{tpu_custom_call.1} parent=1 // pred_check_branch
      %43 = sbr.rel (0) target = $region13
    $region12: #{tpu_custom_call.1} parent=1 // pred_region
      %45 = vsyncadd [#allocation7], 0
      %s47 = sshll.u32 %s2, 4
      %s48 = int_to_ptr.hbm [resolvable:$true] %s47
      %s49 = sshll.u32 [#allocation8], 4
      %s50 = int_to_ptr.vmem [resolvable:$true] %s49
      %52 = dma.hbm_to_vmem [thread:$0]  %s48, 64, %s50, [#allocation7]
    $region13: #{tpu_custom_call.1} parent=1 // pred_fallthru
      _
    // Predicated region
    $region14: #{tpu_custom_call.1} parent=1 // pred_check
      _
    $region15: #{tpu_custom_call.1} parent=1 // pred_check_branch
      %54 = sbr.rel (0) target = $region17
    $region16: #{tpu_custom_call.1} parent=1 // pred_region
      %56 = vsyncadd [#allocation10], 0
      %s57 = sshll.u32 %s3, 4
      %s58 = int_to_ptr.hbm [resolvable:$true] %s57
      %s59 = sshll.u32 [#allocation9], 4
      %s60 = int_to_ptr.vmem [resolvable:$true] %s59
      %65 = dma.hbm_to_vmem [thread:$0]  %s58, 2048, %s60, [#allocation10], 128, 128, 8
    $region17: #{tpu_custom_call.1} parent=1 // pred_fallthru
      _
    // Predicated region
    $region18: #{tpu_custom_call.1} parent=1 // pred_check
      _
    $region19: #{tpu_custom_call.1} parent=1 // pred_check_branch
      %67 = sbr.rel (0) target = $region21
    $region20: #{tpu_custom_call.1} parent=1 // pred_region
      %69 = dma.done [#allocation4], 27648
    $region21: #{tpu_custom_call.1} parent=1 // pred_fallthru
      _
    // Predicated region
    $region22: #{tpu_custom_call.1} parent=1 // pred_check
      _
    $region23: #{tpu_custom_call.1} parent=1 // pred_check_branch
      %71 = sbr.rel (0) target = $region25
    $region24: #{tpu_custom_call.1} parent=1 // pred_region
      %73 = dma.done [#allocation7], 110592
    $region25: #{tpu_custom_call.1} parent=1 // pred_fallthru
      _
    // Predicated region
    $region26: #{tpu_custom_call.1} parent=1 // pred_check
      _
    $region27: #{tpu_custom_call.1} parent=1 // pred_check_branch
      %75 = sbr.rel (0) target = $region29
    $region28: #{tpu_custom_call.1} parent=1 // pred_region
      %77 = dma.done [#allocation7], 64
    $region29: #{tpu_custom_call.1} parent=1 // pred_fallthru
      _
    // Predicated region
    $region30: #{tpu_custom_call.1} parent=1 // pred_check
      _
    $region31: #{tpu_custom_call.1} parent=1 // pred_check_branch
      %79 = sbr.rel (0) target = $region33
    $region32: #{tpu_custom_call.1} parent=1 // pred_region
      %81 = dma.done [#allocation10], 2048
    $region33: #{tpu_custom_call.1} parent=1 // pred_fallthru
      _
    %p82 = scmp.eq.s32.totalorder 0, 0
    // Predicated region
    $region34: #{tpu_custom_call.1} parent=1 // pred_check
      %p83 = pneg %p82
    $region35: #{tpu_custom_call.1} parent=1 // pred_check_branch
      %85 = sbr.rel (%p83) target = $region37
    $region36: #{tpu_custom_call.1} parent=1 // pred_region
      %86 = vst [vmem:[#allocation2] sm:$0xff] 0.0
      %87 = vst [vmem:[#allocation2 + $0x8] sm:$0xff] 0.0
      %88 = vst [vmem:[#allocation2 + $0x10] sm:$0xff] 0.0
      %89 = vst [vmem:[#allocation2 + $0x18] sm:$0xff] 0.0
      %90 = vst [vmem:[#allocation2 + $0x20] sm:$0xff] 0.0
      %91 = vst [vmem:[#allocation2 + $0x28] sm:$0xff] 0.0
      %92 = vst [vmem:[#allocation2 + $0x30] sm:$0xff] 0.0
      %93 = vst [vmem:[#allocation2 + $0x38] sm:$0xff] 0.0
      %94 = vst [vmem:[#allocation2 + $0x40] sm:$0xff] 0.0
      %95 = vst [vmem:[#allocation2 + $0x48] sm:$0xff] 0.0
      %96 = vst [vmem:[#allocation2 + $0x50] sm:$0xff] 0.0
      %97 = vst [vmem:[#allocation2 + $0x58] sm:$0xff] 0.0
      %98 = vst [vmem:[#allocation2 + $0x60] sm:$0xff] 0.0
      %99 = vst [vmem:[#allocation2 + $0x68] sm:$0xff] 0.0
      %100 = vst [vmem:[#allocation2 + $0x70] sm:$0xff] 0.0
      %101 = vst [vmem:[#allocation2 + $0x78] sm:$0xff] 0.0
      %102 = vst [vmem:[#allocation2 + $0x80] sm:$0xff] 0.0
      %103 = vst [vmem:[#allocation2 + $0x88] sm:$0xff] 0.0
      %104 = vst [vmem:[#allocation2 + $0x90] sm:$0xff] 0.0
      %105 = vst [vmem:[#allocation2 + $0x98] sm:$0xff] 0.0
      %106 = vst [vmem:[#allocation2 + $0xa0] sm:$0xff] 0.0
      %107 = vst [vmem:[#allocation2 + $0xa8] sm:$0xff] 0.0
      %108 = vst [vmem:[#allocation2 + $0xb0] sm:$0xff] 0.0
      %109 = vst [vmem:[#allocation2 + $0xb8] sm:$0xff] 0.0
      %110 = vst [vmem:[#allocation2 + $0xc0] sm:$0xff] 0.0
      %111 = vst [vmem:[#allocation2 + $0xc8] sm:$0xff] 0.0
      %112 = vst [vmem:[#allocation2 + $0xd0] sm:$0xff] 0.0
      %113 = vst [vmem:[#allocation2 + $0xd8] sm:$0xff] 0.0
      %114 = vst [vmem:[#allocation2 + $0xe0] sm:$0xff] 0.0
      %115 = vst [vmem:[#allocation2 + $0xe8] sm:$0xff] 0.0
      %116 = vst [vmem:[#allocation2 + $0xf0] sm:$0xff] 0.0
      %117 = vst [vmem:[#allocation2 + $0xf8] sm:$0xff] 0.0
      %118 = vst [vmem:[#allocation2 + $0x100] sm:$0xff] 0.0
      %119 = vst [vmem:[#allocation2 + $0x108] sm:$0xff] 0.0
      %120 = vst [vmem:[#allocation2 + $0x110] sm:$0xff] 0.0
      %121 = vst [vmem:[#allocation2 + $0x118] sm:$0xff] 0.0
      %122 = vst [vmem:[#allocation2 + $0x120] sm:$0xff] 0.0
      %123 = vst [vmem:[#allocation2 + $0x128] sm:$0xff] 0.0
      %124 = vst [vmem:[#allocation2 + $0x130] sm:$0xff] 0.0
      %125 = vst [vmem:[#allocation2 + $0x138] sm:$0xff] 0.0
      %126 = vst [vmem:[#allocation2 + $0x140] sm:$0xff] 0.0
      %127 = vst [vmem:[#allocation2 + $0x148] sm:$0xff] 0.0
      %128 = vst [vmem:[#allocation2 + $0x150] sm:$0xff] 0.0
      %129 = vst [vmem:[#allocation2 + $0x158] sm:$0xff] 0.0
      %130 = vst [vmem:[#allocation2 + $0x160] sm:$0xff] 0.0
      %131 = vst [vmem:[#allocation2 + $0x168] sm:$0xff] 0.0
      %132 = vst [vmem:[#allocation2 + $0x170] sm:$0xff] 0.0
      %133 = vst [vmem:[#allocation2 + $0x178] sm:$0xff] 0.0
      %134 = vst [vmem:[#allocation2 + $0x180] sm:$0xff] 0.0
      %135 = vst [vmem:[#allocation2 + $0x188] sm:$0xff] 0.0
      %136 = vst [vmem:[#allocation2 + $0x190] sm:$0xff] 0.0
      %137 = vst [vmem:[#allocation2 + $0x198] sm:$0xff] 0.0
      %138 = vst [vmem:[#allocation2 + $0x1a0] sm:$0xff] 0.0
      %139 = vst [vmem:[#allocation2 + $0x1a8] sm:$0xff] 0.0
      %140 = vst [vmem:[#allocation2 + $0x1b0] sm:$0xff] 0.0
      %141 = vst [vmem:[#allocation2 + $0x1b8] sm:$0xff] 0.0
      %142 = vst [vmem:[#allocation2 + $0x1c0] sm:$0xff] 0.0
      %143 = vst [vmem:[#allocation2 + $0x1c8] sm:$0xff] 0.0
      %144 = vst [vmem:[#allocation2 + $0x1d0] sm:$0xff] 0.0
      %145 = vst [vmem:[#allocation2 + $0x1d8] sm:$0xff] 0.0
      %146 = vst [vmem:[#allocation2 + $0x1e0] sm:$0xff] 0.0
      %147 = vst [vmem:[#allocation2 + $0x1e8] sm:$0xff] 0.0
      %148 = vst [vmem:[#allocation2 + $0x1f0] sm:$0xff] 0.0
      %149 = vst [vmem:[#allocation2 + $0x1f8] sm:$0xff] 0.0
    $region37: #{tpu_custom_call.1} parent=1 // pred_fallthru
      _
    %v150 = vld [vmem:[#allocation2] sm:$0xff]
    %v151 = vld [vmem:[#allocation2 + $0x8] sm:$0xff]
    %v152 = vld [vmem:[#allocation2 + $0x10] sm:$0xff]
    %v153 = vld [vmem:[#allocation2 + $0x18] sm:$0xff]
    %v154 = vld [vmem:[#allocation2 + $0x20] sm:$0xff]
    %v155 = vld [vmem:[#allocation2 + $0x28] sm:$0xff]
    %v156 = vld [vmem:[#allocation2 + $0x30] sm:$0xff]
    %v157 = vld [vmem:[#allocation2 + $0x38] sm:$0xff]
    %v158 = vld [vmem:[#allocation2 + $0x40] sm:$0xff]
    %v159 = vld [vmem:[#allocation2 + $0x48] sm:$0xff]
    %v160 = vld [vmem:[#allocation2 + $0x50] sm:$0xff]
    %v161 = vld [vmem:[#allocation2 + $0x58] sm:$0xff]
    %v162 = vld [vmem:[#allocation2 + $0x60] sm:$0xff]
    %v163 = vld [vmem:[#allocation2 + $0x68] sm:$0xff]
    %v164 = vld [vmem:[#allocation2 + $0x70] sm:$0xff]
    %v165 = vld [vmem:[#allocation2 + $0x78] sm:$0xff]
    %v166 = vld [vmem:[#allocation2 + $0x80] sm:$0xff]
    %v167 = vld [vmem:[#allocation2 + $0x88] sm:$0xff]
    %v168 = vld [vmem:[#allocation2 + $0x90] sm:$0xff]
    %v169 = vld [vmem:[#allocation2 + $0x98] sm:$0xff]
    %v170 = vld [vmem:[#allocation2 + $0xa0] sm:$0xff]
    %v171 = vld [vmem:[#allocation2 + $0xa8] sm:$0xff]
    %v172 = vld [vmem:[#allocation2 + $0xb0] sm:$0xff]
    %v173 = vld [vmem:[#allocation2 + $0xb8] sm:$0xff]
    %v174 = vld [vmem:[#allocation2 + $0xc0] sm:$0xff]
    %v175 = vld [vmem:[#allocation2 + $0xc8] sm:$0xff]
    %v176 = vld [vmem:[#allocation2 + $0xd0] sm:$0xff]
    %v177 = vld [vmem:[#allocation2 + $0xd8] sm:$0xff]
    %v178 = vld [vmem:[#allocation2 + $0xe0] sm:$0xff]
    %v179 = vld [vmem:[#allocation2 + $0xe8] sm:$0xff]
    %v180 = vld [vmem:[#allocation2 + $0xf0] sm:$0xff]
    %v181 = vld [vmem:[#allocation2 + $0xf8] sm:$0xff]
    %v182 = vld [vmem:[#allocation2 + $0x100] sm:$0xff]
    %v183 = vld [vmem:[#allocation2 + $0x108] sm:$0xff]
    %v184 = vld [vmem:[#allocation2 + $0x110] sm:$0xff]
    %v185 = vld [vmem:[#allocation2 + $0x118] sm:$0xff]
    %v186 = vld [vmem:[#allocation2 + $0x120] sm:$0xff]
    %v187 = vld [vmem:[#allocation2 + $0x128] sm:$0xff]
    %v188 = vld [vmem:[#allocation2 + $0x130] sm:$0xff]
    %v189 = vld [vmem:[#allocation2 + $0x138] sm:$0xff]
    %v190 = vld [vmem:[#allocation2 + $0x140] sm:$0xff]
    %v191 = vld [vmem:[#allocation2 + $0x148] sm:$0xff]
    %v192 = vld [vmem:[#allocation2 + $0x150] sm:$0xff]
    %v193 = vld [vmem:[#allocation2 + $0x158] sm:$0xff]
    %v194 = vld [vmem:[#allocation2 + $0x160] sm:$0xff]
    %v195 = vld [vmem:[#allocation2 + $0x168] sm:$0xff]
    %v196 = vld [vmem:[#allocation2 + $0x170] sm:$0xff]
    %v197 = vld [vmem:[#allocation2 + $0x178] sm:$0xff]
    %v198 = vld [vmem:[#allocation2 + $0x180] sm:$0xff]
    %v199 = vld [vmem:[#allocation2 + $0x188] sm:$0xff]
    %v200 = vld [vmem:[#allocation2 + $0x190] sm:$0xff]
    %v201 = vld [vmem:[#allocation2 + $0x198] sm:$0xff]
    %v202 = vld [vmem:[#allocation2 + $0x1a0] sm:$0xff]
    %v203 = vld [vmem:[#allocation2 + $0x1a8] sm:$0xff]
    %v204 = vld [vmem:[#allocation2 + $0x1b0] sm:$0xff]
    %v205 = vld [vmem:[#allocation2 + $0x1b8] sm:$0xff]
    %v206 = vld [vmem:[#allocation2 + $0x1c0] sm:$0xff]
    %v207 = vld [vmem:[#allocation2 + $0x1c8] sm:$0xff]
    %v208 = vld [vmem:[#allocation2 + $0x1d0] sm:$0xff]
    %v209 = vld [vmem:[#allocation2 + $0x1d8] sm:$0xff]
    %v210 = vld [vmem:[#allocation2 + $0x1e0] sm:$0xff]
    %v211 = vld [vmem:[#allocation2 + $0x1e8] sm:$0xff]
    %v212 = vld [vmem:[#allocation2 + $0x1f0] sm:$0xff]
    %v213 = vld [vmem:[#allocation2 + $0x1f8] sm:$0xff]
    %v214 = vld [vmem:[#allocation3] sm:$0xff]
    %v215 = vld [vmem:[#allocation3 + $0x8] sm:$0xff]
    %v216 = vld [vmem:[#allocation3 + $0x10] sm:$0xff]
    %v217 = vld [vmem:[#allocation3 + $0x18] sm:$0xff]
    %v218 = vld [vmem:[#allocation3 + $0x20] sm:$0xff]
    %v219 = vld [vmem:[#allocation3 + $0x28] sm:$0xff]
    %v220 = vld [vmem:[#allocation3 + $0x30] sm:$0xff]
    %v221 = vld [vmem:[#allocation3 + $0x38] sm:$0xff]
    %v222 = vld [vmem:[#allocation3 + $0x40] sm:$0xff]
    %v223 = vld [vmem:[#allocation3 + $0x48] sm:$0xff]
    %v224 = vld [vmem:[#allocation3 + $0x50] sm:$0xff]
    %v225 = vld [vmem:[#allocation3 + $0x58] sm:$0xff]
    %v226 = vld [vmem:[#allocation3 + $0x60] sm:$0xff]
    %v227 = vld [vmem:[#allocation3 + $0x68] sm:$0xf]
    %v228 = vld [vmem:[#allocation3 + $0x6c] sm:$0xff]
    %v229 = vld [vmem:[#allocation3 + $0x74] sm:$0xff]
    %v230 = vld [vmem:[#allocation3 + $0x7c] sm:$0xff]
    %v231 = vld [vmem:[#allocation3 + $0x84] sm:$0xff]
    %v232 = vld [vmem:[#allocation3 + $0x8c] sm:$0xff]
    %v233 = vld [vmem:[#allocation3 + $0x94] sm:$0xff]
    %v234 = vld [vmem:[#allocation3 + $0x9c] sm:$0xff]
    %v235 = vld [vmem:[#allocation3 + $0xa4] sm:$0xff]
    %v236 = vld [vmem:[#allocation3 + $0xac] sm:$0xff]
    %v237 = vld [vmem:[#allocation3 + $0xb4] sm:$0xff]
    %v238 = vld [vmem:[#allocation3 + $0xbc] sm:$0xff]
    %v239 = vld [vmem:[#allocation3 + $0xc4] sm:$0xff]
    %v240 = vld [vmem:[#allocation3 + $0xcc] sm:$0xff]
    %v241 = vld [vmem:[#allocation3 + $0xd4] sm:$0xf]
    %v242 = vld [vmem:[#allocation3 + $0xd8] sm:$0xff]
    %v243 = vld [vmem:[#allocation3 + $0xe0] sm:$0xff]
    %v244 = vld [vmem:[#allocation3 + $0xe8] sm:$0xff]
    %v245 = vld [vmem:[#allocation3 + $0xf0] sm:$0xff]
    %v246 = vld [vmem:[#allocation3 + $0xf8] sm:$0xff]
    %v247 = vld [vmem:[#allocation3 + $0x100] sm:$0xff]
    %v248 = vld [vmem:[#allocation3 + $0x108] sm:$0xff]
    %v249 = vld [vmem:[#allocation3 + $0x110] sm:$0xff]
    %v250 = vld [vmem:[#allocation3 + $0x118] sm:$0xff]
    %v251 = vld [vmem:[#allocation3 + $0x120] sm:$0xff]
    %v252 = vld [vmem:[#allocation3 + $0x128] sm:$0xff]
    %v253 = vld [vmem:[#allocation3 + $0x130] sm:$0xff]
    %v254 = vld [vmem:[#allocation3 + $0x138] sm:$0xff]
    %v255 = vld [vmem:[#allocation3 + $0x140] sm:$0xf]
    %v256 = vld [vmem:[#allocation3 + $0x144] sm:$0xff]
    %v257 = vld [vmem:[#allocation3 + $0x14c] sm:$0xff]
    %v258 = vld [vmem:[#allocation3 + $0x154] sm:$0xff]
    %v259 = vld [vmem:[#allocation3 + $0x15c] sm:$0xff]
    %v260 = vld [vmem:[#allocation3 + $0x164] sm:$0xff]
    %v261 = vld [vmem:[#allocation3 + $0x16c] sm:$0xff]
    %v262 = vld [vmem:[#allocation3 + $0x174] sm:$0xff]
    %v263 = vld [vmem:[#allocation3 + $0x17c] sm:$0xff]
    %v264 = vld [vmem:[#allocation3 + $0x184] sm:$0xff]
    %v265 = vld [vmem:[#allocation3 + $0x18c] sm:$0xff]
    %v266 = vld [vmem:[#allocation3 + $0x194] sm:$0xff]
    %v267 = vld [vmem:[#allocation3 + $0x19c] sm:$0xff]
    %v268 = vld [vmem:[#allocation3 + $0x1a4] sm:$0xff]
    %v269 = vld [vmem:[#allocation3 + $0x1ac] sm:$0xf]
    %v270 = vld [vmem:[#allocation3 + $0x1b0] sm:$0xff]
    %v271 = vld [vmem:[#allocation3 + $0x1b8] sm:$0xff]
    %v272 = vld [vmem:[#allocation3 + $0x1c0] sm:$0xff]
    %v273 = vld [vmem:[#allocation3 + $0x1c8] sm:$0xff]
    %v274 = vld [vmem:[#allocation3 + $0x1d0] sm:$0xff]
    %v275 = vld [vmem:[#allocation3 + $0x1d8] sm:$0xff]
    %v276 = vld [vmem:[#allocation3 + $0x1e0] sm:$0xff]
    %v277 = vld [vmem:[#allocation3 + $0x1e8] sm:$0xff]
    %v278 = vld [vmem:[#allocation3 + $0x1f0] sm:$0xff]
    %v279 = vld [vmem:[#allocation3 + $0x1f8] sm:$0xff]
    %v280 = vld [vmem:[#allocation3 + $0x200] sm:$0xff]
    %v281 = vld [vmem:[#allocation3 + $0x208] sm:$0xff]
    %v282 = vld [vmem:[#allocation3 + $0x210] sm:$0xff]
    %v283 = vld [vmem:[#allocation3 + $0x218] sm:$0xf]
    %v284 = vld [vmem:[#allocation3 + $0x21c] sm:$0xff]
    %v285 = vld [vmem:[#allocation3 + $0x224] sm:$0xff]
    %v286 = vld [vmem:[#allocation3 + $0x22c] sm:$0xff]
    %v287 = vld [vmem:[#allocation3 + $0x234] sm:$0xff]
    %v288 = vld [vmem:[#allocation3 + $0x23c] sm:$0xff]
    %v289 = vld [vmem:[#allocation3 + $0x244] sm:$0xff]
    %v290 = vld [vmem:[#allocation3 + $0x24c] sm:$0xff]
    %v291 = vld [vmem:[#allocation3 + $0x254] sm:$0xff]
    %v292 = vld [vmem:[#allocation3 + $0x25c] sm:$0xff]
    %v293 = vld [vmem:[#allocation3 + $0x264] sm:$0xff]
    %v294 = vld [vmem:[#allocation3 + $0x26c] sm:$0xff]
    %v295 = vld [vmem:[#allocation3 + $0x274] sm:$0xff]
    %v296 = vld [vmem:[#allocation3 + $0x27c] sm:$0xff]
    %v297 = vld [vmem:[#allocation3 + $0x284] sm:$0xf]
    %v298 = vld [vmem:[#allocation3 + $0x288] sm:$0xff]
    %v299 = vld [vmem:[#allocation3 + $0x290] sm:$0xff]
    %v300 = vld [vmem:[#allocation3 + $0x298] sm:$0xff]
    %v301 = vld [vmem:[#allocation3 + $0x2a0] sm:$0xff]
    %v302 = vld [vmem:[#allocation3 + $0x2a8] sm:$0xff]
    %v303 = vld [vmem:[#allocation3 + $0x2b0] sm:$0xff]
    %v304 = vld [vmem:[#allocation3 + $0x2b8] sm:$0xff]
    %v305 = vld [vmem:[#allocation3 + $0x2c0] sm:$0xff]
    %v306 = vld [vmem:[#allocation3 + $0x2c8] sm:$0xff]
    %v307 = vld [vmem:[#allocation3 + $0x2d0] sm:$0xff]
    %v308 = vld [vmem:[#allocation3 + $0x2d8] sm:$0xff]
    %v309 = vld [vmem:[#allocation3 + $0x2e0] sm:$0xff]
    %v310 = vld [vmem:[#allocation3 + $0x2e8] sm:$0xff]
    %v311 = vld [vmem:[#allocation3 + $0x2f0] sm:$0xf]
    %v312 = vld [vmem:[#allocation3 + $0x2f4] sm:$0xff]
    %v313 = vld [vmem:[#allocation3 + $0x2fc] sm:$0xff]
    %v314 = vld [vmem:[#allocation3 + $0x304] sm:$0xff]
    %v315 = vld [vmem:[#allocation3 + $0x30c] sm:$0xff]
    %v316 = vld [vmem:[#allocation3 + $0x314] sm:$0xff]
    %v317 = vld [vmem:[#allocation3 + $0x31c] sm:$0xff]
    %v318 = vld [vmem:[#allocation3 + $0x324] sm:$0xff]
    %v319 = vld [vmem:[#allocation3 + $0x32c] sm:$0xff]
    %v320 = vld [vmem:[#allocation3 + $0x334] sm:$0xff]
    %v321 = vld [vmem:[#allocation3 + $0x33c] sm:$0xff]
    %v322 = vld [vmem:[#allocation3 + $0x344] sm:$0xff]
    %v323 = vld [vmem:[#allocation3 + $0x34c] sm:$0xff]
    %v324 = vld [vmem:[#allocation3 + $0x354] sm:$0xff]
    %v325 = vld [vmem:[#allocation3 + $0x35c] sm:$0xf]
    %v326 = vld [vmem:[#allocation3 + $0x360] sm:$0xff]
    %v327 = vld [vmem:[#allocation3 + $0x368] sm:$0xff]
    %v328 = vld [vmem:[#allocation3 + $0x370] sm:$0xff]
    %v329 = vld [vmem:[#allocation3 + $0x378] sm:$0xff]
    %v330 = vld [vmem:[#allocation3 + $0x380] sm:$0xff]
    %v331 = vld [vmem:[#allocation3 + $0x388] sm:$0xff]
    %v332 = vld [vmem:[#allocation3 + $0x390] sm:$0xff]
    %v333 = vld [vmem:[#allocation3 + $0x398] sm:$0xff]
    %v334 = vld [vmem:[#allocation3 + $0x3a0] sm:$0xff]
    %v335 = vld [vmem:[#allocation3 + $0x3a8] sm:$0xff]
    %v336 = vld [vmem:[#allocation3 + $0x3b0] sm:$0xff]
    %v337 = vld [vmem:[#allocation3 + $0x3b8] sm:$0xff]
    %v338 = vld [vmem:[#allocation3 + $0x3c0] sm:$0xff]
    %v339 = vld [vmem:[#allocation3 + $0x3c8] sm:$0xf]
    %v340 = vld [vmem:[#allocation3 + $0x3cc] sm:$0xff]
    %v341 = vld [vmem:[#allocation3 + $0x3d4] sm:$0xff]
    %v342 = vld [vmem:[#allocation3 + $0x3dc] sm:$0xff]
    %v343 = vld [vmem:[#allocation3 + $0x3e4] sm:$0xff]
    %v344 = vld [vmem:[#allocation3 + $0x3ec] sm:$0xff]
    %v345 = vld [vmem:[#allocation3 + $0x3f4] sm:$0xff]
    %v346 = vld [vmem:[#allocation3 + $0x3fc] sm:$0xff]
    %v347 = vld [vmem:[#allocation3 + $0x404] sm:$0xff]
    %v348 = vld [vmem:[#allocation3 + $0x40c] sm:$0xff]
    %v349 = vld [vmem:[#allocation3 + $0x414] sm:$0xff]
    %v350 = vld [vmem:[#allocation3 + $0x41c] sm:$0xff]
    %v351 = vld [vmem:[#allocation3 + $0x424] sm:$0xff]
    %v352 = vld [vmem:[#allocation3 + $0x42c] sm:$0xff]
    %v353 = vld [vmem:[#allocation3 + $0x434] sm:$0xf]
    %v354 = vld [vmem:[#allocation3 + $0x438] sm:$0xff]
    %v355 = vld [vmem:[#allocation3 + $0x440] sm:$0xff]
    %v356 = vld [vmem:[#allocation3 + $0x448] sm:$0xff]
    %v357 = vld [vmem:[#allocation3 + $0x450] sm:$0xff]
    %v358 = vld [vmem:[#allocation3 + $0x458] sm:$0xff]
    %v359 = vld [vmem:[#allocation3 + $0x460] sm:$0xff]
    %v360 = vld [vmem:[#allocation3 + $0x468] sm:$0xff]
    %v361 = vld [vmem:[#allocation3 + $0x470] sm:$0xff]
    %v362 = vld [vmem:[#allocation3 + $0x478] sm:$0xff]
    %v363 = vld [vmem:[#allocation3 + $0x480] sm:$0xff]
    %v364 = vld [vmem:[#allocation3 + $0x488] sm:$0xff]
    %v365 = vld [vmem:[#allocation3 + $0x490] sm:$0xff]
    %v366 = vld [vmem:[#allocation3 + $0x498] sm:$0xff]
    %v367 = vld [vmem:[#allocation3 + $0x4a0] sm:$0xf]
    %v368 = vld [vmem:[#allocation3 + $0x4a4] sm:$0xff]
    %v369 = vld [vmem:[#allocation3 + $0x4ac] sm:$0xff]
    %v370 = vld [vmem:[#allocation3 + $0x4b4] sm:$0xff]
    %v371 = vld [vmem:[#allocation3 + $0x4bc] sm:$0xff]
    %v372 = vld [vmem:[#allocation3 + $0x4c4] sm:$0xff]
    %v373 = vld [vmem:[#allocation3 + $0x4cc] sm:$0xff]
    %v374 = vld [vmem:[#allocation3 + $0x4d4] sm:$0xff]
    %v375 = vld [vmem:[#allocation3 + $0x4dc] sm:$0xff]
    %v376 = vld [vmem:[#allocation3 + $0x4e4] sm:$0xff]
    %v377 = vld [vmem:[#allocation3 + $0x4ec] sm:$0xff]
    %v378 = vld [vmem:[#allocation3 + $0x4f4] sm:$0xff]
    %v379 = vld [vmem:[#allocation3 + $0x4fc] sm:$0xff]
    %v380 = vld [vmem:[#allocation3 + $0x504] sm:$0xff]
    %v381 = vld [vmem:[#allocation3 + $0x50c] sm:$0xf]
    %v382 = vld [vmem:[#allocation3 + $0x510] sm:$0xff]
    %v383 = vld [vmem:[#allocation3 + $0x518] sm:$0xff]
    %v384 = vld [vmem:[#allocation3 + $0x520] sm:$0xff]
    %v385 = vld [vmem:[#allocation3 + $0x528] sm:$0xff]
    %v386 = vld [vmem:[#allocation3 + $0x530] sm:$0xff]
    %v387 = vld [vmem:[#allocation3 + $0x538] sm:$0xff]
    %v388 = vld [vmem:[#allocation3 + $0x540] sm:$0xff]
    %v389 = vld [vmem:[#allocation3 + $0x548] sm:$0xff]
    %v390 = vld [vmem:[#allocation3 + $0x550] sm:$0xff]
    %v391 = vld [vmem:[#allocation3 + $0x558] sm:$0xff]
    %v392 = vld [vmem:[#allocation3 + $0x560] sm:$0xff]
    %v393 = vld [vmem:[#allocation3 + $0x568] sm:$0xff]
    %v394 = vld [vmem:[#allocation3 + $0x570] sm:$0xff]
    %v395 = vld [vmem:[#allocation3 + $0x578] sm:$0xf]
    %v396 = vld [vmem:[#allocation3 + $0x57c] sm:$0xff]
    %v397 = vld [vmem:[#allocation3 + $0x584] sm:$0xff]
    %v398 = vld [vmem:[#allocation3 + $0x58c] sm:$0xff]
    %v399 = vld [vmem:[#allocation3 + $0x594] sm:$0xff]
    %v400 = vld [vmem:[#allocation3 + $0x59c] sm:$0xff]
    %v401 = vld [vmem:[#allocation3 + $0x5a4] sm:$0xff]
    %v402 = vld [vmem:[#allocation3 + $0x5ac] sm:$0xff]
    %v403 = vld [vmem:[#allocation3 + $0x5b4] sm:$0xff]
    %v404 = vld [vmem:[#allocation3 + $0x5bc] sm:$0xff]
    %v405 = vld [vmem:[#allocation3 + $0x5c4] sm:$0xff]
    %v406 = vld [vmem:[#allocation3 + $0x5cc] sm:$0xff]
    %v407 = vld [vmem:[#allocation3 + $0x5d4] sm:$0xff]
    %v408 = vld [vmem:[#allocation3 + $0x5dc] sm:$0xff]
    %v409 = vld [vmem:[#allocation3 + $0x5e4] sm:$0xf]
    %v410 = vld [vmem:[#allocation3 + $0x5e8] sm:$0xff]
    %v411 = vld [vmem:[#allocation3 + $0x5f0] sm:$0xff]
    %v412 = vld [vmem:[#allocation3 + $0x5f8] sm:$0xff]
    %v413 = vld [vmem:[#allocation3 + $0x600] sm:$0xff]
    %v414 = vld [vmem:[#allocation3 + $0x608] sm:$0xff]
    %v415 = vld [vmem:[#allocation3 + $0x610] sm:$0xff]
    %v416 = vld [vmem:[#allocation3 + $0x618] sm:$0xff]
    %v417 = vld [vmem:[#allocation3 + $0x620] sm:$0xff]
    %v418 = vld [vmem:[#allocation3 + $0x628] sm:$0xff]
    %v419 = vld [vmem:[#allocation3 + $0x630] sm:$0xff]
    %v420 = vld [vmem:[#allocation3 + $0x638] sm:$0xff]
    %v421 = vld [vmem:[#allocation3 + $0x640] sm:$0xff]
    %v422 = vld [vmem:[#allocation3 + $0x648] sm:$0xff]
    %v423 = vld [vmem:[#allocation3 + $0x650] sm:$0xf]
    %v424 = vld [vmem:[#allocation3 + $0x654] sm:$0xff]
    %v425 = vld [vmem:[#allocation3 + $0x65c] sm:$0xff]
    %v426 = vld [vmem:[#allocation3 + $0x664] sm:$0xff]
    %v427 = vld [vmem:[#allocation3 + $0x66c] sm:$0xff]
    %v428 = vld [vmem:[#allocation3 + $0x674] sm:$0xff]
    %v429 = vld [vmem:[#allocation3 + $0x67c] sm:$0xff]
    %v430 = vld [vmem:[#allocation3 + $0x684] sm:$0xff]
    %v431 = vld [vmem:[#allocation3 + $0x68c] sm:$0xff]
    %v432 = vld [vmem:[#allocation3 + $0x694] sm:$0xff]
    %v433 = vld [vmem:[#allocation3 + $0x69c] sm:$0xff]
    %v434 = vld [vmem:[#allocation3 + $0x6a4] sm:$0xff]
    %v435 = vld [vmem:[#allocation3 + $0x6ac] sm:$0xff]
    %v436 = vld [vmem:[#allocation3 + $0x6b4] sm:$0xff]
    %v437 = vld [vmem:[#allocation3 + $0x6bc] sm:$0xf]
    %v438 = vld [vmem:[#allocation6] sm:$0xff]
    %v439 = vld [vmem:[#allocation6 + $0x8] sm:$0xff]
    %v440 = vld [vmem:[#allocation6 + $0x10] sm:$0xff]
    %v441 = vld [vmem:[#allocation6 + $0x18] sm:$0xff]
    %v442 = vld [vmem:[#allocation6 + $0x20] sm:$0xff]
    %v443 = vld [vmem:[#allocation6 + $0x28] sm:$0xff]
    %v444 = vld [vmem:[#allocation6 + $0x30] sm:$0xff]
    %v445 = vld [vmem:[#allocation6 + $0x38] sm:$0xff]
    %v446 = vld [vmem:[#allocation6 + $0x40] sm:$0xff]
    %v447 = vld [vmem:[#allocation6 + $0x48] sm:$0xff]
    %v448 = vld [vmem:[#allocation6 + $0x50] sm:$0xff]
    %v449 = vld [vmem:[#allocation6 + $0x58] sm:$0xff]
    %v450 = vld [vmem:[#allocation6 + $0x60] sm:$0xff]
    %v451 = vld [vmem:[#allocation6 + $0x68] sm:$0xff]
    %v452 = vld [vmem:[#allocation6 + $0x70] sm:$0xff]
    %v453 = vld [vmem:[#allocation6 + $0x78] sm:$0xff]
    %v454 = vld [vmem:[#allocation6 + $0x80] sm:$0xff]
    %v455 = vld [vmem:[#allocation6 + $0x88] sm:$0xff]
    %v456 = vld [vmem:[#allocation6 + $0x90] sm:$0xff]
    %v457 = vld [vmem:[#allocation6 + $0x98] sm:$0xff]
    %v458 = vld [vmem:[#allocation6 + $0xa0] sm:$0xff]
    %v459 = vld [vmem:[#allocation6 + $0xa8] sm:$0xff]
    %v460 = vld [vmem:[#allocation6 + $0xb0] sm:$0xff]
    %v461 = vld [vmem:[#allocation6 + $0xb8] sm:$0xff]
    %v462 = vld [vmem:[#allocation6 + $0xc0] sm:$0xff]
    %v463 = vld [vmem:[#allocation6 + $0xc8] sm:$0xff]
    %v464 = vld [vmem:[#allocation6 + $0xd0] sm:$0xff]
    %v465 = vld [vmem:[#allocation6 + $0xd8] sm:$0xff]
    %v466 = vld [vmem:[#allocation6 + $0xe0] sm:$0xff]
    %v467 = vld [vmem:[#allocation6 + $0xe8] sm:$0xff]
    %v468 = vld [vmem:[#allocation6 + $0xf0] sm:$0xff]
    %v469 = vld [vmem:[#allocation6 + $0xf8] sm:$0xff]
    %v470 = vld [vmem:[#allocation6 + $0x100] sm:$0xff]
    %v471 = vld [vmem:[#allocation6 + $0x108] sm:$0xff]
    %v472 = vld [vmem:[#allocation6 + $0x110] sm:$0xff]
    %v473 = vld [vmem:[#allocation6 + $0x118] sm:$0xff]
    %v474 = vld [vmem:[#allocation6 + $0x120] sm:$0xff]
    %v475 = vld [vmem:[#allocation6 + $0x128] sm:$0xff]
    %v476 = vld [vmem:[#allocation6 + $0x130] sm:$0xff]
    %v477 = vld [vmem:[#allocation6 + $0x138] sm:$0xff]
    %v478 = vld [vmem:[#allocation6 + $0x140] sm:$0xff]
    %v479 = vld [vmem:[#allocation6 + $0x148] sm:$0xff]
    %v480 = vld [vmem:[#allocation6 + $0x150] sm:$0xff]
    %v481 = vld [vmem:[#allocation6 + $0x158] sm:$0xff]
    %v482 = vld [vmem:[#allocation6 + $0x160] sm:$0xff]
    %v483 = vld [vmem:[#allocation6 + $0x168] sm:$0xff]
    %v484 = vld [vmem:[#allocation6 + $0x170] sm:$0xff]
    %v485 = vld [vmem:[#allocation6 + $0x178] sm:$0xff]
    %v486 = vld [vmem:[#allocation6 + $0x180] sm:$0xff]
    %v487 = vld [vmem:[#allocation6 + $0x188] sm:$0xff]
    %v488 = vld [vmem:[#allocation6 + $0x190] sm:$0xff]
    %v489 = vld [vmem:[#allocation6 + $0x198] sm:$0xff]
    %v490 = vld [vmem:[#allocation6 + $0x1a0] sm:$0xff]
    %v491 = vld [vmem:[#allocation6 + $0x1a8] sm:$0xff]
    %v492 = vld [vmem:[#allocation6 + $0x1b0] sm:$0xff]
    %v493 = vld [vmem:[#allocation6 + $0x1b8] sm:$0xff]
    %v494 = vld [vmem:[#allocation6 + $0x1c0] sm:$0xff]
    %v495 = vld [vmem:[#allocation6 + $0x1c8] sm:$0xff]
    %v496 = vld [vmem:[#allocation6 + $0x1d0] sm:$0xff]
    %v497 = vld [vmem:[#allocation6 + $0x1d8] sm:$0xff]
    %v498 = vld [vmem:[#allocation6 + $0x1e0] sm:$0xff]
    %v499 = vld [vmem:[#allocation6 + $0x1e8] sm:$0xff]
    %v500 = vld [vmem:[#allocation6 + $0x1f0] sm:$0xff]
    %v501 = vld [vmem:[#allocation6 + $0x1f8] sm:$0xff]
    %v502 = vld [vmem:[#allocation6 + $0x200] sm:$0xff]
    %v503 = vld [vmem:[#allocation6 + $0x208] sm:$0xff]
    %v504 = vld [vmem:[#allocation6 + $0x210] sm:$0xff]
    %v505 = vld [vmem:[#allocation6 + $0x218] sm:$0xff]
    %v506 = vld [vmem:[#allocation6 + $0x220] sm:$0xff]
    %v507 = vld [vmem:[#allocation6 + $0x228] sm:$0xff]
    %v508 = vld [vmem:[#allocation6 + $0x230] sm:$0xff]
    %v509 = vld [vmem:[#allocation6 + $0x238] sm:$0xff]
    %v510 = vld [vmem:[#allocation6 + $0x240] sm:$0xff]
    %v511 = vld [vmem:[#allocation6 + $0x248] sm:$0xff]
    %v512 = vld [vmem:[#allocation6 + $0x250] sm:$0xff]
    %v513 = vld [vmem:[#allocation6 + $0x258] sm:$0xff]
    %v514 = vld [vmem:[#allocation6 + $0x260] sm:$0xff]
    %v515 = vld [vmem:[#allocation6 + $0x268] sm:$0xff]
    %v516 = vld [vmem:[#allocation6 + $0x270] sm:$0xff]
    %v517 = vld [vmem:[#allocation6 + $0x278] sm:$0xff]
    %v518 = vld [vmem:[#allocation6 + $0x280] sm:$0xff]
    %v519 = vld [vmem:[#allocation6 + $0x288] sm:$0xff]
    %v520 = vld [vmem:[#allocation6 + $0x290] sm:$0xff]
    %v521 = vld [vmem:[#allocation6 + $0x298] sm:$0xff]
    %v522 = vld [vmem:[#allocation6 + $0x2a0] sm:$0xff]
    %v523 = vld [vmem:[#allocation6 + $0x2a8] sm:$0xff]
    %v524 = vld [vmem:[#allocation6 + $0x2b0] sm:$0xff]
    %v525 = vld [vmem:[#allocation6 + $0x2b8] sm:$0xff]
    %v526 = vld [vmem:[#allocation6 + $0x2c0] sm:$0xff]
    %v527 = vld [vmem:[#allocation6 + $0x2c8] sm:$0xff]
    %v528 = vld [vmem:[#allocation6 + $0x2d0] sm:$0xff]
    %v529 = vld [vmem:[#allocation6 + $0x2d8] sm:$0xff]
    %v530 = vld [vmem:[#allocation6 + $0x2e0] sm:$0xff]
    %v531 = vld [vmem:[#allocation6 + $0x2e8] sm:$0xff]
    %v532 = vld [vmem:[#allocation6 + $0x2f0] sm:$0xff]
    %v533 = vld [vmem:[#allocation6 + $0x2f8] sm:$0xff]
    %v534 = vld [vmem:[#allocation6 + $0x300] sm:$0xff]
    %v535 = vld [vmem:[#allocation6 + $0x308] sm:$0xff]
    %v536 = vld [vmem:[#allocation6 + $0x310] sm:$0xff]
    %v537 = vld [vmem:[#allocation6 + $0x318] sm:$0xff]
    %v538 = vld [vmem:[#allocation6 + $0x320] sm:$0xff]
    %v539 = vld [vmem:[#allocation6 + $0x328] sm:$0xff]
    %v540 = vld [vmem:[#allocation6 + $0x330] sm:$0xff]
    %v541 = vld [vmem:[#allocation6 + $0x338] sm:$0xff]
    %v542 = vld [vmem:[#allocation6 + $0x340] sm:$0xff]
    %v543 = vld [vmem:[#allocation6 + $0x348] sm:$0xff]
    %v544 = vld [vmem:[#allocation6 + $0x350] sm:$0xff]
    %v545 = vld [vmem:[#allocation6 + $0x358] sm:$0xff]
    %v546 = vld [vmem:[#allocation6 + $0x360] sm:$0xff]
    %v547 = vld [vmem:[#allocation6 + $0x368] sm:$0xff]
    %v548 = vld [vmem:[#allocation6 + $0x370] sm:$0xff]
    %v549 = vld [vmem:[#allocation6 + $0x378] sm:$0xff]
    %v550 = vld [vmem:[#allocation6 + $0x380] sm:$0xff]
    %v551 = vld [vmem:[#allocation6 + $0x388] sm:$0xff]
    %v552 = vld [vmem:[#allocation6 + $0x390] sm:$0xff]
    %v553 = vld [vmem:[#allocation6 + $0x398] sm:$0xff]
    %v554 = vld [vmem:[#allocation6 + $0x3a0] sm:$0xff]
    %v555 = vld [vmem:[#allocation6 + $0x3a8] sm:$0xff]
    %v556 = vld [vmem:[#allocation6 + $0x3b0] sm:$0xff]
    %v557 = vld [vmem:[#allocation6 + $0x3b8] sm:$0xff]
    %v558 = vld [vmem:[#allocation6 + $0x3c0] sm:$0xff]
    %v559 = vld [vmem:[#allocation6 + $0x3c8] sm:$0xff]
    %v560 = vld [vmem:[#allocation6 + $0x3d0] sm:$0xff]
    %v561 = vld [vmem:[#allocation6 + $0x3d8] sm:$0xff]
    %v562 = vld [vmem:[#allocation6 + $0x3e0] sm:$0xff]
    %v563 = vld [vmem:[#allocation6 + $0x3e8] sm:$0xff]
    %v564 = vld [vmem:[#allocation6 + $0x3f0] sm:$0xff]
    %v565 = vld [vmem:[#allocation6 + $0x3f8] sm:$0xff]
    %v566 = vld [vmem:[#allocation6 + $0x400] sm:$0xff]
    %v567 = vld [vmem:[#allocation6 + $0x408] sm:$0xff]
    %v568 = vld [vmem:[#allocation6 + $0x410] sm:$0xff]
    %v569 = vld [vmem:[#allocation6 + $0x418] sm:$0xff]
    %v570 = vld [vmem:[#allocation6 + $0x420] sm:$0xff]
    %v571 = vld [vmem:[#allocation6 + $0x428] sm:$0xff]
    %v572 = vld [vmem:[#allocation6 + $0x430] sm:$0xff]
    %v573 = vld [vmem:[#allocation6 + $0x438] sm:$0xff]
    %v574 = vld [vmem:[#allocation6 + $0x440] sm:$0xff]
    %v575 = vld [vmem:[#allocation6 + $0x448] sm:$0xff]
    %v576 = vld [vmem:[#allocation6 + $0x450] sm:$0xff]
    %v577 = vld [vmem:[#allocation6 + $0x458] sm:$0xff]
    %v578 = vld [vmem:[#allocation6 + $0x460] sm:$0xff]
    %v579 = vld [vmem:[#allocation6 + $0x468] sm:$0xff]
    %v580 = vld [vmem:[#allocation6 + $0x470] sm:$0xff]
    %v581 = vld [vmem:[#allocation6 + $0x478] sm:$0xff]
    %v582 = vld [vmem:[#allocation6 + $0x480] sm:$0xff]
    %v583 = vld [vmem:[#allocation6 + $0x488] sm:$0xff]
    %v584 = vld [vmem:[#allocation6 + $0x490] sm:$0xff]
    %v585 = vld [vmem:[#allocation6 + $0x498] sm:$0xff]
    %v586 = vld [vmem:[#allocation6 + $0x4a0] sm:$0xff]
    %v587 = vld [vmem:[#allocation6 + $0x4a8] sm:$0xff]
    %v588 = vld [vmem:[#allocation6 + $0x4b0] sm:$0xff]
    %v589 = vld [vmem:[#allocation6 + $0x4b8] sm:$0xff]
    %v590 = vld [vmem:[#allocation6 + $0x4c0] sm:$0xff]
    %v591 = vld [vmem:[#allocation6 + $0x4c8] sm:$0xff]
    %v592 = vld [vmem:[#allocation6 + $0x4d0] sm:$0xff]
    %v593 = vld [vmem:[#allocation6 + $0x4d8] sm:$0xff]
    %v594 = vld [vmem:[#allocation6 + $0x4e0] sm:$0xff]
    %v595 = vld [vmem:[#allocation6 + $0x4e8] sm:$0xff]
    %v596 = vld [vmem:[#allocation6 + $0x4f0] sm:$0xff]
    %v597 = vld [vmem:[#allocation6 + $0x4f8] sm:$0xff]
    %v598 = vld [vmem:[#allocation6 + $0x500] sm:$0xff]
    %v599 = vld [vmem:[#allocation6 + $0x508] sm:$0xff]
    %v600 = vld [vmem:[#allocation6 + $0x510] sm:$0xff]
    %v601 = vld [vmem:[#allocation6 + $0x518] sm:$0xff]
    %v602 = vld [vmem:[#allocation6 + $0x520] sm:$0xff]
    %v603 = vld [vmem:[#allocation6 + $0x528] sm:$0xff]
    %v604 = vld [vmem:[#allocation6 + $0x530] sm:$0xff]
    %v605 = vld [vmem:[#allocation6 + $0x538] sm:$0xff]
    %v606 = vld [vmem:[#allocation6 + $0x540] sm:$0xff]
    %v607 = vld [vmem:[#allocation6 + $0x548] sm:$0xff]
    %v608 = vld [vmem:[#allocation6 + $0x550] sm:$0xff]
    %v609 = vld [vmem:[#allocation6 + $0x558] sm:$0xff]
    %v610 = vld [vmem:[#allocation6 + $0x560] sm:$0xff]
    %v611 = vld [vmem:[#allocation6 + $0x568] sm:$0xff]
    %v612 = vld [vmem:[#allocation6 + $0x570] sm:$0xff]
    %v613 = vld [vmem:[#allocation6 + $0x578] sm:$0xff]
    %v614 = vld [vmem:[#allocation6 + $0x580] sm:$0xff]
    %v615 = vld [vmem:[#allocation6 + $0x588] sm:$0xff]
    %v616 = vld [vmem:[#allocation6 + $0x590] sm:$0xff]
    %v617 = vld [vmem:[#allocation6 + $0x598] sm:$0xff]
    %v618 = vld [vmem:[#allocation6 + $0x5a0] sm:$0xff]
    %v619 = vld [vmem:[#allocation6 + $0x5a8] sm:$0xff]
    %v620 = vld [vmem:[#allocation6 + $0x5b0] sm:$0xff]
    %v621 = vld [vmem:[#allocation6 + $0x5b8] sm:$0xff]
    %v622 = vld [vmem:[#allocation6 + $0x5c0] sm:$0xff]
    %v623 = vld [vmem:[#allocation6 + $0x5c8] sm:$0xff]
    %v624 = vld [vmem:[#allocation6 + $0x5d0] sm:$0xff]
    %v625 = vld [vmem:[#allocation6 + $0x5d8] sm:$0xff]
    %v626 = vld [vmem:[#allocation6 + $0x5e0] sm:$0xff]
    %v627 = vld [vmem:[#allocation6 + $0x5e8] sm:$0xff]
    %v628 = vld [vmem:[#allocation6 + $0x5f0] sm:$0xff]
    %v629 = vld [vmem:[#allocation6 + $0x5f8] sm:$0xff]
    %v630 = vld [vmem:[#allocation6 + $0x600] sm:$0xff]
    %v631 = vld [vmem:[#allocation6 + $0x608] sm:$0xff]
    %v632 = vld [vmem:[#allocation6 + $0x610] sm:$0xff]
    %v633 = vld [vmem:[#allocation6 + $0x618] sm:$0xff]
    %v634 = vld [vmem:[#allocation6 + $0x620] sm:$0xff]
    %v635 = vld [vmem:[#allocation6 + $0x628] sm:$0xff]
    %v636 = vld [vmem:[#allocation6 + $0x630] sm:$0xff]
    %v637 = vld [vmem:[#allocation6 + $0x638] sm:$0xff]
    %v638 = vld [vmem:[#allocation6 + $0x640] sm:$0xff]
    %v639 = vld [vmem:[#allocation6 + $0x648] sm:$0xff]
    %v640 = vld [vmem:[#allocation6 + $0x650] sm:$0xff]
    %v641 = vld [vmem:[#allocation6 + $0x658] sm:$0xff]
    %v642 = vld [vmem:[#allocation6 + $0x660] sm:$0xff]
    %v643 = vld [vmem:[#allocation6 + $0x668] sm:$0xff]
    %v644 = vld [vmem:[#allocation6 + $0x670] sm:$0xff]
    %v645 = vld [vmem:[#allocation6 + $0x678] sm:$0xff]
    %v646 = vld [vmem:[#allocation6 + $0x680] sm:$0xff]
    %v647 = vld [vmem:[#allocation6 + $0x688] sm:$0xff]
    %v648 = vld [vmem:[#allocation6 + $0x690] sm:$0xff]
    %v649 = vld [vmem:[#allocation6 + $0x698] sm:$0xff]
    %v650 = vld [vmem:[#allocation6 + $0x6a0] sm:$0xff]
    %v651 = vld [vmem:[#allocation6 + $0x6a8] sm:$0xff]
    %v652 = vld [vmem:[#allocation6 + $0x6b0] sm:$0xff]
    %v653 = vld [vmem:[#allocation6 + $0x6b8] sm:$0xff]
    %v654 = vld [vmem:[#allocation6 + $0x6c0] sm:$0xff]
    %v655 = vld [vmem:[#allocation6 + $0x6c8] sm:$0xff]
    %v656 = vld [vmem:[#allocation6 + $0x6d0] sm:$0xff]
    %v657 = vld [vmem:[#allocation6 + $0x6d8] sm:$0xff]
    %v658 = vld [vmem:[#allocation6 + $0x6e0] sm:$0xff]
    %v659 = vld [vmem:[#allocation6 + $0x6e8] sm:$0xff]
    %v660 = vld [vmem:[#allocation6 + $0x6f0] sm:$0xff]
    %v661 = vld [vmem:[#allocation6 + $0x6f8] sm:$0xff]
    %v662 = vld [vmem:[#allocation6 + $0x700] sm:$0xff]
    %v663 = vld [vmem:[#allocation6 + $0x708] sm:$0xff]
    %v664 = vld [vmem:[#allocation6 + $0x710] sm:$0xff]
    %v665 = vld [vmem:[#allocation6 + $0x718] sm:$0xff]
    %v666 = vld [vmem:[#allocation6 + $0x720] sm:$0xff]
    %v667 = vld [vmem:[#allocation6 + $0x728] sm:$0xff]
    %v668 = vld [vmem:[#allocation6 + $0x730] sm:$0xff]
    %v669 = vld [vmem:[#allocation6 + $0x738] sm:$0xff]
    %v670 = vld [vmem:[#allocation6 + $0x740] sm:$0xff]
    %v671 = vld [vmem:[#allocation6 + $0x748] sm:$0xff]
    %v672 = vld [vmem:[#allocation6 + $0x750] sm:$0xff]
    %v673 = vld [vmem:[#allocation6 + $0x758] sm:$0xff]
    %v674 = vld [vmem:[#allocation6 + $0x760] sm:$0xff]
    %v675 = vld [vmem:[#allocation6 + $0x768] sm:$0xff]
    %v676 = vld [vmem:[#allocation6 + $0x770] sm:$0xff]
    %v677 = vld [vmem:[#allocation6 + $0x778] sm:$0xff]
    %v678 = vld [vmem:[#allocation6 + $0x780] sm:$0xff]
    %v679 = vld [vmem:[#allocation6 + $0x788] sm:$0xff]
    %v680 = vld [vmem:[#allocation6 + $0x790] sm:$0xff]
    %v681 = vld [vmem:[#allocation6 + $0x798] sm:$0xff]
    %v682 = vld [vmem:[#allocation6 + $0x7a0] sm:$0xff]
    %v683 = vld [vmem:[#allocation6 + $0x7a8] sm:$0xff]
    %v684 = vld [vmem:[#allocation6 + $0x7b0] sm:$0xff]
    %v685 = vld [vmem:[#allocation6 + $0x7b8] sm:$0xff]
    %v686 = vld [vmem:[#allocation6 + $0x7c0] sm:$0xff]
    %v687 = vld [vmem:[#allocation6 + $0x7c8] sm:$0xff]
    %v688 = vld [vmem:[#allocation6 + $0x7d0] sm:$0xff]
    %v689 = vld [vmem:[#allocation6 + $0x7d8] sm:$0xff]
    %v690 = vld [vmem:[#allocation6 + $0x7e0] sm:$0xff]
    %v691 = vld [vmem:[#allocation6 + $0x7e8] sm:$0xff]
    %v692 = vld [vmem:[#allocation6 + $0x7f0] sm:$0xff]
    %v693 = vld [vmem:[#allocation6 + $0x7f8] sm:$0xff]
    %v694 = vld [vmem:[#allocation6 + $0x800] sm:$0xff]
    %v695 = vld [vmem:[#allocation6 + $0x808] sm:$0xff]
    %v696 = vld [vmem:[#allocation6 + $0x810] sm:$0xff]
    %v697 = vld [vmem:[#allocation6 + $0x818] sm:$0xff]
    %v698 = vld [vmem:[#allocation6 + $0x820] sm:$0xff]
    %v699 = vld [vmem:[#allocation6 + $0x828] sm:$0xff]
    %v700 = vld [vmem:[#allocation6 + $0x830] sm:$0xff]
    %v701 = vld [vmem:[#allocation6 + $0x838] sm:$0xff]
    %v702 = vld [vmem:[#allocation6 + $0x840] sm:$0xff]
    %v703 = vld [vmem:[#allocation6 + $0x848] sm:$0xff]
    %v704 = vld [vmem:[#allocation6 + $0x850] sm:$0xff]
    %v705 = vld [vmem:[#allocation6 + $0x858] sm:$0xff]
    %v706 = vld [vmem:[#allocation6 + $0x860] sm:$0xff]
    %v707 = vld [vmem:[#allocation6 + $0x868] sm:$0xff]
    %v708 = vld [vmem:[#allocation6 + $0x870] sm:$0xff]
    %v709 = vld [vmem:[#allocation6 + $0x878] sm:$0xff]
    %v710 = vld [vmem:[#allocation6 + $0x880] sm:$0xff]
    %v711 = vld [vmem:[#allocation6 + $0x888] sm:$0xff]
    %v712 = vld [vmem:[#allocation6 + $0x890] sm:$0xff]
    %v713 = vld [vmem:[#allocation6 + $0x898] sm:$0xff]
    %v714 = vld [vmem:[#allocation6 + $0x8a0] sm:$0xff]
    %v715 = vld [vmem:[#allocation6 + $0x8a8] sm:$0xff]
    %v716 = vld [vmem:[#allocation6 + $0x8b0] sm:$0xff]
    %v717 = vld [vmem:[#allocation6 + $0x8b8] sm:$0xff]
    %v718 = vld [vmem:[#allocation6 + $0x8c0] sm:$0xff]
    %v719 = vld [vmem:[#allocation6 + $0x8c8] sm:$0xff]
    %v720 = vld [vmem:[#allocation6 + $0x8d0] sm:$0xff]
    %v721 = vld [vmem:[#allocation6 + $0x8d8] sm:$0xff]
    %v722 = vld [vmem:[#allocation6 + $0x8e0] sm:$0xff]
    %v723 = vld [vmem:[#allocation6 + $0x8e8] sm:$0xff]
    %v724 = vld [vmem:[#allocation6 + $0x8f0] sm:$0xff]
    %v725 = vld [vmem:[#allocation6 + $0x8f8] sm:$0xff]
    %v726 = vld [vmem:[#allocation6 + $0x900] sm:$0xff]
    %v727 = vld [vmem:[#allocation6 + $0x908] sm:$0xff]
    %v728 = vld [vmem:[#allocation6 + $0x910] sm:$0xff]
    %v729 = vld [vmem:[#allocation6 + $0x918] sm:$0xff]
    %v730 = vld [vmem:[#allocation6 + $0x920] sm:$0xff]
    %v731 = vld [vmem:[#allocation6 + $0x928] sm:$0xff]
    %v732 = vld [vmem:[#allocation6 + $0x930] sm:$0xff]
    %v733 = vld [vmem:[#allocation6 + $0x938] sm:$0xff]
    %v734 = vld [vmem:[#allocation6 + $0x940] sm:$0xff]
    %v735 = vld [vmem:[#allocation6 + $0x948] sm:$0xff]
    %v736 = vld [vmem:[#allocation6 + $0x950] sm:$0xff]
    %v737 = vld [vmem:[#allocation6 + $0x958] sm:$0xff]
    %v738 = vld [vmem:[#allocation6 + $0x960] sm:$0xff]
    %v739 = vld [vmem:[#allocation6 + $0x968] sm:$0xff]
    %v740 = vld [vmem:[#allocation6 + $0x970] sm:$0xff]
    %v741 = vld [vmem:[#allocation6 + $0x978] sm:$0xff]
    %v742 = vld [vmem:[#allocation6 + $0x980] sm:$0xff]
    %v743 = vld [vmem:[#allocation6 + $0x988] sm:$0xff]
    %v744 = vld [vmem:[#allocation6 + $0x990] sm:$0xff]
    %v745 = vld [vmem:[#allocation6 + $0x998] sm:$0xff]
    %v746 = vld [vmem:[#allocation6 + $0x9a0] sm:$0xff]
    %v747 = vld [vmem:[#allocation6 + $0x9a8] sm:$0xff]
    %v748 = vld [vmem:[#allocation6 + $0x9b0] sm:$0xff]
    %v749 = vld [vmem:[#allocation6 + $0x9b8] sm:$0xff]
    %v750 = vld [vmem:[#allocation6 + $0x9c0] sm:$0xff]
    %v751 = vld [vmem:[#allocation6 + $0x9c8] sm:$0xff]
    %v752 = vld [vmem:[#allocation6 + $0x9d0] sm:$0xff]
    %v753 = vld [vmem:[#allocation6 + $0x9d8] sm:$0xff]
    %v754 = vld [vmem:[#allocation6 + $0x9e0] sm:$0xff]
    %v755 = vld [vmem:[#allocation6 + $0x9e8] sm:$0xff]
    %v756 = vld [vmem:[#allocation6 + $0x9f0] sm:$0xff]
    %v757 = vld [vmem:[#allocation6 + $0x9f8] sm:$0xff]
    %v758 = vld [vmem:[#allocation6 + $0xa00] sm:$0xff]
    %v759 = vld [vmem:[#allocation6 + $0xa08] sm:$0xff]
    %v760 = vld [vmem:[#allocation6 + $0xa10] sm:$0xff]
    %v761 = vld [vmem:[#allocation6 + $0xa18] sm:$0xff]
    %v762 = vld [vmem:[#allocation6 + $0xa20] sm:$0xff]
    %v763 = vld [vmem:[#allocation6 + $0xa28] sm:$0xff]
    %v764 = vld [vmem:[#allocation6 + $0xa30] sm:$0xff]
    %v765 = vld [vmem:[#allocation6 + $0xa38] sm:$0xff]
    %v766 = vld [vmem:[#allocation6 + $0xa40] sm:$0xff]
    %v767 = vld [vmem:[#allocation6 + $0xa48] sm:$0xff]
    %v768 = vld [vmem:[#allocation6 + $0xa50] sm:$0xff]
    %v769 = vld [vmem:[#allocation6 + $0xa58] sm:$0xff]
    %v770 = vld [vmem:[#allocation6 + $0xa60] sm:$0xff]
    %v771 = vld [vmem:[#allocation6 + $0xa68] sm:$0xff]
    %v772 = vld [vmem:[#allocation6 + $0xa70] sm:$0xff]
    %v773 = vld [vmem:[#allocation6 + $0xa78] sm:$0xff]
    %v774 = vld [vmem:[#allocation6 + $0xa80] sm:$0xff]
    %v775 = vld [vmem:[#allocation6 + $0xa88] sm:$0xff]
    %v776 = vld [vmem:[#allocation6 + $0xa90] sm:$0xff]
    %v777 = vld [vmem:[#allocation6 + $0xa98] sm:$0xff]
    %v778 = vld [vmem:[#allocation6 + $0xaa0] sm:$0xff]
    %v779 = vld [vmem:[#allocation6 + $0xaa8] sm:$0xff]
    %v780 = vld [vmem:[#allocation6 + $0xab0] sm:$0xff]
    %v781 = vld [vmem:[#allocation6 + $0xab8] sm:$0xff]
    %v782 = vld [vmem:[#allocation6 + $0xac0] sm:$0xff]
    %v783 = vld [vmem:[#allocation6 + $0xac8] sm:$0xff]
    %v784 = vld [vmem:[#allocation6 + $0xad0] sm:$0xff]
    %v785 = vld [vmem:[#allocation6 + $0xad8] sm:$0xff]
    %v786 = vld [vmem:[#allocation6 + $0xae0] sm:$0xff]
    %v787 = vld [vmem:[#allocation6 + $0xae8] sm:$0xff]
    %v788 = vld [vmem:[#allocation6 + $0xaf0] sm:$0xff]
    %v789 = vld [vmem:[#allocation6 + $0xaf8] sm:$0xff]
    %v790 = vld [vmem:[#allocation6 + $0xb00] sm:$0xff]
    %v791 = vld [vmem:[#allocation6 + $0xb08] sm:$0xff]
    %v792 = vld [vmem:[#allocation6 + $0xb10] sm:$0xff]
    %v793 = vld [vmem:[#allocation6 + $0xb18] sm:$0xff]
    %v794 = vld [vmem:[#allocation6 + $0xb20] sm:$0xff]
    %v795 = vld [vmem:[#allocation6 + $0xb28] sm:$0xff]
    %v796 = vld [vmem:[#allocation6 + $0xb30] sm:$0xff]
    %v797 = vld [vmem:[#allocation6 + $0xb38] sm:$0xff]
    %v798 = vld [vmem:[#allocation6 + $0xb40] sm:$0xff]
    %v799 = vld [vmem:[#allocation6 + $0xb48] sm:$0xff]
    %v800 = vld [vmem:[#allocation6 + $0xb50] sm:$0xff]
    %v801 = vld [vmem:[#allocation6 + $0xb58] sm:$0xff]
    %v802 = vld [vmem:[#allocation6 + $0xb60] sm:$0xff]
    %v803 = vld [vmem:[#allocation6 + $0xb68] sm:$0xff]
    %v804 = vld [vmem:[#allocation6 + $0xb70] sm:$0xff]
    %v805 = vld [vmem:[#allocation6 + $0xb78] sm:$0xff]
    %v806 = vld [vmem:[#allocation6 + $0xb80] sm:$0xff]
    %v807 = vld [vmem:[#allocation6 + $0xb88] sm:$0xff]
    %v808 = vld [vmem:[#allocation6 + $0xb90] sm:$0xff]
    %v809 = vld [vmem:[#allocation6 + $0xb98] sm:$0xff]
    %v810 = vld [vmem:[#allocation6 + $0xba0] sm:$0xff]
    %v811 = vld [vmem:[#allocation6 + $0xba8] sm:$0xff]
    %v812 = vld [vmem:[#allocation6 + $0xbb0] sm:$0xff]
    %v813 = vld [vmem:[#allocation6 + $0xbb8] sm:$0xff]
    %v814 = vld [vmem:[#allocation6 + $0xbc0] sm:$0xff]
    %v815 = vld [vmem:[#allocation6 + $0xbc8] sm:$0xff]
    %v816 = vld [vmem:[#allocation6 + $0xbd0] sm:$0xff]
    %v817 = vld [vmem:[#allocation6 + $0xbd8] sm:$0xff]
    %v818 = vld [vmem:[#allocation6 + $0xbe0] sm:$0xff]
    %v819 = vld [vmem:[#allocation6 + $0xbe8] sm:$0xff]
    %v820 = vld [vmem:[#allocation6 + $0xbf0] sm:$0xff]
    %v821 = vld [vmem:[#allocation6 + $0xbf8] sm:$0xff]
    %v822 = vld [vmem:[#allocation6 + $0xc00] sm:$0xff]
    %v823 = vld [vmem:[#allocation6 + $0xc08] sm:$0xff]
    %v824 = vld [vmem:[#allocation6 + $0xc10] sm:$0xff]
    %v825 = vld [vmem:[#allocation6 + $0xc18] sm:$0xff]
    %v826 = vld [vmem:[#allocation6 + $0xc20] sm:$0xff]
    %v827 = vld [vmem:[#allocation6 + $0xc28] sm:$0xff]
    %v828 = vld [vmem:[#allocation6 + $0xc30] sm:$0xff]
    %v829 = vld [vmem:[#allocation6 + $0xc38] sm:$0xff]
    %v830 = vld [vmem:[#allocation6 + $0xc40] sm:$0xff]
    %v831 = vld [vmem:[#allocation6 + $0xc48] sm:$0xff]
    %v832 = vld [vmem:[#allocation6 + $0xc50] sm:$0xff]
    %v833 = vld [vmem:[#allocation6 + $0xc58] sm:$0xff]
    %v834 = vld [vmem:[#allocation6 + $0xc60] sm:$0xff]
    %v835 = vld [vmem:[#allocation6 + $0xc68] sm:$0xff]
    %v836 = vld [vmem:[#allocation6 + $0xc70] sm:$0xff]
    %v837 = vld [vmem:[#allocation6 + $0xc78] sm:$0xff]
    %v838 = vld [vmem:[#allocation6 + $0xc80] sm:$0xff]
    %v839 = vld [vmem:[#allocation6 + $0xc88] sm:$0xff]
    %v840 = vld [vmem:[#allocation6 + $0xc90] sm:$0xff]
    %v841 = vld [vmem:[#allocation6 + $0xc98] sm:$0xff]
    %v842 = vld [vmem:[#allocation6 + $0xca0] sm:$0xff]
    %v843 = vld [vmem:[#allocation6 + $0xca8] sm:$0xff]
    %v844 = vld [vmem:[#allocation6 + $0xcb0] sm:$0xff]
    %v845 = vld [vmem:[#allocation6 + $0xcb8] sm:$0xff]
    %v846 = vld [vmem:[#allocation6 + $0xcc0] sm:$0xff]
    %v847 = vld [vmem:[#allocation6 + $0xcc8] sm:$0xff]
    %v848 = vld [vmem:[#allocation6 + $0xcd0] sm:$0xff]
    %v849 = vld [vmem:[#allocation6 + $0xcd8] sm:$0xff]
    %v850 = vld [vmem:[#allocation6 + $0xce0] sm:$0xff]
    %v851 = vld [vmem:[#allocation6 + $0xce8] sm:$0xff]
    %v852 = vld [vmem:[#allocation6 + $0xcf0] sm:$0xff]
    %v853 = vld [vmem:[#allocation6 + $0xcf8] sm:$0xff]
    %v854 = vld [vmem:[#allocation6 + $0xd00] sm:$0xff]
    %v855 = vld [vmem:[#allocation6 + $0xd08] sm:$0xff]
    %v856 = vld [vmem:[#allocation6 + $0xd10] sm:$0xff]
    %v857 = vld [vmem:[#allocation6 + $0xd18] sm:$0xff]
    %v858 = vld [vmem:[#allocation6 + $0xd20] sm:$0xff]
    %v859 = vld [vmem:[#allocation6 + $0xd28] sm:$0xff]
    %v860 = vld [vmem:[#allocation6 + $0xd30] sm:$0xff]
    %v861 = vld [vmem:[#allocation6 + $0xd38] sm:$0xff]
    %v862 = vld [vmem:[#allocation6 + $0xd40] sm:$0xff]
    %v863 = vld [vmem:[#allocation6 + $0xd48] sm:$0xff]
    %v864 = vld [vmem:[#allocation6 + $0xd50] sm:$0xff]
    %v865 = vld [vmem:[#allocation6 + $0xd58] sm:$0xff]
    %v866 = vld [vmem:[#allocation6 + $0xd60] sm:$0xff]
    %v867 = vld [vmem:[#allocation6 + $0xd68] sm:$0xff]
    %v868 = vld [vmem:[#allocation6 + $0xd70] sm:$0xff]
    %v869 = vld [vmem:[#allocation6 + $0xd78] sm:$0xff]
    %v870 = vld [vmem:[#allocation6 + $0xd80] sm:$0xff]
    %v871 = vld [vmem:[#allocation6 + $0xd88] sm:$0xff]
    %v872 = vld [vmem:[#allocation6 + $0xd90] sm:$0xff]
    %v873 = vld [vmem:[#allocation6 + $0xd98] sm:$0xff]
    %v874 = vld [vmem:[#allocation6 + $0xda0] sm:$0xff]
    %v875 = vld [vmem:[#allocation6 + $0xda8] sm:$0xff]
    %v876 = vld [vmem:[#allocation6 + $0xdb0] sm:$0xff]
    %v877 = vld [vmem:[#allocation6 + $0xdb8] sm:$0xff]
    %v878 = vld [vmem:[#allocation6 + $0xdc0] sm:$0xff]
    %v879 = vld [vmem:[#allocation6 + $0xdc8] sm:$0xff]
    %v880 = vld [vmem:[#allocation6 + $0xdd0] sm:$0xff]
    %v881 = vld [vmem:[#allocation6 + $0xdd8] sm:$0xff]
    %v882 = vld [vmem:[#allocation6 + $0xde0] sm:$0xff]
    %v883 = vld [vmem:[#allocation6 + $0xde8] sm:$0xff]
    %v884 = vld [vmem:[#allocation6 + $0xdf0] sm:$0xff]
    %v885 = vld [vmem:[#allocation6 + $0xdf8] sm:$0xff]
    %v886 = vld [vmem:[#allocation6 + $0xe00] sm:$0xff]
    %v887 = vld [vmem:[#allocation6 + $0xe08] sm:$0xff]
    %v888 = vld [vmem:[#allocation6 + $0xe10] sm:$0xff]
    %v889 = vld [vmem:[#allocation6 + $0xe18] sm:$0xff]
    %v890 = vld [vmem:[#allocation6 + $0xe20] sm:$0xff]
    %v891 = vld [vmem:[#allocation6 + $0xe28] sm:$0xff]
    %v892 = vld [vmem:[#allocation6 + $0xe30] sm:$0xff]
    %v893 = vld [vmem:[#allocation6 + $0xe38] sm:$0xff]
    %v894 = vld [vmem:[#allocation6 + $0xe40] sm:$0xff]
    %v895 = vld [vmem:[#allocation6 + $0xe48] sm:$0xff]
    %v896 = vld [vmem:[#allocation6 + $0xe50] sm:$0xff]
    %v897 = vld [vmem:[#allocation6 + $0xe58] sm:$0xff]
    %v898 = vld [vmem:[#allocation6 + $0xe60] sm:$0xff]
    %v899 = vld [vmem:[#allocation6 + $0xe68] sm:$0xff]
    %v900 = vld [vmem:[#allocation6 + $0xe70] sm:$0xff]
    %v901 = vld [vmem:[#allocation6 + $0xe78] sm:$0xff]
    %v902 = vld [vmem:[#allocation6 + $0xe80] sm:$0xff]
    %v903 = vld [vmem:[#allocation6 + $0xe88] sm:$0xff]
    %v904 = vld [vmem:[#allocation6 + $0xe90] sm:$0xff]
    %v905 = vld [vmem:[#allocation6 + $0xe98] sm:$0xff]
    %v906 = vld [vmem:[#allocation6 + $0xea0] sm:$0xff]
    %v907 = vld [vmem:[#allocation6 + $0xea8] sm:$0xff]
    %v908 = vld [vmem:[#allocation6 + $0xeb0] sm:$0xff]
    %v909 = vld [vmem:[#allocation6 + $0xeb8] sm:$0xff]
    %v910 = vld [vmem:[#allocation6 + $0xec0] sm:$0xff]
    %v911 = vld [vmem:[#allocation6 + $0xec8] sm:$0xff]
    %v912 = vld [vmem:[#allocation6 + $0xed0] sm:$0xff]
    %v913 = vld [vmem:[#allocation6 + $0xed8] sm:$0xff]
    %v914 = vld [vmem:[#allocation6 + $0xee0] sm:$0xff]
    %v915 = vld [vmem:[#allocation6 + $0xee8] sm:$0xff]
    %v916 = vld [vmem:[#allocation6 + $0xef0] sm:$0xff]
    %v917 = vld [vmem:[#allocation6 + $0xef8] sm:$0xff]
    %v918 = vld [vmem:[#allocation6 + $0xf00] sm:$0xff]
    %v919 = vld [vmem:[#allocation6 + $0xf08] sm:$0xff]
    %v920 = vld [vmem:[#allocation6 + $0xf10] sm:$0xff]
    %v921 = vld [vmem:[#allocation6 + $0xf18] sm:$0xff]
    %v922 = vld [vmem:[#allocation6 + $0xf20] sm:$0xff]
    %v923 = vld [vmem:[#allocation6 + $0xf28] sm:$0xff]
    %v924 = vld [vmem:[#allocation6 + $0xf30] sm:$0xff]
    %v925 = vld [vmem:[#allocation6 + $0xf38] sm:$0xff]
    %v926 = vld [vmem:[#allocation6 + $0xf40] sm:$0xff]
    %v927 = vld [vmem:[#allocation6 + $0xf48] sm:$0xff]
    %v928 = vld [vmem:[#allocation6 + $0xf50] sm:$0xff]
    %v929 = vld [vmem:[#allocation6 + $0xf58] sm:$0xff]
    %v930 = vld [vmem:[#allocation6 + $0xf60] sm:$0xff]
    %v931 = vld [vmem:[#allocation6 + $0xf68] sm:$0xff]
    %v932 = vld [vmem:[#allocation6 + $0xf70] sm:$0xff]
    %v933 = vld [vmem:[#allocation6 + $0xf78] sm:$0xff]
    %v934 = vld [vmem:[#allocation6 + $0xf80] sm:$0xff]
    %v935 = vld [vmem:[#allocation6 + $0xf88] sm:$0xff]
    %v936 = vld [vmem:[#allocation6 + $0xf90] sm:$0xff]
    %v937 = vld [vmem:[#allocation6 + $0xf98] sm:$0xff]
    %v938 = vld [vmem:[#allocation6 + $0xfa0] sm:$0xff]
    %v939 = vld [vmem:[#allocation6 + $0xfa8] sm:$0xff]
    %v940 = vld [vmem:[#allocation6 + $0xfb0] sm:$0xff]
    %v941 = vld [vmem:[#allocation6 + $0xfb8] sm:$0xff]
    %v942 = vld [vmem:[#allocation6 + $0xfc0] sm:$0xff]
    %v943 = vld [vmem:[#allocation6 + $0xfc8] sm:$0xff]
    %v944 = vld [vmem:[#allocation6 + $0xfd0] sm:$0xff]
    %v945 = vld [vmem:[#allocation6 + $0xfd8] sm:$0xff]
    %v946 = vld [vmem:[#allocation6 + $0xfe0] sm:$0xff]
    %v947 = vld [vmem:[#allocation6 + $0xfe8] sm:$0xff]
    %v948 = vld [vmem:[#allocation6 + $0xff0] sm:$0xff]
    %v949 = vld [vmem:[#allocation6 + $0xff8] sm:$0xff]
    %v950 = vld [vmem:[#allocation6 + $0x1000] sm:$0xff]
    %v951 = vld [vmem:[#allocation6 + $0x1008] sm:$0xff]
    %v952 = vld [vmem:[#allocation6 + $0x1010] sm:$0xff]
    %v953 = vld [vmem:[#allocation6 + $0x1018] sm:$0xff]
    %v954 = vld [vmem:[#allocation6 + $0x1020] sm:$0xff]
    %v955 = vld [vmem:[#allocation6 + $0x1028] sm:$0xff]
    %v956 = vld [vmem:[#allocation6 + $0x1030] sm:$0xff]
    %v957 = vld [vmem:[#allocation6 + $0x1038] sm:$0xff]
    %v958 = vld [vmem:[#allocation6 + $0x1040] sm:$0xff]
    %v959 = vld [vmem:[#allocation6 + $0x1048] sm:$0xff]
    %v960 = vld [vmem:[#allocation6 + $0x1050] sm:$0xff]
    %v961 = vld [vmem:[#allocation6 + $0x1058] sm:$0xff]
    %v962 = vld [vmem:[#allocation6 + $0x1060] sm:$0xff]
    %v963 = vld [vmem:[#allocation6 + $0x1068] sm:$0xff]
    %v964 = vld [vmem:[#allocation6 + $0x1070] sm:$0xff]
    %v965 = vld [vmem:[#allocation6 + $0x1078] sm:$0xff]
    %v966 = vld [vmem:[#allocation6 + $0x1080] sm:$0xff]
    %v967 = vld [vmem:[#allocation6 + $0x1088] sm:$0xff]
    %v968 = vld [vmem:[#allocation6 + $0x1090] sm:$0xff]
    %v969 = vld [vmem:[#allocation6 + $0x1098] sm:$0xff]
    %v970 = vld [vmem:[#allocation6 + $0x10a0] sm:$0xff]
    %v971 = vld [vmem:[#allocation6 + $0x10a8] sm:$0xff]
    %v972 = vld [vmem:[#allocation6 + $0x10b0] sm:$0xff]
    %v973 = vld [vmem:[#allocation6 + $0x10b8] sm:$0xff]
    %v974 = vld [vmem:[#allocation6 + $0x10c0] sm:$0xff]
    %v975 = vld [vmem:[#allocation6 + $0x10c8] sm:$0xff]
    %v976 = vld [vmem:[#allocation6 + $0x10d0] sm:$0xff]
    %v977 = vld [vmem:[#allocation6 + $0x10d8] sm:$0xff]
    %v978 = vld [vmem:[#allocation6 + $0x10e0] sm:$0xff]
    %v979 = vld [vmem:[#allocation6 + $0x10e8] sm:$0xff]
    %v980 = vld [vmem:[#allocation6 + $0x10f0] sm:$0xff]
    %v981 = vld [vmem:[#allocation6 + $0x10f8] sm:$0xff]
    %v982 = vld [vmem:[#allocation6 + $0x1100] sm:$0xff]
    %v983 = vld [vmem:[#allocation6 + $0x1108] sm:$0xff]
    %v984 = vld [vmem:[#allocation6 + $0x1110] sm:$0xff]
    %v985 = vld [vmem:[#allocation6 + $0x1118] sm:$0xff]
    %v986 = vld [vmem:[#allocation6 + $0x1120] sm:$0xff]
    %v987 = vld [vmem:[#allocation6 + $0x1128] sm:$0xff]
    %v988 = vld [vmem:[#allocation6 + $0x1130] sm:$0xff]
    %v989 = vld [vmem:[#allocation6 + $0x1138] sm:$0xff]
    %v990 = vld [vmem:[#allocation6 + $0x1140] sm:$0xff]
    %v991 = vld [vmem:[#allocation6 + $0x1148] sm:$0xff]
    %v992 = vld [vmem:[#allocation6 + $0x1150] sm:$0xff]
    %v993 = vld [vmem:[#allocation6 + $0x1158] sm:$0xff]
    %v994 = vld [vmem:[#allocation6 + $0x1160] sm:$0xff]
    %v995 = vld [vmem:[#allocation6 + $0x1168] sm:$0xff]
    %v996 = vld [vmem:[#allocation6 + $0x1170] sm:$0xff]
    %v997 = vld [vmem:[#allocation6 + $0x1178] sm:$0xff]
    %v998 = vld [vmem:[#allocation6 + $0x1180] sm:$0xff]
    %v999 = vld [vmem:[#allocation6 + $0x1188] sm:$0xff]
    %v1000 = vld [vmem:[#allocation6 + $0x1190] sm:$0xff]
    %v1001 = vld [vmem:[#allocation6 + $0x1198] sm:$0xff]
    %v1002 = vld [vmem:[#allocation6 + $0x11a0] sm:$0xff]
    %v1003 = vld [vmem:[#allocation6 + $0x11a8] sm:$0xff]
    %v1004 = vld [vmem:[#allocation6 + $0x11b0] sm:$0xff]
    %v1005 = vld [vmem:[#allocation6 + $0x11b8] sm:$0xff]
    %v1006 = vld [vmem:[#allocation6 + $0x11c0] sm:$0xff]
    %v1007 = vld [vmem:[#allocation6 + $0x11c8] sm:$0xff]
    %v1008 = vld [vmem:[#allocation6 + $0x11d0] sm:$0xff]
    %v1009 = vld [vmem:[#allocation6 + $0x11d8] sm:$0xff]
    %v1010 = vld [vmem:[#allocation6 + $0x11e0] sm:$0xff]
    %v1011 = vld [vmem:[#allocation6 + $0x11e8] sm:$0xff]
    %v1012 = vld [vmem:[#allocation6 + $0x11f0] sm:$0xff]
    %v1013 = vld [vmem:[#allocation6 + $0x11f8] sm:$0xff]
    %v1014 = vld [vmem:[#allocation6 + $0x1200] sm:$0xff]
    %v1015 = vld [vmem:[#allocation6 + $0x1208] sm:$0xff]
    %v1016 = vld [vmem:[#allocation6 + $0x1210] sm:$0xff]
    %v1017 = vld [vmem:[#allocation6 + $0x1218] sm:$0xff]
    %v1018 = vld [vmem:[#allocation6 + $0x1220] sm:$0xff]
    %v1019 = vld [vmem:[#allocation6 + $0x1228] sm:$0xff]
    %v1020 = vld [vmem:[#allocation6 + $0x1230] sm:$0xff]
    %v1021 = vld [vmem:[#allocation6 + $0x1238] sm:$0xff]
    %v1022 = vld [vmem:[#allocation6 + $0x1240] sm:$0xff]
    %v1023 = vld [vmem:[#allocation6 + $0x1248] sm:$0xff]
    %v1024 = vld [vmem:[#allocation6 + $0x1250] sm:$0xff]
    %v1025 = vld [vmem:[#allocation6 + $0x1258] sm:$0xff]
    %v1026 = vld [vmem:[#allocation6 + $0x1260] sm:$0xff]
    %v1027 = vld [vmem:[#allocation6 + $0x1268] sm:$0xff]
    %v1028 = vld [vmem:[#allocation6 + $0x1270] sm:$0xff]
    %v1029 = vld [vmem:[#allocation6 + $0x1278] sm:$0xff]
    %v1030 = vld [vmem:[#allocation6 + $0x1280] sm:$0xff]
    %v1031 = vld [vmem:[#allocation6 + $0x1288] sm:$0xff]
    %v1032 = vld [vmem:[#allocation6 + $0x1290] sm:$0xff]
    %v1033 = vld [vmem:[#allocation6 + $0x1298] sm:$0xff]
    %v1034 = vld [vmem:[#allocation6 + $0x12a0] sm:$0xff]
    %v1035 = vld [vmem:[#allocation6 + $0x12a8] sm:$0xff]
    %v1036 = vld [vmem:[#allocation6 + $0x12b0] sm:$0xff]
    %v1037 = vld [vmem:[#allocation6 + $0x12b8] sm:$0xff]
    %v1038 = vld [vmem:[#allocation6 + $0x12c0] sm:$0xff]
    %v1039 = vld [vmem:[#allocation6 + $0x12c8] sm:$0xff]
    %v1040 = vld [vmem:[#allocation6 + $0x12d0] sm:$0xff]
    %v1041 = vld [vmem:[#allocation6 + $0x12d8] sm:$0xff]
    %v1042 = vld [vmem:[#allocation6 + $0x12e0] sm:$0xff]
    %v1043 = vld [vmem:[#allocation6 + $0x12e8] sm:$0xff]
    %v1044 = vld [vmem:[#allocation6 + $0x12f0] sm:$0xff]
    %v1045 = vld [vmem:[#allocation6 + $0x12f8] sm:$0xff]
    %v1046 = vld [vmem:[#allocation6 + $0x1300] sm:$0xff]
    %v1047 = vld [vmem:[#allocation6 + $0x1308] sm:$0xff]
    %v1048 = vld [vmem:[#allocation6 + $0x1310] sm:$0xff]
    %v1049 = vld [vmem:[#allocation6 + $0x1318] sm:$0xff]
    %v1050 = vld [vmem:[#allocation6 + $0x1320] sm:$0xff]
    %v1051 = vld [vmem:[#allocation6 + $0x1328] sm:$0xff]
    %v1052 = vld [vmem:[#allocation6 + $0x1330] sm:$0xff]
    %v1053 = vld [vmem:[#allocation6 + $0x1338] sm:$0xff]
    %v1054 = vld [vmem:[#allocation6 + $0x1340] sm:$0xff]
    %v1055 = vld [vmem:[#allocation6 + $0x1348] sm:$0xff]
    %v1056 = vld [vmem:[#allocation6 + $0x1350] sm:$0xff]
    %v1057 = vld [vmem:[#allocation6 + $0x1358] sm:$0xff]
    %v1058 = vld [vmem:[#allocation6 + $0x1360] sm:$0xff]
    %v1059 = vld [vmem:[#allocation6 + $0x1368] sm:$0xff]
    %v1060 = vld [vmem:[#allocation6 + $0x1370] sm:$0xff]
    %v1061 = vld [vmem:[#allocation6 + $0x1378] sm:$0xff]
    %v1062 = vld [vmem:[#allocation6 + $0x1380] sm:$0xff]
    %v1063 = vld [vmem:[#allocation6 + $0x1388] sm:$0xff]
    %v1064 = vld [vmem:[#allocation6 + $0x1390] sm:$0xff]
    %v1065 = vld [vmem:[#allocation6 + $0x1398] sm:$0xff]
    %v1066 = vld [vmem:[#allocation6 + $0x13a0] sm:$0xff]
    %v1067 = vld [vmem:[#allocation6 + $0x13a8] sm:$0xff]
    %v1068 = vld [vmem:[#allocation6 + $0x13b0] sm:$0xff]
    %v1069 = vld [vmem:[#allocation6 + $0x13b8] sm:$0xff]
    %v1070 = vld [vmem:[#allocation6 + $0x13c0] sm:$0xff]
    %v1071 = vld [vmem:[#allocation6 + $0x13c8] sm:$0xff]
    %v1072 = vld [vmem:[#allocation6 + $0x13d0] sm:$0xff]
    %v1073 = vld [vmem:[#allocation6 + $0x13d8] sm:$0xff]
    %v1074 = vld [vmem:[#allocation6 + $0x13e0] sm:$0xff]
    %v1075 = vld [vmem:[#allocation6 + $0x13e8] sm:$0xff]
    %v1076 = vld [vmem:[#allocation6 + $0x13f0] sm:$0xff]
    %v1077 = vld [vmem:[#allocation6 + $0x13f8] sm:$0xff]
    %v1078 = vld [vmem:[#allocation6 + $0x1400] sm:$0xff]
    %v1079 = vld [vmem:[#allocation6 + $0x1408] sm:$0xff]
    %v1080 = vld [vmem:[#allocation6 + $0x1410] sm:$0xff]
    %v1081 = vld [vmem:[#allocation6 + $0x1418] sm:$0xff]
    %v1082 = vld [vmem:[#allocation6 + $0x1420] sm:$0xff]
    %v1083 = vld [vmem:[#allocation6 + $0x1428] sm:$0xff]
    %v1084 = vld [vmem:[#allocation6 + $0x1430] sm:$0xff]
    %v1085 = vld [vmem:[#allocation6 + $0x1438] sm:$0xff]
    %v1086 = vld [vmem:[#allocation6 + $0x1440] sm:$0xff]
    %v1087 = vld [vmem:[#allocation6 + $0x1448] sm:$0xff]
    %v1088 = vld [vmem:[#allocation6 + $0x1450] sm:$0xff]
    %v1089 = vld [vmem:[#allocation6 + $0x1458] sm:$0xff]
    %v1090 = vld [vmem:[#allocation6 + $0x1460] sm:$0xff]
    %v1091 = vld [vmem:[#allocation6 + $0x1468] sm:$0xff]
    %v1092 = vld [vmem:[#allocation6 + $0x1470] sm:$0xff]
    %v1093 = vld [vmem:[#allocation6 + $0x1478] sm:$0xff]
    %v1094 = vld [vmem:[#allocation6 + $0x1480] sm:$0xff]
    %v1095 = vld [vmem:[#allocation6 + $0x1488] sm:$0xff]
    %v1096 = vld [vmem:[#allocation6 + $0x1490] sm:$0xff]
    %v1097 = vld [vmem:[#allocation6 + $0x1498] sm:$0xff]
    %v1098 = vld [vmem:[#allocation6 + $0x14a0] sm:$0xff]
    %v1099 = vld [vmem:[#allocation6 + $0x14a8] sm:$0xff]
    %v1100 = vld [vmem:[#allocation6 + $0x14b0] sm:$0xff]
    %v1101 = vld [vmem:[#allocation6 + $0x14b8] sm:$0xff]
    %v1102 = vld [vmem:[#allocation6 + $0x14c0] sm:$0xff]
    %v1103 = vld [vmem:[#allocation6 + $0x14c8] sm:$0xff]
    %v1104 = vld [vmem:[#allocation6 + $0x14d0] sm:$0xff]
    %v1105 = vld [vmem:[#allocation6 + $0x14d8] sm:$0xff]
    %v1106 = vld [vmem:[#allocation6 + $0x14e0] sm:$0xff]
    %v1107 = vld [vmem:[#allocation6 + $0x14e8] sm:$0xff]
    %v1108 = vld [vmem:[#allocation6 + $0x14f0] sm:$0xff]
    %v1109 = vld [vmem:[#allocation6 + $0x14f8] sm:$0xff]
    %v1110 = vld [vmem:[#allocation6 + $0x1500] sm:$0xff]
    %v1111 = vld [vmem:[#allocation6 + $0x1508] sm:$0xff]
    %v1112 = vld [vmem:[#allocation6 + $0x1510] sm:$0xff]
    %v1113 = vld [vmem:[#allocation6 + $0x1518] sm:$0xff]
    %v1114 = vld [vmem:[#allocation6 + $0x1520] sm:$0xff]
    %v1115 = vld [vmem:[#allocation6 + $0x1528] sm:$0xff]
    %v1116 = vld [vmem:[#allocation6 + $0x1530] sm:$0xff]
    %v1117 = vld [vmem:[#allocation6 + $0x1538] sm:$0xff]
    %v1118 = vld [vmem:[#allocation6 + $0x1540] sm:$0xff]
    %v1119 = vld [vmem:[#allocation6 + $0x1548] sm:$0xff]
    %v1120 = vld [vmem:[#allocation6 + $0x1550] sm:$0xff]
    %v1121 = vld [vmem:[#allocation6 + $0x1558] sm:$0xff]
    %v1122 = vld [vmem:[#allocation6 + $0x1560] sm:$0xff]
    %v1123 = vld [vmem:[#allocation6 + $0x1568] sm:$0xff]
    %v1124 = vld [vmem:[#allocation6 + $0x1570] sm:$0xff]
    %v1125 = vld [vmem:[#allocation6 + $0x1578] sm:$0xff]
    %v1126 = vld [vmem:[#allocation6 + $0x1580] sm:$0xff]
    %v1127 = vld [vmem:[#allocation6 + $0x1588] sm:$0xff]
    %v1128 = vld [vmem:[#allocation6 + $0x1590] sm:$0xff]
    %v1129 = vld [vmem:[#allocation6 + $0x1598] sm:$0xff]
    %v1130 = vld [vmem:[#allocation6 + $0x15a0] sm:$0xff]
    %v1131 = vld [vmem:[#allocation6 + $0x15a8] sm:$0xff]
    %v1132 = vld [vmem:[#allocation6 + $0x15b0] sm:$0xff]
    %v1133 = vld [vmem:[#allocation6 + $0x15b8] sm:$0xff]
    %v1134 = vld [vmem:[#allocation6 + $0x15c0] sm:$0xff]
    %v1135 = vld [vmem:[#allocation6 + $0x15c8] sm:$0xff]
    %v1136 = vld [vmem:[#allocation6 + $0x15d0] sm:$0xff]
    %v1137 = vld [vmem:[#allocation6 + $0x15d8] sm:$0xff]
    %v1138 = vld [vmem:[#allocation6 + $0x15e0] sm:$0xff]
    %v1139 = vld [vmem:[#allocation6 + $0x15e8] sm:$0xff]
    %v1140 = vld [vmem:[#allocation6 + $0x15f0] sm:$0xff]
    %v1141 = vld [vmem:[#allocation6 + $0x15f8] sm:$0xff]
    %v1142 = vld [vmem:[#allocation6 + $0x1600] sm:$0xff]
    %v1143 = vld [vmem:[#allocation6 + $0x1608] sm:$0xff]
    %v1144 = vld [vmem:[#allocation6 + $0x1610] sm:$0xff]
    %v1145 = vld [vmem:[#allocation6 + $0x1618] sm:$0xff]
    %v1146 = vld [vmem:[#allocation6 + $0x1620] sm:$0xff]
    %v1147 = vld [vmem:[#allocation6 + $0x1628] sm:$0xff]
    %v1148 = vld [vmem:[#allocation6 + $0x1630] sm:$0xff]
    %v1149 = vld [vmem:[#allocation6 + $0x1638] sm:$0xff]
    %v1150 = vld [vmem:[#allocation6 + $0x1640] sm:$0xff]
    %v1151 = vld [vmem:[#allocation6 + $0x1648] sm:$0xff]
    %v1152 = vld [vmem:[#allocation6 + $0x1650] sm:$0xff]
    %v1153 = vld [vmem:[#allocation6 + $0x1658] sm:$0xff]
    %v1154 = vld [vmem:[#allocation6 + $0x1660] sm:$0xff]
    %v1155 = vld [vmem:[#allocation6 + $0x1668] sm:$0xff]
    %v1156 = vld [vmem:[#allocation6 + $0x1670] sm:$0xff]
    %v1157 = vld [vmem:[#allocation6 + $0x1678] sm:$0xff]
    %v1158 = vld [vmem:[#allocation6 + $0x1680] sm:$0xff]
    %v1159 = vld [vmem:[#allocation6 + $0x1688] sm:$0xff]
    %v1160 = vld [vmem:[#allocation6 + $0x1690] sm:$0xff]
    %v1161 = vld [vmem:[#allocation6 + $0x1698] sm:$0xff]
    %v1162 = vld [vmem:[#allocation6 + $0x16a0] sm:$0xff]
    %v1163 = vld [vmem:[#allocation6 + $0x16a8] sm:$0xff]
    %v1164 = vld [vmem:[#allocation6 + $0x16b0] sm:$0xff]
    %v1165 = vld [vmem:[#allocation6 + $0x16b8] sm:$0xff]
    %v1166 = vld [vmem:[#allocation6 + $0x16c0] sm:$0xff]
    %v1167 = vld [vmem:[#allocation6 + $0x16c8] sm:$0xff]
    %v1168 = vld [vmem:[#allocation6 + $0x16d0] sm:$0xff]
    %v1169 = vld [vmem:[#allocation6 + $0x16d8] sm:$0xff]
    %v1170 = vld [vmem:[#allocation6 + $0x16e0] sm:$0xff]
    %v1171 = vld [vmem:[#allocation6 + $0x16e8] sm:$0xff]
    %v1172 = vld [vmem:[#allocation6 + $0x16f0] sm:$0xff]
    %v1173 = vld [vmem:[#allocation6 + $0x16f8] sm:$0xff]
    %v1174 = vld [vmem:[#allocation6 + $0x1700] sm:$0xff]
    %v1175 = vld [vmem:[#allocation6 + $0x1708] sm:$0xff]
    %v1176 = vld [vmem:[#allocation6 + $0x1710] sm:$0xff]
    %v1177 = vld [vmem:[#allocation6 + $0x1718] sm:$0xff]
    %v1178 = vld [vmem:[#allocation6 + $0x1720] sm:$0xff]
    %v1179 = vld [vmem:[#allocation6 + $0x1728] sm:$0xff]
    %v1180 = vld [vmem:[#allocation6 + $0x1730] sm:$0xff]
    %v1181 = vld [vmem:[#allocation6 + $0x1738] sm:$0xff]
    %v1182 = vld [vmem:[#allocation6 + $0x1740] sm:$0xff]
    %v1183 = vld [vmem:[#allocation6 + $0x1748] sm:$0xff]
    %v1184 = vld [vmem:[#allocation6 + $0x1750] sm:$0xff]
    %v1185 = vld [vmem:[#allocation6 + $0x1758] sm:$0xff]
    %v1186 = vld [vmem:[#allocation6 + $0x1760] sm:$0xff]
    %v1187 = vld [vmem:[#allocation6 + $0x1768] sm:$0xff]
    %v1188 = vld [vmem:[#allocation6 + $0x1770] sm:$0xff]
    %v1189 = vld [vmem:[#allocation6 + $0x1778] sm:$0xff]
    %v1190 = vld [vmem:[#allocation6 + $0x1780] sm:$0xff]
    %v1191 = vld [vmem:[#allocation6 + $0x1788] sm:$0xff]
    %v1192 = vld [vmem:[#allocation6 + $0x1790] sm:$0xff]
    %v1193 = vld [vmem:[#allocation6 + $0x1798] sm:$0xff]
    %v1194 = vld [vmem:[#allocation6 + $0x17a0] sm:$0xff]
    %v1195 = vld [vmem:[#allocation6 + $0x17a8] sm:$0xff]
    %v1196 = vld [vmem:[#allocation6 + $0x17b0] sm:$0xff]
    %v1197 = vld [vmem:[#allocation6 + $0x17b8] sm:$0xff]
    %v1198 = vld [vmem:[#allocation6 + $0x17c0] sm:$0xff]
    %v1199 = vld [vmem:[#allocation6 + $0x17c8] sm:$0xff]
    %v1200 = vld [vmem:[#allocation6 + $0x17d0] sm:$0xff]
    %v1201 = vld [vmem:[#allocation6 + $0x17d8] sm:$0xff]
    %v1202 = vld [vmem:[#allocation6 + $0x17e0] sm:$0xff]
    %v1203 = vld [vmem:[#allocation6 + $0x17e8] sm:$0xff]
    %v1204 = vld [vmem:[#allocation6 + $0x17f0] sm:$0xff]
    %v1205 = vld [vmem:[#allocation6 + $0x17f8] sm:$0xff]
    %v1206 = vld [vmem:[#allocation6 + $0x1800] sm:$0xff]
    %v1207 = vld [vmem:[#allocation6 + $0x1808] sm:$0xff]
    %v1208 = vld [vmem:[#allocation6 + $0x1810] sm:$0xff]
    %v1209 = vld [vmem:[#allocation6 + $0x1818] sm:$0xff]
    %v1210 = vld [vmem:[#allocation6 + $0x1820] sm:$0xff]
    %v1211 = vld [vmem:[#allocation6 + $0x1828] sm:$0xff]
    %v1212 = vld [vmem:[#allocation6 + $0x1830] sm:$0xff]
    %v1213 = vld [vmem:[#allocation6 + $0x1838] sm:$0xff]
    %v1214 = vld [vmem:[#allocation6 + $0x1840] sm:$0xff]
    %v1215 = vld [vmem:[#allocation6 + $0x1848] sm:$0xff]
    %v1216 = vld [vmem:[#allocation6 + $0x1850] sm:$0xff]
    %v1217 = vld [vmem:[#allocation6 + $0x1858] sm:$0xff]
    %v1218 = vld [vmem:[#allocation6 + $0x1860] sm:$0xff]
    %v1219 = vld [vmem:[#allocation6 + $0x1868] sm:$0xff]
    %v1220 = vld [vmem:[#allocation6 + $0x1870] sm:$0xff]
    %v1221 = vld [vmem:[#allocation6 + $0x1878] sm:$0xff]
    %v1222 = vld [vmem:[#allocation6 + $0x1880] sm:$0xff]
    %v1223 = vld [vmem:[#allocation6 + $0x1888] sm:$0xff]
    %v1224 = vld [vmem:[#allocation6 + $0x1890] sm:$0xff]
    %v1225 = vld [vmem:[#allocation6 + $0x1898] sm:$0xff]
    %v1226 = vld [vmem:[#allocation6 + $0x18a0] sm:$0xff]
    %v1227 = vld [vmem:[#allocation6 + $0x18a8] sm:$0xff]
    %v1228 = vld [vmem:[#allocation6 + $0x18b0] sm:$0xff]
    %v1229 = vld [vmem:[#allocation6 + $0x18b8] sm:$0xff]
    %v1230 = vld [vmem:[#allocation6 + $0x18c0] sm:$0xff]
    %v1231 = vld [vmem:[#allocation6 + $0x18c8] sm:$0xff]
    %v1232 = vld [vmem:[#allocation6 + $0x18d0] sm:$0xff]
    %v1233 = vld [vmem:[#allocation6 + $0x18d8] sm:$0xff]
    %v1234 = vld [vmem:[#allocation6 + $0x18e0] sm:$0xff]
    %v1235 = vld [vmem:[#allocation6 + $0x18e8] sm:$0xff]
    %v1236 = vld [vmem:[#allocation6 + $0x18f0] sm:$0xff]
    %v1237 = vld [vmem:[#allocation6 + $0x18f8] sm:$0xff]
    %v1238 = vld [vmem:[#allocation6 + $0x1900] sm:$0xff]
    %v1239 = vld [vmem:[#allocation6 + $0x1908] sm:$0xff]
    %v1240 = vld [vmem:[#allocation6 + $0x1910] sm:$0xff]
    %v1241 = vld [vmem:[#allocation6 + $0x1918] sm:$0xff]
    %v1242 = vld [vmem:[#allocation6 + $0x1920] sm:$0xff]
    %v1243 = vld [vmem:[#allocation6 + $0x1928] sm:$0xff]
    %v1244 = vld [vmem:[#allocation6 + $0x1930] sm:$0xff]
    %v1245 = vld [vmem:[#allocation6 + $0x1938] sm:$0xff]
    %v1246 = vld [vmem:[#allocation6 + $0x1940] sm:$0xff]
    %v1247 = vld [vmem:[#allocation6 + $0x1948] sm:$0xff]
    %v1248 = vld [vmem:[#allocation6 + $0x1950] sm:$0xff]
    %v1249 = vld [vmem:[#allocation6 + $0x1958] sm:$0xff]
    %v1250 = vld [vmem:[#allocation6 + $0x1960] sm:$0xff]
    %v1251 = vld [vmem:[#allocation6 + $0x1968] sm:$0xff]
    %v1252 = vld [vmem:[#allocation6 + $0x1970] sm:$0xff]
    %v1253 = vld [vmem:[#allocation6 + $0x1978] sm:$0xff]
    %v1254 = vld [vmem:[#allocation6 + $0x1980] sm:$0xff]
    %v1255 = vld [vmem:[#allocation6 + $0x1988] sm:$0xff]
    %v1256 = vld [vmem:[#allocation6 + $0x1990] sm:$0xff]
    %v1257 = vld [vmem:[#allocation6 + $0x1998] sm:$0xff]
    %v1258 = vld [vmem:[#allocation6 + $0x19a0] sm:$0xff]
    %v1259 = vld [vmem:[#allocation6 + $0x19a8] sm:$0xff]
    %v1260 = vld [vmem:[#allocation6 + $0x19b0] sm:$0xff]
    %v1261 = vld [vmem:[#allocation6 + $0x19b8] sm:$0xff]
    %v1262 = vld [vmem:[#allocation6 + $0x19c0] sm:$0xff]
    %v1263 = vld [vmem:[#allocation6 + $0x19c8] sm:$0xff]
    %v1264 = vld [vmem:[#allocation6 + $0x19d0] sm:$0xff]
    %v1265 = vld [vmem:[#allocation6 + $0x19d8] sm:$0xff]
    %v1266 = vld [vmem:[#allocation6 + $0x19e0] sm:$0xff]
    %v1267 = vld [vmem:[#allocation6 + $0x19e8] sm:$0xff]
    %v1268 = vld [vmem:[#allocation6 + $0x19f0] sm:$0xff]
    %v1269 = vld [vmem:[#allocation6 + $0x19f8] sm:$0xff]
    %v1270 = vld [vmem:[#allocation6 + $0x1a00] sm:$0xff]
    %v1271 = vld [vmem:[#allocation6 + $0x1a08] sm:$0xff]
    %v1272 = vld [vmem:[#allocation6 + $0x1a10] sm:$0xff]
    %v1273 = vld [vmem:[#allocation6 + $0x1a18] sm:$0xff]
    %v1274 = vld [vmem:[#allocation6 + $0x1a20] sm:$0xff]
    %v1275 = vld [vmem:[#allocation6 + $0x1a28] sm:$0xff]
    %v1276 = vld [vmem:[#allocation6 + $0x1a30] sm:$0xff]
    %v1277 = vld [vmem:[#allocation6 + $0x1a38] sm:$0xff]
    %v1278 = vld [vmem:[#allocation6 + $0x1a40] sm:$0xff]
    %v1279 = vld [vmem:[#allocation6 + $0x1a48] sm:$0xff]
    %v1280 = vld [vmem:[#allocation6 + $0x1a50] sm:$0xff]
    %v1281 = vld [vmem:[#allocation6 + $0x1a58] sm:$0xff]
    %v1282 = vld [vmem:[#allocation6 + $0x1a60] sm:$0xff]
    %v1283 = vld [vmem:[#allocation6 + $0x1a68] sm:$0xff]
    %v1284 = vld [vmem:[#allocation6 + $0x1a70] sm:$0xff]
    %v1285 = vld [vmem:[#allocation6 + $0x1a78] sm:$0xff]
    %v1286 = vld [vmem:[#allocation6 + $0x1a80] sm:$0xff]
    %v1287 = vld [vmem:[#allocation6 + $0x1a88] sm:$0xff]
    %v1288 = vld [vmem:[#allocation6 + $0x1a90] sm:$0xff]
    %v1289 = vld [vmem:[#allocation6 + $0x1a98] sm:$0xff]
    %v1290 = vld [vmem:[#allocation6 + $0x1aa0] sm:$0xff]
    %v1291 = vld [vmem:[#allocation6 + $0x1aa8] sm:$0xff]
    %v1292 = vld [vmem:[#allocation6 + $0x1ab0] sm:$0xff]
    %v1293 = vld [vmem:[#allocation6 + $0x1ab8] sm:$0xff]
    %v1294 = vld [vmem:[#allocation6 + $0x1ac0] sm:$0xff]
    %v1295 = vld [vmem:[#allocation6 + $0x1ac8] sm:$0xff]
    %v1296 = vld [vmem:[#allocation6 + $0x1ad0] sm:$0xff]
    %v1297 = vld [vmem:[#allocation6 + $0x1ad8] sm:$0xff]
    %v1298 = vld [vmem:[#allocation6 + $0x1ae0] sm:$0xff]
    %v1299 = vld [vmem:[#allocation6 + $0x1ae8] sm:$0xff]
    %v1300 = vld [vmem:[#allocation6 + $0x1af0] sm:$0xff]
    %v1301 = vld [vmem:[#allocation6 + $0x1af8] sm:$0xff]
    %v1526 = vunpack.c.l.b16 %v214
    %v1527 = vunpack.c.h.b16 %v214
    %v1528 = vunpack.c.l.b16 %v215
    %v1529 = vunpack.c.h.b16 %v215
    %v1530 = vunpack.c.l.b16 %v216
    %v1531 = vunpack.c.h.b16 %v216
    %v1532 = vunpack.c.l.b16 %v217
    %v1533 = vunpack.c.h.b16 %v217
    %v1534 = vunpack.c.l.b16 %v218
    %v1535 = vunpack.c.h.b16 %v218
    %v1536 = vunpack.c.l.b16 %v219
    %v1537 = vunpack.c.h.b16 %v219
    %v1538 = vunpack.c.l.b16 %v220
    %v1539 = vunpack.c.h.b16 %v220
    %v1540 = vunpack.c.l.b16 %v221
    %v1541 = vunpack.c.h.b16 %v221
    %v1542 = vunpack.c.l.b16 %v222
    %v1543 = vunpack.c.h.b16 %v222
    %v1544 = vunpack.c.l.b16 %v223
    %v1545 = vunpack.c.h.b16 %v223
    %v1546 = vunpack.c.l.b16 %v224
    %v1547 = vunpack.c.h.b16 %v224
    %v1548 = vunpack.c.l.b16 %v225
    %v1549 = vunpack.c.h.b16 %v225
    %v1550 = vunpack.c.l.b16 %v226
    %v1551 = vunpack.c.h.b16 %v226
    %v1552 = vunpack.c.l.b16 %v227
    %v1553 = vunpack.c.l.b16 %v228
    %v1554 = vunpack.c.h.b16 %v228
    %v1555 = vunpack.c.l.b16 %v229
    %v1556 = vunpack.c.h.b16 %v229
    %v1557 = vunpack.c.l.b16 %v230
    %v1558 = vunpack.c.h.b16 %v230
    %v1559 = vunpack.c.l.b16 %v231
    %v1560 = vunpack.c.h.b16 %v231
    %v1561 = vunpack.c.l.b16 %v232
    %v1562 = vunpack.c.h.b16 %v232
    %v1563 = vunpack.c.l.b16 %v233
    %v1564 = vunpack.c.h.b16 %v233
    %v1565 = vunpack.c.l.b16 %v234
    %v1566 = vunpack.c.h.b16 %v234
    %v1567 = vunpack.c.l.b16 %v235
    %v1568 = vunpack.c.h.b16 %v235
    %v1569 = vunpack.c.l.b16 %v236
    %v1570 = vunpack.c.h.b16 %v236
    %v1571 = vunpack.c.l.b16 %v237
    %v1572 = vunpack.c.h.b16 %v237
    %v1573 = vunpack.c.l.b16 %v238
    %v1574 = vunpack.c.h.b16 %v238
    %v1575 = vunpack.c.l.b16 %v239
    %v1576 = vunpack.c.h.b16 %v239
    %v1577 = vunpack.c.l.b16 %v240
    %v1578 = vunpack.c.h.b16 %v240
    %v1579 = vunpack.c.l.b16 %v241
    %v1580 = vunpack.c.l.b16 %v242
    %v1581 = vunpack.c.h.b16 %v242
    %v1582 = vunpack.c.l.b16 %v243
    %v1583 = vunpack.c.h.b16 %v243
    %v1584 = vunpack.c.l.b16 %v244
    %v1585 = vunpack.c.h.b16 %v244
    %v1586 = vunpack.c.l.b16 %v245
    %v1587 = vunpack.c.h.b16 %v245
    %v1588 = vunpack.c.l.b16 %v246
    %v1589 = vunpack.c.h.b16 %v246
    %v1590 = vunpack.c.l.b16 %v247
    %v1591 = vunpack.c.h.b16 %v247
    %v1592 = vunpack.c.l.b16 %v248
    %v1593 = vunpack.c.h.b16 %v248
    %v1594 = vunpack.c.l.b16 %v249
    %v1595 = vunpack.c.h.b16 %v249
    %v1596 = vunpack.c.l.b16 %v250
    %v1597 = vunpack.c.h.b16 %v250
    %v1598 = vunpack.c.l.b16 %v251
    %v1599 = vunpack.c.h.b16 %v251
    %v1600 = vunpack.c.l.b16 %v252
    %v1601 = vunpack.c.h.b16 %v252
    %v1602 = vunpack.c.l.b16 %v253
    %v1603 = vunpack.c.h.b16 %v253
    %v1604 = vunpack.c.l.b16 %v254
    %v1605 = vunpack.c.h.b16 %v254
    %v1606 = vunpack.c.l.b16 %v255
    %v1607 = vunpack.c.l.b16 %v256
    %v1608 = vunpack.c.h.b16 %v256
    %v1609 = vunpack.c.l.b16 %v257
    %v1610 = vunpack.c.h.b16 %v257
    %v1611 = vunpack.c.l.b16 %v258
    %v1612 = vunpack.c.h.b16 %v258
    %v1613 = vunpack.c.l.b16 %v259
    %v1614 = vunpack.c.h.b16 %v259
    %v1615 = vunpack.c.l.b16 %v260
    %v1616 = vunpack.c.h.b16 %v260
    %v1617 = vunpack.c.l.b16 %v261
    %v1618 = vunpack.c.h.b16 %v261
    %v1619 = vunpack.c.l.b16 %v262
    %v1620 = vunpack.c.h.b16 %v262
    %v1621 = vunpack.c.l.b16 %v263
    %v1622 = vunpack.c.h.b16 %v263
    %v1623 = vunpack.c.l.b16 %v264
    %v1624 = vunpack.c.h.b16 %v264
    %v1625 = vunpack.c.l.b16 %v265
    %v1626 = vunpack.c.h.b16 %v265
    %v1627 = vunpack.c.l.b16 %v266
    %v1628 = vunpack.c.h.b16 %v266
    %v1629 = vunpack.c.l.b16 %v267
    %v1630 = vunpack.c.h.b16 %v267
    %v1631 = vunpack.c.l.b16 %v268
    %v1632 = vunpack.c.h.b16 %v268
    %v1633 = vunpack.c.l.b16 %v269
    %v1634 = vunpack.c.l.b16 %v270
    %v1635 = vunpack.c.h.b16 %v270
    %v1636 = vunpack.c.l.b16 %v271
    %v1637 = vunpack.c.h.b16 %v271
    %v1638 = vunpack.c.l.b16 %v272
    %v1639 = vunpack.c.h.b16 %v272
    %v1640 = vunpack.c.l.b16 %v273
    %v1641 = vunpack.c.h.b16 %v273
    %v1642 = vunpack.c.l.b16 %v274
    %v1643 = vunpack.c.h.b16 %v274
    %v1644 = vunpack.c.l.b16 %v275
    %v1645 = vunpack.c.h.b16 %v275
    %v1646 = vunpack.c.l.b16 %v276
    %v1647 = vunpack.c.h.b16 %v276
    %v1648 = vunpack.c.l.b16 %v277
    %v1649 = vunpack.c.h.b16 %v277
    %v1650 = vunpack.c.l.b16 %v278
    %v1651 = vunpack.c.h.b16 %v278
    %v1652 = vunpack.c.l.b16 %v279
    %v1653 = vunpack.c.h.b16 %v279
    %v1654 = vunpack.c.l.b16 %v280
    %v1655 = vunpack.c.h.b16 %v280
    %v1656 = vunpack.c.l.b16 %v281
    %v1657 = vunpack.c.h.b16 %v281
    %v1658 = vunpack.c.l.b16 %v282
    %v1659 = vunpack.c.h.b16 %v282
    %v1660 = vunpack.c.l.b16 %v283
    %v1661 = vunpack.c.l.b16 %v284
    %v1662 = vunpack.c.h.b16 %v284
    %v1663 = vunpack.c.l.b16 %v285
    %v1664 = vunpack.c.h.b16 %v285
    %v1665 = vunpack.c.l.b16 %v286
    %v1666 = vunpack.c.h.b16 %v286
    %v1667 = vunpack.c.l.b16 %v287
    %v1668 = vunpack.c.h.b16 %v287
    %v1669 = vunpack.c.l.b16 %v288
    %v1670 = vunpack.c.h.b16 %v288
    %v1671 = vunpack.c.l.b16 %v289
    %v1672 = vunpack.c.h.b16 %v289
    %v1673 = vunpack.c.l.b16 %v290
    %v1674 = vunpack.c.h.b16 %v290
    %v1675 = vunpack.c.l.b16 %v291
    %v1676 = vunpack.c.h.b16 %v291
    %v1677 = vunpack.c.l.b16 %v292
    %v1678 = vunpack.c.h.b16 %v292
    %v1679 = vunpack.c.l.b16 %v293
    %v1680 = vunpack.c.h.b16 %v293
    %v1681 = vunpack.c.l.b16 %v294
    %v1682 = vunpack.c.h.b16 %v294
    %v1683 = vunpack.c.l.b16 %v295
    %v1684 = vunpack.c.h.b16 %v295
    %v1685 = vunpack.c.l.b16 %v296
    %v1686 = vunpack.c.h.b16 %v296
    %v1687 = vunpack.c.l.b16 %v297
    %v1688 = vunpack.c.l.b16 %v298
    %v1689 = vunpack.c.h.b16 %v298
    %v1690 = vunpack.c.l.b16 %v299
    %v1691 = vunpack.c.h.b16 %v299
    %v1692 = vunpack.c.l.b16 %v300
    %v1693 = vunpack.c.h.b16 %v300
    %v1694 = vunpack.c.l.b16 %v301
    %v1695 = vunpack.c.h.b16 %v301
    %v1696 = vunpack.c.l.b16 %v302
    %v1697 = vunpack.c.h.b16 %v302
    %v1698 = vunpack.c.l.b16 %v303
    %v1699 = vunpack.c.h.b16 %v303
    %v1700 = vunpack.c.l.b16 %v304
    %v1701 = vunpack.c.h.b16 %v304
    %v1702 = vunpack.c.l.b16 %v305
    %v1703 = vunpack.c.h.b16 %v305
    %v1704 = vunpack.c.l.b16 %v306
    %v1705 = vunpack.c.h.b16 %v306
    %v1706 = vunpack.c.l.b16 %v307
    %v1707 = vunpack.c.h.b16 %v307
    %v1708 = vunpack.c.l.b16 %v308
    %v1709 = vunpack.c.h.b16 %v308
    %v1710 = vunpack.c.l.b16 %v309
    %v1711 = vunpack.c.h.b16 %v309
    %v1712 = vunpack.c.l.b16 %v310
    %v1713 = vunpack.c.h.b16 %v310
    %v1714 = vunpack.c.l.b16 %v311
    %v1715 = vunpack.c.l.b16 %v312
    %v1716 = vunpack.c.h.b16 %v312
    %v1717 = vunpack.c.l.b16 %v313
    %v1718 = vunpack.c.h.b16 %v313
    %v1719 = vunpack.c.l.b16 %v314
    %v1720 = vunpack.c.h.b16 %v314
    %v1721 = vunpack.c.l.b16 %v315
    %v1722 = vunpack.c.h.b16 %v315
    %v1723 = vunpack.c.l.b16 %v316
    %v1724 = vunpack.c.h.b16 %v316
    %v1725 = vunpack.c.l.b16 %v317
    %v1726 = vunpack.c.h.b16 %v317
    %v1727 = vunpack.c.l.b16 %v318
    %v1728 = vunpack.c.h.b16 %v318
    %v1729 = vunpack.c.l.b16 %v319
    %v1730 = vunpack.c.h.b16 %v319
    %v1731 = vunpack.c.l.b16 %v320
    %v1732 = vunpack.c.h.b16 %v320
    %v1733 = vunpack.c.l.b16 %v321
    %v1734 = vunpack.c.h.b16 %v321
    %v1735 = vunpack.c.l.b16 %v322
    %v1736 = vunpack.c.h.b16 %v322
    %v1737 = vunpack.c.l.b16 %v323
    %v1738 = vunpack.c.h.b16 %v323
    %v1739 = vunpack.c.l.b16 %v324
    %v1740 = vunpack.c.h.b16 %v324
    %v1741 = vunpack.c.l.b16 %v325
    %v1742 = vunpack.c.l.b16 %v326
    %v1743 = vunpack.c.h.b16 %v326
    %v1744 = vunpack.c.l.b16 %v327
    %v1745 = vunpack.c.h.b16 %v327
    %v1746 = vunpack.c.l.b16 %v328
    %v1747 = vunpack.c.h.b16 %v328
    %v1748 = vunpack.c.l.b16 %v329
    %v1749 = vunpack.c.h.b16 %v329
    %v1750 = vunpack.c.l.b16 %v330
    %v1751 = vunpack.c.h.b16 %v330
    %v1752 = vunpack.c.l.b16 %v331
    %v1753 = vunpack.c.h.b16 %v331
    %v1754 = vunpack.c.l.b16 %v332
    %v1755 = vunpack.c.h.b16 %v332
    %v1756 = vunpack.c.l.b16 %v333
    %v1757 = vunpack.c.h.b16 %v333
    %v1758 = vunpack.c.l.b16 %v334
    %v1759 = vunpack.c.h.b16 %v334
    %v1760 = vunpack.c.l.b16 %v335
    %v1761 = vunpack.c.h.b16 %v335
    %v1762 = vunpack.c.l.b16 %v336
    %v1763 = vunpack.c.h.b16 %v336
    %v1764 = vunpack.c.l.b16 %v337
    %v1765 = vunpack.c.h.b16 %v337
    %v1766 = vunpack.c.l.b16 %v338
    %v1767 = vunpack.c.h.b16 %v338
    %v1768 = vunpack.c.l.b16 %v339
    %v1769 = vunpack.c.l.b16 %v340
    %v1770 = vunpack.c.h.b16 %v340
    %v1771 = vunpack.c.l.b16 %v341
    %v1772 = vunpack.c.h.b16 %v341
    %v1773 = vunpack.c.l.b16 %v342
    %v1774 = vunpack.c.h.b16 %v342
    %v1775 = vunpack.c.l.b16 %v343
    %v1776 = vunpack.c.h.b16 %v343
    %v1777 = vunpack.c.l.b16 %v344
    %v1778 = vunpack.c.h.b16 %v344
    %v1779 = vunpack.c.l.b16 %v345
    %v1780 = vunpack.c.h.b16 %v345
    %v1781 = vunpack.c.l.b16 %v346
    %v1782 = vunpack.c.h.b16 %v346
    %v1783 = vunpack.c.l.b16 %v347
    %v1784 = vunpack.c.h.b16 %v347
    %v1785 = vunpack.c.l.b16 %v348
    %v1786 = vunpack.c.h.b16 %v348
    %v1787 = vunpack.c.l.b16 %v349
    %v1788 = vunpack.c.h.b16 %v349
    %v1789 = vunpack.c.l.b16 %v350
    %v1790 = vunpack.c.h.b16 %v350
    %v1791 = vunpack.c.l.b16 %v351
    %v1792 = vunpack.c.h.b16 %v351
    %v1793 = vunpack.c.l.b16 %v352
    %v1794 = vunpack.c.h.b16 %v352
    %v1795 = vunpack.c.l.b16 %v353
    %v1796 = vunpack.c.l.b16 %v354
    %v1797 = vunpack.c.h.b16 %v354
    %v1798 = vunpack.c.l.b16 %v355
    %v1799 = vunpack.c.h.b16 %v355
    %v1800 = vunpack.c.l.b16 %v356
    %v1801 = vunpack.c.h.b16 %v356
    %v1802 = vunpack.c.l.b16 %v357
    %v1803 = vunpack.c.h.b16 %v357
    %v1804 = vunpack.c.l.b16 %v358
    %v1805 = vunpack.c.h.b16 %v358
    %v1806 = vunpack.c.l.b16 %v359
    %v1807 = vunpack.c.h.b16 %v359
    %v1808 = vunpack.c.l.b16 %v360
    %v1809 = vunpack.c.h.b16 %v360
    %v1810 = vunpack.c.l.b16 %v361
    %v1811 = vunpack.c.h.b16 %v361
    %v1812 = vunpack.c.l.b16 %v362
    %v1813 = vunpack.c.h.b16 %v362
    %v1814 = vunpack.c.l.b16 %v363
    %v1815 = vunpack.c.h.b16 %v363
    %v1816 = vunpack.c.l.b16 %v364
    %v1817 = vunpack.c.h.b16 %v364
    %v1818 = vunpack.c.l.b16 %v365
    %v1819 = vunpack.c.h.b16 %v365
    %v1820 = vunpack.c.l.b16 %v366
    %v1821 = vunpack.c.h.b16 %v366
    %v1822 = vunpack.c.l.b16 %v367
    %v1823 = vunpack.c.l.b16 %v368
    %v1824 = vunpack.c.h.b16 %v368
    %v1825 = vunpack.c.l.b16 %v369
    %v1826 = vunpack.c.h.b16 %v369
    %v1827 = vunpack.c.l.b16 %v370
    %v1828 = vunpack.c.h.b16 %v370
    %v1829 = vunpack.c.l.b16 %v371
    %v1830 = vunpack.c.h.b16 %v371
    %v1831 = vunpack.c.l.b16 %v372
    %v1832 = vunpack.c.h.b16 %v372
    %v1833 = vunpack.c.l.b16 %v373
    %v1834 = vunpack.c.h.b16 %v373
    %v1835 = vunpack.c.l.b16 %v374
    %v1836 = vunpack.c.h.b16 %v374
    %v1837 = vunpack.c.l.b16 %v375
    %v1838 = vunpack.c.h.b16 %v375
    %v1839 = vunpack.c.l.b16 %v376
    %v1840 = vunpack.c.h.b16 %v376
    %v1841 = vunpack.c.l.b16 %v377
    %v1842 = vunpack.c.h.b16 %v377
    %v1843 = vunpack.c.l.b16 %v378
    %v1844 = vunpack.c.h.b16 %v378
    %v1845 = vunpack.c.l.b16 %v379
    %v1846 = vunpack.c.h.b16 %v379
    %v1847 = vunpack.c.l.b16 %v380
    %v1848 = vunpack.c.h.b16 %v380
    %v1849 = vunpack.c.l.b16 %v381
    %v1850 = vunpack.c.l.b16 %v382
    %v1851 = vunpack.c.h.b16 %v382
    %v1852 = vunpack.c.l.b16 %v383
    %v1853 = vunpack.c.h.b16 %v383
    %v1854 = vunpack.c.l.b16 %v384
    %v1855 = vunpack.c.h.b16 %v384
    %v1856 = vunpack.c.l.b16 %v385
    %v1857 = vunpack.c.h.b16 %v385
    %v1858 = vunpack.c.l.b16 %v386
    %v1859 = vunpack.c.h.b16 %v386
    %v1860 = vunpack.c.l.b16 %v387
    %v1861 = vunpack.c.h.b16 %v387
    %v1862 = vunpack.c.l.b16 %v388
    %v1863 = vunpack.c.h.b16 %v388
    %v1864 = vunpack.c.l.b16 %v389
    %v1865 = vunpack.c.h.b16 %v389
    %v1866 = vunpack.c.l.b16 %v390
    %v1867 = vunpack.c.h.b16 %v390
    %v1868 = vunpack.c.l.b16 %v391
    %v1869 = vunpack.c.h.b16 %v391
    %v1870 = vunpack.c.l.b16 %v392
    %v1871 = vunpack.c.h.b16 %v392
    %v1872 = vunpack.c.l.b16 %v393
    %v1873 = vunpack.c.h.b16 %v393
    %v1874 = vunpack.c.l.b16 %v394
    %v1875 = vunpack.c.h.b16 %v394
    %v1876 = vunpack.c.l.b16 %v395
    %v1877 = vunpack.c.l.b16 %v396
    %v1878 = vunpack.c.h.b16 %v396
    %v1879 = vunpack.c.l.b16 %v397
    %v1880 = vunpack.c.h.b16 %v397
    %v1881 = vunpack.c.l.b16 %v398
    %v1882 = vunpack.c.h.b16 %v398
    %v1883 = vunpack.c.l.b16 %v399
    %v1884 = vunpack.c.h.b16 %v399
    %v1885 = vunpack.c.l.b16 %v400
    %v1886 = vunpack.c.h.b16 %v400
    %v1887 = vunpack.c.l.b16 %v401
    %v1888 = vunpack.c.h.b16 %v401
    %v1889 = vunpack.c.l.b16 %v402
    %v1890 = vunpack.c.h.b16 %v402
    %v1891 = vunpack.c.l.b16 %v403
    %v1892 = vunpack.c.h.b16 %v403
    %v1893 = vunpack.c.l.b16 %v404
    %v1894 = vunpack.c.h.b16 %v404
    %v1895 = vunpack.c.l.b16 %v405
    %v1896 = vunpack.c.h.b16 %v405
    %v1897 = vunpack.c.l.b16 %v406
    %v1898 = vunpack.c.h.b16 %v406
    %v1899 = vunpack.c.l.b16 %v407
    %v1900 = vunpack.c.h.b16 %v407
    %v1901 = vunpack.c.l.b16 %v408
    %v1902 = vunpack.c.h.b16 %v408
    %v1903 = vunpack.c.l.b16 %v409
    %v1904 = vunpack.c.l.b16 %v410
    %v1905 = vunpack.c.h.b16 %v410
    %v1906 = vunpack.c.l.b16 %v411
    %v1907 = vunpack.c.h.b16 %v411
    %v1908 = vunpack.c.l.b16 %v412
    %v1909 = vunpack.c.h.b16 %v412
    %v1910 = vunpack.c.l.b16 %v413
    %v1911 = vunpack.c.h.b16 %v413
    %v1912 = vunpack.c.l.b16 %v414
    %v1913 = vunpack.c.h.b16 %v414
    %v1914 = vunpack.c.l.b16 %v415
    %v1915 = vunpack.c.h.b16 %v415
    %v1916 = vunpack.c.l.b16 %v416
    %v1917 = vunpack.c.h.b16 %v416
    %v1918 = vunpack.c.l.b16 %v417
    %v1919 = vunpack.c.h.b16 %v417
    %v1920 = vunpack.c.l.b16 %v418
    %v1921 = vunpack.c.h.b16 %v418
    %v1922 = vunpack.c.l.b16 %v419
    %v1923 = vunpack.c.h.b16 %v419
    %v1924 = vunpack.c.l.b16 %v420
    %v1925 = vunpack.c.h.b16 %v420
    %v1926 = vunpack.c.l.b16 %v421
    %v1927 = vunpack.c.h.b16 %v421
    %v1928 = vunpack.c.l.b16 %v422
    %v1929 = vunpack.c.h.b16 %v422
    %v1930 = vunpack.c.l.b16 %v423
    %v1931 = vunpack.c.l.b16 %v424
    %v1932 = vunpack.c.h.b16 %v424
    %v1933 = vunpack.c.l.b16 %v425
    %v1934 = vunpack.c.h.b16 %v425
    %v1935 = vunpack.c.l.b16 %v426
    %v1936 = vunpack.c.h.b16 %v426
    %v1937 = vunpack.c.l.b16 %v427
    %v1938 = vunpack.c.h.b16 %v427
    %v1939 = vunpack.c.l.b16 %v428
    %v1940 = vunpack.c.h.b16 %v428
    %v1941 = vunpack.c.l.b16 %v429
    %v1942 = vunpack.c.h.b16 %v429
    %v1943 = vunpack.c.l.b16 %v430
    %v1944 = vunpack.c.h.b16 %v430
    %v1945 = vunpack.c.l.b16 %v431
    %v1946 = vunpack.c.h.b16 %v431
    %v1947 = vunpack.c.l.b16 %v432
    %v1948 = vunpack.c.h.b16 %v432
    %v1949 = vunpack.c.l.b16 %v433
    %v1950 = vunpack.c.h.b16 %v433
    %v1951 = vunpack.c.l.b16 %v434
    %v1952 = vunpack.c.h.b16 %v434
    %v1953 = vunpack.c.l.b16 %v435
    %v1954 = vunpack.c.h.b16 %v435
    %v1955 = vunpack.c.l.b16 %v436
    %v1956 = vunpack.c.h.b16 %v436
    %v1957 = vunpack.c.l.b16 %v437
    %v1958 = vpack.c.b16 %v1553, %v1526
    %v1959 = vpack.c.b16 %v1554, %v1527
    %v1960 = vpack.c.b16 %v1555, %v1528
    %v1961 = vpack.c.b16 %v1556, %v1529
    %v1962 = vpack.c.b16 %v1557, %v1530
    %v1963 = vpack.c.b16 %v1558, %v1531
    %v1964 = vpack.c.b16 %v1559, %v1532
    %v1965 = vpack.c.b16 %v1560, %v1533
    %v1966 = vpack.c.b16 %v1561, %v1534
    %v1967 = vpack.c.b16 %v1562, %v1535
    %v1968 = vpack.c.b16 %v1563, %v1536
    %v1969 = vpack.c.b16 %v1564, %v1537
    %v1970 = vpack.c.b16 %v1565, %v1538
    %v1971 = vpack.c.b16 %v1566, %v1539
    %v1972 = vpack.c.b16 %v1567, %v1540
    %v1973 = vpack.c.b16 %v1568, %v1541
    %v1974 = vpack.c.b16 %v1569, %v1542
    %v1975 = vpack.c.b16 %v1570, %v1543
    %v1976 = vpack.c.b16 %v1571, %v1544
    %v1977 = vpack.c.b16 %v1572, %v1545
    %v1978 = vpack.c.b16 %v1573, %v1546
    %v1979 = vpack.c.b16 %v1574, %v1547
    %v1980 = vpack.c.b16 %v1575, %v1548
    %v1981 = vpack.c.b16 %v1576, %v1549
    %v1982 = vpack.c.b16 %v1577, %v1550
    %v1983 = vpack.c.b16 %v1578, %v1551
    %v1984 = vpack.c.b16 %v1579, %v1552
    %v1985 = vpack.c.b16 %v1607, %v1580
    %v1986 = vpack.c.b16 %v1608, %v1581
    %v1987 = vpack.c.b16 %v1609, %v1582
    %v1988 = vpack.c.b16 %v1610, %v1583
    %v1989 = vpack.c.b16 %v1611, %v1584
    %v1990 = vpack.c.b16 %v1612, %v1585
    %v1991 = vpack.c.b16 %v1613, %v1586
    %v1992 = vpack.c.b16 %v1614, %v1587
    %v1993 = vpack.c.b16 %v1615, %v1588
    %v1994 = vpack.c.b16 %v1616, %v1589
    %v1995 = vpack.c.b16 %v1617, %v1590
    %v1996 = vpack.c.b16 %v1618, %v1591
    %v1997 = vpack.c.b16 %v1619, %v1592
    %v1998 = vpack.c.b16 %v1620, %v1593
    %v1999 = vpack.c.b16 %v1621, %v1594
    %v2000 = vpack.c.b16 %v1622, %v1595
    %v2001 = vpack.c.b16 %v1623, %v1596
    %v2002 = vpack.c.b16 %v1624, %v1597
    %v2003 = vpack.c.b16 %v1625, %v1598
    %v2004 = vpack.c.b16 %v1626, %v1599
    %v2005 = vpack.c.b16 %v1627, %v1600
    %v2006 = vpack.c.b16 %v1628, %v1601
    %v2007 = vpack.c.b16 %v1629, %v1602
    %v2008 = vpack.c.b16 %v1630, %v1603
    %v2009 = vpack.c.b16 %v1631, %v1604
    %v2010 = vpack.c.b16 %v1632, %v1605
    %v2011 = vpack.c.b16 %v1633, %v1606
    %v2012 = vpack.c.b16 %v1661, %v1634
    %v2013 = vpack.c.b16 %v1662, %v1635
    %v2014 = vpack.c.b16 %v1663, %v1636
    %v2015 = vpack.c.b16 %v1664, %v1637
    %v2016 = vpack.c.b16 %v1665, %v1638
    %v2017 = vpack.c.b16 %v1666, %v1639
    %v2018 = vpack.c.b16 %v1667, %v1640
    %v2019 = vpack.c.b16 %v1668, %v1641
    %v2020 = vpack.c.b16 %v1669, %v1642
    %v2021 = vpack.c.b16 %v1670, %v1643
    %v2022 = vpack.c.b16 %v1671, %v1644
    %v2023 = vpack.c.b16 %v1672, %v1645
    %v2024 = vpack.c.b16 %v1673, %v1646
    %v2025 = vpack.c.b16 %v1674, %v1647
    %v2026 = vpack.c.b16 %v1675, %v1648
    %v2027 = vpack.c.b16 %v1676, %v1649
    %v2028 = vpack.c.b16 %v1677, %v1650
    %v2029 = vpack.c.b16 %v1678, %v1651
    %v2030 = vpack.c.b16 %v1679, %v1652
    %v2031 = vpack.c.b16 %v1680, %v1653
    %v2032 = vpack.c.b16 %v1681, %v1654
    %v2033 = vpack.c.b16 %v1682, %v1655
    %v2034 = vpack.c.b16 %v1683, %v1656
    %v2035 = vpack.c.b16 %v1684, %v1657
    %v2036 = vpack.c.b16 %v1685, %v1658
    %v2037 = vpack.c.b16 %v1686, %v1659
    %v2038 = vpack.c.b16 %v1687, %v1660
    %v2039 = vpack.c.b16 %v1715, %v1688
    %v2040 = vpack.c.b16 %v1716, %v1689
    %v2041 = vpack.c.b16 %v1717, %v1690
    %v2042 = vpack.c.b16 %v1718, %v1691
    %v2043 = vpack.c.b16 %v1719, %v1692
    %v2044 = vpack.c.b16 %v1720, %v1693
    %v2045 = vpack.c.b16 %v1721, %v1694
    %v2046 = vpack.c.b16 %v1722, %v1695
    %v2047 = vpack.c.b16 %v1723, %v1696
    %v2048 = vpack.c.b16 %v1724, %v1697
    %v2049 = vpack.c.b16 %v1725, %v1698
    %v2050 = vpack.c.b16 %v1726, %v1699
    %v2051 = vpack.c.b16 %v1727, %v1700
    %v2052 = vpack.c.b16 %v1728, %v1701
    %v2053 = vpack.c.b16 %v1729, %v1702
    %v2054 = vpack.c.b16 %v1730, %v1703
    %v2055 = vpack.c.b16 %v1731, %v1704
    %v2056 = vpack.c.b16 %v1732, %v1705
    %v2057 = vpack.c.b16 %v1733, %v1706
    %v2058 = vpack.c.b16 %v1734, %v1707
    %v2059 = vpack.c.b16 %v1735, %v1708
    %v2060 = vpack.c.b16 %v1736, %v1709
    %v2061 = vpack.c.b16 %v1737, %v1710
    %v2062 = vpack.c.b16 %v1738, %v1711
    %v2063 = vpack.c.b16 %v1739, %v1712
    %v2064 = vpack.c.b16 %v1740, %v1713
    %v2065 = vpack.c.b16 %v1741, %v1714
    %v2066 = vpack.c.b16 %v1769, %v1742
    %v2067 = vpack.c.b16 %v1770, %v1743
    %v2068 = vpack.c.b16 %v1771, %v1744
    %v2069 = vpack.c.b16 %v1772, %v1745
    %v2070 = vpack.c.b16 %v1773, %v1746
    %v2071 = vpack.c.b16 %v1774, %v1747
    %v2072 = vpack.c.b16 %v1775, %v1748
    %v2073 = vpack.c.b16 %v1776, %v1749
    %v2074 = vpack.c.b16 %v1777, %v1750
    %v2075 = vpack.c.b16 %v1778, %v1751
    %v2076 = vpack.c.b16 %v1779, %v1752
    %v2077 = vpack.c.b16 %v1780, %v1753
    %v2078 = vpack.c.b16 %v1781, %v1754
    %v2079 = vpack.c.b16 %v1782, %v1755
    %v2080 = vpack.c.b16 %v1783, %v1756
    %v2081 = vpack.c.b16 %v1784, %v1757
    %v2082 = vpack.c.b16 %v1785, %v1758
    %v2083 = vpack.c.b16 %v1786, %v1759
    %v2084 = vpack.c.b16 %v1787, %v1760
    %v2085 = vpack.c.b16 %v1788, %v1761
    %v2086 = vpack.c.b16 %v1789, %v1762
    %v2087 = vpack.c.b16 %v1790, %v1763
    %v2088 = vpack.c.b16 %v1791, %v1764
    %v2089 = vpack.c.b16 %v1792, %v1765
    %v2090 = vpack.c.b16 %v1793, %v1766
    %v2091 = vpack.c.b16 %v1794, %v1767
    %v2092 = vpack.c.b16 %v1795, %v1768
    %v2093 = vpack.c.b16 %v1823, %v1796
    %v2094 = vpack.c.b16 %v1824, %v1797
    %v2095 = vpack.c.b16 %v1825, %v1798
    %v2096 = vpack.c.b16 %v1826, %v1799
    %v2097 = vpack.c.b16 %v1827, %v1800
    %v2098 = vpack.c.b16 %v1828, %v1801
    %v2099 = vpack.c.b16 %v1829, %v1802
    %v2100 = vpack.c.b16 %v1830, %v1803
    %v2101 = vpack.c.b16 %v1831, %v1804
    %v2102 = vpack.c.b16 %v1832, %v1805
    %v2103 = vpack.c.b16 %v1833, %v1806
    %v2104 = vpack.c.b16 %v1834, %v1807
    %v2105 = vpack.c.b16 %v1835, %v1808
    %v2106 = vpack.c.b16 %v1836, %v1809
    %v2107 = vpack.c.b16 %v1837, %v1810
    %v2108 = vpack.c.b16 %v1838, %v1811
    %v2109 = vpack.c.b16 %v1839, %v1812
    %v2110 = vpack.c.b16 %v1840, %v1813
    %v2111 = vpack.c.b16 %v1841, %v1814
    %v2112 = vpack.c.b16 %v1842, %v1815
    %v2113 = vpack.c.b16 %v1843, %v1816
    %v2114 = vpack.c.b16 %v1844, %v1817
    %v2115 = vpack.c.b16 %v1845, %v1818
    %v2116 = vpack.c.b16 %v1846, %v1819
    %v2117 = vpack.c.b16 %v1847, %v1820
    %v2118 = vpack.c.b16 %v1848, %v1821
    %v2119 = vpack.c.b16 %v1849, %v1822
    %v2120 = vpack.c.b16 %v1877, %v1850
    %v2121 = vpack.c.b16 %v1878, %v1851
    %v2122 = vpack.c.b16 %v1879, %v1852
    %v2123 = vpack.c.b16 %v1880, %v1853
    %v2124 = vpack.c.b16 %v1881, %v1854
    %v2125 = vpack.c.b16 %v1882, %v1855
    %v2126 = vpack.c.b16 %v1883, %v1856
    %v2127 = vpack.c.b16 %v1884, %v1857
    %v2128 = vpack.c.b16 %v1885, %v1858
    %v2129 = vpack.c.b16 %v1886, %v1859
    %v2130 = vpack.c.b16 %v1887, %v1860
    %v2131 = vpack.c.b16 %v1888, %v1861
    %v2132 = vpack.c.b16 %v1889, %v1862
    %v2133 = vpack.c.b16 %v1890, %v1863
    %v2134 = vpack.c.b16 %v1891, %v1864
    %v2135 = vpack.c.b16 %v1892, %v1865
    %v2136 = vpack.c.b16 %v1893, %v1866
    %v2137 = vpack.c.b16 %v1894, %v1867
    %v2138 = vpack.c.b16 %v1895, %v1868
    %v2139 = vpack.c.b16 %v1896, %v1869
    %v2140 = vpack.c.b16 %v1897, %v1870
    %v2141 = vpack.c.b16 %v1898, %v1871
    %v2142 = vpack.c.b16 %v1899, %v1872
    %v2143 = vpack.c.b16 %v1900, %v1873
    %v2144 = vpack.c.b16 %v1901, %v1874
    %v2145 = vpack.c.b16 %v1902, %v1875
    %v2146 = vpack.c.b16 %v1903, %v1876
    %v2147 = vpack.c.b16 %v1931, %v1904
    %v2148 = vpack.c.b16 %v1932, %v1905
    %v2149 = vpack.c.b16 %v1933, %v1906
    %v2150 = vpack.c.b16 %v1934, %v1907
    %v2151 = vpack.c.b16 %v1935, %v1908
    %v2152 = vpack.c.b16 %v1936, %v1909
    %v2153 = vpack.c.b16 %v1937, %v1910
    %v2154 = vpack.c.b16 %v1938, %v1911
    %v2155 = vpack.c.b16 %v1939, %v1912
    %v2156 = vpack.c.b16 %v1940, %v1913
    %v2157 = vpack.c.b16 %v1941, %v1914
    %v2158 = vpack.c.b16 %v1942, %v1915
    %v2159 = vpack.c.b16 %v1943, %v1916
    %v2160 = vpack.c.b16 %v1944, %v1917
    %v2161 = vpack.c.b16 %v1945, %v1918
    %v2162 = vpack.c.b16 %v1946, %v1919
    %v2163 = vpack.c.b16 %v1947, %v1920
    %v2164 = vpack.c.b16 %v1948, %v1921
    %v2165 = vpack.c.b16 %v1949, %v1922
    %v2166 = vpack.c.b16 %v1950, %v1923
    %v2167 = vpack.c.b16 %v1951, %v1924
    %v2168 = vpack.c.b16 %v1952, %v1925
    %v2169 = vpack.c.b16 %v1953, %v1926
    %v2170 = vpack.c.b16 %v1954, %v1927
    %v2171 = vpack.c.b16 %v1955, %v1928
    %v2172 = vpack.c.b16 %v1956, %v1929
    %v2173 = vpack.c.b16 %v1957, %v1930
    %v3254 = vunpack.c.l.b16 %v438
    %v3255 = vunpack.c.h.b16 %v438
    %v3256 = vunpack.c.l.b16 %v439
    %v3257 = vunpack.c.h.b16 %v439
    %v3258 = vunpack.c.l.b16 %v440
    %v3259 = vunpack.c.h.b16 %v440
    %v3260 = vunpack.c.l.b16 %v441
    %v3261 = vunpack.c.h.b16 %v441
    %v3262 = vunpack.c.l.b16 %v442
    %v3263 = vunpack.c.h.b16 %v442
    %v3264 = vunpack.c.l.b16 %v443
    %v3265 = vunpack.c.h.b16 %v443
    %v3266 = vunpack.c.l.b16 %v444
    %v3267 = vunpack.c.h.b16 %v444
    %v3268 = vunpack.c.l.b16 %v445
    %v3269 = vunpack.c.h.b16 %v445
    %v3270 = vunpack.c.l.b16 %v446
    %v3271 = vunpack.c.h.b16 %v446
    %v3272 = vunpack.c.l.b16 %v447
    %v3273 = vunpack.c.h.b16 %v447
    %v3274 = vunpack.c.l.b16 %v448
    %v3275 = vunpack.c.h.b16 %v448
    %v3276 = vunpack.c.l.b16 %v449
    %v3277 = vunpack.c.h.b16 %v449
    %v3278 = vunpack.c.l.b16 %v450
    %v3279 = vunpack.c.h.b16 %v450
    %v3280 = vunpack.c.l.b16 %v451
    %v3281 = vunpack.c.h.b16 %v451
    %v3282 = vunpack.c.l.b16 %v452
    %v3283 = vunpack.c.h.b16 %v452
    %v3284 = vunpack.c.l.b16 %v453
    %v3285 = vunpack.c.h.b16 %v453
    %v3286 = vunpack.c.l.b16 %v454
    %v3287 = vunpack.c.h.b16 %v454
    %v3288 = vunpack.c.l.b16 %v455
    %v3289 = vunpack.c.h.b16 %v455
    %v3290 = vunpack.c.l.b16 %v456
    %v3291 = vunpack.c.h.b16 %v456
    %v3292 = vunpack.c.l.b16 %v457
    %v3293 = vunpack.c.h.b16 %v457
    %v3294 = vunpack.c.l.b16 %v458
    %v3295 = vunpack.c.h.b16 %v458
    %v3296 = vunpack.c.l.b16 %v459
    %v3297 = vunpack.c.h.b16 %v459
    %v3298 = vunpack.c.l.b16 %v460
    %v3299 = vunpack.c.h.b16 %v460
    %v3300 = vunpack.c.l.b16 %v461
    %v3301 = vunpack.c.h.b16 %v461
    %v3302 = vunpack.c.l.b16 %v462
    %v3303 = vunpack.c.h.b16 %v462
    %v3304 = vunpack.c.l.b16 %v463
    %v3305 = vunpack.c.h.b16 %v463
    %v3306 = vunpack.c.l.b16 %v464
    %v3307 = vunpack.c.h.b16 %v464
    %v3308 = vunpack.c.l.b16 %v465
    %v3309 = vunpack.c.h.b16 %v465
    %v3310 = vunpack.c.l.b16 %v466
    %v3311 = vunpack.c.h.b16 %v466
    %v3312 = vunpack.c.l.b16 %v467
    %v3313 = vunpack.c.h.b16 %v467
    %v3314 = vunpack.c.l.b16 %v468
    %v3315 = vunpack.c.h.b16 %v468
    %v3316 = vunpack.c.l.b16 %v469
    %v3317 = vunpack.c.h.b16 %v469
    %v3318 = vunpack.c.l.b16 %v470
    %v3319 = vunpack.c.h.b16 %v470
    %v3320 = vunpack.c.l.b16 %v471
    %v3321 = vunpack.c.h.b16 %v471
    %v3322 = vunpack.c.l.b16 %v472
    %v3323 = vunpack.c.h.b16 %v472
    %v3324 = vunpack.c.l.b16 %v473
    %v3325 = vunpack.c.h.b16 %v473
    %v3326 = vunpack.c.l.b16 %v474
    %v3327 = vunpack.c.h.b16 %v474
    %v3328 = vunpack.c.l.b16 %v475
    %v3329 = vunpack.c.h.b16 %v475
    %v3330 = vunpack.c.l.b16 %v476
    %v3331 = vunpack.c.h.b16 %v476
    %v3332 = vunpack.c.l.b16 %v477
    %v3333 = vunpack.c.h.b16 %v477
    %v3334 = vunpack.c.l.b16 %v478
    %v3335 = vunpack.c.h.b16 %v478
    %v3336 = vunpack.c.l.b16 %v479
    %v3337 = vunpack.c.h.b16 %v479
    %v3338 = vunpack.c.l.b16 %v480
    %v3339 = vunpack.c.h.b16 %v480
    %v3340 = vunpack.c.l.b16 %v481
    %v3341 = vunpack.c.h.b16 %v481
    %v3342 = vunpack.c.l.b16 %v482
    %v3343 = vunpack.c.h.b16 %v482
    %v3344 = vunpack.c.l.b16 %v483
    %v3345 = vunpack.c.h.b16 %v483
    %v3346 = vunpack.c.l.b16 %v484
    %v3347 = vunpack.c.h.b16 %v484
    %v3348 = vunpack.c.l.b16 %v485
    %v3349 = vunpack.c.h.b16 %v485
    %v3350 = vunpack.c.l.b16 %v486
    %v3351 = vunpack.c.h.b16 %v486
    %v3352 = vunpack.c.l.b16 %v487
    %v3353 = vunpack.c.h.b16 %v487
    %v3354 = vunpack.c.l.b16 %v488
    %v3355 = vunpack.c.h.b16 %v488
    %v3356 = vunpack.c.l.b16 %v489
    %v3357 = vunpack.c.h.b16 %v489
    %v3358 = vunpack.c.l.b16 %v490
    %v3359 = vunpack.c.h.b16 %v490
    %v3360 = vunpack.c.l.b16 %v491
    %v3361 = vunpack.c.h.b16 %v491
    %v3362 = vunpack.c.l.b16 %v492
    %v3363 = vunpack.c.h.b16 %v492
    %v3364 = vunpack.c.l.b16 %v493
    %v3365 = vunpack.c.h.b16 %v493
    %v3366 = vunpack.c.l.b16 %v494
    %v3367 = vunpack.c.h.b16 %v494
    %v3368 = vunpack.c.l.b16 %v495
    %v3369 = vunpack.c.h.b16 %v495
    %v3370 = vunpack.c.l.b16 %v496
    %v3371 = vunpack.c.h.b16 %v496
    %v3372 = vunpack.c.l.b16 %v497
    %v3373 = vunpack.c.h.b16 %v497
    %v3374 = vunpack.c.l.b16 %v498
    %v3375 = vunpack.c.h.b16 %v498
    %v3376 = vunpack.c.l.b16 %v499
    %v3377 = vunpack.c.h.b16 %v499
    %v3378 = vunpack.c.l.b16 %v500
    %v3379 = vunpack.c.h.b16 %v500
    %v3380 = vunpack.c.l.b16 %v501
    %v3381 = vunpack.c.h.b16 %v501
    %v3382 = vunpack.c.l.b16 %v502
    %v3383 = vunpack.c.h.b16 %v502
    %v3384 = vunpack.c.l.b16 %v503
    %v3385 = vunpack.c.h.b16 %v503
    %v3386 = vunpack.c.l.b16 %v504
    %v3387 = vunpack.c.h.b16 %v504
    %v3388 = vunpack.c.l.b16 %v505
    %v3389 = vunpack.c.h.b16 %v505
    %v3390 = vunpack.c.l.b16 %v506
    %v3391 = vunpack.c.h.b16 %v506
    %v3392 = vunpack.c.l.b16 %v507
    %v3393 = vunpack.c.h.b16 %v507
    %v3394 = vunpack.c.l.b16 %v508
    %v3395 = vunpack.c.h.b16 %v508
    %v3396 = vunpack.c.l.b16 %v509
    %v3397 = vunpack.c.h.b16 %v509
    %v3398 = vunpack.c.l.b16 %v510
    %v3399 = vunpack.c.h.b16 %v510
    %v3400 = vunpack.c.l.b16 %v511
    %v3401 = vunpack.c.h.b16 %v511
    %v3402 = vunpack.c.l.b16 %v512
    %v3403 = vunpack.c.h.b16 %v512
    %v3404 = vunpack.c.l.b16 %v513
    %v3405 = vunpack.c.h.b16 %v513
    %v3406 = vunpack.c.l.b16 %v514
    %v3407 = vunpack.c.h.b16 %v514
    %v3408 = vunpack.c.l.b16 %v515
    %v3409 = vunpack.c.h.b16 %v515
    %v3410 = vunpack.c.l.b16 %v516
    %v3411 = vunpack.c.h.b16 %v516
    %v3412 = vunpack.c.l.b16 %v517
    %v3413 = vunpack.c.h.b16 %v517
    %v3414 = vunpack.c.l.b16 %v518
    %v3415 = vunpack.c.h.b16 %v518
    %v3416 = vunpack.c.l.b16 %v519
    %v3417 = vunpack.c.h.b16 %v519
    %v3418 = vunpack.c.l.b16 %v520
    %v3419 = vunpack.c.h.b16 %v520
    %v3420 = vunpack.c.l.b16 %v521
    %v3421 = vunpack.c.h.b16 %v521
    %v3422 = vunpack.c.l.b16 %v522
    %v3423 = vunpack.c.h.b16 %v522
    %v3424 = vunpack.c.l.b16 %v523
    %v3425 = vunpack.c.h.b16 %v523
    %v3426 = vunpack.c.l.b16 %v524
    %v3427 = vunpack.c.h.b16 %v524
    %v3428 = vunpack.c.l.b16 %v525
    %v3429 = vunpack.c.h.b16 %v525
    %v3430 = vunpack.c.l.b16 %v526
    %v3431 = vunpack.c.h.b16 %v526
    %v3432 = vunpack.c.l.b16 %v527
    %v3433 = vunpack.c.h.b16 %v527
    %v3434 = vunpack.c.l.b16 %v528
    %v3435 = vunpack.c.h.b16 %v528
    %v3436 = vunpack.c.l.b16 %v529
    %v3437 = vunpack.c.h.b16 %v529
    %v3438 = vunpack.c.l.b16 %v530
    %v3439 = vunpack.c.h.b16 %v530
    %v3440 = vunpack.c.l.b16 %v531
    %v3441 = vunpack.c.h.b16 %v531
    %v3442 = vunpack.c.l.b16 %v532
    %v3443 = vunpack.c.h.b16 %v532
    %v3444 = vunpack.c.l.b16 %v533
    %v3445 = vunpack.c.h.b16 %v533
    %v3446 = vunpack.c.l.b16 %v534
    %v3447 = vunpack.c.h.b16 %v534
    %v3448 = vunpack.c.l.b16 %v535
    %v3449 = vunpack.c.h.b16 %v535
    %v3450 = vunpack.c.l.b16 %v536
    %v3451 = vunpack.c.h.b16 %v536
    %v3452 = vunpack.c.l.b16 %v537
    %v3453 = vunpack.c.h.b16 %v537
    %v3454 = vunpack.c.l.b16 %v538
    %v3455 = vunpack.c.h.b16 %v538
    %v3456 = vunpack.c.l.b16 %v539
    %v3457 = vunpack.c.h.b16 %v539
    %v3458 = vunpack.c.l.b16 %v540
    %v3459 = vunpack.c.h.b16 %v540
    %v3460 = vunpack.c.l.b16 %v541
    %v3461 = vunpack.c.h.b16 %v541
    %v3462 = vunpack.c.l.b16 %v542
    %v3463 = vunpack.c.h.b16 %v542
    %v3464 = vunpack.c.l.b16 %v543
    %v3465 = vunpack.c.h.b16 %v543
    %v3466 = vunpack.c.l.b16 %v544
    %v3467 = vunpack.c.h.b16 %v544
    %v3468 = vunpack.c.l.b16 %v545
    %v3469 = vunpack.c.h.b16 %v545
    %v3470 = vunpack.c.l.b16 %v546
    %v3471 = vunpack.c.h.b16 %v546
    %v3472 = vunpack.c.l.b16 %v547
    %v3473 = vunpack.c.h.b16 %v547
    %v3474 = vunpack.c.l.b16 %v548
    %v3475 = vunpack.c.h.b16 %v548
    %v3476 = vunpack.c.l.b16 %v549
    %v3477 = vunpack.c.h.b16 %v549
    %v3478 = vunpack.c.l.b16 %v550
    %v3479 = vunpack.c.h.b16 %v550
    %v3480 = vunpack.c.l.b16 %v551
    %v3481 = vunpack.c.h.b16 %v551
    %v3482 = vunpack.c.l.b16 %v552
    %v3483 = vunpack.c.h.b16 %v552
    %v3484 = vunpack.c.l.b16 %v553
    %v3485 = vunpack.c.h.b16 %v553
    %v3486 = vunpack.c.l.b16 %v554
    %v3487 = vunpack.c.h.b16 %v554
    %v3488 = vunpack.c.l.b16 %v555
    %v3489 = vunpack.c.h.b16 %v555
    %v3490 = vunpack.c.l.b16 %v556
    %v3491 = vunpack.c.h.b16 %v556
    %v3492 = vunpack.c.l.b16 %v557
    %v3493 = vunpack.c.h.b16 %v557
    %v3494 = vunpack.c.l.b16 %v558
    %v3495 = vunpack.c.h.b16 %v558
    %v3496 = vunpack.c.l.b16 %v559
    %v3497 = vunpack.c.h.b16 %v559
    %v3498 = vunpack.c.l.b16 %v560
    %v3499 = vunpack.c.h.b16 %v560
    %v3500 = vunpack.c.l.b16 %v561
    %v3501 = vunpack.c.h.b16 %v561
    %v3502 = vunpack.c.l.b16 %v562
    %v3503 = vunpack.c.h.b16 %v562
    %v3504 = vunpack.c.l.b16 %v563
    %v3505 = vunpack.c.h.b16 %v563
    %v3506 = vunpack.c.l.b16 %v564
    %v3507 = vunpack.c.h.b16 %v564
    %v3508 = vunpack.c.l.b16 %v565
    %v3509 = vunpack.c.h.b16 %v565
    %v3510 = vunpack.c.l.b16 %v566
    %v3511 = vunpack.c.h.b16 %v566
    %v3512 = vunpack.c.l.b16 %v567
    %v3513 = vunpack.c.h.b16 %v567
    %v3514 = vunpack.c.l.b16 %v568
    %v3515 = vunpack.c.h.b16 %v568
    %v3516 = vunpack.c.l.b16 %v569
    %v3517 = vunpack.c.h.b16 %v569
    %v3518 = vunpack.c.l.b16 %v570
    %v3519 = vunpack.c.h.b16 %v570
    %v3520 = vunpack.c.l.b16 %v571
    %v3521 = vunpack.c.h.b16 %v571
    %v3522 = vunpack.c.l.b16 %v572
    %v3523 = vunpack.c.h.b16 %v572
    %v3524 = vunpack.c.l.b16 %v573
    %v3525 = vunpack.c.h.b16 %v573
    %v3526 = vunpack.c.l.b16 %v574
    %v3527 = vunpack.c.h.b16 %v574
    %v3528 = vunpack.c.l.b16 %v575
    %v3529 = vunpack.c.h.b16 %v575
    %v3530 = vunpack.c.l.b16 %v576
    %v3531 = vunpack.c.h.b16 %v576
    %v3532 = vunpack.c.l.b16 %v577
    %v3533 = vunpack.c.h.b16 %v577
    %v3534 = vunpack.c.l.b16 %v578
    %v3535 = vunpack.c.h.b16 %v578
    %v3536 = vunpack.c.l.b16 %v579
    %v3537 = vunpack.c.h.b16 %v579
    %v3538 = vunpack.c.l.b16 %v580
    %v3539 = vunpack.c.h.b16 %v580
    %v3540 = vunpack.c.l.b16 %v581
    %v3541 = vunpack.c.h.b16 %v581
    %v3542 = vunpack.c.l.b16 %v582
    %v3543 = vunpack.c.h.b16 %v582
    %v3544 = vunpack.c.l.b16 %v583
    %v3545 = vunpack.c.h.b16 %v583
    %v3546 = vunpack.c.l.b16 %v584
    %v3547 = vunpack.c.h.b16 %v584
    %v3548 = vunpack.c.l.b16 %v585
    %v3549 = vunpack.c.h.b16 %v585
    %v3550 = vunpack.c.l.b16 %v586
    %v3551 = vunpack.c.h.b16 %v586
    %v3552 = vunpack.c.l.b16 %v587
    %v3553 = vunpack.c.h.b16 %v587
    %v3554 = vunpack.c.l.b16 %v588
    %v3555 = vunpack.c.h.b16 %v588
    %v3556 = vunpack.c.l.b16 %v589
    %v3557 = vunpack.c.h.b16 %v589
    %v3558 = vunpack.c.l.b16 %v590
    %v3559 = vunpack.c.h.b16 %v590
    %v3560 = vunpack.c.l.b16 %v591
    %v3561 = vunpack.c.h.b16 %v591
    %v3562 = vunpack.c.l.b16 %v592
    %v3563 = vunpack.c.h.b16 %v592
    %v3564 = vunpack.c.l.b16 %v593
    %v3565 = vunpack.c.h.b16 %v593
    %v3566 = vunpack.c.l.b16 %v594
    %v3567 = vunpack.c.h.b16 %v594
    %v3568 = vunpack.c.l.b16 %v595
    %v3569 = vunpack.c.h.b16 %v595
    %v3570 = vunpack.c.l.b16 %v596
    %v3571 = vunpack.c.h.b16 %v596
    %v3572 = vunpack.c.l.b16 %v597
    %v3573 = vunpack.c.h.b16 %v597
    %v3574 = vunpack.c.l.b16 %v598
    %v3575 = vunpack.c.h.b16 %v598
    %v3576 = vunpack.c.l.b16 %v599
    %v3577 = vunpack.c.h.b16 %v599
    %v3578 = vunpack.c.l.b16 %v600
    %v3579 = vunpack.c.h.b16 %v600
    %v3580 = vunpack.c.l.b16 %v601
    %v3581 = vunpack.c.h.b16 %v601
    %v3582 = vunpack.c.l.b16 %v602
    %v3583 = vunpack.c.h.b16 %v602
    %v3584 = vunpack.c.l.b16 %v603
    %v3585 = vunpack.c.h.b16 %v603
    %v3586 = vunpack.c.l.b16 %v604
    %v3587 = vunpack.c.h.b16 %v604
    %v3588 = vunpack.c.l.b16 %v605
    %v3589 = vunpack.c.h.b16 %v605
    %v3590 = vunpack.c.l.b16 %v606
    %v3591 = vunpack.c.h.b16 %v606
    %v3592 = vunpack.c.l.b16 %v607
    %v3593 = vunpack.c.h.b16 %v607
    %v3594 = vunpack.c.l.b16 %v608
    %v3595 = vunpack.c.h.b16 %v608
    %v3596 = vunpack.c.l.b16 %v609
    %v3597 = vunpack.c.h.b16 %v609
    %v3598 = vunpack.c.l.b16 %v610
    %v3599 = vunpack.c.h.b16 %v610
    %v3600 = vunpack.c.l.b16 %v611
    %v3601 = vunpack.c.h.b16 %v611
    %v3602 = vunpack.c.l.b16 %v612
    %v3603 = vunpack.c.h.b16 %v612
    %v3604 = vunpack.c.l.b16 %v613
    %v3605 = vunpack.c.h.b16 %v613
    %v3606 = vunpack.c.l.b16 %v614
    %v3607 = vunpack.c.h.b16 %v614
    %v3608 = vunpack.c.l.b16 %v615
    %v3609 = vunpack.c.h.b16 %v615
    %v3610 = vunpack.c.l.b16 %v616
    %v3611 = vunpack.c.h.b16 %v616
    %v3612 = vunpack.c.l.b16 %v617
    %v3613 = vunpack.c.h.b16 %v617
    %v3614 = vunpack.c.l.b16 %v618
    %v3615 = vunpack.c.h.b16 %v618
    %v3616 = vunpack.c.l.b16 %v619
    %v3617 = vunpack.c.h.b16 %v619
    %v3618 = vunpack.c.l.b16 %v620
    %v3619 = vunpack.c.h.b16 %v620
    %v3620 = vunpack.c.l.b16 %v621
    %v3621 = vunpack.c.h.b16 %v621
    %v3622 = vunpack.c.l.b16 %v622
    %v3623 = vunpack.c.h.b16 %v622
    %v3624 = vunpack.c.l.b16 %v623
    %v3625 = vunpack.c.h.b16 %v623
    %v3626 = vunpack.c.l.b16 %v624
    %v3627 = vunpack.c.h.b16 %v624
    %v3628 = vunpack.c.l.b16 %v625
    %v3629 = vunpack.c.h.b16 %v625
    %v3630 = vunpack.c.l.b16 %v626
    %v3631 = vunpack.c.h.b16 %v626
    %v3632 = vunpack.c.l.b16 %v627
    %v3633 = vunpack.c.h.b16 %v627
    %v3634 = vunpack.c.l.b16 %v628
    %v3635 = vunpack.c.h.b16 %v628
    %v3636 = vunpack.c.l.b16 %v629
    %v3637 = vunpack.c.h.b16 %v629
    %v3638 = vunpack.c.l.b16 %v630
    %v3639 = vunpack.c.h.b16 %v630
    %v3640 = vunpack.c.l.b16 %v631
    %v3641 = vunpack.c.h.b16 %v631
    %v3642 = vunpack.c.l.b16 %v632
    %v3643 = vunpack.c.h.b16 %v632
    %v3644 = vunpack.c.l.b16 %v633
    %v3645 = vunpack.c.h.b16 %v633
    %v3646 = vunpack.c.l.b16 %v634
    %v3647 = vunpack.c.h.b16 %v634
    %v3648 = vunpack.c.l.b16 %v635
    %v3649 = vunpack.c.h.b16 %v635
    %v3650 = vunpack.c.l.b16 %v636
    %v3651 = vunpack.c.h.b16 %v636
    %v3652 = vunpack.c.l.b16 %v637
    %v3653 = vunpack.c.h.b16 %v637
    %v3654 = vunpack.c.l.b16 %v638
    %v3655 = vunpack.c.h.b16 %v638
    %v3656 = vunpack.c.l.b16 %v639
    %v3657 = vunpack.c.h.b16 %v639
    %v3658 = vunpack.c.l.b16 %v640
    %v3659 = vunpack.c.h.b16 %v640
    %v3660 = vunpack.c.l.b16 %v641
    %v3661 = vunpack.c.h.b16 %v641
    %v3662 = vunpack.c.l.b16 %v642
    %v3663 = vunpack.c.h.b16 %v642
    %v3664 = vunpack.c.l.b16 %v643
    %v3665 = vunpack.c.h.b16 %v643
    %v3666 = vunpack.c.l.b16 %v644
    %v3667 = vunpack.c.h.b16 %v644
    %v3668 = vunpack.c.l.b16 %v645
    %v3669 = vunpack.c.h.b16 %v645
    %v3670 = vunpack.c.l.b16 %v646
    %v3671 = vunpack.c.h.b16 %v646
    %v3672 = vunpack.c.l.b16 %v647
    %v3673 = vunpack.c.h.b16 %v647
    %v3674 = vunpack.c.l.b16 %v648
    %v3675 = vunpack.c.h.b16 %v648
    %v3676 = vunpack.c.l.b16 %v649
    %v3677 = vunpack.c.h.b16 %v649
    %v3678 = vunpack.c.l.b16 %v650
    %v3679 = vunpack.c.h.b16 %v650
    %v3680 = vunpack.c.l.b16 %v651
    %v3681 = vunpack.c.h.b16 %v651
    %v3682 = vunpack.c.l.b16 %v652
    %v3683 = vunpack.c.h.b16 %v652
    %v3684 = vunpack.c.l.b16 %v653
    %v3685 = vunpack.c.h.b16 %v653
    %v3686 = vunpack.c.l.b16 %v654
    %v3687 = vunpack.c.h.b16 %v654
    %v3688 = vunpack.c.l.b16 %v655
    %v3689 = vunpack.c.h.b16 %v655
    %v3690 = vunpack.c.l.b16 %v656
    %v3691 = vunpack.c.h.b16 %v656
    %v3692 = vunpack.c.l.b16 %v657
    %v3693 = vunpack.c.h.b16 %v657
    %v3694 = vunpack.c.l.b16 %v658
    %v3695 = vunpack.c.h.b16 %v658
    %v3696 = vunpack.c.l.b16 %v659
    %v3697 = vunpack.c.h.b16 %v659
    %v3698 = vunpack.c.l.b16 %v660
    %v3699 = vunpack.c.h.b16 %v660
    %v3700 = vunpack.c.l.b16 %v661
    %v3701 = vunpack.c.h.b16 %v661
    %v3702 = vunpack.c.l.b16 %v662
    %v3703 = vunpack.c.h.b16 %v662
    %v3704 = vunpack.c.l.b16 %v663
    %v3705 = vunpack.c.h.b16 %v663
    %v3706 = vunpack.c.l.b16 %v664
    %v3707 = vunpack.c.h.b16 %v664
    %v3708 = vunpack.c.l.b16 %v665
    %v3709 = vunpack.c.h.b16 %v665
    %v3710 = vunpack.c.l.b16 %v666
    %v3711 = vunpack.c.h.b16 %v666
    %v3712 = vunpack.c.l.b16 %v667
    %v3713 = vunpack.c.h.b16 %v667
    %v3714 = vunpack.c.l.b16 %v668
    %v3715 = vunpack.c.h.b16 %v668
    %v3716 = vunpack.c.l.b16 %v669
    %v3717 = vunpack.c.h.b16 %v669
    %v3718 = vunpack.c.l.b16 %v670
    %v3719 = vunpack.c.h.b16 %v670
    %v3720 = vunpack.c.l.b16 %v671
    %v3721 = vunpack.c.h.b16 %v671
    %v3722 = vunpack.c.l.b16 %v672
    %v3723 = vunpack.c.h.b16 %v672
    %v3724 = vunpack.c.l.b16 %v673
    %v3725 = vunpack.c.h.b16 %v673
    %v3726 = vunpack.c.l.b16 %v674
    %v3727 = vunpack.c.h.b16 %v674
    %v3728 = vunpack.c.l.b16 %v675
    %v3729 = vunpack.c.h.b16 %v675
    %v3730 = vunpack.c.l.b16 %v676
    %v3731 = vunpack.c.h.b16 %v676
    %v3732 = vunpack.c.l.b16 %v677
    %v3733 = vunpack.c.h.b16 %v677
    %v3734 = vunpack.c.l.b16 %v678
    %v3735 = vunpack.c.h.b16 %v678
    %v3736 = vunpack.c.l.b16 %v679
    %v3737 = vunpack.c.h.b16 %v679
    %v3738 = vunpack.c.l.b16 %v680
    %v3739 = vunpack.c.h.b16 %v680
    %v3740 = vunpack.c.l.b16 %v681
    %v3741 = vunpack.c.h.b16 %v681
    %v3742 = vunpack.c.l.b16 %v682
    %v3743 = vunpack.c.h.b16 %v682
    %v3744 = vunpack.c.l.b16 %v683
    %v3745 = vunpack.c.h.b16 %v683
    %v3746 = vunpack.c.l.b16 %v684
    %v3747 = vunpack.c.h.b16 %v684
    %v3748 = vunpack.c.l.b16 %v685
    %v3749 = vunpack.c.h.b16 %v685
    %v3750 = vunpack.c.l.b16 %v686
    %v3751 = vunpack.c.h.b16 %v686
    %v3752 = vunpack.c.l.b16 %v687
    %v3753 = vunpack.c.h.b16 %v687
    %v3754 = vunpack.c.l.b16 %v688
    %v3755 = vunpack.c.h.b16 %v688
    %v3756 = vunpack.c.l.b16 %v689
    %v3757 = vunpack.c.h.b16 %v689
    %v3758 = vunpack.c.l.b16 %v690
    %v3759 = vunpack.c.h.b16 %v690
    %v3760 = vunpack.c.l.b16 %v691
    %v3761 = vunpack.c.h.b16 %v691
    %v3762 = vunpack.c.l.b16 %v692
    %v3763 = vunpack.c.h.b16 %v692
    %v3764 = vunpack.c.l.b16 %v693
    %v3765 = vunpack.c.h.b16 %v693
    %v3766 = vunpack.c.l.b16 %v694
    %v3767 = vunpack.c.h.b16 %v694
    %v3768 = vunpack.c.l.b16 %v695
    %v3769 = vunpack.c.h.b16 %v695
    %v3770 = vunpack.c.l.b16 %v696
    %v3771 = vunpack.c.h.b16 %v696
    %v3772 = vunpack.c.l.b16 %v697
    %v3773 = vunpack.c.h.b16 %v697
    %v3774 = vunpack.c.l.b16 %v698
    %v3775 = vunpack.c.h.b16 %v698
    %v3776 = vunpack.c.l.b16 %v699
    %v3777 = vunpack.c.h.b16 %v699
    %v3778 = vunpack.c.l.b16 %v700
    %v3779 = vunpack.c.h.b16 %v700
    %v3780 = vunpack.c.l.b16 %v701
    %v3781 = vunpack.c.h.b16 %v701
    %v3782 = vunpack.c.l.b16 %v702
    %v3783 = vunpack.c.h.b16 %v702
    %v3784 = vunpack.c.l.b16 %v703
    %v3785 = vunpack.c.h.b16 %v703
    %v3786 = vunpack.c.l.b16 %v704
    %v3787 = vunpack.c.h.b16 %v704
    %v3788 = vunpack.c.l.b16 %v705
    %v3789 = vunpack.c.h.b16 %v705
    %v3790 = vunpack.c.l.b16 %v706
    %v3791 = vunpack.c.h.b16 %v706
    %v3792 = vunpack.c.l.b16 %v707
    %v3793 = vunpack.c.h.b16 %v707
    %v3794 = vunpack.c.l.b16 %v708
    %v3795 = vunpack.c.h.b16 %v708
    %v3796 = vunpack.c.l.b16 %v709
    %v3797 = vunpack.c.h.b16 %v709
    %v3798 = vunpack.c.l.b16 %v710
    %v3799 = vunpack.c.h.b16 %v710
    %v3800 = vunpack.c.l.b16 %v711
    %v3801 = vunpack.c.h.b16 %v711
    %v3802 = vunpack.c.l.b16 %v712
    %v3803 = vunpack.c.h.b16 %v712
    %v3804 = vunpack.c.l.b16 %v713
    %v3805 = vunpack.c.h.b16 %v713
    %v3806 = vunpack.c.l.b16 %v714
    %v3807 = vunpack.c.h.b16 %v714
    %v3808 = vunpack.c.l.b16 %v715
    %v3809 = vunpack.c.h.b16 %v715
    %v3810 = vunpack.c.l.b16 %v716
    %v3811 = vunpack.c.h.b16 %v716
    %v3812 = vunpack.c.l.b16 %v717
    %v3813 = vunpack.c.h.b16 %v717
    %v3814 = vunpack.c.l.b16 %v718
    %v3815 = vunpack.c.h.b16 %v718
    %v3816 = vunpack.c.l.b16 %v719
    %v3817 = vunpack.c.h.b16 %v719
    %v3818 = vunpack.c.l.b16 %v720
    %v3819 = vunpack.c.h.b16 %v720
    %v3820 = vunpack.c.l.b16 %v721
    %v3821 = vunpack.c.h.b16 %v721
    %v3822 = vunpack.c.l.b16 %v722
    %v3823 = vunpack.c.h.b16 %v722
    %v3824 = vunpack.c.l.b16 %v723
    %v3825 = vunpack.c.h.b16 %v723
    %v3826 = vunpack.c.l.b16 %v724
    %v3827 = vunpack.c.h.b16 %v724
    %v3828 = vunpack.c.l.b16 %v725
    %v3829 = vunpack.c.h.b16 %v725
    %v3830 = vunpack.c.l.b16 %v726
    %v3831 = vunpack.c.h.b16 %v726
    %v3832 = vunpack.c.l.b16 %v727
    %v3833 = vunpack.c.h.b16 %v727
    %v3834 = vunpack.c.l.b16 %v728
    %v3835 = vunpack.c.h.b16 %v728
    %v3836 = vunpack.c.l.b16 %v729
    %v3837 = vunpack.c.h.b16 %v729
    %v3838 = vunpack.c.l.b16 %v730
    %v3839 = vunpack.c.h.b16 %v730
    %v3840 = vunpack.c.l.b16 %v731
    %v3841 = vunpack.c.h.b16 %v731
    %v3842 = vunpack.c.l.b16 %v732
    %v3843 = vunpack.c.h.b16 %v732
    %v3844 = vunpack.c.l.b16 %v733
    %v3845 = vunpack.c.h.b16 %v733
    %v3846 = vunpack.c.l.b16 %v734
    %v3847 = vunpack.c.h.b16 %v734
    %v3848 = vunpack.c.l.b16 %v735
    %v3849 = vunpack.c.h.b16 %v735
    %v3850 = vunpack.c.l.b16 %v736
    %v3851 = vunpack.c.h.b16 %v736
    %v3852 = vunpack.c.l.b16 %v737
    %v3853 = vunpack.c.h.b16 %v737
    %v3854 = vunpack.c.l.b16 %v738
    %v3855 = vunpack.c.h.b16 %v738
    %v3856 = vunpack.c.l.b16 %v739
    %v3857 = vunpack.c.h.b16 %v739
    %v3858 = vunpack.c.l.b16 %v740
    %v3859 = vunpack.c.h.b16 %v740
    %v3860 = vunpack.c.l.b16 %v741
    %v3861 = vunpack.c.h.b16 %v741
    %v3862 = vunpack.c.l.b16 %v742
    %v3863 = vunpack.c.h.b16 %v742
    %v3864 = vunpack.c.l.b16 %v743
    %v3865 = vunpack.c.h.b16 %v743
    %v3866 = vunpack.c.l.b16 %v744
    %v3867 = vunpack.c.h.b16 %v744
    %v3868 = vunpack.c.l.b16 %v745
    %v3869 = vunpack.c.h.b16 %v745
    %v3870 = vunpack.c.l.b16 %v746
    %v3871 = vunpack.c.h.b16 %v746
    %v3872 = vunpack.c.l.b16 %v747
    %v3873 = vunpack.c.h.b16 %v747
    %v3874 = vunpack.c.l.b16 %v748
    %v3875 = vunpack.c.h.b16 %v748
    %v3876 = vunpack.c.l.b16 %v749
    %v3877 = vunpack.c.h.b16 %v749
    %v3878 = vunpack.c.l.b16 %v750
    %v3879 = vunpack.c.h.b16 %v750
    %v3880 = vunpack.c.l.b16 %v751
    %v3881 = vunpack.c.h.b16 %v751
    %v3882 = vunpack.c.l.b16 %v752
    %v3883 = vunpack.c.h.b16 %v752
    %v3884 = vunpack.c.l.b16 %v753
    %v3885 = vunpack.c.h.b16 %v753
    %v3886 = vunpack.c.l.b16 %v754
    %v3887 = vunpack.c.h.b16 %v754
    %v3888 = vunpack.c.l.b16 %v755
    %v3889 = vunpack.c.h.b16 %v755
    %v3890 = vunpack.c.l.b16 %v756
    %v3891 = vunpack.c.h.b16 %v756
    %v3892 = vunpack.c.l.b16 %v757
    %v3893 = vunpack.c.h.b16 %v757
    %v3894 = vunpack.c.l.b16 %v758
    %v3895 = vunpack.c.h.b16 %v758
    %v3896 = vunpack.c.l.b16 %v759
    %v3897 = vunpack.c.h.b16 %v759
    %v3898 = vunpack.c.l.b16 %v760
    %v3899 = vunpack.c.h.b16 %v760
    %v3900 = vunpack.c.l.b16 %v761
    %v3901 = vunpack.c.h.b16 %v761
    %v3902 = vunpack.c.l.b16 %v762
    %v3903 = vunpack.c.h.b16 %v762
    %v3904 = vunpack.c.l.b16 %v763
    %v3905 = vunpack.c.h.b16 %v763
    %v3906 = vunpack.c.l.b16 %v764
    %v3907 = vunpack.c.h.b16 %v764
    %v3908 = vunpack.c.l.b16 %v765
    %v3909 = vunpack.c.h.b16 %v765
    %v3910 = vunpack.c.l.b16 %v766
    %v3911 = vunpack.c.h.b16 %v766
    %v3912 = vunpack.c.l.b16 %v767
    %v3913 = vunpack.c.h.b16 %v767
    %v3914 = vunpack.c.l.b16 %v768
    %v3915 = vunpack.c.h.b16 %v768
    %v3916 = vunpack.c.l.b16 %v769
    %v3917 = vunpack.c.h.b16 %v769
    %v3918 = vunpack.c.l.b16 %v770
    %v3919 = vunpack.c.h.b16 %v770
    %v3920 = vunpack.c.l.b16 %v771
    %v3921 = vunpack.c.h.b16 %v771
    %v3922 = vunpack.c.l.b16 %v772
    %v3923 = vunpack.c.h.b16 %v772
    %v3924 = vunpack.c.l.b16 %v773
    %v3925 = vunpack.c.h.b16 %v773
    %v3926 = vunpack.c.l.b16 %v774
    %v3927 = vunpack.c.h.b16 %v774
    %v3928 = vunpack.c.l.b16 %v775
    %v3929 = vunpack.c.h.b16 %v775
    %v3930 = vunpack.c.l.b16 %v776
    %v3931 = vunpack.c.h.b16 %v776
    %v3932 = vunpack.c.l.b16 %v777
    %v3933 = vunpack.c.h.b16 %v777
    %v3934 = vunpack.c.l.b16 %v778
    %v3935 = vunpack.c.h.b16 %v778
    %v3936 = vunpack.c.l.b16 %v779
    %v3937 = vunpack.c.h.b16 %v779
    %v3938 = vunpack.c.l.b16 %v780
    %v3939 = vunpack.c.h.b16 %v780
    %v3940 = vunpack.c.l.b16 %v781
    %v3941 = vunpack.c.h.b16 %v781
    %v3942 = vunpack.c.l.b16 %v782
    %v3943 = vunpack.c.h.b16 %v782
    %v3944 = vunpack.c.l.b16 %v783
    %v3945 = vunpack.c.h.b16 %v783
    %v3946 = vunpack.c.l.b16 %v784
    %v3947 = vunpack.c.h.b16 %v784
    %v3948 = vunpack.c.l.b16 %v785
    %v3949 = vunpack.c.h.b16 %v785
    %v3950 = vunpack.c.l.b16 %v786
    %v3951 = vunpack.c.h.b16 %v786
    %v3952 = vunpack.c.l.b16 %v787
    %v3953 = vunpack.c.h.b16 %v787
    %v3954 = vunpack.c.l.b16 %v788
    %v3955 = vunpack.c.h.b16 %v788
    %v3956 = vunpack.c.l.b16 %v789
    %v3957 = vunpack.c.h.b16 %v789
    %v3958 = vunpack.c.l.b16 %v790
    %v3959 = vunpack.c.h.b16 %v790
    %v3960 = vunpack.c.l.b16 %v791
    %v3961 = vunpack.c.h.b16 %v791
    %v3962 = vunpack.c.l.b16 %v792
    %v3963 = vunpack.c.h.b16 %v792
    %v3964 = vunpack.c.l.b16 %v793
    %v3965 = vunpack.c.h.b16 %v793
    %v3966 = vunpack.c.l.b16 %v794
    %v3967 = vunpack.c.h.b16 %v794
    %v3968 = vunpack.c.l.b16 %v795
    %v3969 = vunpack.c.h.b16 %v795
    %v3970 = vunpack.c.l.b16 %v796
    %v3971 = vunpack.c.h.b16 %v796
    %v3972 = vunpack.c.l.b16 %v797
    %v3973 = vunpack.c.h.b16 %v797
    %v3974 = vunpack.c.l.b16 %v798
    %v3975 = vunpack.c.h.b16 %v798
    %v3976 = vunpack.c.l.b16 %v799
    %v3977 = vunpack.c.h.b16 %v799
    %v3978 = vunpack.c.l.b16 %v800
    %v3979 = vunpack.c.h.b16 %v800
    %v3980 = vunpack.c.l.b16 %v801
    %v3981 = vunpack.c.h.b16 %v801
    %v3982 = vunpack.c.l.b16 %v802
    %v3983 = vunpack.c.h.b16 %v802
    %v3984 = vunpack.c.l.b16 %v803
    %v3985 = vunpack.c.h.b16 %v803
    %v3986 = vunpack.c.l.b16 %v804
    %v3987 = vunpack.c.h.b16 %v804
    %v3988 = vunpack.c.l.b16 %v805
    %v3989 = vunpack.c.h.b16 %v805
    %v3990 = vunpack.c.l.b16 %v806
    %v3991 = vunpack.c.h.b16 %v806
    %v3992 = vunpack.c.l.b16 %v807
    %v3993 = vunpack.c.h.b16 %v807
    %v3994 = vunpack.c.l.b16 %v808
    %v3995 = vunpack.c.h.b16 %v808
    %v3996 = vunpack.c.l.b16 %v809
    %v3997 = vunpack.c.h.b16 %v809
    %v3998 = vunpack.c.l.b16 %v810
    %v3999 = vunpack.c.h.b16 %v810
    %v4000 = vunpack.c.l.b16 %v811
    %v4001 = vunpack.c.h.b16 %v811
    %v4002 = vunpack.c.l.b16 %v812
    %v4003 = vunpack.c.h.b16 %v812
    %v4004 = vunpack.c.l.b16 %v813
    %v4005 = vunpack.c.h.b16 %v813
    %v4006 = vunpack.c.l.b16 %v814
    %v4007 = vunpack.c.h.b16 %v814
    %v4008 = vunpack.c.l.b16 %v815
    %v4009 = vunpack.c.h.b16 %v815
    %v4010 = vunpack.c.l.b16 %v816
    %v4011 = vunpack.c.h.b16 %v816
    %v4012 = vunpack.c.l.b16 %v817
    %v4013 = vunpack.c.h.b16 %v817
    %v4014 = vunpack.c.l.b16 %v818
    %v4015 = vunpack.c.h.b16 %v818
    %v4016 = vunpack.c.l.b16 %v819
    %v4017 = vunpack.c.h.b16 %v819
    %v4018 = vunpack.c.l.b16 %v820
    %v4019 = vunpack.c.h.b16 %v820
    %v4020 = vunpack.c.l.b16 %v821
    %v4021 = vunpack.c.h.b16 %v821
    %v4022 = vunpack.c.l.b16 %v822
    %v4023 = vunpack.c.h.b16 %v822
    %v4024 = vunpack.c.l.b16 %v823
    %v4025 = vunpack.c.h.b16 %v823
    %v4026 = vunpack.c.l.b16 %v824
    %v4027 = vunpack.c.h.b16 %v824
    %v4028 = vunpack.c.l.b16 %v825
    %v4029 = vunpack.c.h.b16 %v825
    %v4030 = vunpack.c.l.b16 %v826
    %v4031 = vunpack.c.h.b16 %v826
    %v4032 = vunpack.c.l.b16 %v827
    %v4033 = vunpack.c.h.b16 %v827
    %v4034 = vunpack.c.l.b16 %v828
    %v4035 = vunpack.c.h.b16 %v828
    %v4036 = vunpack.c.l.b16 %v829
    %v4037 = vunpack.c.h.b16 %v829
    %v4038 = vunpack.c.l.b16 %v830
    %v4039 = vunpack.c.h.b16 %v830
    %v4040 = vunpack.c.l.b16 %v831
    %v4041 = vunpack.c.h.b16 %v831
    %v4042 = vunpack.c.l.b16 %v832
    %v4043 = vunpack.c.h.b16 %v832
    %v4044 = vunpack.c.l.b16 %v833
    %v4045 = vunpack.c.h.b16 %v833
    %v4046 = vunpack.c.l.b16 %v834
    %v4047 = vunpack.c.h.b16 %v834
    %v4048 = vunpack.c.l.b16 %v835
    %v4049 = vunpack.c.h.b16 %v835
    %v4050 = vunpack.c.l.b16 %v836
    %v4051 = vunpack.c.h.b16 %v836
    %v4052 = vunpack.c.l.b16 %v837
    %v4053 = vunpack.c.h.b16 %v837
    %v4054 = vunpack.c.l.b16 %v838
    %v4055 = vunpack.c.h.b16 %v838
    %v4056 = vunpack.c.l.b16 %v839
    %v4057 = vunpack.c.h.b16 %v839
    %v4058 = vunpack.c.l.b16 %v840
    %v4059 = vunpack.c.h.b16 %v840
    %v4060 = vunpack.c.l.b16 %v841
    %v4061 = vunpack.c.h.b16 %v841
    %v4062 = vunpack.c.l.b16 %v842
    %v4063 = vunpack.c.h.b16 %v842
    %v4064 = vunpack.c.l.b16 %v843
    %v4065 = vunpack.c.h.b16 %v843
    %v4066 = vunpack.c.l.b16 %v844
    %v4067 = vunpack.c.h.b16 %v844
    %v4068 = vunpack.c.l.b16 %v845
    %v4069 = vunpack.c.h.b16 %v845
    %v4070 = vunpack.c.l.b16 %v846
    %v4071 = vunpack.c.h.b16 %v846
    %v4072 = vunpack.c.l.b16 %v847
    %v4073 = vunpack.c.h.b16 %v847
    %v4074 = vunpack.c.l.b16 %v848
    %v4075 = vunpack.c.h.b16 %v848
    %v4076 = vunpack.c.l.b16 %v849
    %v4077 = vunpack.c.h.b16 %v849
    %v4078 = vunpack.c.l.b16 %v850
    %v4079 = vunpack.c.h.b16 %v850
    %v4080 = vunpack.c.l.b16 %v851
    %v4081 = vunpack.c.h.b16 %v851
    %v4082 = vunpack.c.l.b16 %v852
    %v4083 = vunpack.c.h.b16 %v852
    %v4084 = vunpack.c.l.b16 %v853
    %v4085 = vunpack.c.h.b16 %v853
    %v4086 = vunpack.c.l.b16 %v854
    %v4087 = vunpack.c.h.b16 %v854
    %v4088 = vunpack.c.l.b16 %v855
    %v4089 = vunpack.c.h.b16 %v855
    %v4090 = vunpack.c.l.b16 %v856
    %v4091 = vunpack.c.h.b16 %v856
    %v4092 = vunpack.c.l.b16 %v857
    %v4093 = vunpack.c.h.b16 %v857
    %v4094 = vunpack.c.l.b16 %v858
    %v4095 = vunpack.c.h.b16 %v858
    %v4096 = vunpack.c.l.b16 %v859
    %v4097 = vunpack.c.h.b16 %v859
    %v4098 = vunpack.c.l.b16 %v860
    %v4099 = vunpack.c.h.b16 %v860
    %v4100 = vunpack.c.l.b16 %v861
    %v4101 = vunpack.c.h.b16 %v861
    %v4102 = vunpack.c.l.b16 %v862
    %v4103 = vunpack.c.h.b16 %v862
    %v4104 = vunpack.c.l.b16 %v863
    %v4105 = vunpack.c.h.b16 %v863
    %v4106 = vunpack.c.l.b16 %v864
    %v4107 = vunpack.c.h.b16 %v864
    %v4108 = vunpack.c.l.b16 %v865
    %v4109 = vunpack.c.h.b16 %v865
    %v4110 = vunpack.c.l.b16 %v866
    %v4111 = vunpack.c.h.b16 %v866
    %v4112 = vunpack.c.l.b16 %v867
    %v4113 = vunpack.c.h.b16 %v867
    %v4114 = vunpack.c.l.b16 %v868
    %v4115 = vunpack.c.h.b16 %v868
    %v4116 = vunpack.c.l.b16 %v869
    %v4117 = vunpack.c.h.b16 %v869
    %v4118 = vunpack.c.l.b16 %v870
    %v4119 = vunpack.c.h.b16 %v870
    %v4120 = vunpack.c.l.b16 %v871
    %v4121 = vunpack.c.h.b16 %v871
    %v4122 = vunpack.c.l.b16 %v872
    %v4123 = vunpack.c.h.b16 %v872
    %v4124 = vunpack.c.l.b16 %v873
    %v4125 = vunpack.c.h.b16 %v873
    %v4126 = vunpack.c.l.b16 %v874
    %v4127 = vunpack.c.h.b16 %v874
    %v4128 = vunpack.c.l.b16 %v875
    %v4129 = vunpack.c.h.b16 %v875
    %v4130 = vunpack.c.l.b16 %v876
    %v4131 = vunpack.c.h.b16 %v876
    %v4132 = vunpack.c.l.b16 %v877
    %v4133 = vunpack.c.h.b16 %v877
    %v4134 = vunpack.c.l.b16 %v878
    %v4135 = vunpack.c.h.b16 %v878
    %v4136 = vunpack.c.l.b16 %v879
    %v4137 = vunpack.c.h.b16 %v879
    %v4138 = vunpack.c.l.b16 %v880
    %v4139 = vunpack.c.h.b16 %v880
    %v4140 = vunpack.c.l.b16 %v881
    %v4141 = vunpack.c.h.b16 %v881
    %v4142 = vunpack.c.l.b16 %v882
    %v4143 = vunpack.c.h.b16 %v882
    %v4144 = vunpack.c.l.b16 %v883
    %v4145 = vunpack.c.h.b16 %v883
    %v4146 = vunpack.c.l.b16 %v884
    %v4147 = vunpack.c.h.b16 %v884
    %v4148 = vunpack.c.l.b16 %v885
    %v4149 = vunpack.c.h.b16 %v885
    %v4150 = vunpack.c.l.b16 %v886
    %v4151 = vunpack.c.h.b16 %v886
    %v4152 = vunpack.c.l.b16 %v887
    %v4153 = vunpack.c.h.b16 %v887
    %v4154 = vunpack.c.l.b16 %v888
    %v4155 = vunpack.c.h.b16 %v888
    %v4156 = vunpack.c.l.b16 %v889
    %v4157 = vunpack.c.h.b16 %v889
    %v4158 = vunpack.c.l.b16 %v890
    %v4159 = vunpack.c.h.b16 %v890
    %v4160 = vunpack.c.l.b16 %v891
    %v4161 = vunpack.c.h.b16 %v891
    %v4162 = vunpack.c.l.b16 %v892
    %v4163 = vunpack.c.h.b16 %v892
    %v4164 = vunpack.c.l.b16 %v893
    %v4165 = vunpack.c.h.b16 %v893
    %v4166 = vunpack.c.l.b16 %v894
    %v4167 = vunpack.c.h.b16 %v894
    %v4168 = vunpack.c.l.b16 %v895
    %v4169 = vunpack.c.h.b16 %v895
    %v4170 = vunpack.c.l.b16 %v896
    %v4171 = vunpack.c.h.b16 %v896
    %v4172 = vunpack.c.l.b16 %v897
    %v4173 = vunpack.c.h.b16 %v897
    %v4174 = vunpack.c.l.b16 %v898
    %v4175 = vunpack.c.h.b16 %v898
    %v4176 = vunpack.c.l.b16 %v899
    %v4177 = vunpack.c.h.b16 %v899
    %v4178 = vunpack.c.l.b16 %v900
    %v4179 = vunpack.c.h.b16 %v900
    %v4180 = vunpack.c.l.b16 %v901
    %v4181 = vunpack.c.h.b16 %v901
    %v4182 = vunpack.c.l.b16 %v902
    %v4183 = vunpack.c.h.b16 %v902
    %v4184 = vunpack.c.l.b16 %v903
    %v4185 = vunpack.c.h.b16 %v903
    %v4186 = vunpack.c.l.b16 %v904
    %v4187 = vunpack.c.h.b16 %v904
    %v4188 = vunpack.c.l.b16 %v905
    %v4189 = vunpack.c.h.b16 %v905
    %v4190 = vunpack.c.l.b16 %v906
    %v4191 = vunpack.c.h.b16 %v906
    %v4192 = vunpack.c.l.b16 %v907
    %v4193 = vunpack.c.h.b16 %v907
    %v4194 = vunpack.c.l.b16 %v908
    %v4195 = vunpack.c.h.b16 %v908
    %v4196 = vunpack.c.l.b16 %v909
    %v4197 = vunpack.c.h.b16 %v909
    %v4198 = vunpack.c.l.b16 %v910
    %v4199 = vunpack.c.h.b16 %v910
    %v4200 = vunpack.c.l.b16 %v911
    %v4201 = vunpack.c.h.b16 %v911
    %v4202 = vunpack.c.l.b16 %v912
    %v4203 = vunpack.c.h.b16 %v912
    %v4204 = vunpack.c.l.b16 %v913
    %v4205 = vunpack.c.h.b16 %v913
    %v4206 = vunpack.c.l.b16 %v914
    %v4207 = vunpack.c.h.b16 %v914
    %v4208 = vunpack.c.l.b16 %v915
    %v4209 = vunpack.c.h.b16 %v915
    %v4210 = vunpack.c.l.b16 %v916
    %v4211 = vunpack.c.h.b16 %v916
    %v4212 = vunpack.c.l.b16 %v917
    %v4213 = vunpack.c.h.b16 %v917
    %v4214 = vunpack.c.l.b16 %v918
    %v4215 = vunpack.c.h.b16 %v918
    %v4216 = vunpack.c.l.b16 %v919
    %v4217 = vunpack.c.h.b16 %v919
    %v4218 = vunpack.c.l.b16 %v920
    %v4219 = vunpack.c.h.b16 %v920
    %v4220 = vunpack.c.l.b16 %v921
    %v4221 = vunpack.c.h.b16 %v921
    %v4222 = vunpack.c.l.b16 %v922
    %v4223 = vunpack.c.h.b16 %v922
    %v4224 = vunpack.c.l.b16 %v923
    %v4225 = vunpack.c.h.b16 %v923
    %v4226 = vunpack.c.l.b16 %v924
    %v4227 = vunpack.c.h.b16 %v924
    %v4228 = vunpack.c.l.b16 %v925
    %v4229 = vunpack.c.h.b16 %v925
    %v4230 = vunpack.c.l.b16 %v926
    %v4231 = vunpack.c.h.b16 %v926
    %v4232 = vunpack.c.l.b16 %v927
    %v4233 = vunpack.c.h.b16 %v927
    %v4234 = vunpack.c.l.b16 %v928
    %v4235 = vunpack.c.h.b16 %v928
    %v4236 = vunpack.c.l.b16 %v929
    %v4237 = vunpack.c.h.b16 %v929
    %v4238 = vunpack.c.l.b16 %v930
    %v4239 = vunpack.c.h.b16 %v930
    %v4240 = vunpack.c.l.b16 %v931
    %v4241 = vunpack.c.h.b16 %v931
    %v4242 = vunpack.c.l.b16 %v932
    %v4243 = vunpack.c.h.b16 %v932
    %v4244 = vunpack.c.l.b16 %v933
    %v4245 = vunpack.c.h.b16 %v933
    %v4246 = vunpack.c.l.b16 %v934
    %v4247 = vunpack.c.h.b16 %v934
    %v4248 = vunpack.c.l.b16 %v935
    %v4249 = vunpack.c.h.b16 %v935
    %v4250 = vunpack.c.l.b16 %v936
    %v4251 = vunpack.c.h.b16 %v936
    %v4252 = vunpack.c.l.b16 %v937
    %v4253 = vunpack.c.h.b16 %v937
    %v4254 = vunpack.c.l.b16 %v938
    %v4255 = vunpack.c.h.b16 %v938
    %v4256 = vunpack.c.l.b16 %v939
    %v4257 = vunpack.c.h.b16 %v939
    %v4258 = vunpack.c.l.b16 %v940
    %v4259 = vunpack.c.h.b16 %v940
    %v4260 = vunpack.c.l.b16 %v941
    %v4261 = vunpack.c.h.b16 %v941
    %v4262 = vunpack.c.l.b16 %v942
    %v4263 = vunpack.c.h.b16 %v942
    %v4264 = vunpack.c.l.b16 %v943
    %v4265 = vunpack.c.h.b16 %v943
    %v4266 = vunpack.c.l.b16 %v944
    %v4267 = vunpack.c.h.b16 %v944
    %v4268 = vunpack.c.l.b16 %v945
    %v4269 = vunpack.c.h.b16 %v945
    %v4270 = vunpack.c.l.b16 %v946
    %v4271 = vunpack.c.h.b16 %v946
    %v4272 = vunpack.c.l.b16 %v947
    %v4273 = vunpack.c.h.b16 %v947
    %v4274 = vunpack.c.l.b16 %v948
    %v4275 = vunpack.c.h.b16 %v948
    %v4276 = vunpack.c.l.b16 %v949
    %v4277 = vunpack.c.h.b16 %v949
    %v4278 = vunpack.c.l.b16 %v950
    %v4279 = vunpack.c.h.b16 %v950
    %v4280 = vunpack.c.l.b16 %v951
    %v4281 = vunpack.c.h.b16 %v951
    %v4282 = vunpack.c.l.b16 %v952
    %v4283 = vunpack.c.h.b16 %v952
    %v4284 = vunpack.c.l.b16 %v953
    %v4285 = vunpack.c.h.b16 %v953
    %v4286 = vunpack.c.l.b16 %v954
    %v4287 = vunpack.c.h.b16 %v954
    %v4288 = vunpack.c.l.b16 %v955
    %v4289 = vunpack.c.h.b16 %v955
    %v4290 = vunpack.c.l.b16 %v956
    %v4291 = vunpack.c.h.b16 %v956
    %v4292 = vunpack.c.l.b16 %v957
    %v4293 = vunpack.c.h.b16 %v957
    %v4294 = vunpack.c.l.b16 %v958
    %v4295 = vunpack.c.h.b16 %v958
    %v4296 = vunpack.c.l.b16 %v959
    %v4297 = vunpack.c.h.b16 %v959
    %v4298 = vunpack.c.l.b16 %v960
    %v4299 = vunpack.c.h.b16 %v960
    %v4300 = vunpack.c.l.b16 %v961
    %v4301 = vunpack.c.h.b16 %v961
    %v4302 = vunpack.c.l.b16 %v962
    %v4303 = vunpack.c.h.b16 %v962
    %v4304 = vunpack.c.l.b16 %v963
    %v4305 = vunpack.c.h.b16 %v963
    %v4306 = vunpack.c.l.b16 %v964
    %v4307 = vunpack.c.h.b16 %v964
    %v4308 = vunpack.c.l.b16 %v965
    %v4309 = vunpack.c.h.b16 %v965
    %v4310 = vunpack.c.l.b16 %v966
    %v4311 = vunpack.c.h.b16 %v966
    %v4312 = vunpack.c.l.b16 %v967
    %v4313 = vunpack.c.h.b16 %v967
    %v4314 = vunpack.c.l.b16 %v968
    %v4315 = vunpack.c.h.b16 %v968
    %v4316 = vunpack.c.l.b16 %v969
    %v4317 = vunpack.c.h.b16 %v969
    %v4318 = vunpack.c.l.b16 %v970
    %v4319 = vunpack.c.h.b16 %v970
    %v4320 = vunpack.c.l.b16 %v971
    %v4321 = vunpack.c.h.b16 %v971
    %v4322 = vunpack.c.l.b16 %v972
    %v4323 = vunpack.c.h.b16 %v972
    %v4324 = vunpack.c.l.b16 %v973
    %v4325 = vunpack.c.h.b16 %v973
    %v4326 = vunpack.c.l.b16 %v974
    %v4327 = vunpack.c.h.b16 %v974
    %v4328 = vunpack.c.l.b16 %v975
    %v4329 = vunpack.c.h.b16 %v975
    %v4330 = vunpack.c.l.b16 %v976
    %v4331 = vunpack.c.h.b16 %v976
    %v4332 = vunpack.c.l.b16 %v977
    %v4333 = vunpack.c.h.b16 %v977
    %v4334 = vunpack.c.l.b16 %v978
    %v4335 = vunpack.c.h.b16 %v978
    %v4336 = vunpack.c.l.b16 %v979
    %v4337 = vunpack.c.h.b16 %v979
    %v4338 = vunpack.c.l.b16 %v980
    %v4339 = vunpack.c.h.b16 %v980
    %v4340 = vunpack.c.l.b16 %v981
    %v4341 = vunpack.c.h.b16 %v981
    %v4342 = vunpack.c.l.b16 %v982
    %v4343 = vunpack.c.h.b16 %v982
    %v4344 = vunpack.c.l.b16 %v983
    %v4345 = vunpack.c.h.b16 %v983
    %v4346 = vunpack.c.l.b16 %v984
    %v4347 = vunpack.c.h.b16 %v984
    %v4348 = vunpack.c.l.b16 %v985
    %v4349 = vunpack.c.h.b16 %v985
    %v4350 = vunpack.c.l.b16 %v986
    %v4351 = vunpack.c.h.b16 %v986
    %v4352 = vunpack.c.l.b16 %v987
    %v4353 = vunpack.c.h.b16 %v987
    %v4354 = vunpack.c.l.b16 %v988
    %v4355 = vunpack.c.h.b16 %v988
    %v4356 = vunpack.c.l.b16 %v989
    %v4357 = vunpack.c.h.b16 %v989
    %v4358 = vunpack.c.l.b16 %v990
    %v4359 = vunpack.c.h.b16 %v990
    %v4360 = vunpack.c.l.b16 %v991
    %v4361 = vunpack.c.h.b16 %v991
    %v4362 = vunpack.c.l.b16 %v992
    %v4363 = vunpack.c.h.b16 %v992
    %v4364 = vunpack.c.l.b16 %v993
    %v4365 = vunpack.c.h.b16 %v993
    %v4366 = vunpack.c.l.b16 %v994
    %v4367 = vunpack.c.h.b16 %v994
    %v4368 = vunpack.c.l.b16 %v995
    %v4369 = vunpack.c.h.b16 %v995
    %v4370 = vunpack.c.l.b16 %v996
    %v4371 = vunpack.c.h.b16 %v996
    %v4372 = vunpack.c.l.b16 %v997
    %v4373 = vunpack.c.h.b16 %v997
    %v4374 = vunpack.c.l.b16 %v998
    %v4375 = vunpack.c.h.b16 %v998
    %v4376 = vunpack.c.l.b16 %v999
    %v4377 = vunpack.c.h.b16 %v999
    %v4378 = vunpack.c.l.b16 %v1000
    %v4379 = vunpack.c.h.b16 %v1000
    %v4380 = vunpack.c.l.b16 %v1001
    %v4381 = vunpack.c.h.b16 %v1001
    %v4382 = vunpack.c.l.b16 %v1002
    %v4383 = vunpack.c.h.b16 %v1002
    %v4384 = vunpack.c.l.b16 %v1003
    %v4385 = vunpack.c.h.b16 %v1003
    %v4386 = vunpack.c.l.b16 %v1004
    %v4387 = vunpack.c.h.b16 %v1004
    %v4388 = vunpack.c.l.b16 %v1005
    %v4389 = vunpack.c.h.b16 %v1005
    %v4390 = vunpack.c.l.b16 %v1006
    %v4391 = vunpack.c.h.b16 %v1006
    %v4392 = vunpack.c.l.b16 %v1007
    %v4393 = vunpack.c.h.b16 %v1007
    %v4394 = vunpack.c.l.b16 %v1008
    %v4395 = vunpack.c.h.b16 %v1008
    %v4396 = vunpack.c.l.b16 %v1009
    %v4397 = vunpack.c.h.b16 %v1009
    %v4398 = vunpack.c.l.b16 %v1010
    %v4399 = vunpack.c.h.b16 %v1010
    %v4400 = vunpack.c.l.b16 %v1011
    %v4401 = vunpack.c.h.b16 %v1011
    %v4402 = vunpack.c.l.b16 %v1012
    %v4403 = vunpack.c.h.b16 %v1012
    %v4404 = vunpack.c.l.b16 %v1013
    %v4405 = vunpack.c.h.b16 %v1013
    %v4406 = vunpack.c.l.b16 %v1014
    %v4407 = vunpack.c.h.b16 %v1014
    %v4408 = vunpack.c.l.b16 %v1015
    %v4409 = vunpack.c.h.b16 %v1015
    %v4410 = vunpack.c.l.b16 %v1016
    %v4411 = vunpack.c.h.b16 %v1016
    %v4412 = vunpack.c.l.b16 %v1017
    %v4413 = vunpack.c.h.b16 %v1017
    %v4414 = vunpack.c.l.b16 %v1018
    %v4415 = vunpack.c.h.b16 %v1018
    %v4416 = vunpack.c.l.b16 %v1019
    %v4417 = vunpack.c.h.b16 %v1019
    %v4418 = vunpack.c.l.b16 %v1020
    %v4419 = vunpack.c.h.b16 %v1020
    %v4420 = vunpack.c.l.b16 %v1021
    %v4421 = vunpack.c.h.b16 %v1021
    %v4422 = vunpack.c.l.b16 %v1022
    %v4423 = vunpack.c.h.b16 %v1022
    %v4424 = vunpack.c.l.b16 %v1023
    %v4425 = vunpack.c.h.b16 %v1023
    %v4426 = vunpack.c.l.b16 %v1024
    %v4427 = vunpack.c.h.b16 %v1024
    %v4428 = vunpack.c.l.b16 %v1025
    %v4429 = vunpack.c.h.b16 %v1025
    %v4430 = vunpack.c.l.b16 %v1026
    %v4431 = vunpack.c.h.b16 %v1026
    %v4432 = vunpack.c.l.b16 %v1027
    %v4433 = vunpack.c.h.b16 %v1027
    %v4434 = vunpack.c.l.b16 %v1028
    %v4435 = vunpack.c.h.b16 %v1028
    %v4436 = vunpack.c.l.b16 %v1029
    %v4437 = vunpack.c.h.b16 %v1029
    %v4438 = vunpack.c.l.b16 %v1030
    %v4439 = vunpack.c.h.b16 %v1030
    %v4440 = vunpack.c.l.b16 %v1031
    %v4441 = vunpack.c.h.b16 %v1031
    %v4442 = vunpack.c.l.b16 %v1032
    %v4443 = vunpack.c.h.b16 %v1032
    %v4444 = vunpack.c.l.b16 %v1033
    %v4445 = vunpack.c.h.b16 %v1033
    %v4446 = vunpack.c.l.b16 %v1034
    %v4447 = vunpack.c.h.b16 %v1034
    %v4448 = vunpack.c.l.b16 %v1035
    %v4449 = vunpack.c.h.b16 %v1035
    %v4450 = vunpack.c.l.b16 %v1036
    %v4451 = vunpack.c.h.b16 %v1036
    %v4452 = vunpack.c.l.b16 %v1037
    %v4453 = vunpack.c.h.b16 %v1037
    %v4454 = vunpack.c.l.b16 %v1038
    %v4455 = vunpack.c.h.b16 %v1038
    %v4456 = vunpack.c.l.b16 %v1039
    %v4457 = vunpack.c.h.b16 %v1039
    %v4458 = vunpack.c.l.b16 %v1040
    %v4459 = vunpack.c.h.b16 %v1040
    %v4460 = vunpack.c.l.b16 %v1041
    %v4461 = vunpack.c.h.b16 %v1041
    %v4462 = vunpack.c.l.b16 %v1042
    %v4463 = vunpack.c.h.b16 %v1042
    %v4464 = vunpack.c.l.b16 %v1043
    %v4465 = vunpack.c.h.b16 %v1043
    %v4466 = vunpack.c.l.b16 %v1044
    %v4467 = vunpack.c.h.b16 %v1044
    %v4468 = vunpack.c.l.b16 %v1045
    %v4469 = vunpack.c.h.b16 %v1045
    %v4470 = vunpack.c.l.b16 %v1046
    %v4471 = vunpack.c.h.b16 %v1046
    %v4472 = vunpack.c.l.b16 %v1047
    %v4473 = vunpack.c.h.b16 %v1047
    %v4474 = vunpack.c.l.b16 %v1048
    %v4475 = vunpack.c.h.b16 %v1048
    %v4476 = vunpack.c.l.b16 %v1049
    %v4477 = vunpack.c.h.b16 %v1049
    %v4478 = vunpack.c.l.b16 %v1050
    %v4479 = vunpack.c.h.b16 %v1050
    %v4480 = vunpack.c.l.b16 %v1051
    %v4481 = vunpack.c.h.b16 %v1051
    %v4482 = vunpack.c.l.b16 %v1052
    %v4483 = vunpack.c.h.b16 %v1052
    %v4484 = vunpack.c.l.b16 %v1053
    %v4485 = vunpack.c.h.b16 %v1053
    %v4486 = vunpack.c.l.b16 %v1054
    %v4487 = vunpack.c.h.b16 %v1054
    %v4488 = vunpack.c.l.b16 %v1055
    %v4489 = vunpack.c.h.b16 %v1055
    %v4490 = vunpack.c.l.b16 %v1056
    %v4491 = vunpack.c.h.b16 %v1056
    %v4492 = vunpack.c.l.b16 %v1057
    %v4493 = vunpack.c.h.b16 %v1057
    %v4494 = vunpack.c.l.b16 %v1058
    %v4495 = vunpack.c.h.b16 %v1058
    %v4496 = vunpack.c.l.b16 %v1059
    %v4497 = vunpack.c.h.b16 %v1059
    %v4498 = vunpack.c.l.b16 %v1060
    %v4499 = vunpack.c.h.b16 %v1060
    %v4500 = vunpack.c.l.b16 %v1061
    %v4501 = vunpack.c.h.b16 %v1061
    %v4502 = vunpack.c.l.b16 %v1062
    %v4503 = vunpack.c.h.b16 %v1062
    %v4504 = vunpack.c.l.b16 %v1063
    %v4505 = vunpack.c.h.b16 %v1063
    %v4506 = vunpack.c.l.b16 %v1064
    %v4507 = vunpack.c.h.b16 %v1064
    %v4508 = vunpack.c.l.b16 %v1065
    %v4509 = vunpack.c.h.b16 %v1065
    %v4510 = vunpack.c.l.b16 %v1066
    %v4511 = vunpack.c.h.b16 %v1066
    %v4512 = vunpack.c.l.b16 %v1067
    %v4513 = vunpack.c.h.b16 %v1067
    %v4514 = vunpack.c.l.b16 %v1068
    %v4515 = vunpack.c.h.b16 %v1068
    %v4516 = vunpack.c.l.b16 %v1069
    %v4517 = vunpack.c.h.b16 %v1069
    %v4518 = vunpack.c.l.b16 %v1070
    %v4519 = vunpack.c.h.b16 %v1070
    %v4520 = vunpack.c.l.b16 %v1071
    %v4521 = vunpack.c.h.b16 %v1071
    %v4522 = vunpack.c.l.b16 %v1072
    %v4523 = vunpack.c.h.b16 %v1072
    %v4524 = vunpack.c.l.b16 %v1073
    %v4525 = vunpack.c.h.b16 %v1073
    %v4526 = vunpack.c.l.b16 %v1074
    %v4527 = vunpack.c.h.b16 %v1074
    %v4528 = vunpack.c.l.b16 %v1075
    %v4529 = vunpack.c.h.b16 %v1075
    %v4530 = vunpack.c.l.b16 %v1076
    %v4531 = vunpack.c.h.b16 %v1076
    %v4532 = vunpack.c.l.b16 %v1077
    %v4533 = vunpack.c.h.b16 %v1077
    %v4534 = vunpack.c.l.b16 %v1078
    %v4535 = vunpack.c.h.b16 %v1078
    %v4536 = vunpack.c.l.b16 %v1079
    %v4537 = vunpack.c.h.b16 %v1079
    %v4538 = vunpack.c.l.b16 %v1080
    %v4539 = vunpack.c.h.b16 %v1080
    %v4540 = vunpack.c.l.b16 %v1081
    %v4541 = vunpack.c.h.b16 %v1081
    %v4542 = vunpack.c.l.b16 %v1082
    %v4543 = vunpack.c.h.b16 %v1082
    %v4544 = vunpack.c.l.b16 %v1083
    %v4545 = vunpack.c.h.b16 %v1083
    %v4546 = vunpack.c.l.b16 %v1084
    %v4547 = vunpack.c.h.b16 %v1084
    %v4548 = vunpack.c.l.b16 %v1085
    %v4549 = vunpack.c.h.b16 %v1085
    %v4550 = vunpack.c.l.b16 %v1086
    %v4551 = vunpack.c.h.b16 %v1086
    %v4552 = vunpack.c.l.b16 %v1087
    %v4553 = vunpack.c.h.b16 %v1087
    %v4554 = vunpack.c.l.b16 %v1088
    %v4555 = vunpack.c.h.b16 %v1088
    %v4556 = vunpack.c.l.b16 %v1089
    %v4557 = vunpack.c.h.b16 %v1089
    %v4558 = vunpack.c.l.b16 %v1090
    %v4559 = vunpack.c.h.b16 %v1090
    %v4560 = vunpack.c.l.b16 %v1091
    %v4561 = vunpack.c.h.b16 %v1091
    %v4562 = vunpack.c.l.b16 %v1092
    %v4563 = vunpack.c.h.b16 %v1092
    %v4564 = vunpack.c.l.b16 %v1093
    %v4565 = vunpack.c.h.b16 %v1093
    %v4566 = vunpack.c.l.b16 %v1094
    %v4567 = vunpack.c.h.b16 %v1094
    %v4568 = vunpack.c.l.b16 %v1095
    %v4569 = vunpack.c.h.b16 %v1095
    %v4570 = vunpack.c.l.b16 %v1096
    %v4571 = vunpack.c.h.b16 %v1096
    %v4572 = vunpack.c.l.b16 %v1097
    %v4573 = vunpack.c.h.b16 %v1097
    %v4574 = vunpack.c.l.b16 %v1098
    %v4575 = vunpack.c.h.b16 %v1098
    %v4576 = vunpack.c.l.b16 %v1099
    %v4577 = vunpack.c.h.b16 %v1099
    %v4578 = vunpack.c.l.b16 %v1100
    %v4579 = vunpack.c.h.b16 %v1100
    %v4580 = vunpack.c.l.b16 %v1101
    %v4581 = vunpack.c.h.b16 %v1101
    %v4582 = vunpack.c.l.b16 %v1102
    %v4583 = vunpack.c.h.b16 %v1102
    %v4584 = vunpack.c.l.b16 %v1103
    %v4585 = vunpack.c.h.b16 %v1103
    %v4586 = vunpack.c.l.b16 %v1104
    %v4587 = vunpack.c.h.b16 %v1104
    %v4588 = vunpack.c.l.b16 %v1105
    %v4589 = vunpack.c.h.b16 %v1105
    %v4590 = vunpack.c.l.b16 %v1106
    %v4591 = vunpack.c.h.b16 %v1106
    %v4592 = vunpack.c.l.b16 %v1107
    %v4593 = vunpack.c.h.b16 %v1107
    %v4594 = vunpack.c.l.b16 %v1108
    %v4595 = vunpack.c.h.b16 %v1108
    %v4596 = vunpack.c.l.b16 %v1109
    %v4597 = vunpack.c.h.b16 %v1109
    %v4598 = vunpack.c.l.b16 %v1110
    %v4599 = vunpack.c.h.b16 %v1110
    %v4600 = vunpack.c.l.b16 %v1111
    %v4601 = vunpack.c.h.b16 %v1111
    %v4602 = vunpack.c.l.b16 %v1112
    %v4603 = vunpack.c.h.b16 %v1112
    %v4604 = vunpack.c.l.b16 %v1113
    %v4605 = vunpack.c.h.b16 %v1113
    %v4606 = vunpack.c.l.b16 %v1114
    %v4607 = vunpack.c.h.b16 %v1114
    %v4608 = vunpack.c.l.b16 %v1115
    %v4609 = vunpack.c.h.b16 %v1115
    %v4610 = vunpack.c.l.b16 %v1116
    %v4611 = vunpack.c.h.b16 %v1116
    %v4612 = vunpack.c.l.b16 %v1117
    %v4613 = vunpack.c.h.b16 %v1117
    %v4614 = vunpack.c.l.b16 %v1118
    %v4615 = vunpack.c.h.b16 %v1118
    %v4616 = vunpack.c.l.b16 %v1119
    %v4617 = vunpack.c.h.b16 %v1119
    %v4618 = vunpack.c.l.b16 %v1120
    %v4619 = vunpack.c.h.b16 %v1120
    %v4620 = vunpack.c.l.b16 %v1121
    %v4621 = vunpack.c.h.b16 %v1121
    %v4622 = vunpack.c.l.b16 %v1122
    %v4623 = vunpack.c.h.b16 %v1122
    %v4624 = vunpack.c.l.b16 %v1123
    %v4625 = vunpack.c.h.b16 %v1123
    %v4626 = vunpack.c.l.b16 %v1124
    %v4627 = vunpack.c.h.b16 %v1124
    %v4628 = vunpack.c.l.b16 %v1125
    %v4629 = vunpack.c.h.b16 %v1125
    %v4630 = vunpack.c.l.b16 %v1126
    %v4631 = vunpack.c.h.b16 %v1126
    %v4632 = vunpack.c.l.b16 %v1127
    %v4633 = vunpack.c.h.b16 %v1127
    %v4634 = vunpack.c.l.b16 %v1128
    %v4635 = vunpack.c.h.b16 %v1128
    %v4636 = vunpack.c.l.b16 %v1129
    %v4637 = vunpack.c.h.b16 %v1129
    %v4638 = vunpack.c.l.b16 %v1130
    %v4639 = vunpack.c.h.b16 %v1130
    %v4640 = vunpack.c.l.b16 %v1131
    %v4641 = vunpack.c.h.b16 %v1131
    %v4642 = vunpack.c.l.b16 %v1132
    %v4643 = vunpack.c.h.b16 %v1132
    %v4644 = vunpack.c.l.b16 %v1133
    %v4645 = vunpack.c.h.b16 %v1133
    %v4646 = vunpack.c.l.b16 %v1134
    %v4647 = vunpack.c.h.b16 %v1134
    %v4648 = vunpack.c.l.b16 %v1135
    %v4649 = vunpack.c.h.b16 %v1135
    %v4650 = vunpack.c.l.b16 %v1136
    %v4651 = vunpack.c.h.b16 %v1136
    %v4652 = vunpack.c.l.b16 %v1137
    %v4653 = vunpack.c.h.b16 %v1137
    %v4654 = vunpack.c.l.b16 %v1138
    %v4655 = vunpack.c.h.b16 %v1138
    %v4656 = vunpack.c.l.b16 %v1139
    %v4657 = vunpack.c.h.b16 %v1139
    %v4658 = vunpack.c.l.b16 %v1140
    %v4659 = vunpack.c.h.b16 %v1140
    %v4660 = vunpack.c.l.b16 %v1141
    %v4661 = vunpack.c.h.b16 %v1141
    %v4662 = vunpack.c.l.b16 %v1142
    %v4663 = vunpack.c.h.b16 %v1142
    %v4664 = vunpack.c.l.b16 %v1143
    %v4665 = vunpack.c.h.b16 %v1143
    %v4666 = vunpack.c.l.b16 %v1144
    %v4667 = vunpack.c.h.b16 %v1144
    %v4668 = vunpack.c.l.b16 %v1145
    %v4669 = vunpack.c.h.b16 %v1145
    %v4670 = vunpack.c.l.b16 %v1146
    %v4671 = vunpack.c.h.b16 %v1146
    %v4672 = vunpack.c.l.b16 %v1147
    %v4673 = vunpack.c.h.b16 %v1147
    %v4674 = vunpack.c.l.b16 %v1148
    %v4675 = vunpack.c.h.b16 %v1148
    %v4676 = vunpack.c.l.b16 %v1149
    %v4677 = vunpack.c.h.b16 %v1149
    %v4678 = vunpack.c.l.b16 %v1150
    %v4679 = vunpack.c.h.b16 %v1150
    %v4680 = vunpack.c.l.b16 %v1151
    %v4681 = vunpack.c.h.b16 %v1151
    %v4682 = vunpack.c.l.b16 %v1152
    %v4683 = vunpack.c.h.b16 %v1152
    %v4684 = vunpack.c.l.b16 %v1153
    %v4685 = vunpack.c.h.b16 %v1153
    %v4686 = vunpack.c.l.b16 %v1154
    %v4687 = vunpack.c.h.b16 %v1154
    %v4688 = vunpack.c.l.b16 %v1155
    %v4689 = vunpack.c.h.b16 %v1155
    %v4690 = vunpack.c.l.b16 %v1156
    %v4691 = vunpack.c.h.b16 %v1156
    %v4692 = vunpack.c.l.b16 %v1157
    %v4693 = vunpack.c.h.b16 %v1157
    %v4694 = vunpack.c.l.b16 %v1158
    %v4695 = vunpack.c.h.b16 %v1158
    %v4696 = vunpack.c.l.b16 %v1159
    %v4697 = vunpack.c.h.b16 %v1159
    %v4698 = vunpack.c.l.b16 %v1160
    %v4699 = vunpack.c.h.b16 %v1160
    %v4700 = vunpack.c.l.b16 %v1161
    %v4701 = vunpack.c.h.b16 %v1161
    %v4702 = vunpack.c.l.b16 %v1162
    %v4703 = vunpack.c.h.b16 %v1162
    %v4704 = vunpack.c.l.b16 %v1163
    %v4705 = vunpack.c.h.b16 %v1163
    %v4706 = vunpack.c.l.b16 %v1164
    %v4707 = vunpack.c.h.b16 %v1164
    %v4708 = vunpack.c.l.b16 %v1165
    %v4709 = vunpack.c.h.b16 %v1165
    %v4710 = vunpack.c.l.b16 %v1166
    %v4711 = vunpack.c.h.b16 %v1166
    %v4712 = vunpack.c.l.b16 %v1167
    %v4713 = vunpack.c.h.b16 %v1167
    %v4714 = vunpack.c.l.b16 %v1168
    %v4715 = vunpack.c.h.b16 %v1168
    %v4716 = vunpack.c.l.b16 %v1169
    %v4717 = vunpack.c.h.b16 %v1169
    %v4718 = vunpack.c.l.b16 %v1170
    %v4719 = vunpack.c.h.b16 %v1170
    %v4720 = vunpack.c.l.b16 %v1171
    %v4721 = vunpack.c.h.b16 %v1171
    %v4722 = vunpack.c.l.b16 %v1172
    %v4723 = vunpack.c.h.b16 %v1172
    %v4724 = vunpack.c.l.b16 %v1173
    %v4725 = vunpack.c.h.b16 %v1173
    %v4726 = vunpack.c.l.b16 %v1174
    %v4727 = vunpack.c.h.b16 %v1174
    %v4728 = vunpack.c.l.b16 %v1175
    %v4729 = vunpack.c.h.b16 %v1175
    %v4730 = vunpack.c.l.b16 %v1176
    %v4731 = vunpack.c.h.b16 %v1176
    %v4732 = vunpack.c.l.b16 %v1177
    %v4733 = vunpack.c.h.b16 %v1177
    %v4734 = vunpack.c.l.b16 %v1178
    %v4735 = vunpack.c.h.b16 %v1178
    %v4736 = vunpack.c.l.b16 %v1179
    %v4737 = vunpack.c.h.b16 %v1179
    %v4738 = vunpack.c.l.b16 %v1180
    %v4739 = vunpack.c.h.b16 %v1180
    %v4740 = vunpack.c.l.b16 %v1181
    %v4741 = vunpack.c.h.b16 %v1181
    %v4742 = vunpack.c.l.b16 %v1182
    %v4743 = vunpack.c.h.b16 %v1182
    %v4744 = vunpack.c.l.b16 %v1183
    %v4745 = vunpack.c.h.b16 %v1183
    %v4746 = vunpack.c.l.b16 %v1184
    %v4747 = vunpack.c.h.b16 %v1184
    %v4748 = vunpack.c.l.b16 %v1185
    %v4749 = vunpack.c.h.b16 %v1185
    %v4750 = vunpack.c.l.b16 %v1186
    %v4751 = vunpack.c.h.b16 %v1186
    %v4752 = vunpack.c.l.b16 %v1187
    %v4753 = vunpack.c.h.b16 %v1187
    %v4754 = vunpack.c.l.b16 %v1188
    %v4755 = vunpack.c.h.b16 %v1188
    %v4756 = vunpack.c.l.b16 %v1189
    %v4757 = vunpack.c.h.b16 %v1189
    %v4758 = vunpack.c.l.b16 %v1190
    %v4759 = vunpack.c.h.b16 %v1190
    %v4760 = vunpack.c.l.b16 %v1191
    %v4761 = vunpack.c.h.b16 %v1191
    %v4762 = vunpack.c.l.b16 %v1192
    %v4763 = vunpack.c.h.b16 %v1192
    %v4764 = vunpack.c.l.b16 %v1193
    %v4765 = vunpack.c.h.b16 %v1193
    %v4766 = vunpack.c.l.b16 %v1194
    %v4767 = vunpack.c.h.b16 %v1194
    %v4768 = vunpack.c.l.b16 %v1195
    %v4769 = vunpack.c.h.b16 %v1195
    %v4770 = vunpack.c.l.b16 %v1196
    %v4771 = vunpack.c.h.b16 %v1196
    %v4772 = vunpack.c.l.b16 %v1197
    %v4773 = vunpack.c.h.b16 %v1197
    %v4774 = vunpack.c.l.b16 %v1198
    %v4775 = vunpack.c.h.b16 %v1198
    %v4776 = vunpack.c.l.b16 %v1199
    %v4777 = vunpack.c.h.b16 %v1199
    %v4778 = vunpack.c.l.b16 %v1200
    %v4779 = vunpack.c.h.b16 %v1200
    %v4780 = vunpack.c.l.b16 %v1201
    %v4781 = vunpack.c.h.b16 %v1201
    %v4782 = vunpack.c.l.b16 %v1202
    %v4783 = vunpack.c.h.b16 %v1202
    %v4784 = vunpack.c.l.b16 %v1203
    %v4785 = vunpack.c.h.b16 %v1203
    %v4786 = vunpack.c.l.b16 %v1204
    %v4787 = vunpack.c.h.b16 %v1204
    %v4788 = vunpack.c.l.b16 %v1205
    %v4789 = vunpack.c.h.b16 %v1205
    %v4790 = vunpack.c.l.b16 %v1206
    %v4791 = vunpack.c.h.b16 %v1206
    %v4792 = vunpack.c.l.b16 %v1207
    %v4793 = vunpack.c.h.b16 %v1207
    %v4794 = vunpack.c.l.b16 %v1208
    %v4795 = vunpack.c.h.b16 %v1208
    %v4796 = vunpack.c.l.b16 %v1209
    %v4797 = vunpack.c.h.b16 %v1209
    %v4798 = vunpack.c.l.b16 %v1210
    %v4799 = vunpack.c.h.b16 %v1210
    %v4800 = vunpack.c.l.b16 %v1211
    %v4801 = vunpack.c.h.b16 %v1211
    %v4802 = vunpack.c.l.b16 %v1212
    %v4803 = vunpack.c.h.b16 %v1212
    %v4804 = vunpack.c.l.b16 %v1213
    %v4805 = vunpack.c.h.b16 %v1213
    %v4806 = vunpack.c.l.b16 %v1214
    %v4807 = vunpack.c.h.b16 %v1214
    %v4808 = vunpack.c.l.b16 %v1215
    %v4809 = vunpack.c.h.b16 %v1215
    %v4810 = vunpack.c.l.b16 %v1216
    %v4811 = vunpack.c.h.b16 %v1216
    %v4812 = vunpack.c.l.b16 %v1217
    %v4813 = vunpack.c.h.b16 %v1217
    %v4814 = vunpack.c.l.b16 %v1218
    %v4815 = vunpack.c.h.b16 %v1218
    %v4816 = vunpack.c.l.b16 %v1219
    %v4817 = vunpack.c.h.b16 %v1219
    %v4818 = vunpack.c.l.b16 %v1220
    %v4819 = vunpack.c.h.b16 %v1220
    %v4820 = vunpack.c.l.b16 %v1221
    %v4821 = vunpack.c.h.b16 %v1221
    %v4822 = vunpack.c.l.b16 %v1222
    %v4823 = vunpack.c.h.b16 %v1222
    %v4824 = vunpack.c.l.b16 %v1223
    %v4825 = vunpack.c.h.b16 %v1223
    %v4826 = vunpack.c.l.b16 %v1224
    %v4827 = vunpack.c.h.b16 %v1224
    %v4828 = vunpack.c.l.b16 %v1225
    %v4829 = vunpack.c.h.b16 %v1225
    %v4830 = vunpack.c.l.b16 %v1226
    %v4831 = vunpack.c.h.b16 %v1226
    %v4832 = vunpack.c.l.b16 %v1227
    %v4833 = vunpack.c.h.b16 %v1227
    %v4834 = vunpack.c.l.b16 %v1228
    %v4835 = vunpack.c.h.b16 %v1228
    %v4836 = vunpack.c.l.b16 %v1229
    %v4837 = vunpack.c.h.b16 %v1229
    %v4838 = vunpack.c.l.b16 %v1230
    %v4839 = vunpack.c.h.b16 %v1230
    %v4840 = vunpack.c.l.b16 %v1231
    %v4841 = vunpack.c.h.b16 %v1231
    %v4842 = vunpack.c.l.b16 %v1232
    %v4843 = vunpack.c.h.b16 %v1232
    %v4844 = vunpack.c.l.b16 %v1233
    %v4845 = vunpack.c.h.b16 %v1233
    %v4846 = vunpack.c.l.b16 %v1234
    %v4847 = vunpack.c.h.b16 %v1234
    %v4848 = vunpack.c.l.b16 %v1235
    %v4849 = vunpack.c.h.b16 %v1235
    %v4850 = vunpack.c.l.b16 %v1236
    %v4851 = vunpack.c.h.b16 %v1236
    %v4852 = vunpack.c.l.b16 %v1237
    %v4853 = vunpack.c.h.b16 %v1237
    %v4854 = vunpack.c.l.b16 %v1238
    %v4855 = vunpack.c.h.b16 %v1238
    %v4856 = vunpack.c.l.b16 %v1239
    %v4857 = vunpack.c.h.b16 %v1239
    %v4858 = vunpack.c.l.b16 %v1240
    %v4859 = vunpack.c.h.b16 %v1240
    %v4860 = vunpack.c.l.b16 %v1241
    %v4861 = vunpack.c.h.b16 %v1241
    %v4862 = vunpack.c.l.b16 %v1242
    %v4863 = vunpack.c.h.b16 %v1242
    %v4864 = vunpack.c.l.b16 %v1243
    %v4865 = vunpack.c.h.b16 %v1243
    %v4866 = vunpack.c.l.b16 %v1244
    %v4867 = vunpack.c.h.b16 %v1244
    %v4868 = vunpack.c.l.b16 %v1245
    %v4869 = vunpack.c.h.b16 %v1245
    %v4870 = vunpack.c.l.b16 %v1246
    %v4871 = vunpack.c.h.b16 %v1246
    %v4872 = vunpack.c.l.b16 %v1247
    %v4873 = vunpack.c.h.b16 %v1247
    %v4874 = vunpack.c.l.b16 %v1248
    %v4875 = vunpack.c.h.b16 %v1248
    %v4876 = vunpack.c.l.b16 %v1249
    %v4877 = vunpack.c.h.b16 %v1249
    %v4878 = vunpack.c.l.b16 %v1250
    %v4879 = vunpack.c.h.b16 %v1250
    %v4880 = vunpack.c.l.b16 %v1251
    %v4881 = vunpack.c.h.b16 %v1251
    %v4882 = vunpack.c.l.b16 %v1252
    %v4883 = vunpack.c.h.b16 %v1252
    %v4884 = vunpack.c.l.b16 %v1253
    %v4885 = vunpack.c.h.b16 %v1253
    %v4886 = vunpack.c.l.b16 %v1254
    %v4887 = vunpack.c.h.b16 %v1254
    %v4888 = vunpack.c.l.b16 %v1255
    %v4889 = vunpack.c.h.b16 %v1255
    %v4890 = vunpack.c.l.b16 %v1256
    %v4891 = vunpack.c.h.b16 %v1256
    %v4892 = vunpack.c.l.b16 %v1257
    %v4893 = vunpack.c.h.b16 %v1257
    %v4894 = vunpack.c.l.b16 %v1258
    %v4895 = vunpack.c.h.b16 %v1258
    %v4896 = vunpack.c.l.b16 %v1259
    %v4897 = vunpack.c.h.b16 %v1259
    %v4898 = vunpack.c.l.b16 %v1260
    %v4899 = vunpack.c.h.b16 %v1260
    %v4900 = vunpack.c.l.b16 %v1261
    %v4901 = vunpack.c.h.b16 %v1261
    %v4902 = vunpack.c.l.b16 %v1262
    %v4903 = vunpack.c.h.b16 %v1262
    %v4904 = vunpack.c.l.b16 %v1263
    %v4905 = vunpack.c.h.b16 %v1263
    %v4906 = vunpack.c.l.b16 %v1264
    %v4907 = vunpack.c.h.b16 %v1264
    %v4908 = vunpack.c.l.b16 %v1265
    %v4909 = vunpack.c.h.b16 %v1265
    %v4910 = vunpack.c.l.b16 %v1266
    %v4911 = vunpack.c.h.b16 %v1266
    %v4912 = vunpack.c.l.b16 %v1267
    %v4913 = vunpack.c.h.b16 %v1267
    %v4914 = vunpack.c.l.b16 %v1268
    %v4915 = vunpack.c.h.b16 %v1268
    %v4916 = vunpack.c.l.b16 %v1269
    %v4917 = vunpack.c.h.b16 %v1269
    %v4918 = vunpack.c.l.b16 %v1270
    %v4919 = vunpack.c.h.b16 %v1270
    %v4920 = vunpack.c.l.b16 %v1271
    %v4921 = vunpack.c.h.b16 %v1271
    %v4922 = vunpack.c.l.b16 %v1272
    %v4923 = vunpack.c.h.b16 %v1272
    %v4924 = vunpack.c.l.b16 %v1273
    %v4925 = vunpack.c.h.b16 %v1273
    %v4926 = vunpack.c.l.b16 %v1274
    %v4927 = vunpack.c.h.b16 %v1274
    %v4928 = vunpack.c.l.b16 %v1275
    %v4929 = vunpack.c.h.b16 %v1275
    %v4930 = vunpack.c.l.b16 %v1276
    %v4931 = vunpack.c.h.b16 %v1276
    %v4932 = vunpack.c.l.b16 %v1277
    %v4933 = vunpack.c.h.b16 %v1277
    %v4934 = vunpack.c.l.b16 %v1278
    %v4935 = vunpack.c.h.b16 %v1278
    %v4936 = vunpack.c.l.b16 %v1279
    %v4937 = vunpack.c.h.b16 %v1279
    %v4938 = vunpack.c.l.b16 %v1280
    %v4939 = vunpack.c.h.b16 %v1280
    %v4940 = vunpack.c.l.b16 %v1281
    %v4941 = vunpack.c.h.b16 %v1281
    %v4942 = vunpack.c.l.b16 %v1282
    %v4943 = vunpack.c.h.b16 %v1282
    %v4944 = vunpack.c.l.b16 %v1283
    %v4945 = vunpack.c.h.b16 %v1283
    %v4946 = vunpack.c.l.b16 %v1284
    %v4947 = vunpack.c.h.b16 %v1284
    %v4948 = vunpack.c.l.b16 %v1285
    %v4949 = vunpack.c.h.b16 %v1285
    %v4950 = vunpack.c.l.b16 %v1286
    %v4951 = vunpack.c.h.b16 %v1286
    %v4952 = vunpack.c.l.b16 %v1287
    %v4953 = vunpack.c.h.b16 %v1287
    %v4954 = vunpack.c.l.b16 %v1288
    %v4955 = vunpack.c.h.b16 %v1288
    %v4956 = vunpack.c.l.b16 %v1289
    %v4957 = vunpack.c.h.b16 %v1289
    %v4958 = vunpack.c.l.b16 %v1290
    %v4959 = vunpack.c.h.b16 %v1290
    %v4960 = vunpack.c.l.b16 %v1291
    %v4961 = vunpack.c.h.b16 %v1291
    %v4962 = vunpack.c.l.b16 %v1292
    %v4963 = vunpack.c.h.b16 %v1292
    %v4964 = vunpack.c.l.b16 %v1293
    %v4965 = vunpack.c.h.b16 %v1293
    %v4966 = vunpack.c.l.b16 %v1294
    %v4967 = vunpack.c.h.b16 %v1294
    %v4968 = vunpack.c.l.b16 %v1295
    %v4969 = vunpack.c.h.b16 %v1295
    %v4970 = vunpack.c.l.b16 %v1296
    %v4971 = vunpack.c.h.b16 %v1296
    %v4972 = vunpack.c.l.b16 %v1297
    %v4973 = vunpack.c.h.b16 %v1297
    %v4974 = vunpack.c.l.b16 %v1298
    %v4975 = vunpack.c.h.b16 %v1298
    %v4976 = vunpack.c.l.b16 %v1299
    %v4977 = vunpack.c.h.b16 %v1299
    %v4978 = vunpack.c.l.b16 %v1300
    %v4979 = vunpack.c.h.b16 %v1300
    %v4980 = vunpack.c.l.b16 %v1301
    %v4981 = vunpack.c.h.b16 %v1301
    %v4982 = vpack.c.b16 %v3258, %v3254
    %v4983 = vpack.c.b16 %v3259, %v3255
    %v4984 = vpack.c.b16 %v3260, %v3256
    %v4985 = vpack.c.b16 %v3261, %v3257
    %v4986 = vpack.c.b16 %v3266, %v3262
    %v4987 = vpack.c.b16 %v3267, %v3263
    %v4988 = vpack.c.b16 %v3268, %v3264
    %v4989 = vpack.c.b16 %v3269, %v3265
    %v4990 = vpack.c.b16 %v3274, %v3270
    %v4991 = vpack.c.b16 %v3275, %v3271
    %v4992 = vpack.c.b16 %v3276, %v3272
    %v4993 = vpack.c.b16 %v3277, %v3273
    %v4994 = vpack.c.b16 %v3282, %v3278
    %v4995 = vpack.c.b16 %v3283, %v3279
    %v4996 = vpack.c.b16 %v3284, %v3280
    %v4997 = vpack.c.b16 %v3285, %v3281
    %v4998 = vpack.c.b16 %v3290, %v3286
    %v4999 = vpack.c.b16 %v3291, %v3287
    %v5000 = vpack.c.b16 %v3292, %v3288
    %v5001 = vpack.c.b16 %v3293, %v3289
    %v5002 = vpack.c.b16 %v3298, %v3294
    %v5003 = vpack.c.b16 %v3299, %v3295
    %v5004 = vpack.c.b16 %v3300, %v3296
    %v5005 = vpack.c.b16 %v3301, %v3297
    %v5006 = vpack.c.b16 %v3306, %v3302
    %v5007 = vpack.c.b16 %v3307, %v3303
    %v5008 = vpack.c.b16 %v3308, %v3304
    %v5009 = vpack.c.b16 %v3309, %v3305
    %v5010 = vpack.c.b16 %v3314, %v3310
    %v5011 = vpack.c.b16 %v3315, %v3311
    %v5012 = vpack.c.b16 %v3316, %v3312
    %v5013 = vpack.c.b16 %v3317, %v3313
    %v5014 = vpack.c.b16 %v3322, %v3318
    %v5015 = vpack.c.b16 %v3323, %v3319
    %v5016 = vpack.c.b16 %v3324, %v3320
    %v5017 = vpack.c.b16 %v3325, %v3321
    %v5018 = vpack.c.b16 %v3330, %v3326
    %v5019 = vpack.c.b16 %v3331, %v3327
    %v5020 = vpack.c.b16 %v3332, %v3328
    %v5021 = vpack.c.b16 %v3333, %v3329
    %v5022 = vpack.c.b16 %v3338, %v3334
    %v5023 = vpack.c.b16 %v3339, %v3335
    %v5024 = vpack.c.b16 %v3340, %v3336
    %v5025 = vpack.c.b16 %v3341, %v3337
    %v5026 = vpack.c.b16 %v3346, %v3342
    %v5027 = vpack.c.b16 %v3347, %v3343
    %v5028 = vpack.c.b16 %v3348, %v3344
    %v5029 = vpack.c.b16 %v3349, %v3345
    %v5030 = vpack.c.b16 %v3354, %v3350
    %v5031 = vpack.c.b16 %v3355, %v3351
    %v5032 = vpack.c.b16 %v3356, %v3352
    %v5033 = vpack.c.b16 %v3357, %v3353
    %v5034 = vpack.c.b16 %v3362, %v3358
    %v5035 = vpack.c.b16 %v3363, %v3359
    %v5036 = vpack.c.b16 %v3364, %v3360
    %v5037 = vpack.c.b16 %v3365, %v3361
    %v5038 = vpack.c.b16 %v3370, %v3366
    %v5039 = vpack.c.b16 %v3371, %v3367
    %v5040 = vpack.c.b16 %v3372, %v3368
    %v5041 = vpack.c.b16 %v3373, %v3369
    %v5042 = vpack.c.b16 %v3378, %v3374
    %v5043 = vpack.c.b16 %v3379, %v3375
    %v5044 = vpack.c.b16 %v3380, %v3376
    %v5045 = vpack.c.b16 %v3381, %v3377
    %v5046 = vpack.c.b16 %v3386, %v3382
    %v5047 = vpack.c.b16 %v3387, %v3383
    %v5048 = vpack.c.b16 %v3388, %v3384
    %v5049 = vpack.c.b16 %v3389, %v3385
    %v5050 = vpack.c.b16 %v3394, %v3390
    %v5051 = vpack.c.b16 %v3395, %v3391
    %v5052 = vpack.c.b16 %v3396, %v3392
    %v5053 = vpack.c.b16 %v3397, %v3393
    %v5054 = vpack.c.b16 %v3402, %v3398
    %v5055 = vpack.c.b16 %v3403, %v3399
    %v5056 = vpack.c.b16 %v3404, %v3400
    %v5057 = vpack.c.b16 %v3405, %v3401
    %v5058 = vpack.c.b16 %v3410, %v3406
    %v5059 = vpack.c.b16 %v3411, %v3407
    %v5060 = vpack.c.b16 %v3412, %v3408
    %v5061 = vpack.c.b16 %v3413, %v3409
    %v5062 = vpack.c.b16 %v3418, %v3414
    %v5063 = vpack.c.b16 %v3419, %v3415
    %v5064 = vpack.c.b16 %v3420, %v3416
    %v5065 = vpack.c.b16 %v3421, %v3417
    %v5066 = vpack.c.b16 %v3426, %v3422
    %v5067 = vpack.c.b16 %v3427, %v3423
    %v5068 = vpack.c.b16 %v3428, %v3424
    %v5069 = vpack.c.b16 %v3429, %v3425
    %v5070 = vpack.c.b16 %v3434, %v3430
    %v5071 = vpack.c.b16 %v3435, %v3431
    %v5072 = vpack.c.b16 %v3436, %v3432
    %v5073 = vpack.c.b16 %v3437, %v3433
    %v5074 = vpack.c.b16 %v3442, %v3438
    %v5075 = vpack.c.b16 %v3443, %v3439
    %v5076 = vpack.c.b16 %v3444, %v3440
    %v5077 = vpack.c.b16 %v3445, %v3441
    %v5078 = vpack.c.b16 %v3450, %v3446
    %v5079 = vpack.c.b16 %v3451, %v3447
    %v5080 = vpack.c.b16 %v3452, %v3448
    %v5081 = vpack.c.b16 %v3453, %v3449
    %v5082 = vpack.c.b16 %v3458, %v3454
    %v5083 = vpack.c.b16 %v3459, %v3455
    %v5084 = vpack.c.b16 %v3460, %v3456
    %v5085 = vpack.c.b16 %v3461, %v3457
    %v5086 = vpack.c.b16 %v3466, %v3462
    %v5087 = vpack.c.b16 %v3467, %v3463
    %v5088 = vpack.c.b16 %v3468, %v3464
    %v5089 = vpack.c.b16 %v3469, %v3465
    %v5090 = vpack.c.b16 %v3474, %v3470
    %v5091 = vpack.c.b16 %v3475, %v3471
    %v5092 = vpack.c.b16 %v3476, %v3472
    %v5093 = vpack.c.b16 %v3477, %v3473
    %v5094 = vpack.c.b16 %v3482, %v3478
    %v5095 = vpack.c.b16 %v3483, %v3479
    %v5096 = vpack.c.b16 %v3484, %v3480
    %v5097 = vpack.c.b16 %v3485, %v3481
    %v5098 = vpack.c.b16 %v3490, %v3486
    %v5099 = vpack.c.b16 %v3491, %v3487
    %v5100 = vpack.c.b16 %v3492, %v3488
    %v5101 = vpack.c.b16 %v3493, %v3489
    %v5102 = vpack.c.b16 %v3498, %v3494
    %v5103 = vpack.c.b16 %v3499, %v3495
    %v5104 = vpack.c.b16 %v3500, %v3496
    %v5105 = vpack.c.b16 %v3501, %v3497
    %v5106 = vpack.c.b16 %v3506, %v3502
    %v5107 = vpack.c.b16 %v3507, %v3503
    %v5108 = vpack.c.b16 %v3508, %v3504
    %v5109 = vpack.c.b16 %v3509, %v3505
    %v5110 = vpack.c.b16 %v3514, %v3510
    %v5111 = vpack.c.b16 %v3515, %v3511
    %v5112 = vpack.c.b16 %v3516, %v3512
    %v5113 = vpack.c.b16 %v3517, %v3513
    %v5114 = vpack.c.b16 %v3522, %v3518
    %v5115 = vpack.c.b16 %v3523, %v3519
    %v5116 = vpack.c.b16 %v3524, %v3520
    %v5117 = vpack.c.b16 %v3525, %v3521
    %v5118 = vpack.c.b16 %v3530, %v3526
    %v5119 = vpack.c.b16 %v3531, %v3527
    %v5120 = vpack.c.b16 %v3532, %v3528
    %v5121 = vpack.c.b16 %v3533, %v3529
    %v5122 = vpack.c.b16 %v3538, %v3534
    %v5123 = vpack.c.b16 %v3539, %v3535
    %v5124 = vpack.c.b16 %v3540, %v3536
    %v5125 = vpack.c.b16 %v3541, %v3537
    %v5126 = vpack.c.b16 %v3546, %v3542
    %v5127 = vpack.c.b16 %v3547, %v3543
    %v5128 = vpack.c.b16 %v3548, %v3544
    %v5129 = vpack.c.b16 %v3549, %v3545
    %v5130 = vpack.c.b16 %v3554, %v3550
    %v5131 = vpack.c.b16 %v3555, %v3551
    %v5132 = vpack.c.b16 %v3556, %v3552
    %v5133 = vpack.c.b16 %v3557, %v3553
    %v5134 = vpack.c.b16 %v3562, %v3558
    %v5135 = vpack.c.b16 %v3563, %v3559
    %v5136 = vpack.c.b16 %v3564, %v3560
    %v5137 = vpack.c.b16 %v3565, %v3561
    %v5138 = vpack.c.b16 %v3570, %v3566
    %v5139 = vpack.c.b16 %v3571, %v3567
    %v5140 = vpack.c.b16 %v3572, %v3568
    %v5141 = vpack.c.b16 %v3573, %v3569
    %v5142 = vpack.c.b16 %v3578, %v3574
    %v5143 = vpack.c.b16 %v3579, %v3575
    %v5144 = vpack.c.b16 %v3580, %v3576
    %v5145 = vpack.c.b16 %v3581, %v3577
    %v5146 = vpack.c.b16 %v3586, %v3582
    %v5147 = vpack.c.b16 %v3587, %v3583
    %v5148 = vpack.c.b16 %v3588, %v3584
    %v5149 = vpack.c.b16 %v3589, %v3585
    %v5150 = vpack.c.b16 %v3594, %v3590
    %v5151 = vpack.c.b16 %v3595, %v3591
    %v5152 = vpack.c.b16 %v3596, %v3592
    %v5153 = vpack.c.b16 %v3597, %v3593
    %v5154 = vpack.c.b16 %v3602, %v3598
    %v5155 = vpack.c.b16 %v3603, %v3599
    %v5156 = vpack.c.b16 %v3604, %v3600
    %v5157 = vpack.c.b16 %v3605, %v3601
    %v5158 = vpack.c.b16 %v3610, %v3606
    %v5159 = vpack.c.b16 %v3611, %v3607
    %v5160 = vpack.c.b16 %v3612, %v3608
    %v5161 = vpack.c.b16 %v3613, %v3609
    %v5162 = vpack.c.b16 %v3618, %v3614
    %v5163 = vpack.c.b16 %v3619, %v3615
    %v5164 = vpack.c.b16 %v3620, %v3616
    %v5165 = vpack.c.b16 %v3621, %v3617
    %v5166 = vpack.c.b16 %v3626, %v3622
    %v5167 = vpack.c.b16 %v3627, %v3623
    %v5168 = vpack.c.b16 %v3628, %v3624
    %v5169 = vpack.c.b16 %v3629, %v3625
    %v5170 = vpack.c.b16 %v3634, %v3630
    %v5171 = vpack.c.b16 %v3635, %v3631
    %v5172 = vpack.c.b16 %v3636, %v3632
    %v5173 = vpack.c.b16 %v3637, %v3633
    %v5174 = vpack.c.b16 %v3642, %v3638
    %v5175 = vpack.c.b16 %v3643, %v3639
    %v5176 = vpack.c.b16 %v3644, %v3640
    %v5177 = vpack.c.b16 %v3645, %v3641
    %v5178 = vpack.c.b16 %v3650, %v3646
    %v5179 = vpack.c.b16 %v3651, %v3647
    %v5180 = vpack.c.b16 %v3652, %v3648
    %v5181 = vpack.c.b16 %v3653, %v3649
    %v5182 = vpack.c.b16 %v3658, %v3654
    %v5183 = vpack.c.b16 %v3659, %v3655
    %v5184 = vpack.c.b16 %v3660, %v3656
    %v5185 = vpack.c.b16 %v3661, %v3657
    %v5186 = vpack.c.b16 %v3666, %v3662
    %v5187 = vpack.c.b16 %v3667, %v3663
    %v5188 = vpack.c.b16 %v3668, %v3664
    %v5189 = vpack.c.b16 %v3669, %v3665
    %v5190 = vpack.c.b16 %v3674, %v3670
    %v5191 = vpack.c.b16 %v3675, %v3671
    %v5192 = vpack.c.b16 %v3676, %v3672
    %v5193 = vpack.c.b16 %v3677, %v3673
    %v5194 = vpack.c.b16 %v3682, %v3678
    %v5195 = vpack.c.b16 %v3683, %v3679
    %v5196 = vpack.c.b16 %v3684, %v3680
    %v5197 = vpack.c.b16 %v3685, %v3681
    %v5198 = vpack.c.b16 %v3690, %v3686
    %v5199 = vpack.c.b16 %v3691, %v3687
    %v5200 = vpack.c.b16 %v3692, %v3688
    %v5201 = vpack.c.b16 %v3693, %v3689
    %v5202 = vpack.c.b16 %v3698, %v3694
    %v5203 = vpack.c.b16 %v3699, %v3695
    %v5204 = vpack.c.b16 %v3700, %v3696
    %v5205 = vpack.c.b16 %v3701, %v3697
    %v5206 = vpack.c.b16 %v3706, %v3702
    %v5207 = vpack.c.b16 %v3707, %v3703
    %v5208 = vpack.c.b16 %v3708, %v3704
    %v5209 = vpack.c.b16 %v3709, %v3705
    %v5210 = vpack.c.b16 %v3714, %v3710
    %v5211 = vpack.c.b16 %v3715, %v3711
    %v5212 = vpack.c.b16 %v3716, %v3712
    %v5213 = vpack.c.b16 %v3717, %v3713
    %v5214 = vpack.c.b16 %v3722, %v3718
    %v5215 = vpack.c.b16 %v3723, %v3719
    %v5216 = vpack.c.b16 %v3724, %v3720
    %v5217 = vpack.c.b16 %v3725, %v3721
    %v5218 = vpack.c.b16 %v3730, %v3726
    %v5219 = vpack.c.b16 %v3731, %v3727
    %v5220 = vpack.c.b16 %v3732, %v3728
    %v5221 = vpack.c.b16 %v3733, %v3729
    %v5222 = vpack.c.b16 %v3738, %v3734
    %v5223 = vpack.c.b16 %v3739, %v3735
    %v5224 = vpack.c.b16 %v3740, %v3736
    %v5225 = vpack.c.b16 %v3741, %v3737
    %v5226 = vpack.c.b16 %v3746, %v3742
    %v5227 = vpack.c.b16 %v3747, %v3743
    %v5228 = vpack.c.b16 %v3748, %v3744
    %v5229 = vpack.c.b16 %v3749, %v3745
    %v5230 = vpack.c.b16 %v3754, %v3750
    %v5231 = vpack.c.b16 %v3755, %v3751
    %v5232 = vpack.c.b16 %v3756, %v3752
    %v5233 = vpack.c.b16 %v3757, %v3753
    %v5234 = vpack.c.b16 %v3762, %v3758
    %v5235 = vpack.c.b16 %v3763, %v3759
    %v5236 = vpack.c.b16 %v3764, %v3760
    %v5237 = vpack.c.b16 %v3765, %v3761
    %v5238 = vpack.c.b16 %v3770, %v3766
    %v5239 = vpack.c.b16 %v3771, %v3767
    %v5240 = vpack.c.b16 %v3772, %v3768
    %v5241 = vpack.c.b16 %v3773, %v3769
    %v5242 = vpack.c.b16 %v3778, %v3774
    %v5243 = vpack.c.b16 %v3779, %v3775
    %v5244 = vpack.c.b16 %v3780, %v3776
    %v5245 = vpack.c.b16 %v3781, %v3777
    %v5246 = vpack.c.b16 %v3786, %v3782
    %v5247 = vpack.c.b16 %v3787, %v3783
    %v5248 = vpack.c.b16 %v3788, %v3784
    %v5249 = vpack.c.b16 %v3789, %v3785
    %v5250 = vpack.c.b16 %v3794, %v3790
    %v5251 = vpack.c.b16 %v3795, %v3791
    %v5252 = vpack.c.b16 %v3796, %v3792
    %v5253 = vpack.c.b16 %v3797, %v3793
    %v5254 = vpack.c.b16 %v3802, %v3798
    %v5255 = vpack.c.b16 %v3803, %v3799
    %v5256 = vpack.c.b16 %v3804, %v3800
    %v5257 = vpack.c.b16 %v3805, %v3801
    %v5258 = vpack.c.b16 %v3810, %v3806
    %v5259 = vpack.c.b16 %v3811, %v3807
    %v5260 = vpack.c.b16 %v3812, %v3808
    %v5261 = vpack.c.b16 %v3813, %v3809
    %v5262 = vpack.c.b16 %v3818, %v3814
    %v5263 = vpack.c.b16 %v3819, %v3815
    %v5264 = vpack.c.b16 %v3820, %v3816
    %v5265 = vpack.c.b16 %v3821, %v3817
    %v5266 = vpack.c.b16 %v3826, %v3822
    %v5267 = vpack.c.b16 %v3827, %v3823
    %v5268 = vpack.c.b16 %v3828, %v3824
    %v5269 = vpack.c.b16 %v3829, %v3825
    %v5270 = vpack.c.b16 %v3834, %v3830
    %v5271 = vpack.c.b16 %v3835, %v3831
    %v5272 = vpack.c.b16 %v3836, %v3832
    %v5273 = vpack.c.b16 %v3837, %v3833
    %v5274 = vpack.c.b16 %v3842, %v3838
    %v5275 = vpack.c.b16 %v3843, %v3839
    %v5276 = vpack.c.b16 %v3844, %v3840
    %v5277 = vpack.c.b16 %v3845, %v3841
    %v5278 = vpack.c.b16 %v3850, %v3846
    %v5279 = vpack.c.b16 %v3851, %v3847
    %v5280 = vpack.c.b16 %v3852, %v3848
    %v5281 = vpack.c.b16 %v3853, %v3849
    %v5282 = vpack.c.b16 %v3858, %v3854
    %v5283 = vpack.c.b16 %v3859, %v3855
    %v5284 = vpack.c.b16 %v3860, %v3856
    %v5285 = vpack.c.b16 %v3861, %v3857
    %v5286 = vpack.c.b16 %v3866, %v3862
    %v5287 = vpack.c.b16 %v3867, %v3863
    %v5288 = vpack.c.b16 %v3868, %v3864
    %v5289 = vpack.c.b16 %v3869, %v3865
    %v5290 = vpack.c.b16 %v3874, %v3870
    %v5291 = vpack.c.b16 %v3875, %v3871
    %v5292 = vpack.c.b16 %v3876, %v3872
    %v5293 = vpack.c.b16 %v3877, %v3873
    %v5294 = vpack.c.b16 %v3882, %v3878
    %v5295 = vpack.c.b16 %v3883, %v3879
    %v5296 = vpack.c.b16 %v3884, %v3880
    %v5297 = vpack.c.b16 %v3885, %v3881
    %v5298 = vpack.c.b16 %v3890, %v3886
    %v5299 = vpack.c.b16 %v3891, %v3887
    %v5300 = vpack.c.b16 %v3892, %v3888
    %v5301 = vpack.c.b16 %v3893, %v3889
    %v5302 = vpack.c.b16 %v3898, %v3894
    %v5303 = vpack.c.b16 %v3899, %v3895
    %v5304 = vpack.c.b16 %v3900, %v3896
    %v5305 = vpack.c.b16 %v3901, %v3897
    %v5306 = vpack.c.b16 %v3906, %v3902
    %v5307 = vpack.c.b16 %v3907, %v3903
    %v5308 = vpack.c.b16 %v3908, %v3904
    %v5309 = vpack.c.b16 %v3909, %v3905
    %v5310 = vpack.c.b16 %v3914, %v3910
    %v5311 = vpack.c.b16 %v3915, %v3911
    %v5312 = vpack.c.b16 %v3916, %v3912
    %v5313 = vpack.c.b16 %v3917, %v3913
    %v5314 = vpack.c.b16 %v3922, %v3918
    %v5315 = vpack.c.b16 %v3923, %v3919
    %v5316 = vpack.c.b16 %v3924, %v3920
    %v5317 = vpack.c.b16 %v3925, %v3921
    %v5318 = vpack.c.b16 %v3930, %v3926
    %v5319 = vpack.c.b16 %v3931, %v3927
    %v5320 = vpack.c.b16 %v3932, %v3928
    %v5321 = vpack.c.b16 %v3933, %v3929
    %v5322 = vpack.c.b16 %v3938, %v3934
    %v5323 = vpack.c.b16 %v3939, %v3935
    %v5324 = vpack.c.b16 %v3940, %v3936
    %v5325 = vpack.c.b16 %v3941, %v3937
    %v5326 = vpack.c.b16 %v3946, %v3942
    %v5327 = vpack.c.b16 %v3947, %v3943
    %v5328 = vpack.c.b16 %v3948, %v3944
    %v5329 = vpack.c.b16 %v3949, %v3945
    %v5330 = vpack.c.b16 %v3954, %v3950
    %v5331 = vpack.c.b16 %v3955, %v3951
    %v5332 = vpack.c.b16 %v3956, %v3952
    %v5333 = vpack.c.b16 %v3957, %v3953
    %v5334 = vpack.c.b16 %v3962, %v3958
    %v5335 = vpack.c.b16 %v3963, %v3959
    %v5336 = vpack.c.b16 %v3964, %v3960
    %v5337 = vpack.c.b16 %v3965, %v3961
    %v5338 = vpack.c.b16 %v3970, %v3966
    %v5339 = vpack.c.b16 %v3971, %v3967
    %v5340 = vpack.c.b16 %v3972, %v3968
    %v5341 = vpack.c.b16 %v3973, %v3969
    %v5342 = vpack.c.b16 %v3978, %v3974
    %v5343 = vpack.c.b16 %v3979, %v3975
    %v5344 = vpack.c.b16 %v3980, %v3976
    %v5345 = vpack.c.b16 %v3981, %v3977
    %v5346 = vpack.c.b16 %v3986, %v3982
    %v5347 = vpack.c.b16 %v3987, %v3983
    %v5348 = vpack.c.b16 %v3988, %v3984
    %v5349 = vpack.c.b16 %v3989, %v3985
    %v5350 = vpack.c.b16 %v3994, %v3990
    %v5351 = vpack.c.b16 %v3995, %v3991
    %v5352 = vpack.c.b16 %v3996, %v3992
    %v5353 = vpack.c.b16 %v3997, %v3993
    %v5354 = vpack.c.b16 %v4002, %v3998
    %v5355 = vpack.c.b16 %v4003, %v3999
    %v5356 = vpack.c.b16 %v4004, %v4000
    %v5357 = vpack.c.b16 %v4005, %v4001
    %v5358 = vpack.c.b16 %v4010, %v4006
    %v5359 = vpack.c.b16 %v4011, %v4007
    %v5360 = vpack.c.b16 %v4012, %v4008
    %v5361 = vpack.c.b16 %v4013, %v4009
    %v5362 = vpack.c.b16 %v4018, %v4014
    %v5363 = vpack.c.b16 %v4019, %v4015
    %v5364 = vpack.c.b16 %v4020, %v4016
    %v5365 = vpack.c.b16 %v4021, %v4017
    %v5366 = vpack.c.b16 %v4026, %v4022
    %v5367 = vpack.c.b16 %v4027, %v4023
    %v5368 = vpack.c.b16 %v4028, %v4024
    %v5369 = vpack.c.b16 %v4029, %v4025
    %v5370 = vpack.c.b16 %v4034, %v4030
    %v5371 = vpack.c.b16 %v4035, %v4031
    %v5372 = vpack.c.b16 %v4036, %v4032
    %v5373 = vpack.c.b16 %v4037, %v4033
    %v5374 = vpack.c.b16 %v4042, %v4038
    %v5375 = vpack.c.b16 %v4043, %v4039
    %v5376 = vpack.c.b16 %v4044, %v4040
    %v5377 = vpack.c.b16 %v4045, %v4041
    %v5378 = vpack.c.b16 %v4050, %v4046
    %v5379 = vpack.c.b16 %v4051, %v4047
    %v5380 = vpack.c.b16 %v4052, %v4048
    %v5381 = vpack.c.b16 %v4053, %v4049
    %v5382 = vpack.c.b16 %v4058, %v4054
    %v5383 = vpack.c.b16 %v4059, %v4055
    %v5384 = vpack.c.b16 %v4060, %v4056
    %v5385 = vpack.c.b16 %v4061, %v4057
    %v5386 = vpack.c.b16 %v4066, %v4062
    %v5387 = vpack.c.b16 %v4067, %v4063
    %v5388 = vpack.c.b16 %v4068, %v4064
    %v5389 = vpack.c.b16 %v4069, %v4065
    %v5390 = vpack.c.b16 %v4074, %v4070
    %v5391 = vpack.c.b16 %v4075, %v4071
    %v5392 = vpack.c.b16 %v4076, %v4072
    %v5393 = vpack.c.b16 %v4077, %v4073
    %v5394 = vpack.c.b16 %v4082, %v4078
    %v5395 = vpack.c.b16 %v4083, %v4079
    %v5396 = vpack.c.b16 %v4084, %v4080
    %v5397 = vpack.c.b16 %v4085, %v4081
    %v5398 = vpack.c.b16 %v4090, %v4086
    %v5399 = vpack.c.b16 %v4091, %v4087
    %v5400 = vpack.c.b16 %v4092, %v4088
    %v5401 = vpack.c.b16 %v4093, %v4089
    %v5402 = vpack.c.b16 %v4098, %v4094
    %v5403 = vpack.c.b16 %v4099, %v4095
    %v5404 = vpack.c.b16 %v4100, %v4096
    %v5405 = vpack.c.b16 %v4101, %v4097
    %v5406 = vpack.c.b16 %v4106, %v4102
    %v5407 = vpack.c.b16 %v4107, %v4103
    %v5408 = vpack.c.b16 %v4108, %v4104
    %v5409 = vpack.c.b16 %v4109, %v4105
    %v5410 = vpack.c.b16 %v4114, %v4110
    %v5411 = vpack.c.b16 %v4115, %v4111
    %v5412 = vpack.c.b16 %v4116, %v4112
    %v5413 = vpack.c.b16 %v4117, %v4113
    %v5414 = vpack.c.b16 %v4122, %v4118
    %v5415 = vpack.c.b16 %v4123, %v4119
    %v5416 = vpack.c.b16 %v4124, %v4120
    %v5417 = vpack.c.b16 %v4125, %v4121
    %v5418 = vpack.c.b16 %v4130, %v4126
    %v5419 = vpack.c.b16 %v4131, %v4127
    %v5420 = vpack.c.b16 %v4132, %v4128
    %v5421 = vpack.c.b16 %v4133, %v4129
    %v5422 = vpack.c.b16 %v4138, %v4134
    %v5423 = vpack.c.b16 %v4139, %v4135
    %v5424 = vpack.c.b16 %v4140, %v4136
    %v5425 = vpack.c.b16 %v4141, %v4137
    %v5426 = vpack.c.b16 %v4146, %v4142
    %v5427 = vpack.c.b16 %v4147, %v4143
    %v5428 = vpack.c.b16 %v4148, %v4144
    %v5429 = vpack.c.b16 %v4149, %v4145
    %v5430 = vpack.c.b16 %v4154, %v4150
    %v5431 = vpack.c.b16 %v4155, %v4151
    %v5432 = vpack.c.b16 %v4156, %v4152
    %v5433 = vpack.c.b16 %v4157, %v4153
    %v5434 = vpack.c.b16 %v4162, %v4158
    %v5435 = vpack.c.b16 %v4163, %v4159
    %v5436 = vpack.c.b16 %v4164, %v4160
    %v5437 = vpack.c.b16 %v4165, %v4161
    %v5438 = vpack.c.b16 %v4170, %v4166
    %v5439 = vpack.c.b16 %v4171, %v4167
    %v5440 = vpack.c.b16 %v4172, %v4168
    %v5441 = vpack.c.b16 %v4173, %v4169
    %v5442 = vpack.c.b16 %v4178, %v4174
    %v5443 = vpack.c.b16 %v4179, %v4175
    %v5444 = vpack.c.b16 %v4180, %v4176
    %v5445 = vpack.c.b16 %v4181, %v4177
    %v5446 = vpack.c.b16 %v4186, %v4182
    %v5447 = vpack.c.b16 %v4187, %v4183
    %v5448 = vpack.c.b16 %v4188, %v4184
    %v5449 = vpack.c.b16 %v4189, %v4185
    %v5450 = vpack.c.b16 %v4194, %v4190
    %v5451 = vpack.c.b16 %v4195, %v4191
    %v5452 = vpack.c.b16 %v4196, %v4192
    %v5453 = vpack.c.b16 %v4197, %v4193
    %v5454 = vpack.c.b16 %v4202, %v4198
    %v5455 = vpack.c.b16 %v4203, %v4199
    %v5456 = vpack.c.b16 %v4204, %v4200
    %v5457 = vpack.c.b16 %v4205, %v4201
    %v5458 = vpack.c.b16 %v4210, %v4206
    %v5459 = vpack.c.b16 %v4211, %v4207
    %v5460 = vpack.c.b16 %v4212, %v4208
    %v5461 = vpack.c.b16 %v4213, %v4209
    %v5462 = vpack.c.b16 %v4218, %v4214
    %v5463 = vpack.c.b16 %v4219, %v4215
    %v5464 = vpack.c.b16 %v4220, %v4216
    %v5465 = vpack.c.b16 %v4221, %v4217
    %v5466 = vpack.c.b16 %v4226, %v4222
    %v5467 = vpack.c.b16 %v4227, %v4223
    %v5468 = vpack.c.b16 %v4228, %v4224
    %v5469 = vpack.c.b16 %v4229, %v4225
    %v5470 = vpack.c.b16 %v4234, %v4230
    %v5471 = vpack.c.b16 %v4235, %v4231
    %v5472 = vpack.c.b16 %v4236, %v4232
    %v5473 = vpack.c.b16 %v4237, %v4233
    %v5474 = vpack.c.b16 %v4242, %v4238
    %v5475 = vpack.c.b16 %v4243, %v4239
    %v5476 = vpack.c.b16 %v4244, %v4240
    %v5477 = vpack.c.b16 %v4245, %v4241
    %v5478 = vpack.c.b16 %v4250, %v4246
    %v5479 = vpack.c.b16 %v4251, %v4247
    %v5480 = vpack.c.b16 %v4252, %v4248
    %v5481 = vpack.c.b16 %v4253, %v4249
    %v5482 = vpack.c.b16 %v4258, %v4254
    %v5483 = vpack.c.b16 %v4259, %v4255
    %v5484 = vpack.c.b16 %v4260, %v4256
    %v5485 = vpack.c.b16 %v4261, %v4257
    %v5486 = vpack.c.b16 %v4266, %v4262
    %v5487 = vpack.c.b16 %v4267, %v4263
    %v5488 = vpack.c.b16 %v4268, %v4264
    %v5489 = vpack.c.b16 %v4269, %v4265
    %v5490 = vpack.c.b16 %v4274, %v4270
    %v5491 = vpack.c.b16 %v4275, %v4271
    %v5492 = vpack.c.b16 %v4276, %v4272
    %v5493 = vpack.c.b16 %v4277, %v4273
    %v5494 = vpack.c.b16 %v4282, %v4278
    %v5495 = vpack.c.b16 %v4283, %v4279
    %v5496 = vpack.c.b16 %v4284, %v4280
    %v5497 = vpack.c.b16 %v4285, %v4281
    %v5498 = vpack.c.b16 %v4290, %v4286
    %v5499 = vpack.c.b16 %v4291, %v4287
    %v5500 = vpack.c.b16 %v4292, %v4288
    %v5501 = vpack.c.b16 %v4293, %v4289
    %v5502 = vpack.c.b16 %v4298, %v4294
    %v5503 = vpack.c.b16 %v4299, %v4295
    %v5504 = vpack.c.b16 %v4300, %v4296
    %v5505 = vpack.c.b16 %v4301, %v4297
    %v5506 = vpack.c.b16 %v4306, %v4302
    %v5507 = vpack.c.b16 %v4307, %v4303
    %v5508 = vpack.c.b16 %v4308, %v4304
    %v5509 = vpack.c.b16 %v4309, %v4305
    %v5510 = vpack.c.b16 %v4314, %v4310
    %v5511 = vpack.c.b16 %v4315, %v4311
    %v5512 = vpack.c.b16 %v4316, %v4312
    %v5513 = vpack.c.b16 %v4317, %v4313
    %v5514 = vpack.c.b16 %v4322, %v4318
    %v5515 = vpack.c.b16 %v4323, %v4319
    %v5516 = vpack.c.b16 %v4324, %v4320
    %v5517 = vpack.c.b16 %v4325, %v4321
    %v5518 = vpack.c.b16 %v4330, %v4326
    %v5519 = vpack.c.b16 %v4331, %v4327
    %v5520 = vpack.c.b16 %v4332, %v4328
    %v5521 = vpack.c.b16 %v4333, %v4329
    %v5522 = vpack.c.b16 %v4338, %v4334
    %v5523 = vpack.c.b16 %v4339, %v4335
    %v5524 = vpack.c.b16 %v4340, %v4336
    %v5525 = vpack.c.b16 %v4341, %v4337
    %v5526 = vpack.c.b16 %v4346, %v4342
    %v5527 = vpack.c.b16 %v4347, %v4343
    %v5528 = vpack.c.b16 %v4348, %v4344
    %v5529 = vpack.c.b16 %v4349, %v4345
    %v5530 = vpack.c.b16 %v4354, %v4350
    %v5531 = vpack.c.b16 %v4355, %v4351
    %v5532 = vpack.c.b16 %v4356, %v4352
    %v5533 = vpack.c.b16 %v4357, %v4353
    %v5534 = vpack.c.b16 %v4362, %v4358
    %v5535 = vpack.c.b16 %v4363, %v4359
    %v5536 = vpack.c.b16 %v4364, %v4360
    %v5537 = vpack.c.b16 %v4365, %v4361
    %v5538 = vpack.c.b16 %v4370, %v4366
    %v5539 = vpack.c.b16 %v4371, %v4367
    %v5540 = vpack.c.b16 %v4372, %v4368
    %v5541 = vpack.c.b16 %v4373, %v4369
    %v5542 = vpack.c.b16 %v4378, %v4374
    %v5543 = vpack.c.b16 %v4379, %v4375
    %v5544 = vpack.c.b16 %v4380, %v4376
    %v5545 = vpack.c.b16 %v4381, %v4377
    %v5546 = vpack.c.b16 %v4386, %v4382
    %v5547 = vpack.c.b16 %v4387, %v4383
    %v5548 = vpack.c.b16 %v4388, %v4384
    %v5549 = vpack.c.b16 %v4389, %v4385
    %v5550 = vpack.c.b16 %v4394, %v4390
    %v5551 = vpack.c.b16 %v4395, %v4391
    %v5552 = vpack.c.b16 %v4396, %v4392
    %v5553 = vpack.c.b16 %v4397, %v4393
    %v5554 = vpack.c.b16 %v4402, %v4398
    %v5555 = vpack.c.b16 %v4403, %v4399
    %v5556 = vpack.c.b16 %v4404, %v4400
    %v5557 = vpack.c.b16 %v4405, %v4401
    %v5558 = vpack.c.b16 %v4410, %v4406
    %v5559 = vpack.c.b16 %v4411, %v4407
    %v5560 = vpack.c.b16 %v4412, %v4408
    %v5561 = vpack.c.b16 %v4413, %v4409
    %v5562 = vpack.c.b16 %v4418, %v4414
    %v5563 = vpack.c.b16 %v4419, %v4415
    %v5564 = vpack.c.b16 %v4420, %v4416
    %v5565 = vpack.c.b16 %v4421, %v4417
    %v5566 = vpack.c.b16 %v4426, %v4422
    %v5567 = vpack.c.b16 %v4427, %v4423
    %v5568 = vpack.c.b16 %v4428, %v4424
    %v5569 = vpack.c.b16 %v4429, %v4425
    %v5570 = vpack.c.b16 %v4434, %v4430
    %v5571 = vpack.c.b16 %v4435, %v4431
    %v5572 = vpack.c.b16 %v4436, %v4432
    %v5573 = vpack.c.b16 %v4437, %v4433
    %v5574 = vpack.c.b16 %v4442, %v4438
    %v5575 = vpack.c.b16 %v4443, %v4439
    %v5576 = vpack.c.b16 %v4444, %v4440
    %v5577 = vpack.c.b16 %v4445, %v4441
    %v5578 = vpack.c.b16 %v4450, %v4446
    %v5579 = vpack.c.b16 %v4451, %v4447
    %v5580 = vpack.c.b16 %v4452, %v4448
    %v5581 = vpack.c.b16 %v4453, %v4449
    %v5582 = vpack.c.b16 %v4458, %v4454
    %v5583 = vpack.c.b16 %v4459, %v4455
    %v5584 = vpack.c.b16 %v4460, %v4456
    %v5585 = vpack.c.b16 %v4461, %v4457
    %v5586 = vpack.c.b16 %v4466, %v4462
    %v5587 = vpack.c.b16 %v4467, %v4463
    %v5588 = vpack.c.b16 %v4468, %v4464
    %v5589 = vpack.c.b16 %v4469, %v4465
    %v5590 = vpack.c.b16 %v4474, %v4470
    %v5591 = vpack.c.b16 %v4475, %v4471
    %v5592 = vpack.c.b16 %v4476, %v4472
    %v5593 = vpack.c.b16 %v4477, %v4473
    %v5594 = vpack.c.b16 %v4482, %v4478
    %v5595 = vpack.c.b16 %v4483, %v4479
    %v5596 = vpack.c.b16 %v4484, %v4480
    %v5597 = vpack.c.b16 %v4485, %v4481
    %v5598 = vpack.c.b16 %v4490, %v4486
    %v5599 = vpack.c.b16 %v4491, %v4487
    %v5600 = vpack.c.b16 %v4492, %v4488
    %v5601 = vpack.c.b16 %v4493, %v4489
    %v5602 = vpack.c.b16 %v4498, %v4494
    %v5603 = vpack.c.b16 %v4499, %v4495
    %v5604 = vpack.c.b16 %v4500, %v4496
    %v5605 = vpack.c.b16 %v4501, %v4497
    %v5606 = vpack.c.b16 %v4506, %v4502
    %v5607 = vpack.c.b16 %v4507, %v4503
    %v5608 = vpack.c.b16 %v4508, %v4504
    %v5609 = vpack.c.b16 %v4509, %v4505
    %v5610 = vpack.c.b16 %v4514, %v4510
    %v5611 = vpack.c.b16 %v4515, %v4511
    %v5612 = vpack.c.b16 %v4516, %v4512
    %v5613 = vpack.c.b16 %v4517, %v4513
    %v5614 = vpack.c.b16 %v4522, %v4518
    %v5615 = vpack.c.b16 %v4523, %v4519
    %v5616 = vpack.c.b16 %v4524, %v4520
    %v5617 = vpack.c.b16 %v4525, %v4521
    %v5618 = vpack.c.b16 %v4530, %v4526
    %v5619 = vpack.c.b16 %v4531, %v4527
    %v5620 = vpack.c.b16 %v4532, %v4528
    %v5621 = vpack.c.b16 %v4533, %v4529
    %v5622 = vpack.c.b16 %v4538, %v4534
    %v5623 = vpack.c.b16 %v4539, %v4535
    %v5624 = vpack.c.b16 %v4540, %v4536
    %v5625 = vpack.c.b16 %v4541, %v4537
    %v5626 = vpack.c.b16 %v4546, %v4542
    %v5627 = vpack.c.b16 %v4547, %v4543
    %v5628 = vpack.c.b16 %v4548, %v4544
    %v5629 = vpack.c.b16 %v4549, %v4545
    %v5630 = vpack.c.b16 %v4554, %v4550
    %v5631 = vpack.c.b16 %v4555, %v4551
    %v5632 = vpack.c.b16 %v4556, %v4552
    %v5633 = vpack.c.b16 %v4557, %v4553
    %v5634 = vpack.c.b16 %v4562, %v4558
    %v5635 = vpack.c.b16 %v4563, %v4559
    %v5636 = vpack.c.b16 %v4564, %v4560
    %v5637 = vpack.c.b16 %v4565, %v4561
    %v5638 = vpack.c.b16 %v4570, %v4566
    %v5639 = vpack.c.b16 %v4571, %v4567
    %v5640 = vpack.c.b16 %v4572, %v4568
    %v5641 = vpack.c.b16 %v4573, %v4569
    %v5642 = vpack.c.b16 %v4578, %v4574
    %v5643 = vpack.c.b16 %v4579, %v4575
    %v5644 = vpack.c.b16 %v4580, %v4576
    %v5645 = vpack.c.b16 %v4581, %v4577
    %v5646 = vpack.c.b16 %v4586, %v4582
    %v5647 = vpack.c.b16 %v4587, %v4583
    %v5648 = vpack.c.b16 %v4588, %v4584
    %v5649 = vpack.c.b16 %v4589, %v4585
    %v5650 = vpack.c.b16 %v4594, %v4590
    %v5651 = vpack.c.b16 %v4595, %v4591
    %v5652 = vpack.c.b16 %v4596, %v4592
    %v5653 = vpack.c.b16 %v4597, %v4593
    %v5654 = vpack.c.b16 %v4602, %v4598
    %v5655 = vpack.c.b16 %v4603, %v4599
    %v5656 = vpack.c.b16 %v4604, %v4600
    %v5657 = vpack.c.b16 %v4605, %v4601
    %v5658 = vpack.c.b16 %v4610, %v4606
    %v5659 = vpack.c.b16 %v4611, %v4607
    %v5660 = vpack.c.b16 %v4612, %v4608
    %v5661 = vpack.c.b16 %v4613, %v4609
    %v5662 = vpack.c.b16 %v4618, %v4614
    %v5663 = vpack.c.b16 %v4619, %v4615
    %v5664 = vpack.c.b16 %v4620, %v4616
    %v5665 = vpack.c.b16 %v4621, %v4617
    %v5666 = vpack.c.b16 %v4626, %v4622
    %v5667 = vpack.c.b16 %v4627, %v4623
    %v5668 = vpack.c.b16 %v4628, %v4624
    %v5669 = vpack.c.b16 %v4629, %v4625
    %v5670 = vpack.c.b16 %v4634, %v4630
    %v5671 = vpack.c.b16 %v4635, %v4631
    %v5672 = vpack.c.b16 %v4636, %v4632
    %v5673 = vpack.c.b16 %v4637, %v4633
    %v5674 = vpack.c.b16 %v4642, %v4638
    %v5675 = vpack.c.b16 %v4643, %v4639
    %v5676 = vpack.c.b16 %v4644, %v4640
    %v5677 = vpack.c.b16 %v4645, %v4641
    %v5678 = vpack.c.b16 %v4650, %v4646
    %v5679 = vpack.c.b16 %v4651, %v4647
    %v5680 = vpack.c.b16 %v4652, %v4648
    %v5681 = vpack.c.b16 %v4653, %v4649
    %v5682 = vpack.c.b16 %v4658, %v4654
    %v5683 = vpack.c.b16 %v4659, %v4655
    %v5684 = vpack.c.b16 %v4660, %v4656
    %v5685 = vpack.c.b16 %v4661, %v4657
    %v5686 = vpack.c.b16 %v4666, %v4662
    %v5687 = vpack.c.b16 %v4667, %v4663
    %v5688 = vpack.c.b16 %v4668, %v4664
    %v5689 = vpack.c.b16 %v4669, %v4665
    %v5690 = vpack.c.b16 %v4674, %v4670
    %v5691 = vpack.c.b16 %v4675, %v4671
    %v5692 = vpack.c.b16 %v4676, %v4672
    %v5693 = vpack.c.b16 %v4677, %v4673
    %v5694 = vpack.c.b16 %v4682, %v4678
    %v5695 = vpack.c.b16 %v4683, %v4679
    %v5696 = vpack.c.b16 %v4684, %v4680
    %v5697 = vpack.c.b16 %v4685, %v4681
    %v5698 = vpack.c.b16 %v4690, %v4686
    %v5699 = vpack.c.b16 %v4691, %v4687
    %v5700 = vpack.c.b16 %v4692, %v4688
    %v5701 = vpack.c.b16 %v4693, %v4689
    %v5702 = vpack.c.b16 %v4698, %v4694
    %v5703 = vpack.c.b16 %v4699, %v4695
    %v5704 = vpack.c.b16 %v4700, %v4696
    %v5705 = vpack.c.b16 %v4701, %v4697
    %v5706 = vpack.c.b16 %v4706, %v4702
    %v5707 = vpack.c.b16 %v4707, %v4703
    %v5708 = vpack.c.b16 %v4708, %v4704
    %v5709 = vpack.c.b16 %v4709, %v4705
    %v5710 = vpack.c.b16 %v4714, %v4710
    %v5711 = vpack.c.b16 %v4715, %v4711
    %v5712 = vpack.c.b16 %v4716, %v4712
    %v5713 = vpack.c.b16 %v4717, %v4713
    %v5714 = vpack.c.b16 %v4722, %v4718
    %v5715 = vpack.c.b16 %v4723, %v4719
    %v5716 = vpack.c.b16 %v4724, %v4720
    %v5717 = vpack.c.b16 %v4725, %v4721
    %v5718 = vpack.c.b16 %v4730, %v4726
    %v5719 = vpack.c.b16 %v4731, %v4727
    %v5720 = vpack.c.b16 %v4732, %v4728
    %v5721 = vpack.c.b16 %v4733, %v4729
    %v5722 = vpack.c.b16 %v4738, %v4734
    %v5723 = vpack.c.b16 %v4739, %v4735
    %v5724 = vpack.c.b16 %v4740, %v4736
    %v5725 = vpack.c.b16 %v4741, %v4737
    %v5726 = vpack.c.b16 %v4746, %v4742
    %v5727 = vpack.c.b16 %v4747, %v4743
    %v5728 = vpack.c.b16 %v4748, %v4744
    %v5729 = vpack.c.b16 %v4749, %v4745
    %v5730 = vpack.c.b16 %v4754, %v4750
    %v5731 = vpack.c.b16 %v4755, %v4751
    %v5732 = vpack.c.b16 %v4756, %v4752
    %v5733 = vpack.c.b16 %v4757, %v4753
    %v5734 = vpack.c.b16 %v4762, %v4758
    %v5735 = vpack.c.b16 %v4763, %v4759
    %v5736 = vpack.c.b16 %v4764, %v4760
    %v5737 = vpack.c.b16 %v4765, %v4761
    %v5738 = vpack.c.b16 %v4770, %v4766
    %v5739 = vpack.c.b16 %v4771, %v4767
    %v5740 = vpack.c.b16 %v4772, %v4768
    %v5741 = vpack.c.b16 %v4773, %v4769
    %v5742 = vpack.c.b16 %v4778, %v4774
    %v5743 = vpack.c.b16 %v4779, %v4775
    %v5744 = vpack.c.b16 %v4780, %v4776
    %v5745 = vpack.c.b16 %v4781, %v4777
    %v5746 = vpack.c.b16 %v4786, %v4782
    %v5747 = vpack.c.b16 %v4787, %v4783
    %v5748 = vpack.c.b16 %v4788, %v4784
    %v5749 = vpack.c.b16 %v4789, %v4785
    %v5750 = vpack.c.b16 %v4794, %v4790
    %v5751 = vpack.c.b16 %v4795, %v4791
    %v5752 = vpack.c.b16 %v4796, %v4792
    %v5753 = vpack.c.b16 %v4797, %v4793
    %v5754 = vpack.c.b16 %v4802, %v4798
    %v5755 = vpack.c.b16 %v4803, %v4799
    %v5756 = vpack.c.b16 %v4804, %v4800
    %v5757 = vpack.c.b16 %v4805, %v4801
    %v5758 = vpack.c.b16 %v4810, %v4806
    %v5759 = vpack.c.b16 %v4811, %v4807
    %v5760 = vpack.c.b16 %v4812, %v4808
    %v5761 = vpack.c.b16 %v4813, %v4809
    %v5762 = vpack.c.b16 %v4818, %v4814
    %v5763 = vpack.c.b16 %v4819, %v4815
    %v5764 = vpack.c.b16 %v4820, %v4816
    %v5765 = vpack.c.b16 %v4821, %v4817
    %v5766 = vpack.c.b16 %v4826, %v4822
    %v5767 = vpack.c.b16 %v4827, %v4823
    %v5768 = vpack.c.b16 %v4828, %v4824
    %v5769 = vpack.c.b16 %v4829, %v4825
    %v5770 = vpack.c.b16 %v4834, %v4830
    %v5771 = vpack.c.b16 %v4835, %v4831
    %v5772 = vpack.c.b16 %v4836, %v4832
    %v5773 = vpack.c.b16 %v4837, %v4833
    %v5774 = vpack.c.b16 %v4842, %v4838
    %v5775 = vpack.c.b16 %v4843, %v4839
    %v5776 = vpack.c.b16 %v4844, %v4840
    %v5777 = vpack.c.b16 %v4845, %v4841
    %v5778 = vpack.c.b16 %v4850, %v4846
    %v5779 = vpack.c.b16 %v4851, %v4847
    %v5780 = vpack.c.b16 %v4852, %v4848
    %v5781 = vpack.c.b16 %v4853, %v4849
    %v5782 = vpack.c.b16 %v4858, %v4854
    %v5783 = vpack.c.b16 %v4859, %v4855
    %v5784 = vpack.c.b16 %v4860, %v4856
    %v5785 = vpack.c.b16 %v4861, %v4857
    %v5786 = vpack.c.b16 %v4866, %v4862
    %v5787 = vpack.c.b16 %v4867, %v4863
    %v5788 = vpack.c.b16 %v4868, %v4864
    %v5789 = vpack.c.b16 %v4869, %v4865
    %v5790 = vpack.c.b16 %v4874, %v4870
    %v5791 = vpack.c.b16 %v4875, %v4871
    %v5792 = vpack.c.b16 %v4876, %v4872
    %v5793 = vpack.c.b16 %v4877, %v4873
    %v5794 = vpack.c.b16 %v4882, %v4878
    %v5795 = vpack.c.b16 %v4883, %v4879
    %v5796 = vpack.c.b16 %v4884, %v4880
    %v5797 = vpack.c.b16 %v4885, %v4881
    %v5798 = vpack.c.b16 %v4890, %v4886
    %v5799 = vpack.c.b16 %v4891, %v4887
    %v5800 = vpack.c.b16 %v4892, %v4888
    %v5801 = vpack.c.b16 %v4893, %v4889
    %v5802 = vpack.c.b16 %v4898, %v4894
    %v5803 = vpack.c.b16 %v4899, %v4895
    %v5804 = vpack.c.b16 %v4900, %v4896
    %v5805 = vpack.c.b16 %v4901, %v4897
    %v5806 = vpack.c.b16 %v4906, %v4902
    %v5807 = vpack.c.b16 %v4907, %v4903
    %v5808 = vpack.c.b16 %v4908, %v4904
    %v5809 = vpack.c.b16 %v4909, %v4905
    %v5810 = vpack.c.b16 %v4914, %v4910
    %v5811 = vpack.c.b16 %v4915, %v4911
    %v5812 = vpack.c.b16 %v4916, %v4912
    %v5813 = vpack.c.b16 %v4917, %v4913
    %v5814 = vpack.c.b16 %v4922, %v4918
    %v5815 = vpack.c.b16 %v4923, %v4919
    %v5816 = vpack.c.b16 %v4924, %v4920
    %v5817 = vpack.c.b16 %v4925, %v4921
    %v5818 = vpack.c.b16 %v4930, %v4926
    %v5819 = vpack.c.b16 %v4931, %v4927
    %v5820 = vpack.c.b16 %v4932, %v4928
    %v5821 = vpack.c.b16 %v4933, %v4929
    %v5822 = vpack.c.b16 %v4938, %v4934
    %v5823 = vpack.c.b16 %v4939, %v4935
    %v5824 = vpack.c.b16 %v4940, %v4936
    %v5825 = vpack.c.b16 %v4941, %v4937
    %v5826 = vpack.c.b16 %v4946, %v4942
    %v5827 = vpack.c.b16 %v4947, %v4943
    %v5828 = vpack.c.b16 %v4948, %v4944
    %v5829 = vpack.c.b16 %v4949, %v4945
    %v5830 = vpack.c.b16 %v4954, %v4950
    %v5831 = vpack.c.b16 %v4955, %v4951
    %v5832 = vpack.c.b16 %v4956, %v4952
    %v5833 = vpack.c.b16 %v4957, %v4953
    %v5834 = vpack.c.b16 %v4962, %v4958
    %v5835 = vpack.c.b16 %v4963, %v4959
    %v5836 = vpack.c.b16 %v4964, %v4960
    %v5837 = vpack.c.b16 %v4965, %v4961
    %v5838 = vpack.c.b16 %v4970, %v4966
    %v5839 = vpack.c.b16 %v4971, %v4967
    %v5840 = vpack.c.b16 %v4972, %v4968
    %v5841 = vpack.c.b16 %v4973, %v4969
    %v5842 = vpack.c.b16 %v4978, %v4974
    %v5843 = vpack.c.b16 %v4979, %v4975
    %v5844 = vpack.c.b16 %v4980, %v4976
    %v5845 = vpack.c.b16 %v4981, %v4977
    %6710 = vmatpush.bf16.msra.mxu0 %v5010
    %6711 = vmatpush.bf16.msra.mxu0 %v5006
    %6712 = vmatpush.bf16.msra.mxu0 %v5002
    %6713 = vmatpush.bf16.msra.mxu0 %v4998
    %6714 = vmatpush.bf16.msra.mxu0 %v4994
    %6715 = vmatpush.bf16.msra.mxu0 %v4990
    %6716 = vmatpush.bf16.msra.mxu0 %v4986
    %6717 = vmatpush.bf16.msra.mxu0 %v4982
    %6718 = vmatmul.bf16.gmra.mxu0 %v1958
    %v6719 = vpop.f32.mrf.mxu0
    %v6720 = vadd.f32 0.0, %v6719
    %v6721 = vpop.f32.mrf.mxu0
    %v6722 = vadd.f32 0.0, %v6721
    %6723 = vmatmul.bf16.gmra.mxu0 %v1985
    %v6724 = vpop.f32.mrf.mxu0
    %v6725 = vadd.f32 0.0, %v6724
    %v6726 = vpop.f32.mrf.mxu0
    %v6727 = vadd.f32 0.0, %v6726
    %6728 = vmatmul.bf16.gmra.mxu0 %v2012
    %v6729 = vpop.f32.mrf.mxu0
    %v6730 = vadd.f32 0.0, %v6729
    %v6731 = vpop.f32.mrf.mxu0
    %v6732 = vadd.f32 0.0, %v6731
    %6733 = vmatmul.bf16.gmra.mxu0 %v2039
    %v6734 = vpop.f32.mrf.mxu0
    %v6735 = vadd.f32 0.0, %v6734
    %v6736 = vpop.f32.mrf.mxu0
    %v6737 = vadd.f32 0.0, %v6736
    %6738 = vmatmul.bf16.gmra.mxu0 %v2066
    %v6739 = vpop.f32.mrf.mxu0
    %v6740 = vadd.f32 0.0, %v6739
    %v6741 = vpop.f32.mrf.mxu0
    %v6742 = vadd.f32 0.0, %v6741
    %6743 = vmatmul.bf16.gmra.mxu0 %v2093
    %v6744 = vpop.f32.mrf.mxu0
    %v6745 = vadd.f32 0.0, %v6744
    %v6746 = vpop.f32.mrf.mxu0
    %v6747 = vadd.f32 0.0, %v6746
    %6748 = vmatmul.bf16.gmra.mxu0 %v2120
    %v6749 = vpop.f32.mrf.mxu0
    %v6750 = vadd.f32 0.0, %v6749
    %v6751 = vpop.f32.mrf.mxu0
    %v6752 = vadd.f32 0.0, %v6751
    %6753 = vmatmul.bf16.gmra.mxu0 %v2147
    %v6754 = vpop.f32.mrf.mxu0
    %v6755 = vadd.f32 0.0, %v6754
    %v6756 = vpop.f32.mrf.mxu0
    %v6757 = vadd.f32 0.0, %v6756
    %6758 = vdwg.mxu0
    %6759 = vmatpush.bf16.msra.mxu0 %v5042
    %6760 = vmatpush.bf16.msra.mxu0 %v5038
    %6761 = vmatpush.bf16.msra.mxu0 %v5034
    %6762 = vmatpush.bf16.msra.mxu0 %v5030
    %6763 = vmatpush.bf16.msra.mxu0 %v5026
    %6764 = vmatpush.bf16.msra.mxu0 %v5022
    %6765 = vmatpush.bf16.msra.mxu0 %v5018
    %6766 = vmatpush.bf16.msra.mxu0 %v5014
    %6767 = vmatmul.bf16.gmra.mxu0 %v1959
    %v6768 = vpop.f32.mrf.mxu0
    %v6769 = vadd.f32 %v6720, %v6768
    %v6770 = vpop.f32.mrf.mxu0
    %v6771 = vadd.f32 %v6722, %v6770
    %6772 = vmatmul.bf16.gmra.mxu0 %v1986
    %v6773 = vpop.f32.mrf.mxu0
    %v6774 = vadd.f32 %v6725, %v6773
    %v6775 = vpop.f32.mrf.mxu0
    %v6776 = vadd.f32 %v6727, %v6775
    %6777 = vmatmul.bf16.gmra.mxu0 %v2013
    %v6778 = vpop.f32.mrf.mxu0
    %v6779 = vadd.f32 %v6730, %v6778
    %v6780 = vpop.f32.mrf.mxu0
    %v6781 = vadd.f32 %v6732, %v6780
    %6782 = vmatmul.bf16.gmra.mxu0 %v2040
    %v6783 = vpop.f32.mrf.mxu0
    %v6784 = vadd.f32 %v6735, %v6783
    %v6785 = vpop.f32.mrf.mxu0
    %v6786 = vadd.f32 %v6737, %v6785
    %6787 = vmatmul.bf16.gmra.mxu0 %v2067
    %v6788 = vpop.f32.mrf.mxu0
    %v6789 = vadd.f32 %v6740, %v6788
    %v6790 = vpop.f32.mrf.mxu0
    %v6791 = vadd.f32 %v6742, %v6790
    %6792 = vmatmul.bf16.gmra.mxu0 %v2094
    %v6793 = vpop.f32.mrf.mxu0
    %v6794 = vadd.f32 %v6745, %v6793
    %v6795 = vpop.f32.mrf.mxu0
    %v6796 = vadd.f32 %v6747, %v6795
    %6797 = vmatmul.bf16.gmra.mxu0 %v2121
    %v6798 = vpop.f32.mrf.mxu0
    %v6799 = vadd.f32 %v6750, %v6798
    %v6800 = vpop.f32.mrf.mxu0
    %v6801 = vadd.f32 %v6752, %v6800
    %6802 = vmatmul.bf16.gmra.mxu0 %v2148
    %v6803 = vpop.f32.mrf.mxu0
    %v6804 = vadd.f32 %v6755, %v6803
    %v6805 = vpop.f32.mrf.mxu0
    %v6806 = vadd.f32 %v6757, %v6805
    %6807 = vdwg.mxu0
    %6808 = vmatpush.bf16.msra.mxu0 %v5074
    %6809 = vmatpush.bf16.msra.mxu0 %v5070
    %6810 = vmatpush.bf16.msra.mxu0 %v5066
    %6811 = vmatpush.bf16.msra.mxu0 %v5062
    %6812 = vmatpush.bf16.msra.mxu0 %v5058
    %6813 = vmatpush.bf16.msra.mxu0 %v5054
    %6814 = vmatpush.bf16.msra.mxu0 %v5050
    %6815 = vmatpush.bf16.msra.mxu0 %v5046
    %6816 = vmatmul.bf16.gmra.mxu0 %v1960
    %v6817 = vpop.f32.mrf.mxu0
    %v6818 = vadd.f32 %v6769, %v6817
    %v6819 = vpop.f32.mrf.mxu0
    %v6820 = vadd.f32 %v6771, %v6819
    %6821 = vmatmul.bf16.gmra.mxu0 %v1987
    %v6822 = vpop.f32.mrf.mxu0
    %v6823 = vadd.f32 %v6774, %v6822
    %v6824 = vpop.f32.mrf.mxu0
    %v6825 = vadd.f32 %v6776, %v6824
    %6826 = vmatmul.bf16.gmra.mxu0 %v2014
    %v6827 = vpop.f32.mrf.mxu0
    %v6828 = vadd.f32 %v6779, %v6827
    %v6829 = vpop.f32.mrf.mxu0
    %v6830 = vadd.f32 %v6781, %v6829
    %6831 = vmatmul.bf16.gmra.mxu0 %v2041
    %v6832 = vpop.f32.mrf.mxu0
    %v6833 = vadd.f32 %v6784, %v6832
    %v6834 = vpop.f32.mrf.mxu0
    %v6835 = vadd.f32 %v6786, %v6834
    %6836 = vmatmul.bf16.gmra.mxu0 %v2068
    %v6837 = vpop.f32.mrf.mxu0
    %v6838 = vadd.f32 %v6789, %v6837
    %v6839 = vpop.f32.mrf.mxu0
    %v6840 = vadd.f32 %v6791, %v6839
    %6841 = vmatmul.bf16.gmra.mxu0 %v2095
    %v6842 = vpop.f32.mrf.mxu0
    %v6843 = vadd.f32 %v6794, %v6842
    %v6844 = vpop.f32.mrf.mxu0
    %v6845 = vadd.f32 %v6796, %v6844
    %6846 = vmatmul.bf16.gmra.mxu0 %v2122
    %v6847 = vpop.f32.mrf.mxu0
    %v6848 = vadd.f32 %v6799, %v6847
    %v6849 = vpop.f32.mrf.mxu0
    %v6850 = vadd.f32 %v6801, %v6849
    %6851 = vmatmul.bf16.gmra.mxu0 %v2149
    %v6852 = vpop.f32.mrf.mxu0
    %v6853 = vadd.f32 %v6804, %v6852
    %v6854 = vpop.f32.mrf.mxu0
    %v6855 = vadd.f32 %v6806, %v6854
    %6856 = vdwg.mxu0
    %6857 = vmatpush.bf16.msra.mxu0 %v5106
    %6858 = vmatpush.bf16.msra.mxu0 %v5102
    %6859 = vmatpush.bf16.msra.mxu0 %v5098
    %6860 = vmatpush.bf16.msra.mxu0 %v5094
    %6861 = vmatpush.bf16.msra.mxu0 %v5090
    %6862 = vmatpush.bf16.msra.mxu0 %v5086
    %6863 = vmatpush.bf16.msra.mxu0 %v5082
    %6864 = vmatpush.bf16.msra.mxu0 %v5078
    %6865 = vmatmul.bf16.gmra.mxu0 %v1961
    %v6866 = vpop.f32.mrf.mxu0
    %v6867 = vadd.f32 %v6818, %v6866
    %v6868 = vpop.f32.mrf.mxu0
    %v6869 = vadd.f32 %v6820, %v6868
    %6870 = vmatmul.bf16.gmra.mxu0 %v1988
    %v6871 = vpop.f32.mrf.mxu0
    %v6872 = vadd.f32 %v6823, %v6871
    %v6873 = vpop.f32.mrf.mxu0
    %v6874 = vadd.f32 %v6825, %v6873
    %6875 = vmatmul.bf16.gmra.mxu0 %v2015
    %v6876 = vpop.f32.mrf.mxu0
    %v6877 = vadd.f32 %v6828, %v6876
    %v6878 = vpop.f32.mrf.mxu0
    %v6879 = vadd.f32 %v6830, %v6878
    %6880 = vmatmul.bf16.gmra.mxu0 %v2042
    %v6881 = vpop.f32.mrf.mxu0
    %v6882 = vadd.f32 %v6833, %v6881
    %v6883 = vpop.f32.mrf.mxu0
    %v6884 = vadd.f32 %v6835, %v6883
    %6885 = vmatmul.bf16.gmra.mxu0 %v2069
    %v6886 = vpop.f32.mrf.mxu0
    %v6887 = vadd.f32 %v6838, %v6886
    %v6888 = vpop.f32.mrf.mxu0
    %v6889 = vadd.f32 %v6840, %v6888
    %6890 = vmatmul.bf16.gmra.mxu0 %v2096
    %v6891 = vpop.f32.mrf.mxu0
    %v6892 = vadd.f32 %v6843, %v6891
    %v6893 = vpop.f32.mrf.mxu0
    %v6894 = vadd.f32 %v6845, %v6893
    %6895 = vmatmul.bf16.gmra.mxu0 %v2123
    %v6896 = vpop.f32.mrf.mxu0
    %v6897 = vadd.f32 %v6848, %v6896
    %v6898 = vpop.f32.mrf.mxu0
    %v6899 = vadd.f32 %v6850, %v6898
    %6900 = vmatmul.bf16.gmra.mxu0 %v2150
    %v6901 = vpop.f32.mrf.mxu0
    %v6902 = vadd.f32 %v6853, %v6901
    %v6903 = vpop.f32.mrf.mxu0
    %v6904 = vadd.f32 %v6855, %v6903
    %6905 = vdwg.mxu0
    %6906 = vmatpush.bf16.msra.mxu0 %v5138
    %6907 = vmatpush.bf16.msra.mxu0 %v5134
    %6908 = vmatpush.bf16.msra.mxu0 %v5130
    %6909 = vmatpush.bf16.msra.mxu0 %v5126
    %6910 = vmatpush.bf16.msra.mxu0 %v5122
    %6911 = vmatpush.bf16.msra.mxu0 %v5118
    %6912 = vmatpush.bf16.msra.mxu0 %v5114
    %6913 = vmatpush.bf16.msra.mxu0 %v5110
    %6914 = vmatmul.bf16.gmra.mxu0 %v1962
    %v6915 = vpop.f32.mrf.mxu0
    %v6916 = vadd.f32 %v6867, %v6915
    %v6917 = vpop.f32.mrf.mxu0
    %v6918 = vadd.f32 %v6869, %v6917
    %6919 = vmatmul.bf16.gmra.mxu0 %v1989
    %v6920 = vpop.f32.mrf.mxu0
    %v6921 = vadd.f32 %v6872, %v6920
    %v6922 = vpop.f32.mrf.mxu0
    %v6923 = vadd.f32 %v6874, %v6922
    %6924 = vmatmul.bf16.gmra.mxu0 %v2016
    %v6925 = vpop.f32.mrf.mxu0
    %v6926 = vadd.f32 %v6877, %v6925
    %v6927 = vpop.f32.mrf.mxu0
    %v6928 = vadd.f32 %v6879, %v6927
    %6929 = vmatmul.bf16.gmra.mxu0 %v2043
    %v6930 = vpop.f32.mrf.mxu0
    %v6931 = vadd.f32 %v6882, %v6930
    %v6932 = vpop.f32.mrf.mxu0
    %v6933 = vadd.f32 %v6884, %v6932
    %6934 = vmatmul.bf16.gmra.mxu0 %v2070
    %v6935 = vpop.f32.mrf.mxu0
    %v6936 = vadd.f32 %v6887, %v6935
    %v6937 = vpop.f32.mrf.mxu0
    %v6938 = vadd.f32 %v6889, %v6937
    %6939 = vmatmul.bf16.gmra.mxu0 %v2097
    %v6940 = vpop.f32.mrf.mxu0
    %v6941 = vadd.f32 %v6892, %v6940
    %v6942 = vpop.f32.mrf.mxu0
    %v6943 = vadd.f32 %v6894, %v6942
    %6944 = vmatmul.bf16.gmra.mxu0 %v2124
    %v6945 = vpop.f32.mrf.mxu0
    %v6946 = vadd.f32 %v6897, %v6945
    %v6947 = vpop.f32.mrf.mxu0
    %v6948 = vadd.f32 %v6899, %v6947
    %6949 = vmatmul.bf16.gmra.mxu0 %v2151
    %v6950 = vpop.f32.mrf.mxu0
    %v6951 = vadd.f32 %v6902, %v6950
    %v6952 = vpop.f32.mrf.mxu0
    %v6953 = vadd.f32 %v6904, %v6952
    %6954 = vdwg.mxu0
    %6955 = vmatpush.bf16.msra.mxu0 %v5170
    %6956 = vmatpush.bf16.msra.mxu0 %v5166
    %6957 = vmatpush.bf16.msra.mxu0 %v5162
    %6958 = vmatpush.bf16.msra.mxu0 %v5158
    %6959 = vmatpush.bf16.msra.mxu0 %v5154
    %6960 = vmatpush.bf16.msra.mxu0 %v5150
    %6961 = vmatpush.bf16.msra.mxu0 %v5146
    %6962 = vmatpush.bf16.msra.mxu0 %v5142
    %6963 = vmatmul.bf16.gmra.mxu0 %v1963
    %v6964 = vpop.f32.mrf.mxu0
    %v6965 = vadd.f32 %v6916, %v6964
    %v6966 = vpop.f32.mrf.mxu0
    %v6967 = vadd.f32 %v6918, %v6966
    %6968 = vmatmul.bf16.gmra.mxu0 %v1990
    %v6969 = vpop.f32.mrf.mxu0
    %v6970 = vadd.f32 %v6921, %v6969
    %v6971 = vpop.f32.mrf.mxu0
    %v6972 = vadd.f32 %v6923, %v6971
    %6973 = vmatmul.bf16.gmra.mxu0 %v2017
    %v6974 = vpop.f32.mrf.mxu0
    %v6975 = vadd.f32 %v6926, %v6974
    %v6976 = vpop.f32.mrf.mxu0
    %v6977 = vadd.f32 %v6928, %v6976
    %6978 = vmatmul.bf16.gmra.mxu0 %v2044
    %v6979 = vpop.f32.mrf.mxu0
    %v6980 = vadd.f32 %v6931, %v6979
    %v6981 = vpop.f32.mrf.mxu0
    %v6982 = vadd.f32 %v6933, %v6981
    %6983 = vmatmul.bf16.gmra.mxu0 %v2071
    %v6984 = vpop.f32.mrf.mxu0
    %v6985 = vadd.f32 %v6936, %v6984
    %v6986 = vpop.f32.mrf.mxu0
    %v6987 = vadd.f32 %v6938, %v6986
    %6988 = vmatmul.bf16.gmra.mxu0 %v2098
    %v6989 = vpop.f32.mrf.mxu0
    %v6990 = vadd.f32 %v6941, %v6989
    %v6991 = vpop.f32.mrf.mxu0
    %v6992 = vadd.f32 %v6943, %v6991
    %6993 = vmatmul.bf16.gmra.mxu0 %v2125
    %v6994 = vpop.f32.mrf.mxu0
    %v6995 = vadd.f32 %v6946, %v6994
    %v6996 = vpop.f32.mrf.mxu0
    %v6997 = vadd.f32 %v6948, %v6996
    %6998 = vmatmul.bf16.gmra.mxu0 %v2152
    %v6999 = vpop.f32.mrf.mxu0
    %v7000 = vadd.f32 %v6951, %v6999
    %v7001 = vpop.f32.mrf.mxu0
    %v7002 = vadd.f32 %v6953, %v7001
    %7003 = vdwg.mxu0
    %7004 = vmatpush.bf16.msra.mxu0 %v5202
    %7005 = vmatpush.bf16.msra.mxu0 %v5198
    %7006 = vmatpush.bf16.msra.mxu0 %v5194
    %7007 = vmatpush.bf16.msra.mxu0 %v5190
    %7008 = vmatpush.bf16.msra.mxu0 %v5186
    %7009 = vmatpush.bf16.msra.mxu0 %v5182
    %7010 = vmatpush.bf16.msra.mxu0 %v5178
    %7011 = vmatpush.bf16.msra.mxu0 %v5174
    %7012 = vmatmul.bf16.gmra.mxu0 %v1964
    %v7013 = vpop.f32.mrf.mxu0
    %v7014 = vadd.f32 %v6965, %v7013
    %v7015 = vpop.f32.mrf.mxu0
    %v7016 = vadd.f32 %v6967, %v7015
    %7017 = vmatmul.bf16.gmra.mxu0 %v1991
    %v7018 = vpop.f32.mrf.mxu0
    %v7019 = vadd.f32 %v6970, %v7018
    %v7020 = vpop.f32.mrf.mxu0
    %v7021 = vadd.f32 %v6972, %v7020
    %7022 = vmatmul.bf16.gmra.mxu0 %v2018
    %v7023 = vpop.f32.mrf.mxu0
    %v7024 = vadd.f32 %v6975, %v7023
    %v7025 = vpop.f32.mrf.mxu0
    %v7026 = vadd.f32 %v6977, %v7025
    %7027 = vmatmul.bf16.gmra.mxu0 %v2045
    %v7028 = vpop.f32.mrf.mxu0
    %v7029 = vadd.f32 %v6980, %v7028
    %v7030 = vpop.f32.mrf.mxu0
    %v7031 = vadd.f32 %v6982, %v7030
    %7032 = vmatmul.bf16.gmra.mxu0 %v2072
    %v7033 = vpop.f32.mrf.mxu0
    %v7034 = vadd.f32 %v6985, %v7033
    %v7035 = vpop.f32.mrf.mxu0
    %v7036 = vadd.f32 %v6987, %v7035
    %7037 = vmatmul.bf16.gmra.mxu0 %v2099
    %v7038 = vpop.f32.mrf.mxu0
    %v7039 = vadd.f32 %v6990, %v7038
    %v7040 = vpop.f32.mrf.mxu0
    %v7041 = vadd.f32 %v6992, %v7040
    %7042 = vmatmul.bf16.gmra.mxu0 %v2126
    %v7043 = vpop.f32.mrf.mxu0
    %v7044 = vadd.f32 %v6995, %v7043
    %v7045 = vpop.f32.mrf.mxu0
    %v7046 = vadd.f32 %v6997, %v7045
    %7047 = vmatmul.bf16.gmra.mxu0 %v2153
    %v7048 = vpop.f32.mrf.mxu0
    %v7049 = vadd.f32 %v7000, %v7048
    %v7050 = vpop.f32.mrf.mxu0
    %v7051 = vadd.f32 %v7002, %v7050
    %7052 = vdwg.mxu0
    %7053 = vmatpush.bf16.msra.mxu0 %v5234
    %7054 = vmatpush.bf16.msra.mxu0 %v5230
    %7055 = vmatpush.bf16.msra.mxu0 %v5226
    %7056 = vmatpush.bf16.msra.mxu0 %v5222
    %7057 = vmatpush.bf16.msra.mxu0 %v5218
    %7058 = vmatpush.bf16.msra.mxu0 %v5214
    %7059 = vmatpush.bf16.msra.mxu0 %v5210
    %7060 = vmatpush.bf16.msra.mxu0 %v5206
    %7061 = vmatmul.bf16.gmra.mxu0 %v1965
    %v7062 = vpop.f32.mrf.mxu0
    %v7063 = vadd.f32 %v7014, %v7062
    %v7064 = vpop.f32.mrf.mxu0
    %v7065 = vadd.f32 %v7016, %v7064
    %7066 = vmatmul.bf16.gmra.mxu0 %v1992
    %v7067 = vpop.f32.mrf.mxu0
    %v7068 = vadd.f32 %v7019, %v7067
    %v7069 = vpop.f32.mrf.mxu0
    %v7070 = vadd.f32 %v7021, %v7069
    %7071 = vmatmul.bf16.gmra.mxu0 %v2019
    %v7072 = vpop.f32.mrf.mxu0
    %v7073 = vadd.f32 %v7024, %v7072
    %v7074 = vpop.f32.mrf.mxu0
    %v7075 = vadd.f32 %v7026, %v7074
    %7076 = vmatmul.bf16.gmra.mxu0 %v2046
    %v7077 = vpop.f32.mrf.mxu0
    %v7078 = vadd.f32 %v7029, %v7077
    %v7079 = vpop.f32.mrf.mxu0
    %v7080 = vadd.f32 %v7031, %v7079
    %7081 = vmatmul.bf16.gmra.mxu0 %v2073
    %v7082 = vpop.f32.mrf.mxu0
    %v7083 = vadd.f32 %v7034, %v7082
    %v7084 = vpop.f32.mrf.mxu0
    %v7085 = vadd.f32 %v7036, %v7084
    %7086 = vmatmul.bf16.gmra.mxu0 %v2100
    %v7087 = vpop.f32.mrf.mxu0
    %v7088 = vadd.f32 %v7039, %v7087
    %v7089 = vpop.f32.mrf.mxu0
    %v7090 = vadd.f32 %v7041, %v7089
    %7091 = vmatmul.bf16.gmra.mxu0 %v2127
    %v7092 = vpop.f32.mrf.mxu0
    %v7093 = vadd.f32 %v7044, %v7092
    %v7094 = vpop.f32.mrf.mxu0
    %v7095 = vadd.f32 %v7046, %v7094
    %7096 = vmatmul.bf16.gmra.mxu0 %v2154
    %v7097 = vpop.f32.mrf.mxu0
    %v7098 = vadd.f32 %v7049, %v7097
    %v7099 = vpop.f32.mrf.mxu0
    %v7100 = vadd.f32 %v7051, %v7099
    %7101 = vdwg.mxu0
    %7102 = vmatpush.bf16.msra.mxu0 %v5266
    %7103 = vmatpush.bf16.msra.mxu0 %v5262
    %7104 = vmatpush.bf16.msra.mxu0 %v5258
    %7105 = vmatpush.bf16.msra.mxu0 %v5254
    %7106 = vmatpush.bf16.msra.mxu0 %v5250
    %7107 = vmatpush.bf16.msra.mxu0 %v5246
    %7108 = vmatpush.bf16.msra.mxu0 %v5242
    %7109 = vmatpush.bf16.msra.mxu0 %v5238
    %7110 = vmatmul.bf16.gmra.mxu0 %v1966
    %v7111 = vpop.f32.mrf.mxu0
    %v7112 = vadd.f32 %v7063, %v7111
    %v7113 = vpop.f32.mrf.mxu0
    %v7114 = vadd.f32 %v7065, %v7113
    %7115 = vmatmul.bf16.gmra.mxu0 %v1993
    %v7116 = vpop.f32.mrf.mxu0
    %v7117 = vadd.f32 %v7068, %v7116
    %v7118 = vpop.f32.mrf.mxu0
    %v7119 = vadd.f32 %v7070, %v7118
    %7120 = vmatmul.bf16.gmra.mxu0 %v2020
    %v7121 = vpop.f32.mrf.mxu0
    %v7122 = vadd.f32 %v7073, %v7121
    %v7123 = vpop.f32.mrf.mxu0
    %v7124 = vadd.f32 %v7075, %v7123
    %7125 = vmatmul.bf16.gmra.mxu0 %v2047
    %v7126 = vpop.f32.mrf.mxu0
    %v7127 = vadd.f32 %v7078, %v7126
    %v7128 = vpop.f32.mrf.mxu0
    %v7129 = vadd.f32 %v7080, %v7128
    %7130 = vmatmul.bf16.gmra.mxu0 %v2074
    %v7131 = vpop.f32.mrf.mxu0
    %v7132 = vadd.f32 %v7083, %v7131
    %v7133 = vpop.f32.mrf.mxu0
    %v7134 = vadd.f32 %v7085, %v7133
    %7135 = vmatmul.bf16.gmra.mxu0 %v2101
    %v7136 = vpop.f32.mrf.mxu0
    %v7137 = vadd.f32 %v7088, %v7136
    %v7138 = vpop.f32.mrf.mxu0
    %v7139 = vadd.f32 %v7090, %v7138
    %7140 = vmatmul.bf16.gmra.mxu0 %v2128
    %v7141 = vpop.f32.mrf.mxu0
    %v7142 = vadd.f32 %v7093, %v7141
    %v7143 = vpop.f32.mrf.mxu0
    %v7144 = vadd.f32 %v7095, %v7143
    %7145 = vmatmul.bf16.gmra.mxu0 %v2155
    %v7146 = vpop.f32.mrf.mxu0
    %v7147 = vadd.f32 %v7098, %v7146
    %v7148 = vpop.f32.mrf.mxu0
    %v7149 = vadd.f32 %v7100, %v7148
    %7150 = vdwg.mxu0
    %7151 = vmatpush.bf16.msra.mxu0 %v5298
    %7152 = vmatpush.bf16.msra.mxu0 %v5294
    %7153 = vmatpush.bf16.msra.mxu0 %v5290
    %7154 = vmatpush.bf16.msra.mxu0 %v5286
    %7155 = vmatpush.bf16.msra.mxu0 %v5282
    %7156 = vmatpush.bf16.msra.mxu0 %v5278
    %7157 = vmatpush.bf16.msra.mxu0 %v5274
    %7158 = vmatpush.bf16.msra.mxu0 %v5270
    %7159 = vmatmul.bf16.gmra.mxu0 %v1967
    %v7160 = vpop.f32.mrf.mxu0
    %v7161 = vadd.f32 %v7112, %v7160
    %v7162 = vpop.f32.mrf.mxu0
    %v7163 = vadd.f32 %v7114, %v7162
    %7164 = vmatmul.bf16.gmra.mxu0 %v1994
    %v7165 = vpop.f32.mrf.mxu0
    %v7166 = vadd.f32 %v7117, %v7165
    %v7167 = vpop.f32.mrf.mxu0
    %v7168 = vadd.f32 %v7119, %v7167
    %7169 = vmatmul.bf16.gmra.mxu0 %v2021
    %v7170 = vpop.f32.mrf.mxu0
    %v7171 = vadd.f32 %v7122, %v7170
    %v7172 = vpop.f32.mrf.mxu0
    %v7173 = vadd.f32 %v7124, %v7172
    %7174 = vmatmul.bf16.gmra.mxu0 %v2048
    %v7175 = vpop.f32.mrf.mxu0
    %v7176 = vadd.f32 %v7127, %v7175
    %v7177 = vpop.f32.mrf.mxu0
    %v7178 = vadd.f32 %v7129, %v7177
    %7179 = vmatmul.bf16.gmra.mxu0 %v2075
    %v7180 = vpop.f32.mrf.mxu0
    %v7181 = vadd.f32 %v7132, %v7180
    %v7182 = vpop.f32.mrf.mxu0
    %v7183 = vadd.f32 %v7134, %v7182
    %7184 = vmatmul.bf16.gmra.mxu0 %v2102
    %v7185 = vpop.f32.mrf.mxu0
    %v7186 = vadd.f32 %v7137, %v7185
    %v7187 = vpop.f32.mrf.mxu0
    %v7188 = vadd.f32 %v7139, %v7187
    %7189 = vmatmul.bf16.gmra.mxu0 %v2129
    %v7190 = vpop.f32.mrf.mxu0
    %v7191 = vadd.f32 %v7142, %v7190
    %v7192 = vpop.f32.mrf.mxu0
    %v7193 = vadd.f32 %v7144, %v7192
    %7194 = vmatmul.bf16.gmra.mxu0 %v2156
    %v7195 = vpop.f32.mrf.mxu0
    %v7196 = vadd.f32 %v7147, %v7195
    %v7197 = vpop.f32.mrf.mxu0
    %v7198 = vadd.f32 %v7149, %v7197
    %7199 = vdwg.mxu0
    %7200 = vmatpush.bf16.msra.mxu0 %v5330
    %7201 = vmatpush.bf16.msra.mxu0 %v5326
    %7202 = vmatpush.bf16.msra.mxu0 %v5322
    %7203 = vmatpush.bf16.msra.mxu0 %v5318
    %7204 = vmatpush.bf16.msra.mxu0 %v5314
    %7205 = vmatpush.bf16.msra.mxu0 %v5310
    %7206 = vmatpush.bf16.msra.mxu0 %v5306
    %7207 = vmatpush.bf16.msra.mxu0 %v5302
    %7208 = vmatmul.bf16.gmra.mxu0 %v1968
    %v7209 = vpop.f32.mrf.mxu0
    %v7210 = vadd.f32 %v7161, %v7209
    %v7211 = vpop.f32.mrf.mxu0
    %v7212 = vadd.f32 %v7163, %v7211
    %7213 = vmatmul.bf16.gmra.mxu0 %v1995
    %v7214 = vpop.f32.mrf.mxu0
    %v7215 = vadd.f32 %v7166, %v7214
    %v7216 = vpop.f32.mrf.mxu0
    %v7217 = vadd.f32 %v7168, %v7216
    %7218 = vmatmul.bf16.gmra.mxu0 %v2022
    %v7219 = vpop.f32.mrf.mxu0
    %v7220 = vadd.f32 %v7171, %v7219
    %v7221 = vpop.f32.mrf.mxu0
    %v7222 = vadd.f32 %v7173, %v7221
    %7223 = vmatmul.bf16.gmra.mxu0 %v2049
    %v7224 = vpop.f32.mrf.mxu0
    %v7225 = vadd.f32 %v7176, %v7224
    %v7226 = vpop.f32.mrf.mxu0
    %v7227 = vadd.f32 %v7178, %v7226
    %7228 = vmatmul.bf16.gmra.mxu0 %v2076
    %v7229 = vpop.f32.mrf.mxu0
    %v7230 = vadd.f32 %v7181, %v7229
    %v7231 = vpop.f32.mrf.mxu0
    %v7232 = vadd.f32 %v7183, %v7231
    %7233 = vmatmul.bf16.gmra.mxu0 %v2103
    %v7234 = vpop.f32.mrf.mxu0
    %v7235 = vadd.f32 %v7186, %v7234
    %v7236 = vpop.f32.mrf.mxu0
    %v7237 = vadd.f32 %v7188, %v7236
    %7238 = vmatmul.bf16.gmra.mxu0 %v2130
    %v7239 = vpop.f32.mrf.mxu0
    %v7240 = vadd.f32 %v7191, %v7239
    %v7241 = vpop.f32.mrf.mxu0
    %v7242 = vadd.f32 %v7193, %v7241
    %7243 = vmatmul.bf16.gmra.mxu0 %v2157
    %v7244 = vpop.f32.mrf.mxu0
    %v7245 = vadd.f32 %v7196, %v7244
    %v7246 = vpop.f32.mrf.mxu0
    %v7247 = vadd.f32 %v7198, %v7246
    %7248 = vdwg.mxu0
    %7249 = vmatpush.bf16.msra.mxu0 %v5362
    %7250 = vmatpush.bf16.msra.mxu0 %v5358
    %7251 = vmatpush.bf16.msra.mxu0 %v5354
    %7252 = vmatpush.bf16.msra.mxu0 %v5350
    %7253 = vmatpush.bf16.msra.mxu0 %v5346
    %7254 = vmatpush.bf16.msra.mxu0 %v5342
    %7255 = vmatpush.bf16.msra.mxu0 %v5338
    %7256 = vmatpush.bf16.msra.mxu0 %v5334
    %7257 = vmatmul.bf16.gmra.mxu0 %v1969
    %v7258 = vpop.f32.mrf.mxu0
    %v7259 = vadd.f32 %v7210, %v7258
    %v7260 = vpop.f32.mrf.mxu0
    %v7261 = vadd.f32 %v7212, %v7260
    %7262 = vmatmul.bf16.gmra.mxu0 %v1996
    %v7263 = vpop.f32.mrf.mxu0
    %v7264 = vadd.f32 %v7215, %v7263
    %v7265 = vpop.f32.mrf.mxu0
    %v7266 = vadd.f32 %v7217, %v7265
    %7267 = vmatmul.bf16.gmra.mxu0 %v2023
    %v7268 = vpop.f32.mrf.mxu0
    %v7269 = vadd.f32 %v7220, %v7268
    %v7270 = vpop.f32.mrf.mxu0
    %v7271 = vadd.f32 %v7222, %v7270
    %7272 = vmatmul.bf16.gmra.mxu0 %v2050
    %v7273 = vpop.f32.mrf.mxu0
    %v7274 = vadd.f32 %v7225, %v7273
    %v7275 = vpop.f32.mrf.mxu0
    %v7276 = vadd.f32 %v7227, %v7275
    %7277 = vmatmul.bf16.gmra.mxu0 %v2077
    %v7278 = vpop.f32.mrf.mxu0
    %v7279 = vadd.f32 %v7230, %v7278
    %v7280 = vpop.f32.mrf.mxu0
    %v7281 = vadd.f32 %v7232, %v7280
    %7282 = vmatmul.bf16.gmra.mxu0 %v2104
    %v7283 = vpop.f32.mrf.mxu0
    %v7284 = vadd.f32 %v7235, %v7283
    %v7285 = vpop.f32.mrf.mxu0
    %v7286 = vadd.f32 %v7237, %v7285
    %7287 = vmatmul.bf16.gmra.mxu0 %v2131
    %v7288 = vpop.f32.mrf.mxu0
    %v7289 = vadd.f32 %v7240, %v7288
    %v7290 = vpop.f32.mrf.mxu0
    %v7291 = vadd.f32 %v7242, %v7290
    %7292 = vmatmul.bf16.gmra.mxu0 %v2158
    %v7293 = vpop.f32.mrf.mxu0
    %v7294 = vadd.f32 %v7245, %v7293
    %v7295 = vpop.f32.mrf.mxu0
    %v7296 = vadd.f32 %v7247, %v7295
    %7297 = vdwg.mxu0
    %7298 = vmatpush.bf16.msra.mxu0 %v5394
    %7299 = vmatpush.bf16.msra.mxu0 %v5390
    %7300 = vmatpush.bf16.msra.mxu0 %v5386
    %7301 = vmatpush.bf16.msra.mxu0 %v5382
    %7302 = vmatpush.bf16.msra.mxu0 %v5378
    %7303 = vmatpush.bf16.msra.mxu0 %v5374
    %7304 = vmatpush.bf16.msra.mxu0 %v5370
    %7305 = vmatpush.bf16.msra.mxu0 %v5366
    %7306 = vmatmul.bf16.gmra.mxu0 %v1970
    %v7307 = vpop.f32.mrf.mxu0
    %v7308 = vadd.f32 %v7259, %v7307
    %v7309 = vpop.f32.mrf.mxu0
    %v7310 = vadd.f32 %v7261, %v7309
    %7311 = vmatmul.bf16.gmra.mxu0 %v1997
    %v7312 = vpop.f32.mrf.mxu0
    %v7313 = vadd.f32 %v7264, %v7312
    %v7314 = vpop.f32.mrf.mxu0
    %v7315 = vadd.f32 %v7266, %v7314
    %7316 = vmatmul.bf16.gmra.mxu0 %v2024
    %v7317 = vpop.f32.mrf.mxu0
    %v7318 = vadd.f32 %v7269, %v7317
    %v7319 = vpop.f32.mrf.mxu0
    %v7320 = vadd.f32 %v7271, %v7319
    %7321 = vmatmul.bf16.gmra.mxu0 %v2051
    %v7322 = vpop.f32.mrf.mxu0
    %v7323 = vadd.f32 %v7274, %v7322
    %v7324 = vpop.f32.mrf.mxu0
    %v7325 = vadd.f32 %v7276, %v7324
    %7326 = vmatmul.bf16.gmra.mxu0 %v2078
    %v7327 = vpop.f32.mrf.mxu0
    %v7328 = vadd.f32 %v7279, %v7327
    %v7329 = vpop.f32.mrf.mxu0
    %v7330 = vadd.f32 %v7281, %v7329
    %7331 = vmatmul.bf16.gmra.mxu0 %v2105
    %v7332 = vpop.f32.mrf.mxu0
    %v7333 = vadd.f32 %v7284, %v7332
    %v7334 = vpop.f32.mrf.mxu0
    %v7335 = vadd.f32 %v7286, %v7334
    %7336 = vmatmul.bf16.gmra.mxu0 %v2132
    %v7337 = vpop.f32.mrf.mxu0
    %v7338 = vadd.f32 %v7289, %v7337
    %v7339 = vpop.f32.mrf.mxu0
    %v7340 = vadd.f32 %v7291, %v7339
    %7341 = vmatmul.bf16.gmra.mxu0 %v2159
    %v7342 = vpop.f32.mrf.mxu0
    %v7343 = vadd.f32 %v7294, %v7342
    %v7344 = vpop.f32.mrf.mxu0
    %v7345 = vadd.f32 %v7296, %v7344
    %7346 = vdwg.mxu0
    %7347 = vmatpush.bf16.msra.mxu0 %v5426
    %7348 = vmatpush.bf16.msra.mxu0 %v5422
    %7349 = vmatpush.bf16.msra.mxu0 %v5418
    %7350 = vmatpush.bf16.msra.mxu0 %v5414
    %7351 = vmatpush.bf16.msra.mxu0 %v5410
    %7352 = vmatpush.bf16.msra.mxu0 %v5406
    %7353 = vmatpush.bf16.msra.mxu0 %v5402
    %7354 = vmatpush.bf16.msra.mxu0 %v5398
    %7355 = vmatmul.bf16.gmra.mxu0 %v1971
    %v7356 = vpop.f32.mrf.mxu0
    %v7357 = vadd.f32 %v7308, %v7356
    %v7358 = vpop.f32.mrf.mxu0
    %v7359 = vadd.f32 %v7310, %v7358
    %7360 = vmatmul.bf16.gmra.mxu0 %v1998
    %v7361 = vpop.f32.mrf.mxu0
    %v7362 = vadd.f32 %v7313, %v7361
    %v7363 = vpop.f32.mrf.mxu0
    %v7364 = vadd.f32 %v7315, %v7363
    %7365 = vmatmul.bf16.gmra.mxu0 %v2025
    %v7366 = vpop.f32.mrf.mxu0
    %v7367 = vadd.f32 %v7318, %v7366
    %v7368 = vpop.f32.mrf.mxu0
    %v7369 = vadd.f32 %v7320, %v7368
    %7370 = vmatmul.bf16.gmra.mxu0 %v2052
    %v7371 = vpop.f32.mrf.mxu0
    %v7372 = vadd.f32 %v7323, %v7371
    %v7373 = vpop.f32.mrf.mxu0
    %v7374 = vadd.f32 %v7325, %v7373
    %7375 = vmatmul.bf16.gmra.mxu0 %v2079
    %v7376 = vpop.f32.mrf.mxu0
    %v7377 = vadd.f32 %v7328, %v7376
    %v7378 = vpop.f32.mrf.mxu0
    %v7379 = vadd.f32 %v7330, %v7378
    %7380 = vmatmul.bf16.gmra.mxu0 %v2106
    %v7381 = vpop.f32.mrf.mxu0
    %v7382 = vadd.f32 %v7333, %v7381
    %v7383 = vpop.f32.mrf.mxu0
    %v7384 = vadd.f32 %v7335, %v7383
    %7385 = vmatmul.bf16.gmra.mxu0 %v2133
    %v7386 = vpop.f32.mrf.mxu0
    %v7387 = vadd.f32 %v7338, %v7386
    %v7388 = vpop.f32.mrf.mxu0
    %v7389 = vadd.f32 %v7340, %v7388
    %7390 = vmatmul.bf16.gmra.mxu0 %v2160
    %v7391 = vpop.f32.mrf.mxu0
    %v7392 = vadd.f32 %v7343, %v7391
    %v7393 = vpop.f32.mrf.mxu0
    %v7394 = vadd.f32 %v7345, %v7393
    %7395 = vdwg.mxu0
    %7396 = vmatpush.bf16.msra.mxu0 %v5458
    %7397 = vmatpush.bf16.msra.mxu0 %v5454
    %7398 = vmatpush.bf16.msra.mxu0 %v5450
    %7399 = vmatpush.bf16.msra.mxu0 %v5446
    %7400 = vmatpush.bf16.msra.mxu0 %v5442
    %7401 = vmatpush.bf16.msra.mxu0 %v5438
    %7402 = vmatpush.bf16.msra.mxu0 %v5434
    %7403 = vmatpush.bf16.msra.mxu0 %v5430
    %7404 = vmatmul.bf16.gmra.mxu0 %v1972
    %v7405 = vpop.f32.mrf.mxu0
    %v7406 = vadd.f32 %v7357, %v7405
    %v7407 = vpop.f32.mrf.mxu0
    %v7408 = vadd.f32 %v7359, %v7407
    %7409 = vmatmul.bf16.gmra.mxu0 %v1999
    %v7410 = vpop.f32.mrf.mxu0
    %v7411 = vadd.f32 %v7362, %v7410
    %v7412 = vpop.f32.mrf.mxu0
    %v7413 = vadd.f32 %v7364, %v7412
    %7414 = vmatmul.bf16.gmra.mxu0 %v2026
    %v7415 = vpop.f32.mrf.mxu0
    %v7416 = vadd.f32 %v7367, %v7415
    %v7417 = vpop.f32.mrf.mxu0
    %v7418 = vadd.f32 %v7369, %v7417
    %7419 = vmatmul.bf16.gmra.mxu0 %v2053
    %v7420 = vpop.f32.mrf.mxu0
    %v7421 = vadd.f32 %v7372, %v7420
    %v7422 = vpop.f32.mrf.mxu0
    %v7423 = vadd.f32 %v7374, %v7422
    %7424 = vmatmul.bf16.gmra.mxu0 %v2080
    %v7425 = vpop.f32.mrf.mxu0
    %v7426 = vadd.f32 %v7377, %v7425
    %v7427 = vpop.f32.mrf.mxu0
    %v7428 = vadd.f32 %v7379, %v7427
    %7429 = vmatmul.bf16.gmra.mxu0 %v2107
    %v7430 = vpop.f32.mrf.mxu0
    %v7431 = vadd.f32 %v7382, %v7430
    %v7432 = vpop.f32.mrf.mxu0
    %v7433 = vadd.f32 %v7384, %v7432
    %7434 = vmatmul.bf16.gmra.mxu0 %v2134
    %v7435 = vpop.f32.mrf.mxu0
    %v7436 = vadd.f32 %v7387, %v7435
    %v7437 = vpop.f32.mrf.mxu0
    %v7438 = vadd.f32 %v7389, %v7437
    %7439 = vmatmul.bf16.gmra.mxu0 %v2161
    %v7440 = vpop.f32.mrf.mxu0
    %v7441 = vadd.f32 %v7392, %v7440
    %v7442 = vpop.f32.mrf.mxu0
    %v7443 = vadd.f32 %v7394, %v7442
    %7444 = vdwg.mxu0
    %7445 = vmatpush.bf16.msra.mxu0 %v5490
    %7446 = vmatpush.bf16.msra.mxu0 %v5486
    %7447 = vmatpush.bf16.msra.mxu0 %v5482
    %7448 = vmatpush.bf16.msra.mxu0 %v5478
    %7449 = vmatpush.bf16.msra.mxu0 %v5474
    %7450 = vmatpush.bf16.msra.mxu0 %v5470
    %7451 = vmatpush.bf16.msra.mxu0 %v5466
    %7452 = vmatpush.bf16.msra.mxu0 %v5462
    %7453 = vmatmul.bf16.gmra.mxu0 %v1973
    %v7454 = vpop.f32.mrf.mxu0
    %v7455 = vadd.f32 %v7406, %v7454
    %v7456 = vpop.f32.mrf.mxu0
    %v7457 = vadd.f32 %v7408, %v7456
    %7458 = vmatmul.bf16.gmra.mxu0 %v2000
    %v7459 = vpop.f32.mrf.mxu0
    %v7460 = vadd.f32 %v7411, %v7459
    %v7461 = vpop.f32.mrf.mxu0
    %v7462 = vadd.f32 %v7413, %v7461
    %7463 = vmatmul.bf16.gmra.mxu0 %v2027
    %v7464 = vpop.f32.mrf.mxu0
    %v7465 = vadd.f32 %v7416, %v7464
    %v7466 = vpop.f32.mrf.mxu0
    %v7467 = vadd.f32 %v7418, %v7466
    %7468 = vmatmul.bf16.gmra.mxu0 %v2054
    %v7469 = vpop.f32.mrf.mxu0
    %v7470 = vadd.f32 %v7421, %v7469
    %v7471 = vpop.f32.mrf.mxu0
    %v7472 = vadd.f32 %v7423, %v7471
    %7473 = vmatmul.bf16.gmra.mxu0 %v2081
    %v7474 = vpop.f32.mrf.mxu0
    %v7475 = vadd.f32 %v7426, %v7474
    %v7476 = vpop.f32.mrf.mxu0
    %v7477 = vadd.f32 %v7428, %v7476
    %7478 = vmatmul.bf16.gmra.mxu0 %v2108
    %v7479 = vpop.f32.mrf.mxu0
    %v7480 = vadd.f32 %v7431, %v7479
    %v7481 = vpop.f32.mrf.mxu0
    %v7482 = vadd.f32 %v7433, %v7481
    %7483 = vmatmul.bf16.gmra.mxu0 %v2135
    %v7484 = vpop.f32.mrf.mxu0
    %v7485 = vadd.f32 %v7436, %v7484
    %v7486 = vpop.f32.mrf.mxu0
    %v7487 = vadd.f32 %v7438, %v7486
    %7488 = vmatmul.bf16.gmra.mxu0 %v2162
    %v7489 = vpop.f32.mrf.mxu0
    %v7490 = vadd.f32 %v7441, %v7489
    %v7491 = vpop.f32.mrf.mxu0
    %v7492 = vadd.f32 %v7443, %v7491
    %7493 = vdwg.mxu0
    %7494 = vmatpush.bf16.msra.mxu0 %v5522
    %7495 = vmatpush.bf16.msra.mxu0 %v5518
    %7496 = vmatpush.bf16.msra.mxu0 %v5514
    %7497 = vmatpush.bf16.msra.mxu0 %v5510
    %7498 = vmatpush.bf16.msra.mxu0 %v5506
    %7499 = vmatpush.bf16.msra.mxu0 %v5502
    %7500 = vmatpush.bf16.msra.mxu0 %v5498
    %7501 = vmatpush.bf16.msra.mxu0 %v5494
    %7502 = vmatmul.bf16.gmra.mxu0 %v1974
    %v7503 = vpop.f32.mrf.mxu0
    %v7504 = vadd.f32 %v7455, %v7503
    %v7505 = vpop.f32.mrf.mxu0
    %v7506 = vadd.f32 %v7457, %v7505
    %7507 = vmatmul.bf16.gmra.mxu0 %v2001
    %v7508 = vpop.f32.mrf.mxu0
    %v7509 = vadd.f32 %v7460, %v7508
    %v7510 = vpop.f32.mrf.mxu0
    %v7511 = vadd.f32 %v7462, %v7510
    %7512 = vmatmul.bf16.gmra.mxu0 %v2028
    %v7513 = vpop.f32.mrf.mxu0
    %v7514 = vadd.f32 %v7465, %v7513
    %v7515 = vpop.f32.mrf.mxu0
    %v7516 = vadd.f32 %v7467, %v7515
    %7517 = vmatmul.bf16.gmra.mxu0 %v2055
    %v7518 = vpop.f32.mrf.mxu0
    %v7519 = vadd.f32 %v7470, %v7518
    %v7520 = vpop.f32.mrf.mxu0
    %v7521 = vadd.f32 %v7472, %v7520
    %7522 = vmatmul.bf16.gmra.mxu0 %v2082
    %v7523 = vpop.f32.mrf.mxu0
    %v7524 = vadd.f32 %v7475, %v7523
    %v7525 = vpop.f32.mrf.mxu0
    %v7526 = vadd.f32 %v7477, %v7525
    %7527 = vmatmul.bf16.gmra.mxu0 %v2109
    %v7528 = vpop.f32.mrf.mxu0
    %v7529 = vadd.f32 %v7480, %v7528
    %v7530 = vpop.f32.mrf.mxu0
    %v7531 = vadd.f32 %v7482, %v7530
    %7532 = vmatmul.bf16.gmra.mxu0 %v2136
    %v7533 = vpop.f32.mrf.mxu0
    %v7534 = vadd.f32 %v7485, %v7533
    %v7535 = vpop.f32.mrf.mxu0
    %v7536 = vadd.f32 %v7487, %v7535
    %7537 = vmatmul.bf16.gmra.mxu0 %v2163
    %v7538 = vpop.f32.mrf.mxu0
    %v7539 = vadd.f32 %v7490, %v7538
    %v7540 = vpop.f32.mrf.mxu0
    %v7541 = vadd.f32 %v7492, %v7540
    %7542 = vdwg.mxu0
    %7543 = vmatpush.bf16.msra.mxu0 %v5554
    %7544 = vmatpush.bf16.msra.mxu0 %v5550
    %7545 = vmatpush.bf16.msra.mxu0 %v5546
    %7546 = vmatpush.bf16.msra.mxu0 %v5542
    %7547 = vmatpush.bf16.msra.mxu0 %v5538
    %7548 = vmatpush.bf16.msra.mxu0 %v5534
    %7549 = vmatpush.bf16.msra.mxu0 %v5530
    %7550 = vmatpush.bf16.msra.mxu0 %v5526
    %7551 = vmatmul.bf16.gmra.mxu0 %v1975
    %v7552 = vpop.f32.mrf.mxu0
    %v7553 = vadd.f32 %v7504, %v7552
    %v7554 = vpop.f32.mrf.mxu0
    %v7555 = vadd.f32 %v7506, %v7554
    %7556 = vmatmul.bf16.gmra.mxu0 %v2002
    %v7557 = vpop.f32.mrf.mxu0
    %v7558 = vadd.f32 %v7509, %v7557
    %v7559 = vpop.f32.mrf.mxu0
    %v7560 = vadd.f32 %v7511, %v7559
    %7561 = vmatmul.bf16.gmra.mxu0 %v2029
    %v7562 = vpop.f32.mrf.mxu0
    %v7563 = vadd.f32 %v7514, %v7562
    %v7564 = vpop.f32.mrf.mxu0
    %v7565 = vadd.f32 %v7516, %v7564
    %7566 = vmatmul.bf16.gmra.mxu0 %v2056
    %v7567 = vpop.f32.mrf.mxu0
    %v7568 = vadd.f32 %v7519, %v7567
    %v7569 = vpop.f32.mrf.mxu0
    %v7570 = vadd.f32 %v7521, %v7569
    %7571 = vmatmul.bf16.gmra.mxu0 %v2083
    %v7572 = vpop.f32.mrf.mxu0
    %v7573 = vadd.f32 %v7524, %v7572
    %v7574 = vpop.f32.mrf.mxu0
    %v7575 = vadd.f32 %v7526, %v7574
    %7576 = vmatmul.bf16.gmra.mxu0 %v2110
    %v7577 = vpop.f32.mrf.mxu0
    %v7578 = vadd.f32 %v7529, %v7577
    %v7579 = vpop.f32.mrf.mxu0
    %v7580 = vadd.f32 %v7531, %v7579
    %7581 = vmatmul.bf16.gmra.mxu0 %v2137
    %v7582 = vpop.f32.mrf.mxu0
    %v7583 = vadd.f32 %v7534, %v7582
    %v7584 = vpop.f32.mrf.mxu0
    %v7585 = vadd.f32 %v7536, %v7584
    %7586 = vmatmul.bf16.gmra.mxu0 %v2164
    %v7587 = vpop.f32.mrf.mxu0
    %v7588 = vadd.f32 %v7539, %v7587
    %v7589 = vpop.f32.mrf.mxu0
    %v7590 = vadd.f32 %v7541, %v7589
    %7591 = vdwg.mxu0
    %7592 = vmatpush.bf16.msra.mxu0 %v5586
    %7593 = vmatpush.bf16.msra.mxu0 %v5582
    %7594 = vmatpush.bf16.msra.mxu0 %v5578
    %7595 = vmatpush.bf16.msra.mxu0 %v5574
    %7596 = vmatpush.bf16.msra.mxu0 %v5570
    %7597 = vmatpush.bf16.msra.mxu0 %v5566
    %7598 = vmatpush.bf16.msra.mxu0 %v5562
    %7599 = vmatpush.bf16.msra.mxu0 %v5558
    %7600 = vmatmul.bf16.gmra.mxu0 %v1976
    %v7601 = vpop.f32.mrf.mxu0
    %v7602 = vadd.f32 %v7553, %v7601
    %v7603 = vpop.f32.mrf.mxu0
    %v7604 = vadd.f32 %v7555, %v7603
    %7605 = vmatmul.bf16.gmra.mxu0 %v2003
    %v7606 = vpop.f32.mrf.mxu0
    %v7607 = vadd.f32 %v7558, %v7606
    %v7608 = vpop.f32.mrf.mxu0
    %v7609 = vadd.f32 %v7560, %v7608
    %7610 = vmatmul.bf16.gmra.mxu0 %v2030
    %v7611 = vpop.f32.mrf.mxu0
    %v7612 = vadd.f32 %v7563, %v7611
    %v7613 = vpop.f32.mrf.mxu0
    %v7614 = vadd.f32 %v7565, %v7613
    %7615 = vmatmul.bf16.gmra.mxu0 %v2057
    %v7616 = vpop.f32.mrf.mxu0
    %v7617 = vadd.f32 %v7568, %v7616
    %v7618 = vpop.f32.mrf.mxu0
    %v7619 = vadd.f32 %v7570, %v7618
    %7620 = vmatmul.bf16.gmra.mxu0 %v2084
    %v7621 = vpop.f32.mrf.mxu0
    %v7622 = vadd.f32 %v7573, %v7621
    %v7623 = vpop.f32.mrf.mxu0
    %v7624 = vadd.f32 %v7575, %v7623
    %7625 = vmatmul.bf16.gmra.mxu0 %v2111
    %v7626 = vpop.f32.mrf.mxu0
    %v7627 = vadd.f32 %v7578, %v7626
    %v7628 = vpop.f32.mrf.mxu0
    %v7629 = vadd.f32 %v7580, %v7628
    %7630 = vmatmul.bf16.gmra.mxu0 %v2138
    %v7631 = vpop.f32.mrf.mxu0
    %v7632 = vadd.f32 %v7583, %v7631
    %v7633 = vpop.f32.mrf.mxu0
    %v7634 = vadd.f32 %v7585, %v7633
    %7635 = vmatmul.bf16.gmra.mxu0 %v2165
    %v7636 = vpop.f32.mrf.mxu0
    %v7637 = vadd.f32 %v7588, %v7636
    %v7638 = vpop.f32.mrf.mxu0
    %v7639 = vadd.f32 %v7590, %v7638
    %7640 = vdwg.mxu0
    %7641 = vmatpush.bf16.msra.mxu0 %v5618
    %7642 = vmatpush.bf16.msra.mxu0 %v5614
    %7643 = vmatpush.bf16.msra.mxu0 %v5610
    %7644 = vmatpush.bf16.msra.mxu0 %v5606
    %7645 = vmatpush.bf16.msra.mxu0 %v5602
    %7646 = vmatpush.bf16.msra.mxu0 %v5598
    %7647 = vmatpush.bf16.msra.mxu0 %v5594
    %7648 = vmatpush.bf16.msra.mxu0 %v5590
    %7649 = vmatmul.bf16.gmra.mxu0 %v1977
    %v7650 = vpop.f32.mrf.mxu0
    %v7651 = vadd.f32 %v7602, %v7650
    %v7652 = vpop.f32.mrf.mxu0
    %v7653 = vadd.f32 %v7604, %v7652
    %7654 = vmatmul.bf16.gmra.mxu0 %v2004
    %v7655 = vpop.f32.mrf.mxu0
    %v7656 = vadd.f32 %v7607, %v7655
    %v7657 = vpop.f32.mrf.mxu0
    %v7658 = vadd.f32 %v7609, %v7657
    %7659 = vmatmul.bf16.gmra.mxu0 %v2031
    %v7660 = vpop.f32.mrf.mxu0
    %v7661 = vadd.f32 %v7612, %v7660
    %v7662 = vpop.f32.mrf.mxu0
    %v7663 = vadd.f32 %v7614, %v7662
    %7664 = vmatmul.bf16.gmra.mxu0 %v2058
    %v7665 = vpop.f32.mrf.mxu0
    %v7666 = vadd.f32 %v7617, %v7665
    %v7667 = vpop.f32.mrf.mxu0
    %v7668 = vadd.f32 %v7619, %v7667
    %7669 = vmatmul.bf16.gmra.mxu0 %v2085
    %v7670 = vpop.f32.mrf.mxu0
    %v7671 = vadd.f32 %v7622, %v7670
    %v7672 = vpop.f32.mrf.mxu0
    %v7673 = vadd.f32 %v7624, %v7672
    %7674 = vmatmul.bf16.gmra.mxu0 %v2112
    %v7675 = vpop.f32.mrf.mxu0
    %v7676 = vadd.f32 %v7627, %v7675
    %v7677 = vpop.f32.mrf.mxu0
    %v7678 = vadd.f32 %v7629, %v7677
    %7679 = vmatmul.bf16.gmra.mxu0 %v2139
    %v7680 = vpop.f32.mrf.mxu0
    %v7681 = vadd.f32 %v7632, %v7680
    %v7682 = vpop.f32.mrf.mxu0
    %v7683 = vadd.f32 %v7634, %v7682
    %7684 = vmatmul.bf16.gmra.mxu0 %v2166
    %v7685 = vpop.f32.mrf.mxu0
    %v7686 = vadd.f32 %v7637, %v7685
    %v7687 = vpop.f32.mrf.mxu0
    %v7688 = vadd.f32 %v7639, %v7687
    %7689 = vdwg.mxu0
    %7690 = vmatpush.bf16.msra.mxu0 %v5650
    %7691 = vmatpush.bf16.msra.mxu0 %v5646
    %7692 = vmatpush.bf16.msra.mxu0 %v5642
    %7693 = vmatpush.bf16.msra.mxu0 %v5638
    %7694 = vmatpush.bf16.msra.mxu0 %v5634
    %7695 = vmatpush.bf16.msra.mxu0 %v5630
    %7696 = vmatpush.bf16.msra.mxu0 %v5626
    %7697 = vmatpush.bf16.msra.mxu0 %v5622
    %7698 = vmatmul.bf16.gmra.mxu0 %v1978
    %v7699 = vpop.f32.mrf.mxu0
    %v7700 = vadd.f32 %v7651, %v7699
    %v7701 = vpop.f32.mrf.mxu0
    %v7702 = vadd.f32 %v7653, %v7701
    %7703 = vmatmul.bf16.gmra.mxu0 %v2005
    %v7704 = vpop.f32.mrf.mxu0
    %v7705 = vadd.f32 %v7656, %v7704
    %v7706 = vpop.f32.mrf.mxu0
    %v7707 = vadd.f32 %v7658, %v7706
    %7708 = vmatmul.bf16.gmra.mxu0 %v2032
    %v7709 = vpop.f32.mrf.mxu0
    %v7710 = vadd.f32 %v7661, %v7709
    %v7711 = vpop.f32.mrf.mxu0
    %v7712 = vadd.f32 %v7663, %v7711
    %7713 = vmatmul.bf16.gmra.mxu0 %v2059
    %v7714 = vpop.f32.mrf.mxu0
    %v7715 = vadd.f32 %v7666, %v7714
    %v7716 = vpop.f32.mrf.mxu0
    %v7717 = vadd.f32 %v7668, %v7716
    %7718 = vmatmul.bf16.gmra.mxu0 %v2086
    %v7719 = vpop.f32.mrf.mxu0
    %v7720 = vadd.f32 %v7671, %v7719
    %v7721 = vpop.f32.mrf.mxu0
    %v7722 = vadd.f32 %v7673, %v7721
    %7723 = vmatmul.bf16.gmra.mxu0 %v2113
    %v7724 = vpop.f32.mrf.mxu0
    %v7725 = vadd.f32 %v7676, %v7724
    %v7726 = vpop.f32.mrf.mxu0
    %v7727 = vadd.f32 %v7678, %v7726
    %7728 = vmatmul.bf16.gmra.mxu0 %v2140
    %v7729 = vpop.f32.mrf.mxu0
    %v7730 = vadd.f32 %v7681, %v7729
    %v7731 = vpop.f32.mrf.mxu0
    %v7732 = vadd.f32 %v7683, %v7731
    %7733 = vmatmul.bf16.gmra.mxu0 %v2167
    %v7734 = vpop.f32.mrf.mxu0
    %v7735 = vadd.f32 %v7686, %v7734
    %v7736 = vpop.f32.mrf.mxu0
    %v7737 = vadd.f32 %v7688, %v7736
    %7738 = vdwg.mxu0
    %7739 = vmatpush.bf16.msra.mxu0 %v5682
    %7740 = vmatpush.bf16.msra.mxu0 %v5678
    %7741 = vmatpush.bf16.msra.mxu0 %v5674
    %7742 = vmatpush.bf16.msra.mxu0 %v5670
    %7743 = vmatpush.bf16.msra.mxu0 %v5666
    %7744 = vmatpush.bf16.msra.mxu0 %v5662
    %7745 = vmatpush.bf16.msra.mxu0 %v5658
    %7746 = vmatpush.bf16.msra.mxu0 %v5654
    %7747 = vmatmul.bf16.gmra.mxu0 %v1979
    %v7748 = vpop.f32.mrf.mxu0
    %v7749 = vadd.f32 %v7700, %v7748
    %v7750 = vpop.f32.mrf.mxu0
    %v7751 = vadd.f32 %v7702, %v7750
    %7752 = vmatmul.bf16.gmra.mxu0 %v2006
    %v7753 = vpop.f32.mrf.mxu0
    %v7754 = vadd.f32 %v7705, %v7753
    %v7755 = vpop.f32.mrf.mxu0
    %v7756 = vadd.f32 %v7707, %v7755
    %7757 = vmatmul.bf16.gmra.mxu0 %v2033
    %v7758 = vpop.f32.mrf.mxu0
    %v7759 = vadd.f32 %v7710, %v7758
    %v7760 = vpop.f32.mrf.mxu0
    %v7761 = vadd.f32 %v7712, %v7760
    %7762 = vmatmul.bf16.gmra.mxu0 %v2060
    %v7763 = vpop.f32.mrf.mxu0
    %v7764 = vadd.f32 %v7715, %v7763
    %v7765 = vpop.f32.mrf.mxu0
    %v7766 = vadd.f32 %v7717, %v7765
    %7767 = vmatmul.bf16.gmra.mxu0 %v2087
    %v7768 = vpop.f32.mrf.mxu0
    %v7769 = vadd.f32 %v7720, %v7768
    %v7770 = vpop.f32.mrf.mxu0
    %v7771 = vadd.f32 %v7722, %v7770
    %7772 = vmatmul.bf16.gmra.mxu0 %v2114
    %v7773 = vpop.f32.mrf.mxu0
    %v7774 = vadd.f32 %v7725, %v7773
    %v7775 = vpop.f32.mrf.mxu0
    %v7776 = vadd.f32 %v7727, %v7775
    %7777 = vmatmul.bf16.gmra.mxu0 %v2141
    %v7778 = vpop.f32.mrf.mxu0
    %v7779 = vadd.f32 %v7730, %v7778
    %v7780 = vpop.f32.mrf.mxu0
    %v7781 = vadd.f32 %v7732, %v7780
    %7782 = vmatmul.bf16.gmra.mxu0 %v2168
    %v7783 = vpop.f32.mrf.mxu0
    %v7784 = vadd.f32 %v7735, %v7783
    %v7785 = vpop.f32.mrf.mxu0
    %v7786 = vadd.f32 %v7737, %v7785
    %7787 = vdwg.mxu0
    %7788 = vmatpush.bf16.msra.mxu0 %v5714
    %7789 = vmatpush.bf16.msra.mxu0 %v5710
    %7790 = vmatpush.bf16.msra.mxu0 %v5706
    %7791 = vmatpush.bf16.msra.mxu0 %v5702
    %7792 = vmatpush.bf16.msra.mxu0 %v5698
    %7793 = vmatpush.bf16.msra.mxu0 %v5694
    %7794 = vmatpush.bf16.msra.mxu0 %v5690
    %7795 = vmatpush.bf16.msra.mxu0 %v5686
    %7796 = vmatmul.bf16.gmra.mxu0 %v1980
    %v7797 = vpop.f32.mrf.mxu0
    %v7798 = vadd.f32 %v7749, %v7797
    %v7799 = vpop.f32.mrf.mxu0
    %v7800 = vadd.f32 %v7751, %v7799
    %7801 = vmatmul.bf16.gmra.mxu0 %v2007
    %v7802 = vpop.f32.mrf.mxu0
    %v7803 = vadd.f32 %v7754, %v7802
    %v7804 = vpop.f32.mrf.mxu0
    %v7805 = vadd.f32 %v7756, %v7804
    %7806 = vmatmul.bf16.gmra.mxu0 %v2034
    %v7807 = vpop.f32.mrf.mxu0
    %v7808 = vadd.f32 %v7759, %v7807
    %v7809 = vpop.f32.mrf.mxu0
    %v7810 = vadd.f32 %v7761, %v7809
    %7811 = vmatmul.bf16.gmra.mxu0 %v2061
    %v7812 = vpop.f32.mrf.mxu0
    %v7813 = vadd.f32 %v7764, %v7812
    %v7814 = vpop.f32.mrf.mxu0
    %v7815 = vadd.f32 %v7766, %v7814
    %7816 = vmatmul.bf16.gmra.mxu0 %v2088
    %v7817 = vpop.f32.mrf.mxu0
    %v7818 = vadd.f32 %v7769, %v7817
    %v7819 = vpop.f32.mrf.mxu0
    %v7820 = vadd.f32 %v7771, %v7819
    %7821 = vmatmul.bf16.gmra.mxu0 %v2115
    %v7822 = vpop.f32.mrf.mxu0
    %v7823 = vadd.f32 %v7774, %v7822
    %v7824 = vpop.f32.mrf.mxu0
    %v7825 = vadd.f32 %v7776, %v7824
    %7826 = vmatmul.bf16.gmra.mxu0 %v2142
    %v7827 = vpop.f32.mrf.mxu0
    %v7828 = vadd.f32 %v7779, %v7827
    %v7829 = vpop.f32.mrf.mxu0
    %v7830 = vadd.f32 %v7781, %v7829
    %7831 = vmatmul.bf16.gmra.mxu0 %v2169
    %v7832 = vpop.f32.mrf.mxu0
    %v7833 = vadd.f32 %v7784, %v7832
    %v7834 = vpop.f32.mrf.mxu0
    %v7835 = vadd.f32 %v7786, %v7834
    %7836 = vdwg.mxu0
    %7837 = vmatpush.bf16.msra.mxu0 %v5746
    %7838 = vmatpush.bf16.msra.mxu0 %v5742
    %7839 = vmatpush.bf16.msra.mxu0 %v5738
    %7840 = vmatpush.bf16.msra.mxu0 %v5734
    %7841 = vmatpush.bf16.msra.mxu0 %v5730
    %7842 = vmatpush.bf16.msra.mxu0 %v5726
    %7843 = vmatpush.bf16.msra.mxu0 %v5722
    %7844 = vmatpush.bf16.msra.mxu0 %v5718
    %7845 = vmatmul.bf16.gmra.mxu0 %v1981
    %v7846 = vpop.f32.mrf.mxu0
    %v7847 = vadd.f32 %v7798, %v7846
    %v7848 = vpop.f32.mrf.mxu0
    %v7849 = vadd.f32 %v7800, %v7848
    %7850 = vmatmul.bf16.gmra.mxu0 %v2008
    %v7851 = vpop.f32.mrf.mxu0
    %v7852 = vadd.f32 %v7803, %v7851
    %v7853 = vpop.f32.mrf.mxu0
    %v7854 = vadd.f32 %v7805, %v7853
    %7855 = vmatmul.bf16.gmra.mxu0 %v2035
    %v7856 = vpop.f32.mrf.mxu0
    %v7857 = vadd.f32 %v7808, %v7856
    %v7858 = vpop.f32.mrf.mxu0
    %v7859 = vadd.f32 %v7810, %v7858
    %7860 = vmatmul.bf16.gmra.mxu0 %v2062
    %v7861 = vpop.f32.mrf.mxu0
    %v7862 = vadd.f32 %v7813, %v7861
    %v7863 = vpop.f32.mrf.mxu0
    %v7864 = vadd.f32 %v7815, %v7863
    %7865 = vmatmul.bf16.gmra.mxu0 %v2089
    %v7866 = vpop.f32.mrf.mxu0
    %v7867 = vadd.f32 %v7818, %v7866
    %v7868 = vpop.f32.mrf.mxu0
    %v7869 = vadd.f32 %v7820, %v7868
    %7870 = vmatmul.bf16.gmra.mxu0 %v2116
    %v7871 = vpop.f32.mrf.mxu0
    %v7872 = vadd.f32 %v7823, %v7871
    %v7873 = vpop.f32.mrf.mxu0
    %v7874 = vadd.f32 %v7825, %v7873
    %7875 = vmatmul.bf16.gmra.mxu0 %v2143
    %v7876 = vpop.f32.mrf.mxu0
    %v7877 = vadd.f32 %v7828, %v7876
    %v7878 = vpop.f32.mrf.mxu0
    %v7879 = vadd.f32 %v7830, %v7878
    %7880 = vmatmul.bf16.gmra.mxu0 %v2170
    %v7881 = vpop.f32.mrf.mxu0
    %v7882 = vadd.f32 %v7833, %v7881
    %v7883 = vpop.f32.mrf.mxu0
    %v7884 = vadd.f32 %v7835, %v7883
    %7885 = vdwg.mxu0
    %7886 = vmatpush.bf16.msra.mxu0 %v5778
    %7887 = vmatpush.bf16.msra.mxu0 %v5774
    %7888 = vmatpush.bf16.msra.mxu0 %v5770
    %7889 = vmatpush.bf16.msra.mxu0 %v5766
    %7890 = vmatpush.bf16.msra.mxu0 %v5762
    %7891 = vmatpush.bf16.msra.mxu0 %v5758
    %7892 = vmatpush.bf16.msra.mxu0 %v5754
    %7893 = vmatpush.bf16.msra.mxu0 %v5750
    %7894 = vmatmul.bf16.gmra.mxu0 %v1982
    %v7895 = vpop.f32.mrf.mxu0
    %v7896 = vadd.f32 %v7847, %v7895
    %v7897 = vpop.f32.mrf.mxu0
    %v7898 = vadd.f32 %v7849, %v7897
    %7899 = vmatmul.bf16.gmra.mxu0 %v2009
    %v7900 = vpop.f32.mrf.mxu0
    %v7901 = vadd.f32 %v7852, %v7900
    %v7902 = vpop.f32.mrf.mxu0
    %v7903 = vadd.f32 %v7854, %v7902
    %7904 = vmatmul.bf16.gmra.mxu0 %v2036
    %v7905 = vpop.f32.mrf.mxu0
    %v7906 = vadd.f32 %v7857, %v7905
    %v7907 = vpop.f32.mrf.mxu0
    %v7908 = vadd.f32 %v7859, %v7907
    %7909 = vmatmul.bf16.gmra.mxu0 %v2063
    %v7910 = vpop.f32.mrf.mxu0
    %v7911 = vadd.f32 %v7862, %v7910
    %v7912 = vpop.f32.mrf.mxu0
    %v7913 = vadd.f32 %v7864, %v7912
    %7914 = vmatmul.bf16.gmra.mxu0 %v2090
    %v7915 = vpop.f32.mrf.mxu0
    %v7916 = vadd.f32 %v7867, %v7915
    %v7917 = vpop.f32.mrf.mxu0
    %v7918 = vadd.f32 %v7869, %v7917
    %7919 = vmatmul.bf16.gmra.mxu0 %v2117
    %v7920 = vpop.f32.mrf.mxu0
    %v7921 = vadd.f32 %v7872, %v7920
    %v7922 = vpop.f32.mrf.mxu0
    %v7923 = vadd.f32 %v7874, %v7922
    %7924 = vmatmul.bf16.gmra.mxu0 %v2144
    %v7925 = vpop.f32.mrf.mxu0
    %v7926 = vadd.f32 %v7877, %v7925
    %v7927 = vpop.f32.mrf.mxu0
    %v7928 = vadd.f32 %v7879, %v7927
    %7929 = vmatmul.bf16.gmra.mxu0 %v2171
    %v7930 = vpop.f32.mrf.mxu0
    %v7931 = vadd.f32 %v7882, %v7930
    %v7932 = vpop.f32.mrf.mxu0
    %v7933 = vadd.f32 %v7884, %v7932
    %7934 = vdwg.mxu0
    %7935 = vmatpush.bf16.msra.mxu0 %v5810
    %7936 = vmatpush.bf16.msra.mxu0 %v5806
    %7937 = vmatpush.bf16.msra.mxu0 %v5802
    %7938 = vmatpush.bf16.msra.mxu0 %v5798
    %7939 = vmatpush.bf16.msra.mxu0 %v5794
    %7940 = vmatpush.bf16.msra.mxu0 %v5790
    %7941 = vmatpush.bf16.msra.mxu0 %v5786
    %7942 = vmatpush.bf16.msra.mxu0 %v5782
    %7943 = vmatmul.bf16.gmra.mxu0 %v1983
    %v7944 = vpop.f32.mrf.mxu0
    %v7945 = vadd.f32 %v7896, %v7944
    %v7946 = vpop.f32.mrf.mxu0
    %v7947 = vadd.f32 %v7898, %v7946
    %7948 = vmatmul.bf16.gmra.mxu0 %v2010
    %v7949 = vpop.f32.mrf.mxu0
    %v7950 = vadd.f32 %v7901, %v7949
    %v7951 = vpop.f32.mrf.mxu0
    %v7952 = vadd.f32 %v7903, %v7951
    %7953 = vmatmul.bf16.gmra.mxu0 %v2037
    %v7954 = vpop.f32.mrf.mxu0
    %v7955 = vadd.f32 %v7906, %v7954
    %v7956 = vpop.f32.mrf.mxu0
    %v7957 = vadd.f32 %v7908, %v7956
    %7958 = vmatmul.bf16.gmra.mxu0 %v2064
    %v7959 = vpop.f32.mrf.mxu0
    %v7960 = vadd.f32 %v7911, %v7959
    %v7961 = vpop.f32.mrf.mxu0
    %v7962 = vadd.f32 %v7913, %v7961
    %7963 = vmatmul.bf16.gmra.mxu0 %v2091
    %v7964 = vpop.f32.mrf.mxu0
    %v7965 = vadd.f32 %v7916, %v7964
    %v7966 = vpop.f32.mrf.mxu0
    %v7967 = vadd.f32 %v7918, %v7966
    %7968 = vmatmul.bf16.gmra.mxu0 %v2118
    %v7969 = vpop.f32.mrf.mxu0
    %v7970 = vadd.f32 %v7921, %v7969
    %v7971 = vpop.f32.mrf.mxu0
    %v7972 = vadd.f32 %v7923, %v7971
    %7973 = vmatmul.bf16.gmra.mxu0 %v2145
    %v7974 = vpop.f32.mrf.mxu0
    %v7975 = vadd.f32 %v7926, %v7974
    %v7976 = vpop.f32.mrf.mxu0
    %v7977 = vadd.f32 %v7928, %v7976
    %7978 = vmatmul.bf16.gmra.mxu0 %v2172
    %v7979 = vpop.f32.mrf.mxu0
    %v7980 = vadd.f32 %v7931, %v7979
    %v7981 = vpop.f32.mrf.mxu0
    %v7982 = vadd.f32 %v7933, %v7981
    %7983 = vdwg.mxu0
    %7984 = vmatpush.bf16.msra.mxu0 %v5842
    %7985 = vmatpush.bf16.msra.mxu0 %v5838
    %7986 = vmatpush.bf16.msra.mxu0 %v5834
    %7987 = vmatpush.bf16.msra.mxu0 %v5830
    %7988 = vmatpush.bf16.msra.mxu0 %v5826
    %7989 = vmatpush.bf16.msra.mxu0 %v5822
    %7990 = vmatpush.bf16.msra.mxu0 %v5818
    %7991 = vmatpush.bf16.msra.mxu0 %v5814
    %7992 = vmatmul.bf16.gmra.mxu0 %v1984
    %v7993 = vpop.f32.mrf.mxu0
    %v7994 = vadd.f32 %v7945, %v7993
    %v7995 = vpop.f32.mrf.mxu0
    %v7996 = vadd.f32 %v7947, %v7995
    %7997 = vmatmul.bf16.gmra.mxu0 %v2011
    %v7998 = vpop.f32.mrf.mxu0
    %v7999 = vadd.f32 %v7950, %v7998
    %v8000 = vpop.f32.mrf.mxu0
    %v8001 = vadd.f32 %v7952, %v8000
    %8002 = vmatmul.bf16.gmra.mxu0 %v2038
    %v8003 = vpop.f32.mrf.mxu0
    %v8004 = vadd.f32 %v7955, %v8003
    %v8005 = vpop.f32.mrf.mxu0
    %v8006 = vadd.f32 %v7957, %v8005
    %8007 = vmatmul.bf16.gmra.mxu0 %v2065
    %v8008 = vpop.f32.mrf.mxu0
    %v8009 = vadd.f32 %v7960, %v8008
    %v8010 = vpop.f32.mrf.mxu0
    %v8011 = vadd.f32 %v7962, %v8010
    %8012 = vmatmul.bf16.gmra.mxu0 %v2092
    %v8013 = vpop.f32.mrf.mxu0
    %v8014 = vadd.f32 %v7965, %v8013
    %v8015 = vpop.f32.mrf.mxu0
    %v8016 = vadd.f32 %v7967, %v8015
    %8017 = vmatmul.bf16.gmra.mxu0 %v2119
    %v8018 = vpop.f32.mrf.mxu0
    %v8019 = vadd.f32 %v7970, %v8018
    %v8020 = vpop.f32.mrf.mxu0
    %v8021 = vadd.f32 %v7972, %v8020
    %8022 = vmatmul.bf16.gmra.mxu0 %v2146
    %v8023 = vpop.f32.mrf.mxu0
    %v8024 = vadd.f32 %v7975, %v8023
    %v8025 = vpop.f32.mrf.mxu0
    %v8026 = vadd.f32 %v7977, %v8025
    %8027 = vmatmul.bf16.gmra.mxu0 %v2173
    %v8028 = vpop.f32.mrf.mxu0
    %v8029 = vadd.f32 %v7980, %v8028
    %v8030 = vpop.f32.mrf.mxu0
    %v8031 = vadd.f32 %v7982, %v8030
    %8032 = vdwg.mxu0
    %8033 = vmatpush.bf16.msra.mxu0 %v5011
    %8034 = vmatpush.bf16.msra.mxu0 %v5007
    %8035 = vmatpush.bf16.msra.mxu0 %v5003
    %8036 = vmatpush.bf16.msra.mxu0 %v4999
    %8037 = vmatpush.bf16.msra.mxu0 %v4995
    %8038 = vmatpush.bf16.msra.mxu0 %v4991
    %8039 = vmatpush.bf16.msra.mxu0 %v4987
    %8040 = vmatpush.bf16.msra.mxu0 %v4983
    %8041 = vmatmul.bf16.gmra.mxu0 %v1958
    %v8042 = vpop.f32.mrf.mxu0
    %v8043 = vadd.f32 0.0, %v8042
    %v8044 = vpop.f32.mrf.mxu0
    %v8045 = vadd.f32 0.0, %v8044
    %8046 = vmatmul.bf16.gmra.mxu0 %v1985
    %v8047 = vpop.f32.mrf.mxu0
    %v8048 = vadd.f32 0.0, %v8047
    %v8049 = vpop.f32.mrf.mxu0
    %v8050 = vadd.f32 0.0, %v8049
    %8051 = vmatmul.bf16.gmra.mxu0 %v2012
    %v8052 = vpop.f32.mrf.mxu0
    %v8053 = vadd.f32 0.0, %v8052
    %v8054 = vpop.f32.mrf.mxu0
    %v8055 = vadd.f32 0.0, %v8054
    %8056 = vmatmul.bf16.gmra.mxu0 %v2039
    %v8057 = vpop.f32.mrf.mxu0
    %v8058 = vadd.f32 0.0, %v8057
    %v8059 = vpop.f32.mrf.mxu0
    %v8060 = vadd.f32 0.0, %v8059
    %8061 = vmatmul.bf16.gmra.mxu0 %v2066
    %v8062 = vpop.f32.mrf.mxu0
    %v8063 = vadd.f32 0.0, %v8062
    %v8064 = vpop.f32.mrf.mxu0
    %v8065 = vadd.f32 0.0, %v8064
    %8066 = vmatmul.bf16.gmra.mxu0 %v2093
    %v8067 = vpop.f32.mrf.mxu0
    %v8068 = vadd.f32 0.0, %v8067
    %v8069 = vpop.f32.mrf.mxu0
    %v8070 = vadd.f32 0.0, %v8069
    %8071 = vmatmul.bf16.gmra.mxu0 %v2120
    %v8072 = vpop.f32.mrf.mxu0
    %v8073 = vadd.f32 0.0, %v8072
    %v8074 = vpop.f32.mrf.mxu0
    %v8075 = vadd.f32 0.0, %v8074
    %8076 = vmatmul.bf16.gmra.mxu0 %v2147
    %v8077 = vpop.f32.mrf.mxu0
    %v8078 = vadd.f32 0.0, %v8077
    %v8079 = vpop.f32.mrf.mxu0
    %v8080 = vadd.f32 0.0, %v8079
    %8081 = vdwg.mxu0
    %8082 = vmatpush.bf16.msra.mxu0 %v5043
    %8083 = vmatpush.bf16.msra.mxu0 %v5039
    %8084 = vmatpush.bf16.msra.mxu0 %v5035
    %8085 = vmatpush.bf16.msra.mxu0 %v5031
    %8086 = vmatpush.bf16.msra.mxu0 %v5027
    %8087 = vmatpush.bf16.msra.mxu0 %v5023
    %8088 = vmatpush.bf16.msra.mxu0 %v5019
    %8089 = vmatpush.bf16.msra.mxu0 %v5015
    %8090 = vmatmul.bf16.gmra.mxu0 %v1959
    %v8091 = vpop.f32.mrf.mxu0
    %v8092 = vadd.f32 %v8043, %v8091
    %v8093 = vpop.f32.mrf.mxu0
    %v8094 = vadd.f32 %v8045, %v8093
    %8095 = vmatmul.bf16.gmra.mxu0 %v1986
    %v8096 = vpop.f32.mrf.mxu0
    %v8097 = vadd.f32 %v8048, %v8096
    %v8098 = vpop.f32.mrf.mxu0
    %v8099 = vadd.f32 %v8050, %v8098
    %8100 = vmatmul.bf16.gmra.mxu0 %v2013
    %v8101 = vpop.f32.mrf.mxu0
    %v8102 = vadd.f32 %v8053, %v8101
    %v8103 = vpop.f32.mrf.mxu0
    %v8104 = vadd.f32 %v8055, %v8103
    %8105 = vmatmul.bf16.gmra.mxu0 %v2040
    %v8106 = vpop.f32.mrf.mxu0
    %v8107 = vadd.f32 %v8058, %v8106
    %v8108 = vpop.f32.mrf.mxu0
    %v8109 = vadd.f32 %v8060, %v8108
    %8110 = vmatmul.bf16.gmra.mxu0 %v2067
    %v8111 = vpop.f32.mrf.mxu0
    %v8112 = vadd.f32 %v8063, %v8111
    %v8113 = vpop.f32.mrf.mxu0
    %v8114 = vadd.f32 %v8065, %v8113
    %8115 = vmatmul.bf16.gmra.mxu0 %v2094
    %v8116 = vpop.f32.mrf.mxu0
    %v8117 = vadd.f32 %v8068, %v8116
    %v8118 = vpop.f32.mrf.mxu0
    %v8119 = vadd.f32 %v8070, %v8118
    %8120 = vmatmul.bf16.gmra.mxu0 %v2121
    %v8121 = vpop.f32.mrf.mxu0
    %v8122 = vadd.f32 %v8073, %v8121
    %v8123 = vpop.f32.mrf.mxu0
    %v8124 = vadd.f32 %v8075, %v8123
    %8125 = vmatmul.bf16.gmra.mxu0 %v2148
    %v8126 = vpop.f32.mrf.mxu0
    %v8127 = vadd.f32 %v8078, %v8126
    %v8128 = vpop.f32.mrf.mxu0
    %v8129 = vadd.f32 %v8080, %v8128
    %8130 = vdwg.mxu0
    %8131 = vmatpush.bf16.msra.mxu0 %v5075
    %8132 = vmatpush.bf16.msra.mxu0 %v5071
    %8133 = vmatpush.bf16.msra.mxu0 %v5067
    %8134 = vmatpush.bf16.msra.mxu0 %v5063
    %8135 = vmatpush.bf16.msra.mxu0 %v5059
    %8136 = vmatpush.bf16.msra.mxu0 %v5055
    %8137 = vmatpush.bf16.msra.mxu0 %v5051
    %8138 = vmatpush.bf16.msra.mxu0 %v5047
    %8139 = vmatmul.bf16.gmra.mxu0 %v1960
    %v8140 = vpop.f32.mrf.mxu0
    %v8141 = vadd.f32 %v8092, %v8140
    %v8142 = vpop.f32.mrf.mxu0
    %v8143 = vadd.f32 %v8094, %v8142
    %8144 = vmatmul.bf16.gmra.mxu0 %v1987
    %v8145 = vpop.f32.mrf.mxu0
    %v8146 = vadd.f32 %v8097, %v8145
    %v8147 = vpop.f32.mrf.mxu0
    %v8148 = vadd.f32 %v8099, %v8147
    %8149 = vmatmul.bf16.gmra.mxu0 %v2014
    %v8150 = vpop.f32.mrf.mxu0
    %v8151 = vadd.f32 %v8102, %v8150
    %v8152 = vpop.f32.mrf.mxu0
    %v8153 = vadd.f32 %v8104, %v8152
    %8154 = vmatmul.bf16.gmra.mxu0 %v2041
    %v8155 = vpop.f32.mrf.mxu0
    %v8156 = vadd.f32 %v8107, %v8155
    %v8157 = vpop.f32.mrf.mxu0
    %v8158 = vadd.f32 %v8109, %v8157
    %8159 = vmatmul.bf16.gmra.mxu0 %v2068
    %v8160 = vpop.f32.mrf.mxu0
    %v8161 = vadd.f32 %v8112, %v8160
    %v8162 = vpop.f32.mrf.mxu0
    %v8163 = vadd.f32 %v8114, %v8162
    %8164 = vmatmul.bf16.gmra.mxu0 %v2095
    %v8165 = vpop.f32.mrf.mxu0
    %v8166 = vadd.f32 %v8117, %v8165
    %v8167 = vpop.f32.mrf.mxu0
    %v8168 = vadd.f32 %v8119, %v8167
    %8169 = vmatmul.bf16.gmra.mxu0 %v2122
    %v8170 = vpop.f32.mrf.mxu0
    %v8171 = vadd.f32 %v8122, %v8170
    %v8172 = vpop.f32.mrf.mxu0
    %v8173 = vadd.f32 %v8124, %v8172
    %8174 = vmatmul.bf16.gmra.mxu0 %v2149
    %v8175 = vpop.f32.mrf.mxu0
    %v8176 = vadd.f32 %v8127, %v8175
    %v8177 = vpop.f32.mrf.mxu0
    %v8178 = vadd.f32 %v8129, %v8177
    %8179 = vdwg.mxu0
    %8180 = vmatpush.bf16.msra.mxu0 %v5107
    %8181 = vmatpush.bf16.msra.mxu0 %v5103
    %8182 = vmatpush.bf16.msra.mxu0 %v5099
    %8183 = vmatpush.bf16.msra.mxu0 %v5095
    %8184 = vmatpush.bf16.msra.mxu0 %v5091
    %8185 = vmatpush.bf16.msra.mxu0 %v5087
    %8186 = vmatpush.bf16.msra.mxu0 %v5083
    %8187 = vmatpush.bf16.msra.mxu0 %v5079
    %8188 = vmatmul.bf16.gmra.mxu0 %v1961
    %v8189 = vpop.f32.mrf.mxu0
    %v8190 = vadd.f32 %v8141, %v8189
    %v8191 = vpop.f32.mrf.mxu0
    %v8192 = vadd.f32 %v8143, %v8191
    %8193 = vmatmul.bf16.gmra.mxu0 %v1988
    %v8194 = vpop.f32.mrf.mxu0
    %v8195 = vadd.f32 %v8146, %v8194
    %v8196 = vpop.f32.mrf.mxu0
    %v8197 = vadd.f32 %v8148, %v8196
    %8198 = vmatmul.bf16.gmra.mxu0 %v2015
    %v8199 = vpop.f32.mrf.mxu0
    %v8200 = vadd.f32 %v8151, %v8199
    %v8201 = vpop.f32.mrf.mxu0
    %v8202 = vadd.f32 %v8153, %v8201
    %8203 = vmatmul.bf16.gmra.mxu0 %v2042
    %v8204 = vpop.f32.mrf.mxu0
    %v8205 = vadd.f32 %v8156, %v8204
    %v8206 = vpop.f32.mrf.mxu0
    %v8207 = vadd.f32 %v8158, %v8206
    %8208 = vmatmul.bf16.gmra.mxu0 %v2069
    %v8209 = vpop.f32.mrf.mxu0
    %v8210 = vadd.f32 %v8161, %v8209
    %v8211 = vpop.f32.mrf.mxu0
    %v8212 = vadd.f32 %v8163, %v8211
    %8213 = vmatmul.bf16.gmra.mxu0 %v2096
    %v8214 = vpop.f32.mrf.mxu0
    %v8215 = vadd.f32 %v8166, %v8214
    %v8216 = vpop.f32.mrf.mxu0
    %v8217 = vadd.f32 %v8168, %v8216
    %8218 = vmatmul.bf16.gmra.mxu0 %v2123
    %v8219 = vpop.f32.mrf.mxu0
    %v8220 = vadd.f32 %v8171, %v8219
    %v8221 = vpop.f32.mrf.mxu0
    %v8222 = vadd.f32 %v8173, %v8221
    %8223 = vmatmul.bf16.gmra.mxu0 %v2150
    %v8224 = vpop.f32.mrf.mxu0
    %v8225 = vadd.f32 %v8176, %v8224
    %v8226 = vpop.f32.mrf.mxu0
    %v8227 = vadd.f32 %v8178, %v8226
    %8228 = vdwg.mxu0
    %8229 = vmatpush.bf16.msra.mxu0 %v5139
    %8230 = vmatpush.bf16.msra.mxu0 %v5135
    %8231 = vmatpush.bf16.msra.mxu0 %v5131
    %8232 = vmatpush.bf16.msra.mxu0 %v5127
    %8233 = vmatpush.bf16.msra.mxu0 %v5123
    %8234 = vmatpush.bf16.msra.mxu0 %v5119
    %8235 = vmatpush.bf16.msra.mxu0 %v5115
    %8236 = vmatpush.bf16.msra.mxu0 %v5111
    %8237 = vmatmul.bf16.gmra.mxu0 %v1962
    %v8238 = vpop.f32.mrf.mxu0
    %v8239 = vadd.f32 %v8190, %v8238
    %v8240 = vpop.f32.mrf.mxu0
    %v8241 = vadd.f32 %v8192, %v8240
    %8242 = vmatmul.bf16.gmra.mxu0 %v1989
    %v8243 = vpop.f32.mrf.mxu0
    %v8244 = vadd.f32 %v8195, %v8243
    %v8245 = vpop.f32.mrf.mxu0
    %v8246 = vadd.f32 %v8197, %v8245
    %8247 = vmatmul.bf16.gmra.mxu0 %v2016
    %v8248 = vpop.f32.mrf.mxu0
    %v8249 = vadd.f32 %v8200, %v8248
    %v8250 = vpop.f32.mrf.mxu0
    %v8251 = vadd.f32 %v8202, %v8250
    %8252 = vmatmul.bf16.gmra.mxu0 %v2043
    %v8253 = vpop.f32.mrf.mxu0
    %v8254 = vadd.f32 %v8205, %v8253
    %v8255 = vpop.f32.mrf.mxu0
    %v8256 = vadd.f32 %v8207, %v8255
    %8257 = vmatmul.bf16.gmra.mxu0 %v2070
    %v8258 = vpop.f32.mrf.mxu0
    %v8259 = vadd.f32 %v8210, %v8258
    %v8260 = vpop.f32.mrf.mxu0
    %v8261 = vadd.f32 %v8212, %v8260
    %8262 = vmatmul.bf16.gmra.mxu0 %v2097
    %v8263 = vpop.f32.mrf.mxu0
    %v8264 = vadd.f32 %v8215, %v8263
    %v8265 = vpop.f32.mrf.mxu0
    %v8266 = vadd.f32 %v8217, %v8265
    %8267 = vmatmul.bf16.gmra.mxu0 %v2124
    %v8268 = vpop.f32.mrf.mxu0
    %v8269 = vadd.f32 %v8220, %v8268
    %v8270 = vpop.f32.mrf.mxu0
    %v8271 = vadd.f32 %v8222, %v8270
    %8272 = vmatmul.bf16.gmra.mxu0 %v2151
    %v8273 = vpop.f32.mrf.mxu0
    %v8274 = vadd.f32 %v8225, %v8273
    %v8275 = vpop.f32.mrf.mxu0
    %v8276 = vadd.f32 %v8227, %v8275
    %8277 = vdwg.mxu0
    %8278 = vmatpush.bf16.msra.mxu0 %v5171
    %8279 = vmatpush.bf16.msra.mxu0 %v5167
    %8280 = vmatpush.bf16.msra.mxu0 %v5163
    %8281 = vmatpush.bf16.msra.mxu0 %v5159
    %8282 = vmatpush.bf16.msra.mxu0 %v5155
    %8283 = vmatpush.bf16.msra.mxu0 %v5151
    %8284 = vmatpush.bf16.msra.mxu0 %v5147
    %8285 = vmatpush.bf16.msra.mxu0 %v5143
    %8286 = vmatmul.bf16.gmra.mxu0 %v1963
    %v8287 = vpop.f32.mrf.mxu0
    %v8288 = vadd.f32 %v8239, %v8287
    %v8289 = vpop.f32.mrf.mxu0
    %v8290 = vadd.f32 %v8241, %v8289
    %8291 = vmatmul.bf16.gmra.mxu0 %v1990
    %v8292 = vpop.f32.mrf.mxu0
    %v8293 = vadd.f32 %v8244, %v8292
    %v8294 = vpop.f32.mrf.mxu0
    %v8295 = vadd.f32 %v8246, %v8294
    %8296 = vmatmul.bf16.gmra.mxu0 %v2017
    %v8297 = vpop.f32.mrf.mxu0
    %v8298 = vadd.f32 %v8249, %v8297
    %v8299 = vpop.f32.mrf.mxu0
    %v8300 = vadd.f32 %v8251, %v8299
    %8301 = vmatmul.bf16.gmra.mxu0 %v2044
    %v8302 = vpop.f32.mrf.mxu0
    %v8303 = vadd.f32 %v8254, %v8302
    %v8304 = vpop.f32.mrf.mxu0
    %v8305 = vadd.f32 %v8256, %v8304
    %8306 = vmatmul.bf16.gmra.mxu0 %v2071
    %v8307 = vpop.f32.mrf.mxu0
    %v8308 = vadd.f32 %v8259, %v8307
    %v8309 = vpop.f32.mrf.mxu0
    %v8310 = vadd.f32 %v8261, %v8309
    %8311 = vmatmul.bf16.gmra.mxu0 %v2098
    %v8312 = vpop.f32.mrf.mxu0
    %v8313 = vadd.f32 %v8264, %v8312
    %v8314 = vpop.f32.mrf.mxu0
    %v8315 = vadd.f32 %v8266, %v8314
    %8316 = vmatmul.bf16.gmra.mxu0 %v2125
    %v8317 = vpop.f32.mrf.mxu0
    %v8318 = vadd.f32 %v8269, %v8317
    %v8319 = vpop.f32.mrf.mxu0
    %v8320 = vadd.f32 %v8271, %v8319
    %8321 = vmatmul.bf16.gmra.mxu0 %v2152
    %v8322 = vpop.f32.mrf.mxu0
    %v8323 = vadd.f32 %v8274, %v8322
    %v8324 = vpop.f32.mrf.mxu0
    %v8325 = vadd.f32 %v8276, %v8324
    %8326 = vdwg.mxu0
    %8327 = vmatpush.bf16.msra.mxu0 %v5203
    %8328 = vmatpush.bf16.msra.mxu0 %v5199
    %8329 = vmatpush.bf16.msra.mxu0 %v5195
    %8330 = vmatpush.bf16.msra.mxu0 %v5191
    %8331 = vmatpush.bf16.msra.mxu0 %v5187
    %8332 = vmatpush.bf16.msra.mxu0 %v5183
    %8333 = vmatpush.bf16.msra.mxu0 %v5179
    %8334 = vmatpush.bf16.msra.mxu0 %v5175
    %8335 = vmatmul.bf16.gmra.mxu0 %v1964
    %v8336 = vpop.f32.mrf.mxu0
    %v8337 = vadd.f32 %v8288, %v8336
    %v8338 = vpop.f32.mrf.mxu0
    %v8339 = vadd.f32 %v8290, %v8338
    %8340 = vmatmul.bf16.gmra.mxu0 %v1991
    %v8341 = vpop.f32.mrf.mxu0
    %v8342 = vadd.f32 %v8293, %v8341
    %v8343 = vpop.f32.mrf.mxu0
    %v8344 = vadd.f32 %v8295, %v8343
    %8345 = vmatmul.bf16.gmra.mxu0 %v2018
    %v8346 = vpop.f32.mrf.mxu0
    %v8347 = vadd.f32 %v8298, %v8346
    %v8348 = vpop.f32.mrf.mxu0
    %v8349 = vadd.f32 %v8300, %v8348
    %8350 = vmatmul.bf16.gmra.mxu0 %v2045
    %v8351 = vpop.f32.mrf.mxu0
    %v8352 = vadd.f32 %v8303, %v8351
    %v8353 = vpop.f32.mrf.mxu0
    %v8354 = vadd.f32 %v8305, %v8353
    %8355 = vmatmul.bf16.gmra.mxu0 %v2072
    %v8356 = vpop.f32.mrf.mxu0
    %v8357 = vadd.f32 %v8308, %v8356
    %v8358 = vpop.f32.mrf.mxu0
    %v8359 = vadd.f32 %v8310, %v8358
    %8360 = vmatmul.bf16.gmra.mxu0 %v2099
    %v8361 = vpop.f32.mrf.mxu0
    %v8362 = vadd.f32 %v8313, %v8361
    %v8363 = vpop.f32.mrf.mxu0
    %v8364 = vadd.f32 %v8315, %v8363
    %8365 = vmatmul.bf16.gmra.mxu0 %v2126
    %v8366 = vpop.f32.mrf.mxu0
    %v8367 = vadd.f32 %v8318, %v8366
    %v8368 = vpop.f32.mrf.mxu0
    %v8369 = vadd.f32 %v8320, %v8368
    %8370 = vmatmul.bf16.gmra.mxu0 %v2153
    %v8371 = vpop.f32.mrf.mxu0
    %v8372 = vadd.f32 %v8323, %v8371
    %v8373 = vpop.f32.mrf.mxu0
    %v8374 = vadd.f32 %v8325, %v8373
    %8375 = vdwg.mxu0
    %8376 = vmatpush.bf16.msra.mxu0 %v5235
    %8377 = vmatpush.bf16.msra.mxu0 %v5231
    %8378 = vmatpush.bf16.msra.mxu0 %v5227
    %8379 = vmatpush.bf16.msra.mxu0 %v5223
    %8380 = vmatpush.bf16.msra.mxu0 %v5219
    %8381 = vmatpush.bf16.msra.mxu0 %v5215
    %8382 = vmatpush.bf16.msra.mxu0 %v5211
    %8383 = vmatpush.bf16.msra.mxu0 %v5207
    %8384 = vmatmul.bf16.gmra.mxu0 %v1965
    %v8385 = vpop.f32.mrf.mxu0
    %v8386 = vadd.f32 %v8337, %v8385
    %v8387 = vpop.f32.mrf.mxu0
    %v8388 = vadd.f32 %v8339, %v8387
    %8389 = vmatmul.bf16.gmra.mxu0 %v1992
    %v8390 = vpop.f32.mrf.mxu0
    %v8391 = vadd.f32 %v8342, %v8390
    %v8392 = vpop.f32.mrf.mxu0
    %v8393 = vadd.f32 %v8344, %v8392
    %8394 = vmatmul.bf16.gmra.mxu0 %v2019
    %v8395 = vpop.f32.mrf.mxu0
    %v8396 = vadd.f32 %v8347, %v8395
    %v8397 = vpop.f32.mrf.mxu0
    %v8398 = vadd.f32 %v8349, %v8397
    %8399 = vmatmul.bf16.gmra.mxu0 %v2046
    %v8400 = vpop.f32.mrf.mxu0
    %v8401 = vadd.f32 %v8352, %v8400
    %v8402 = vpop.f32.mrf.mxu0
    %v8403 = vadd.f32 %v8354, %v8402
    %8404 = vmatmul.bf16.gmra.mxu0 %v2073
    %v8405 = vpop.f32.mrf.mxu0
    %v8406 = vadd.f32 %v8357, %v8405
    %v8407 = vpop.f32.mrf.mxu0
    %v8408 = vadd.f32 %v8359, %v8407
    %8409 = vmatmul.bf16.gmra.mxu0 %v2100
    %v8410 = vpop.f32.mrf.mxu0
    %v8411 = vadd.f32 %v8362, %v8410
    %v8412 = vpop.f32.mrf.mxu0
    %v8413 = vadd.f32 %v8364, %v8412
    %8414 = vmatmul.bf16.gmra.mxu0 %v2127
    %v8415 = vpop.f32.mrf.mxu0
    %v8416 = vadd.f32 %v8367, %v8415
    %v8417 = vpop.f32.mrf.mxu0
    %v8418 = vadd.f32 %v8369, %v8417
    %8419 = vmatmul.bf16.gmra.mxu0 %v2154
    %v8420 = vpop.f32.mrf.mxu0
    %v8421 = vadd.f32 %v8372, %v8420
    %v8422 = vpop.f32.mrf.mxu0
    %v8423 = vadd.f32 %v8374, %v8422
    %8424 = vdwg.mxu0
    %8425 = vmatpush.bf16.msra.mxu0 %v5267
    %8426 = vmatpush.bf16.msra.mxu0 %v5263
    %8427 = vmatpush.bf16.msra.mxu0 %v5259
    %8428 = vmatpush.bf16.msra.mxu0 %v5255
    %8429 = vmatpush.bf16.msra.mxu0 %v5251
    %8430 = vmatpush.bf16.msra.mxu0 %v5247
    %8431 = vmatpush.bf16.msra.mxu0 %v5243
    %8432 = vmatpush.bf16.msra.mxu0 %v5239
    %8433 = vmatmul.bf16.gmra.mxu0 %v1966
    %v8434 = vpop.f32.mrf.mxu0
    %v8435 = vadd.f32 %v8386, %v8434
    %v8436 = vpop.f32.mrf.mxu0
    %v8437 = vadd.f32 %v8388, %v8436
    %8438 = vmatmul.bf16.gmra.mxu0 %v1993
    %v8439 = vpop.f32.mrf.mxu0
    %v8440 = vadd.f32 %v8391, %v8439
    %v8441 = vpop.f32.mrf.mxu0
    %v8442 = vadd.f32 %v8393, %v8441
    %8443 = vmatmul.bf16.gmra.mxu0 %v2020
    %v8444 = vpop.f32.mrf.mxu0
    %v8445 = vadd.f32 %v8396, %v8444
    %v8446 = vpop.f32.mrf.mxu0
    %v8447 = vadd.f32 %v8398, %v8446
    %8448 = vmatmul.bf16.gmra.mxu0 %v2047
    %v8449 = vpop.f32.mrf.mxu0
    %v8450 = vadd.f32 %v8401, %v8449
    %v8451 = vpop.f32.mrf.mxu0
    %v8452 = vadd.f32 %v8403, %v8451
    %8453 = vmatmul.bf16.gmra.mxu0 %v2074
    %v8454 = vpop.f32.mrf.mxu0
    %v8455 = vadd.f32 %v8406, %v8454
    %v8456 = vpop.f32.mrf.mxu0
    %v8457 = vadd.f32 %v8408, %v8456
    %8458 = vmatmul.bf16.gmra.mxu0 %v2101
    %v8459 = vpop.f32.mrf.mxu0
    %v8460 = vadd.f32 %v8411, %v8459
    %v8461 = vpop.f32.mrf.mxu0
    %v8462 = vadd.f32 %v8413, %v8461
    %8463 = vmatmul.bf16.gmra.mxu0 %v2128
    %v8464 = vpop.f32.mrf.mxu0
    %v8465 = vadd.f32 %v8416, %v8464
    %v8466 = vpop.f32.mrf.mxu0
    %v8467 = vadd.f32 %v8418, %v8466
    %8468 = vmatmul.bf16.gmra.mxu0 %v2155
    %v8469 = vpop.f32.mrf.mxu0
    %v8470 = vadd.f32 %v8421, %v8469
    %v8471 = vpop.f32.mrf.mxu0
    %v8472 = vadd.f32 %v8423, %v8471
    %8473 = vdwg.mxu0
    %8474 = vmatpush.bf16.msra.mxu0 %v5299
    %8475 = vmatpush.bf16.msra.mxu0 %v5295
    %8476 = vmatpush.bf16.msra.mxu0 %v5291
    %8477 = vmatpush.bf16.msra.mxu0 %v5287
    %8478 = vmatpush.bf16.msra.mxu0 %v5283
    %8479 = vmatpush.bf16.msra.mxu0 %v5279
    %8480 = vmatpush.bf16.msra.mxu0 %v5275
    %8481 = vmatpush.bf16.msra.mxu0 %v5271
    %8482 = vmatmul.bf16.gmra.mxu0 %v1967
    %v8483 = vpop.f32.mrf.mxu0
    %v8484 = vadd.f32 %v8435, %v8483
    %v8485 = vpop.f32.mrf.mxu0
    %v8486 = vadd.f32 %v8437, %v8485
    %8487 = vmatmul.bf16.gmra.mxu0 %v1994
    %v8488 = vpop.f32.mrf.mxu0
    %v8489 = vadd.f32 %v8440, %v8488
    %v8490 = vpop.f32.mrf.mxu0
    %v8491 = vadd.f32 %v8442, %v8490
    %8492 = vmatmul.bf16.gmra.mxu0 %v2021
    %v8493 = vpop.f32.mrf.mxu0
    %v8494 = vadd.f32 %v8445, %v8493
    %v8495 = vpop.f32.mrf.mxu0
    %v8496 = vadd.f32 %v8447, %v8495
    %8497 = vmatmul.bf16.gmra.mxu0 %v2048
    %v8498 = vpop.f32.mrf.mxu0
    %v8499 = vadd.f32 %v8450, %v8498
    %v8500 = vpop.f32.mrf.mxu0
    %v8501 = vadd.f32 %v8452, %v8500
    %8502 = vmatmul.bf16.gmra.mxu0 %v2075
    %v8503 = vpop.f32.mrf.mxu0
    %v8504 = vadd.f32 %v8455, %v8503
    %v8505 = vpop.f32.mrf.mxu0
    %v8506 = vadd.f32 %v8457, %v8505
    %8507 = vmatmul.bf16.gmra.mxu0 %v2102
    %v8508 = vpop.f32.mrf.mxu0
    %v8509 = vadd.f32 %v8460, %v8508
    %v8510 = vpop.f32.mrf.mxu0
    %v8511 = vadd.f32 %v8462, %v8510
    %8512 = vmatmul.bf16.gmra.mxu0 %v2129
    %v8513 = vpop.f32.mrf.mxu0
    %v8514 = vadd.f32 %v8465, %v8513
    %v8515 = vpop.f32.mrf.mxu0
    %v8516 = vadd.f32 %v8467, %v8515
    %8517 = vmatmul.bf16.gmra.mxu0 %v2156
    %v8518 = vpop.f32.mrf.mxu0
    %v8519 = vadd.f32 %v8470, %v8518
    %v8520 = vpop.f32.mrf.mxu0
    %v8521 = vadd.f32 %v8472, %v8520
    %8522 = vdwg.mxu0
    %8523 = vmatpush.bf16.msra.mxu0 %v5331
    %8524 = vmatpush.bf16.msra.mxu0 %v5327
    %8525 = vmatpush.bf16.msra.mxu0 %v5323
    %8526 = vmatpush.bf16.msra.mxu0 %v5319
    %8527 = vmatpush.bf16.msra.mxu0 %v5315
    %8528 = vmatpush.bf16.msra.mxu0 %v5311
    %8529 = vmatpush.bf16.msra.mxu0 %v5307
    %8530 = vmatpush.bf16.msra.mxu0 %v5303
    %8531 = vmatmul.bf16.gmra.mxu0 %v1968
    %v8532 = vpop.f32.mrf.mxu0
    %v8533 = vadd.f32 %v8484, %v8532
    %v8534 = vpop.f32.mrf.mxu0
    %v8535 = vadd.f32 %v8486, %v8534
    %8536 = vmatmul.bf16.gmra.mxu0 %v1995
    %v8537 = vpop.f32.mrf.mxu0
    %v8538 = vadd.f32 %v8489, %v8537
    %v8539 = vpop.f32.mrf.mxu0
    %v8540 = vadd.f32 %v8491, %v8539
    %8541 = vmatmul.bf16.gmra.mxu0 %v2022
    %v8542 = vpop.f32.mrf.mxu0
    %v8543 = vadd.f32 %v8494, %v8542
    %v8544 = vpop.f32.mrf.mxu0
    %v8545 = vadd.f32 %v8496, %v8544
    %8546 = vmatmul.bf16.gmra.mxu0 %v2049
    %v8547 = vpop.f32.mrf.mxu0
    %v8548 = vadd.f32 %v8499, %v8547
    %v8549 = vpop.f32.mrf.mxu0
    %v8550 = vadd.f32 %v8501, %v8549
    %8551 = vmatmul.bf16.gmra.mxu0 %v2076
    %v8552 = vpop.f32.mrf.mxu0
    %v8553 = vadd.f32 %v8504, %v8552
    %v8554 = vpop.f32.mrf.mxu0
    %v8555 = vadd.f32 %v8506, %v8554
    %8556 = vmatmul.bf16.gmra.mxu0 %v2103
    %v8557 = vpop.f32.mrf.mxu0
    %v8558 = vadd.f32 %v8509, %v8557
    %v8559 = vpop.f32.mrf.mxu0
    %v8560 = vadd.f32 %v8511, %v8559
    %8561 = vmatmul.bf16.gmra.mxu0 %v2130
    %v8562 = vpop.f32.mrf.mxu0
    %v8563 = vadd.f32 %v8514, %v8562
    %v8564 = vpop.f32.mrf.mxu0
    %v8565 = vadd.f32 %v8516, %v8564
    %8566 = vmatmul.bf16.gmra.mxu0 %v2157
    %v8567 = vpop.f32.mrf.mxu0
    %v8568 = vadd.f32 %v8519, %v8567
    %v8569 = vpop.f32.mrf.mxu0
    %v8570 = vadd.f32 %v8521, %v8569
    %8571 = vdwg.mxu0
    %8572 = vmatpush.bf16.msra.mxu0 %v5363
    %8573 = vmatpush.bf16.msra.mxu0 %v5359
    %8574 = vmatpush.bf16.msra.mxu0 %v5355
    %8575 = vmatpush.bf16.msra.mxu0 %v5351
    %8576 = vmatpush.bf16.msra.mxu0 %v5347
    %8577 = vmatpush.bf16.msra.mxu0 %v5343
    %8578 = vmatpush.bf16.msra.mxu0 %v5339
    %8579 = vmatpush.bf16.msra.mxu0 %v5335
    %8580 = vmatmul.bf16.gmra.mxu0 %v1969
    %v8581 = vpop.f32.mrf.mxu0
    %v8582 = vadd.f32 %v8533, %v8581
    %v8583 = vpop.f32.mrf.mxu0
    %v8584 = vadd.f32 %v8535, %v8583
    %8585 = vmatmul.bf16.gmra.mxu0 %v1996
    %v8586 = vpop.f32.mrf.mxu0
    %v8587 = vadd.f32 %v8538, %v8586
    %v8588 = vpop.f32.mrf.mxu0
    %v8589 = vadd.f32 %v8540, %v8588
    %8590 = vmatmul.bf16.gmra.mxu0 %v2023
    %v8591 = vpop.f32.mrf.mxu0
    %v8592 = vadd.f32 %v8543, %v8591
    %v8593 = vpop.f32.mrf.mxu0
    %v8594 = vadd.f32 %v8545, %v8593
    %8595 = vmatmul.bf16.gmra.mxu0 %v2050
    %v8596 = vpop.f32.mrf.mxu0
    %v8597 = vadd.f32 %v8548, %v8596
    %v8598 = vpop.f32.mrf.mxu0
    %v8599 = vadd.f32 %v8550, %v8598
    %8600 = vmatmul.bf16.gmra.mxu0 %v2077
    %v8601 = vpop.f32.mrf.mxu0
    %v8602 = vadd.f32 %v8553, %v8601
    %v8603 = vpop.f32.mrf.mxu0
    %v8604 = vadd.f32 %v8555, %v8603
    %8605 = vmatmul.bf16.gmra.mxu0 %v2104
    %v8606 = vpop.f32.mrf.mxu0
    %v8607 = vadd.f32 %v8558, %v8606
    %v8608 = vpop.f32.mrf.mxu0
    %v8609 = vadd.f32 %v8560, %v8608
    %8610 = vmatmul.bf16.gmra.mxu0 %v2131
    %v8611 = vpop.f32.mrf.mxu0
    %v8612 = vadd.f32 %v8563, %v8611
    %v8613 = vpop.f32.mrf.mxu0
    %v8614 = vadd.f32 %v8565, %v8613
    %8615 = vmatmul.bf16.gmra.mxu0 %v2158
    %v8616 = vpop.f32.mrf.mxu0
    %v8617 = vadd.f32 %v8568, %v8616
    %v8618 = vpop.f32.mrf.mxu0
    %v8619 = vadd.f32 %v8570, %v8618
    %8620 = vdwg.mxu0
    %8621 = vmatpush.bf16.msra.mxu0 %v5395
    %8622 = vmatpush.bf16.msra.mxu0 %v5391
    %8623 = vmatpush.bf16.msra.mxu0 %v5387
    %8624 = vmatpush.bf16.msra.mxu0 %v5383
    %8625 = vmatpush.bf16.msra.mxu0 %v5379
    %8626 = vmatpush.bf16.msra.mxu0 %v5375
    %8627 = vmatpush.bf16.msra.mxu0 %v5371
    %8628 = vmatpush.bf16.msra.mxu0 %v5367
    %8629 = vmatmul.bf16.gmra.mxu0 %v1970
    %v8630 = vpop.f32.mrf.mxu0
    %v8631 = vadd.f32 %v8582, %v8630
    %v8632 = vpop.f32.mrf.mxu0
    %v8633 = vadd.f32 %v8584, %v8632
    %8634 = vmatmul.bf16.gmra.mxu0 %v1997
    %v8635 = vpop.f32.mrf.mxu0
    %v8636 = vadd.f32 %v8587, %v8635
    %v8637 = vpop.f32.mrf.mxu0
    %v8638 = vadd.f32 %v8589, %v8637
    %8639 = vmatmul.bf16.gmra.mxu0 %v2024
    %v8640 = vpop.f32.mrf.mxu0
    %v8641 = vadd.f32 %v8592, %v8640
    %v8642 = vpop.f32.mrf.mxu0
    %v8643 = vadd.f32 %v8594, %v8642
    %8644 = vmatmul.bf16.gmra.mxu0 %v2051
    %v8645 = vpop.f32.mrf.mxu0
    %v8646 = vadd.f32 %v8597, %v8645
    %v8647 = vpop.f32.mrf.mxu0
    %v8648 = vadd.f32 %v8599, %v8647
    %8649 = vmatmul.bf16.gmra.mxu0 %v2078
    %v8650 = vpop.f32.mrf.mxu0
    %v8651 = vadd.f32 %v8602, %v8650
    %v8652 = vpop.f32.mrf.mxu0
    %v8653 = vadd.f32 %v8604, %v8652
    %8654 = vmatmul.bf16.gmra.mxu0 %v2105
    %v8655 = vpop.f32.mrf.mxu0
    %v8656 = vadd.f32 %v8607, %v8655
    %v8657 = vpop.f32.mrf.mxu0
    %v8658 = vadd.f32 %v8609, %v8657
    %8659 = vmatmul.bf16.gmra.mxu0 %v2132
    %v8660 = vpop.f32.mrf.mxu0
    %v8661 = vadd.f32 %v8612, %v8660
    %v8662 = vpop.f32.mrf.mxu0
    %v8663 = vadd.f32 %v8614, %v8662
    %8664 = vmatmul.bf16.gmra.mxu0 %v2159
    %v8665 = vpop.f32.mrf.mxu0
    %v8666 = vadd.f32 %v8617, %v8665
    %v8667 = vpop.f32.mrf.mxu0
    %v8668 = vadd.f32 %v8619, %v8667
    %8669 = vdwg.mxu0
    %8670 = vmatpush.bf16.msra.mxu0 %v5427
    %8671 = vmatpush.bf16.msra.mxu0 %v5423
    %8672 = vmatpush.bf16.msra.mxu0 %v5419
    %8673 = vmatpush.bf16.msra.mxu0 %v5415
    %8674 = vmatpush.bf16.msra.mxu0 %v5411
    %8675 = vmatpush.bf16.msra.mxu0 %v5407
    %8676 = vmatpush.bf16.msra.mxu0 %v5403
    %8677 = vmatpush.bf16.msra.mxu0 %v5399
    %8678 = vmatmul.bf16.gmra.mxu0 %v1971
    %v8679 = vpop.f32.mrf.mxu0
    %v8680 = vadd.f32 %v8631, %v8679
    %v8681 = vpop.f32.mrf.mxu0
    %v8682 = vadd.f32 %v8633, %v8681
    %8683 = vmatmul.bf16.gmra.mxu0 %v1998
    %v8684 = vpop.f32.mrf.mxu0
    %v8685 = vadd.f32 %v8636, %v8684
    %v8686 = vpop.f32.mrf.mxu0
    %v8687 = vadd.f32 %v8638, %v8686
    %8688 = vmatmul.bf16.gmra.mxu0 %v2025
    %v8689 = vpop.f32.mrf.mxu0
    %v8690 = vadd.f32 %v8641, %v8689
    %v8691 = vpop.f32.mrf.mxu0
    %v8692 = vadd.f32 %v8643, %v8691
    %8693 = vmatmul.bf16.gmra.mxu0 %v2052
    %v8694 = vpop.f32.mrf.mxu0
    %v8695 = vadd.f32 %v8646, %v8694
    %v8696 = vpop.f32.mrf.mxu0
    %v8697 = vadd.f32 %v8648, %v8696
    %8698 = vmatmul.bf16.gmra.mxu0 %v2079
    %v8699 = vpop.f32.mrf.mxu0
    %v8700 = vadd.f32 %v8651, %v8699
    %v8701 = vpop.f32.mrf.mxu0
    %v8702 = vadd.f32 %v8653, %v8701
    %8703 = vmatmul.bf16.gmra.mxu0 %v2106
    %v8704 = vpop.f32.mrf.mxu0
    %v8705 = vadd.f32 %v8656, %v8704
    %v8706 = vpop.f32.mrf.mxu0
    %v8707 = vadd.f32 %v8658, %v8706
    %8708 = vmatmul.bf16.gmra.mxu0 %v2133
    %v8709 = vpop.f32.mrf.mxu0
    %v8710 = vadd.f32 %v8661, %v8709
    %v8711 = vpop.f32.mrf.mxu0
    %v8712 = vadd.f32 %v8663, %v8711
    %8713 = vmatmul.bf16.gmra.mxu0 %v2160
    %v8714 = vpop.f32.mrf.mxu0
    %v8715 = vadd.f32 %v8666, %v8714
    %v8716 = vpop.f32.mrf.mxu0
    %v8717 = vadd.f32 %v8668, %v8716
    %8718 = vdwg.mxu0
    %8719 = vmatpush.bf16.msra.mxu0 %v5459
    %8720 = vmatpush.bf16.msra.mxu0 %v5455
    %8721 = vmatpush.bf16.msra.mxu0 %v5451
    %8722 = vmatpush.bf16.msra.mxu0 %v5447
    %8723 = vmatpush.bf16.msra.mxu0 %v5443
    %8724 = vmatpush.bf16.msra.mxu0 %v5439
    %8725 = vmatpush.bf16.msra.mxu0 %v5435
    %8726 = vmatpush.bf16.msra.mxu0 %v5431
    %8727 = vmatmul.bf16.gmra.mxu0 %v1972
    %v8728 = vpop.f32.mrf.mxu0
    %v8729 = vadd.f32 %v8680, %v8728
    %v8730 = vpop.f32.mrf.mxu0
    %v8731 = vadd.f32 %v8682, %v8730
    %8732 = vmatmul.bf16.gmra.mxu0 %v1999
    %v8733 = vpop.f32.mrf.mxu0
    %v8734 = vadd.f32 %v8685, %v8733
    %v8735 = vpop.f32.mrf.mxu0
    %v8736 = vadd.f32 %v8687, %v8735
    %8737 = vmatmul.bf16.gmra.mxu0 %v2026
    %v8738 = vpop.f32.mrf.mxu0
    %v8739 = vadd.f32 %v8690, %v8738
    %v8740 = vpop.f32.mrf.mxu0
    %v8741 = vadd.f32 %v8692, %v8740
    %8742 = vmatmul.bf16.gmra.mxu0 %v2053
    %v8743 = vpop.f32.mrf.mxu0
    %v8744 = vadd.f32 %v8695, %v8743
    %v8745 = vpop.f32.mrf.mxu0
    %v8746 = vadd.f32 %v8697, %v8745
    %8747 = vmatmul.bf16.gmra.mxu0 %v2080
    %v8748 = vpop.f32.mrf.mxu0
    %v8749 = vadd.f32 %v8700, %v8748
    %v8750 = vpop.f32.mrf.mxu0
    %v8751 = vadd.f32 %v8702, %v8750
    %8752 = vmatmul.bf16.gmra.mxu0 %v2107
    %v8753 = vpop.f32.mrf.mxu0
    %v8754 = vadd.f32 %v8705, %v8753
    %v8755 = vpop.f32.mrf.mxu0
    %v8756 = vadd.f32 %v8707, %v8755
    %8757 = vmatmul.bf16.gmra.mxu0 %v2134
    %v8758 = vpop.f32.mrf.mxu0
    %v8759 = vadd.f32 %v8710, %v8758
    %v8760 = vpop.f32.mrf.mxu0
    %v8761 = vadd.f32 %v8712, %v8760
    %8762 = vmatmul.bf16.gmra.mxu0 %v2161
    %v8763 = vpop.f32.mrf.mxu0
    %v8764 = vadd.f32 %v8715, %v8763
    %v8765 = vpop.f32.mrf.mxu0
    %v8766 = vadd.f32 %v8717, %v8765
    %8767 = vdwg.mxu0
    %8768 = vmatpush.bf16.msra.mxu0 %v5491
    %8769 = vmatpush.bf16.msra.mxu0 %v5487
    %8770 = vmatpush.bf16.msra.mxu0 %v5483
    %8771 = vmatpush.bf16.msra.mxu0 %v5479
    %8772 = vmatpush.bf16.msra.mxu0 %v5475
    %8773 = vmatpush.bf16.msra.mxu0 %v5471
    %8774 = vmatpush.bf16.msra.mxu0 %v5467
    %8775 = vmatpush.bf16.msra.mxu0 %v5463
    %8776 = vmatmul.bf16.gmra.mxu0 %v1973
    %v8777 = vpop.f32.mrf.mxu0
    %v8778 = vadd.f32 %v8729, %v8777
    %v8779 = vpop.f32.mrf.mxu0
    %v8780 = vadd.f32 %v8731, %v8779
    %8781 = vmatmul.bf16.gmra.mxu0 %v2000
    %v8782 = vpop.f32.mrf.mxu0
    %v8783 = vadd.f32 %v8734, %v8782
    %v8784 = vpop.f32.mrf.mxu0
    %v8785 = vadd.f32 %v8736, %v8784
    %8786 = vmatmul.bf16.gmra.mxu0 %v2027
    %v8787 = vpop.f32.mrf.mxu0
    %v8788 = vadd.f32 %v8739, %v8787
    %v8789 = vpop.f32.mrf.mxu0
    %v8790 = vadd.f32 %v8741, %v8789
    %8791 = vmatmul.bf16.gmra.mxu0 %v2054
    %v8792 = vpop.f32.mrf.mxu0
    %v8793 = vadd.f32 %v8744, %v8792
    %v8794 = vpop.f32.mrf.mxu0
    %v8795 = vadd.f32 %v8746, %v8794
    %8796 = vmatmul.bf16.gmra.mxu0 %v2081
    %v8797 = vpop.f32.mrf.mxu0
    %v8798 = vadd.f32 %v8749, %v8797
    %v8799 = vpop.f32.mrf.mxu0
    %v8800 = vadd.f32 %v8751, %v8799
    %8801 = vmatmul.bf16.gmra.mxu0 %v2108
    %v8802 = vpop.f32.mrf.mxu0
    %v8803 = vadd.f32 %v8754, %v8802
    %v8804 = vpop.f32.mrf.mxu0
    %v8805 = vadd.f32 %v8756, %v8804
    %8806 = vmatmul.bf16.gmra.mxu0 %v2135
    %v8807 = vpop.f32.mrf.mxu0
    %v8808 = vadd.f32 %v8759, %v8807
    %v8809 = vpop.f32.mrf.mxu0
    %v8810 = vadd.f32 %v8761, %v8809
    %8811 = vmatmul.bf16.gmra.mxu0 %v2162
    %v8812 = vpop.f32.mrf.mxu0
    %v8813 = vadd.f32 %v8764, %v8812
    %v8814 = vpop.f32.mrf.mxu0
    %v8815 = vadd.f32 %v8766, %v8814
    %8816 = vdwg.mxu0
    %8817 = vmatpush.bf16.msra.mxu0 %v5523
    %8818 = vmatpush.bf16.msra.mxu0 %v5519
    %8819 = vmatpush.bf16.msra.mxu0 %v5515
    %8820 = vmatpush.bf16.msra.mxu0 %v5511
    %8821 = vmatpush.bf16.msra.mxu0 %v5507
    %8822 = vmatpush.bf16.msra.mxu0 %v5503
    %8823 = vmatpush.bf16.msra.mxu0 %v5499
    %8824 = vmatpush.bf16.msra.mxu0 %v5495
    %8825 = vmatmul.bf16.gmra.mxu0 %v1974
    %v8826 = vpop.f32.mrf.mxu0
    %v8827 = vadd.f32 %v8778, %v8826
    %v8828 = vpop.f32.mrf.mxu0
    %v8829 = vadd.f32 %v8780, %v8828
    %8830 = vmatmul.bf16.gmra.mxu0 %v2001
    %v8831 = vpop.f32.mrf.mxu0
    %v8832 = vadd.f32 %v8783, %v8831
    %v8833 = vpop.f32.mrf.mxu0
    %v8834 = vadd.f32 %v8785, %v8833
    %8835 = vmatmul.bf16.gmra.mxu0 %v2028
    %v8836 = vpop.f32.mrf.mxu0
    %v8837 = vadd.f32 %v8788, %v8836
    %v8838 = vpop.f32.mrf.mxu0
    %v8839 = vadd.f32 %v8790, %v8838
    %8840 = vmatmul.bf16.gmra.mxu0 %v2055
    %v8841 = vpop.f32.mrf.mxu0
    %v8842 = vadd.f32 %v8793, %v8841
    %v8843 = vpop.f32.mrf.mxu0
    %v8844 = vadd.f32 %v8795, %v8843
    %8845 = vmatmul.bf16.gmra.mxu0 %v2082
    %v8846 = vpop.f32.mrf.mxu0
    %v8847 = vadd.f32 %v8798, %v8846
    %v8848 = vpop.f32.mrf.mxu0
    %v8849 = vadd.f32 %v8800, %v8848
    %8850 = vmatmul.bf16.gmra.mxu0 %v2109
    %v8851 = vpop.f32.mrf.mxu0
    %v8852 = vadd.f32 %v8803, %v8851
    %v8853 = vpop.f32.mrf.mxu0
    %v8854 = vadd.f32 %v8805, %v8853
    %8855 = vmatmul.bf16.gmra.mxu0 %v2136
    %v8856 = vpop.f32.mrf.mxu0
    %v8857 = vadd.f32 %v8808, %v8856
    %v8858 = vpop.f32.mrf.mxu0
    %v8859 = vadd.f32 %v8810, %v8858
    %8860 = vmatmul.bf16.gmra.mxu0 %v2163
    %v8861 = vpop.f32.mrf.mxu0
    %v8862 = vadd.f32 %v8813, %v8861
    %v8863 = vpop.f32.mrf.mxu0
    %v8864 = vadd.f32 %v8815, %v8863
    %8865 = vdwg.mxu0
    %8866 = vmatpush.bf16.msra.mxu0 %v5555
    %8867 = vmatpush.bf16.msra.mxu0 %v5551
    %8868 = vmatpush.bf16.msra.mxu0 %v5547
    %8869 = vmatpush.bf16.msra.mxu0 %v5543
    %8870 = vmatpush.bf16.msra.mxu0 %v5539
    %8871 = vmatpush.bf16.msra.mxu0 %v5535
    %8872 = vmatpush.bf16.msra.mxu0 %v5531
    %8873 = vmatpush.bf16.msra.mxu0 %v5527
    %8874 = vmatmul.bf16.gmra.mxu0 %v1975
    %v8875 = vpop.f32.mrf.mxu0
    %v8876 = vadd.f32 %v8827, %v8875
    %v8877 = vpop.f32.mrf.mxu0
    %v8878 = vadd.f32 %v8829, %v8877
    %8879 = vmatmul.bf16.gmra.mxu0 %v2002
    %v8880 = vpop.f32.mrf.mxu0
    %v8881 = vadd.f32 %v8832, %v8880
    %v8882 = vpop.f32.mrf.mxu0
    %v8883 = vadd.f32 %v8834, %v8882
    %8884 = vmatmul.bf16.gmra.mxu0 %v2029
    %v8885 = vpop.f32.mrf.mxu0
    %v8886 = vadd.f32 %v8837, %v8885
    %v8887 = vpop.f32.mrf.mxu0
    %v8888 = vadd.f32 %v8839, %v8887
    %8889 = vmatmul.bf16.gmra.mxu0 %v2056
    %v8890 = vpop.f32.mrf.mxu0
    %v8891 = vadd.f32 %v8842, %v8890
    %v8892 = vpop.f32.mrf.mxu0
    %v8893 = vadd.f32 %v8844, %v8892
    %8894 = vmatmul.bf16.gmra.mxu0 %v2083
    %v8895 = vpop.f32.mrf.mxu0
    %v8896 = vadd.f32 %v8847, %v8895
    %v8897 = vpop.f32.mrf.mxu0
    %v8898 = vadd.f32 %v8849, %v8897
    %8899 = vmatmul.bf16.gmra.mxu0 %v2110
    %v8900 = vpop.f32.mrf.mxu0
    %v8901 = vadd.f32 %v8852, %v8900
    %v8902 = vpop.f32.mrf.mxu0
    %v8903 = vadd.f32 %v8854, %v8902
    %8904 = vmatmul.bf16.gmra.mxu0 %v2137
    %v8905 = vpop.f32.mrf.mxu0
    %v8906 = vadd.f32 %v8857, %v8905
    %v8907 = vpop.f32.mrf.mxu0
    %v8908 = vadd.f32 %v8859, %v8907
    %8909 = vmatmul.bf16.gmra.mxu0 %v2164
    %v8910 = vpop.f32.mrf.mxu0
    %v8911 = vadd.f32 %v8862, %v8910
    %v8912 = vpop.f32.mrf.mxu0
    %v8913 = vadd.f32 %v8864, %v8912
    %8914 = vdwg.mxu0
    %8915 = vmatpush.bf16.msra.mxu0 %v5587
    %8916 = vmatpush.bf16.msra.mxu0 %v5583
    %8917 = vmatpush.bf16.msra.mxu0 %v5579
    %8918 = vmatpush.bf16.msra.mxu0 %v5575
    %8919 = vmatpush.bf16.msra.mxu0 %v5571
    %8920 = vmatpush.bf16.msra.mxu0 %v5567
    %8921 = vmatpush.bf16.msra.mxu0 %v5563
    %8922 = vmatpush.bf16.msra.mxu0 %v5559
    %8923 = vmatmul.bf16.gmra.mxu0 %v1976
    %v8924 = vpop.f32.mrf.mxu0
    %v8925 = vadd.f32 %v8876, %v8924
    %v8926 = vpop.f32.mrf.mxu0
    %v8927 = vadd.f32 %v8878, %v8926
    %8928 = vmatmul.bf16.gmra.mxu0 %v2003
    %v8929 = vpop.f32.mrf.mxu0
    %v8930 = vadd.f32 %v8881, %v8929
    %v8931 = vpop.f32.mrf.mxu0
    %v8932 = vadd.f32 %v8883, %v8931
    %8933 = vmatmul.bf16.gmra.mxu0 %v2030
    %v8934 = vpop.f32.mrf.mxu0
    %v8935 = vadd.f32 %v8886, %v8934
    %v8936 = vpop.f32.mrf.mxu0
    %v8937 = vadd.f32 %v8888, %v8936
    %8938 = vmatmul.bf16.gmra.mxu0 %v2057
    %v8939 = vpop.f32.mrf.mxu0
    %v8940 = vadd.f32 %v8891, %v8939
    %v8941 = vpop.f32.mrf.mxu0
    %v8942 = vadd.f32 %v8893, %v8941
    %8943 = vmatmul.bf16.gmra.mxu0 %v2084
    %v8944 = vpop.f32.mrf.mxu0
    %v8945 = vadd.f32 %v8896, %v8944
    %v8946 = vpop.f32.mrf.mxu0
    %v8947 = vadd.f32 %v8898, %v8946
    %8948 = vmatmul.bf16.gmra.mxu0 %v2111
    %v8949 = vpop.f32.mrf.mxu0
    %v8950 = vadd.f32 %v8901, %v8949
    %v8951 = vpop.f32.mrf.mxu0
    %v8952 = vadd.f32 %v8903, %v8951
    %8953 = vmatmul.bf16.gmra.mxu0 %v2138
    %v8954 = vpop.f32.mrf.mxu0
    %v8955 = vadd.f32 %v8906, %v8954
    %v8956 = vpop.f32.mrf.mxu0
    %v8957 = vadd.f32 %v8908, %v8956
    %8958 = vmatmul.bf16.gmra.mxu0 %v2165
    %v8959 = vpop.f32.mrf.mxu0
    %v8960 = vadd.f32 %v8911, %v8959
    %v8961 = vpop.f32.mrf.mxu0
    %v8962 = vadd.f32 %v8913, %v8961
    %8963 = vdwg.mxu0
    %8964 = vmatpush.bf16.msra.mxu0 %v5619
    %8965 = vmatpush.bf16.msra.mxu0 %v5615
    %8966 = vmatpush.bf16.msra.mxu0 %v5611
    %8967 = vmatpush.bf16.msra.mxu0 %v5607
    %8968 = vmatpush.bf16.msra.mxu0 %v5603
    %8969 = vmatpush.bf16.msra.mxu0 %v5599
    %8970 = vmatpush.bf16.msra.mxu0 %v5595
    %8971 = vmatpush.bf16.msra.mxu0 %v5591
    %8972 = vmatmul.bf16.gmra.mxu0 %v1977
    %v8973 = vpop.f32.mrf.mxu0
    %v8974 = vadd.f32 %v8925, %v8973
    %v8975 = vpop.f32.mrf.mxu0
    %v8976 = vadd.f32 %v8927, %v8975
    %8977 = vmatmul.bf16.gmra.mxu0 %v2004
    %v8978 = vpop.f32.mrf.mxu0
    %v8979 = vadd.f32 %v8930, %v8978
    %v8980 = vpop.f32.mrf.mxu0
    %v8981 = vadd.f32 %v8932, %v8980
    %8982 = vmatmul.bf16.gmra.mxu0 %v2031
    %v8983 = vpop.f32.mrf.mxu0
    %v8984 = vadd.f32 %v8935, %v8983
    %v8985 = vpop.f32.mrf.mxu0
    %v8986 = vadd.f32 %v8937, %v8985
    %8987 = vmatmul.bf16.gmra.mxu0 %v2058
    %v8988 = vpop.f32.mrf.mxu0
    %v8989 = vadd.f32 %v8940, %v8988
    %v8990 = vpop.f32.mrf.mxu0
    %v8991 = vadd.f32 %v8942, %v8990
    %8992 = vmatmul.bf16.gmra.mxu0 %v2085
    %v8993 = vpop.f32.mrf.mxu0
    %v8994 = vadd.f32 %v8945, %v8993
    %v8995 = vpop.f32.mrf.mxu0
    %v8996 = vadd.f32 %v8947, %v8995
    %8997 = vmatmul.bf16.gmra.mxu0 %v2112
    %v8998 = vpop.f32.mrf.mxu0
    %v8999 = vadd.f32 %v8950, %v8998
    %v9000 = vpop.f32.mrf.mxu0
    %v9001 = vadd.f32 %v8952, %v9000
    %9002 = vmatmul.bf16.gmra.mxu0 %v2139
    %v9003 = vpop.f32.mrf.mxu0
    %v9004 = vadd.f32 %v8955, %v9003
    %v9005 = vpop.f32.mrf.mxu0
    %v9006 = vadd.f32 %v8957, %v9005
    %9007 = vmatmul.bf16.gmra.mxu0 %v2166
    %v9008 = vpop.f32.mrf.mxu0
    %v9009 = vadd.f32 %v8960, %v9008
    %v9010 = vpop.f32.mrf.mxu0
    %v9011 = vadd.f32 %v8962, %v9010
    %9012 = vdwg.mxu0
    %9013 = vmatpush.bf16.msra.mxu0 %v5651
    %9014 = vmatpush.bf16.msra.mxu0 %v5647
    %9015 = vmatpush.bf16.msra.mxu0 %v5643
    %9016 = vmatpush.bf16.msra.mxu0 %v5639
    %9017 = vmatpush.bf16.msra.mxu0 %v5635
    %9018 = vmatpush.bf16.msra.mxu0 %v5631
    %9019 = vmatpush.bf16.msra.mxu0 %v5627
    %9020 = vmatpush.bf16.msra.mxu0 %v5623
    %9021 = vmatmul.bf16.gmra.mxu0 %v1978
    %v9022 = vpop.f32.mrf.mxu0
    %v9023 = vadd.f32 %v8974, %v9022
    %v9024 = vpop.f32.mrf.mxu0
    %v9025 = vadd.f32 %v8976, %v9024
    %9026 = vmatmul.bf16.gmra.mxu0 %v2005
    %v9027 = vpop.f32.mrf.mxu0
    %v9028 = vadd.f32 %v8979, %v9027
    %v9029 = vpop.f32.mrf.mxu0
    %v9030 = vadd.f32 %v8981, %v9029
    %9031 = vmatmul.bf16.gmra.mxu0 %v2032
    %v9032 = vpop.f32.mrf.mxu0
    %v9033 = vadd.f32 %v8984, %v9032
    %v9034 = vpop.f32.mrf.mxu0
    %v9035 = vadd.f32 %v8986, %v9034
    %9036 = vmatmul.bf16.gmra.mxu0 %v2059
    %v9037 = vpop.f32.mrf.mxu0
    %v9038 = vadd.f32 %v8989, %v9037
    %v9039 = vpop.f32.mrf.mxu0
    %v9040 = vadd.f32 %v8991, %v9039
    %9041 = vmatmul.bf16.gmra.mxu0 %v2086
    %v9042 = vpop.f32.mrf.mxu0
    %v9043 = vadd.f32 %v8994, %v9042
    %v9044 = vpop.f32.mrf.mxu0
    %v9045 = vadd.f32 %v8996, %v9044
    %9046 = vmatmul.bf16.gmra.mxu0 %v2113
    %v9047 = vpop.f32.mrf.mxu0
    %v9048 = vadd.f32 %v8999, %v9047
    %v9049 = vpop.f32.mrf.mxu0
    %v9050 = vadd.f32 %v9001, %v9049
    %9051 = vmatmul.bf16.gmra.mxu0 %v2140
    %v9052 = vpop.f32.mrf.mxu0
    %v9053 = vadd.f32 %v9004, %v9052
    %v9054 = vpop.f32.mrf.mxu0
    %v9055 = vadd.f32 %v9006, %v9054
    %9056 = vmatmul.bf16.gmra.mxu0 %v2167
    %v9057 = vpop.f32.mrf.mxu0
    %v9058 = vadd.f32 %v9009, %v9057
    %v9059 = vpop.f32.mrf.mxu0
    %v9060 = vadd.f32 %v9011, %v9059
    %9061 = vdwg.mxu0
    %9062 = vmatpush.bf16.msra.mxu0 %v5683
    %9063 = vmatpush.bf16.msra.mxu0 %v5679
    %9064 = vmatpush.bf16.msra.mxu0 %v5675
    %9065 = vmatpush.bf16.msra.mxu0 %v5671
    %9066 = vmatpush.bf16.msra.mxu0 %v5667
    %9067 = vmatpush.bf16.msra.mxu0 %v5663
    %9068 = vmatpush.bf16.msra.mxu0 %v5659
    %9069 = vmatpush.bf16.msra.mxu0 %v5655
    %9070 = vmatmul.bf16.gmra.mxu0 %v1979
    %v9071 = vpop.f32.mrf.mxu0
    %v9072 = vadd.f32 %v9023, %v9071
    %v9073 = vpop.f32.mrf.mxu0
    %v9074 = vadd.f32 %v9025, %v9073
    %9075 = vmatmul.bf16.gmra.mxu0 %v2006
    %v9076 = vpop.f32.mrf.mxu0
    %v9077 = vadd.f32 %v9028, %v9076
    %v9078 = vpop.f32.mrf.mxu0
    %v9079 = vadd.f32 %v9030, %v9078
    %9080 = vmatmul.bf16.gmra.mxu0 %v2033
    %v9081 = vpop.f32.mrf.mxu0
    %v9082 = vadd.f32 %v9033, %v9081
    %v9083 = vpop.f32.mrf.mxu0
    %v9084 = vadd.f32 %v9035, %v9083
    %9085 = vmatmul.bf16.gmra.mxu0 %v2060
    %v9086 = vpop.f32.mrf.mxu0
    %v9087 = vadd.f32 %v9038, %v9086
    %v9088 = vpop.f32.mrf.mxu0
    %v9089 = vadd.f32 %v9040, %v9088
    %9090 = vmatmul.bf16.gmra.mxu0 %v2087
    %v9091 = vpop.f32.mrf.mxu0
    %v9092 = vadd.f32 %v9043, %v9091
    %v9093 = vpop.f32.mrf.mxu0
    %v9094 = vadd.f32 %v9045, %v9093
    %9095 = vmatmul.bf16.gmra.mxu0 %v2114
    %v9096 = vpop.f32.mrf.mxu0
    %v9097 = vadd.f32 %v9048, %v9096
    %v9098 = vpop.f32.mrf.mxu0
    %v9099 = vadd.f32 %v9050, %v9098
    %9100 = vmatmul.bf16.gmra.mxu0 %v2141
    %v9101 = vpop.f32.mrf.mxu0
    %v9102 = vadd.f32 %v9053, %v9101
    %v9103 = vpop.f32.mrf.mxu0
    %v9104 = vadd.f32 %v9055, %v9103
    %9105 = vmatmul.bf16.gmra.mxu0 %v2168
    %v9106 = vpop.f32.mrf.mxu0
    %v9107 = vadd.f32 %v9058, %v9106
    %v9108 = vpop.f32.mrf.mxu0
    %v9109 = vadd.f32 %v9060, %v9108
    %9110 = vdwg.mxu0
    %9111 = vmatpush.bf16.msra.mxu0 %v5715
    %9112 = vmatpush.bf16.msra.mxu0 %v5711
    %9113 = vmatpush.bf16.msra.mxu0 %v5707
    %9114 = vmatpush.bf16.msra.mxu0 %v5703
    %9115 = vmatpush.bf16.msra.mxu0 %v5699
    %9116 = vmatpush.bf16.msra.mxu0 %v5695
    %9117 = vmatpush.bf16.msra.mxu0 %v5691
    %9118 = vmatpush.bf16.msra.mxu0 %v5687
    %9119 = vmatmul.bf16.gmra.mxu0 %v1980
    %v9120 = vpop.f32.mrf.mxu0
    %v9121 = vadd.f32 %v9072, %v9120
    %v9122 = vpop.f32.mrf.mxu0
    %v9123 = vadd.f32 %v9074, %v9122
    %9124 = vmatmul.bf16.gmra.mxu0 %v2007
    %v9125 = vpop.f32.mrf.mxu0
    %v9126 = vadd.f32 %v9077, %v9125
    %v9127 = vpop.f32.mrf.mxu0
    %v9128 = vadd.f32 %v9079, %v9127
    %9129 = vmatmul.bf16.gmra.mxu0 %v2034
    %v9130 = vpop.f32.mrf.mxu0
    %v9131 = vadd.f32 %v9082, %v9130
    %v9132 = vpop.f32.mrf.mxu0
    %v9133 = vadd.f32 %v9084, %v9132
    %9134 = vmatmul.bf16.gmra.mxu0 %v2061
    %v9135 = vpop.f32.mrf.mxu0
    %v9136 = vadd.f32 %v9087, %v9135
    %v9137 = vpop.f32.mrf.mxu0
    %v9138 = vadd.f32 %v9089, %v9137
    %9139 = vmatmul.bf16.gmra.mxu0 %v2088
    %v9140 = vpop.f32.mrf.mxu0
    %v9141 = vadd.f32 %v9092, %v9140
    %v9142 = vpop.f32.mrf.mxu0
    %v9143 = vadd.f32 %v9094, %v9142
    %9144 = vmatmul.bf16.gmra.mxu0 %v2115
    %v9145 = vpop.f32.mrf.mxu0
    %v9146 = vadd.f32 %v9097, %v9145
    %v9147 = vpop.f32.mrf.mxu0
    %v9148 = vadd.f32 %v9099, %v9147
    %9149 = vmatmul.bf16.gmra.mxu0 %v2142
    %v9150 = vpop.f32.mrf.mxu0
    %v9151 = vadd.f32 %v9102, %v9150
    %v9152 = vpop.f32.mrf.mxu0
    %v9153 = vadd.f32 %v9104, %v9152
    %9154 = vmatmul.bf16.gmra.mxu0 %v2169
    %v9155 = vpop.f32.mrf.mxu0
    %v9156 = vadd.f32 %v9107, %v9155
    %v9157 = vpop.f32.mrf.mxu0
    %v9158 = vadd.f32 %v9109, %v9157
    %9159 = vdwg.mxu0
    %9160 = vmatpush.bf16.msra.mxu0 %v5747
    %9161 = vmatpush.bf16.msra.mxu0 %v5743
    %9162 = vmatpush.bf16.msra.mxu0 %v5739
    %9163 = vmatpush.bf16.msra.mxu0 %v5735
    %9164 = vmatpush.bf16.msra.mxu0 %v5731
    %9165 = vmatpush.bf16.msra.mxu0 %v5727
    %9166 = vmatpush.bf16.msra.mxu0 %v5723
    %9167 = vmatpush.bf16.msra.mxu0 %v5719
    %9168 = vmatmul.bf16.gmra.mxu0 %v1981
    %v9169 = vpop.f32.mrf.mxu0
    %v9170 = vadd.f32 %v9121, %v9169
    %v9171 = vpop.f32.mrf.mxu0
    %v9172 = vadd.f32 %v9123, %v9171
    %9173 = vmatmul.bf16.gmra.mxu0 %v2008
    %v9174 = vpop.f32.mrf.mxu0
    %v9175 = vadd.f32 %v9126, %v9174
    %v9176 = vpop.f32.mrf.mxu0
    %v9177 = vadd.f32 %v9128, %v9176
    %9178 = vmatmul.bf16.gmra.mxu0 %v2035
    %v9179 = vpop.f32.mrf.mxu0
    %v9180 = vadd.f32 %v9131, %v9179
    %v9181 = vpop.f32.mrf.mxu0
    %v9182 = vadd.f32 %v9133, %v9181
    %9183 = vmatmul.bf16.gmra.mxu0 %v2062
    %v9184 = vpop.f32.mrf.mxu0
    %v9185 = vadd.f32 %v9136, %v9184
    %v9186 = vpop.f32.mrf.mxu0
    %v9187 = vadd.f32 %v9138, %v9186
    %9188 = vmatmul.bf16.gmra.mxu0 %v2089
    %v9189 = vpop.f32.mrf.mxu0
    %v9190 = vadd.f32 %v9141, %v9189
    %v9191 = vpop.f32.mrf.mxu0
    %v9192 = vadd.f32 %v9143, %v9191
    %9193 = vmatmul.bf16.gmra.mxu0 %v2116
    %v9194 = vpop.f32.mrf.mxu0
    %v9195 = vadd.f32 %v9146, %v9194
    %v9196 = vpop.f32.mrf.mxu0
    %v9197 = vadd.f32 %v9148, %v9196
    %9198 = vmatmul.bf16.gmra.mxu0 %v2143
    %v9199 = vpop.f32.mrf.mxu0
    %v9200 = vadd.f32 %v9151, %v9199
    %v9201 = vpop.f32.mrf.mxu0
    %v9202 = vadd.f32 %v9153, %v9201
    %9203 = vmatmul.bf16.gmra.mxu0 %v2170
    %v9204 = vpop.f32.mrf.mxu0
    %v9205 = vadd.f32 %v9156, %v9204
    %v9206 = vpop.f32.mrf.mxu0
    %v9207 = vadd.f32 %v9158, %v9206
    %9208 = vdwg.mxu0
    %9209 = vmatpush.bf16.msra.mxu0 %v5779
    %9210 = vmatpush.bf16.msra.mxu0 %v5775
    %9211 = vmatpush.bf16.msra.mxu0 %v5771
    %9212 = vmatpush.bf16.msra.mxu0 %v5767
    %9213 = vmatpush.bf16.msra.mxu0 %v5763
    %9214 = vmatpush.bf16.msra.mxu0 %v5759
    %9215 = vmatpush.bf16.msra.mxu0 %v5755
    %9216 = vmatpush.bf16.msra.mxu0 %v5751
    %9217 = vmatmul.bf16.gmra.mxu0 %v1982
    %v9218 = vpop.f32.mrf.mxu0
    %v9219 = vadd.f32 %v9170, %v9218
    %v9220 = vpop.f32.mrf.mxu0
    %v9221 = vadd.f32 %v9172, %v9220
    %9222 = vmatmul.bf16.gmra.mxu0 %v2009
    %v9223 = vpop.f32.mrf.mxu0
    %v9224 = vadd.f32 %v9175, %v9223
    %v9225 = vpop.f32.mrf.mxu0
    %v9226 = vadd.f32 %v9177, %v9225
    %9227 = vmatmul.bf16.gmra.mxu0 %v2036
    %v9228 = vpop.f32.mrf.mxu0
    %v9229 = vadd.f32 %v9180, %v9228
    %v9230 = vpop.f32.mrf.mxu0
    %v9231 = vadd.f32 %v9182, %v9230
    %9232 = vmatmul.bf16.gmra.mxu0 %v2063
    %v9233 = vpop.f32.mrf.mxu0
    %v9234 = vadd.f32 %v9185, %v9233
    %v9235 = vpop.f32.mrf.mxu0
    %v9236 = vadd.f32 %v9187, %v9235
    %9237 = vmatmul.bf16.gmra.mxu0 %v2090
    %v9238 = vpop.f32.mrf.mxu0
    %v9239 = vadd.f32 %v9190, %v9238
    %v9240 = vpop.f32.mrf.mxu0
    %v9241 = vadd.f32 %v9192, %v9240
    %9242 = vmatmul.bf16.gmra.mxu0 %v2117
    %v9243 = vpop.f32.mrf.mxu0
    %v9244 = vadd.f32 %v9195, %v9243
    %v9245 = vpop.f32.mrf.mxu0
    %v9246 = vadd.f32 %v9197, %v9245
    %9247 = vmatmul.bf16.gmra.mxu0 %v2144
    %v9248 = vpop.f32.mrf.mxu0
    %v9249 = vadd.f32 %v9200, %v9248
    %v9250 = vpop.f32.mrf.mxu0
    %v9251 = vadd.f32 %v9202, %v9250
    %9252 = vmatmul.bf16.gmra.mxu0 %v2171
    %v9253 = vpop.f32.mrf.mxu0
    %v9254 = vadd.f32 %v9205, %v9253
    %v9255 = vpop.f32.mrf.mxu0
    %v9256 = vadd.f32 %v9207, %v9255
    %9257 = vdwg.mxu0
    %9258 = vmatpush.bf16.msra.mxu0 %v5811
    %9259 = vmatpush.bf16.msra.mxu0 %v5807
    %9260 = vmatpush.bf16.msra.mxu0 %v5803
    %9261 = vmatpush.bf16.msra.mxu0 %v5799
    %9262 = vmatpush.bf16.msra.mxu0 %v5795
    %9263 = vmatpush.bf16.msra.mxu0 %v5791
    %9264 = vmatpush.bf16.msra.mxu0 %v5787
    %9265 = vmatpush.bf16.msra.mxu0 %v5783
    %9266 = vmatmul.bf16.gmra.mxu0 %v1983
    %v9267 = vpop.f32.mrf.mxu0
    %v9268 = vadd.f32 %v9219, %v9267
    %v9269 = vpop.f32.mrf.mxu0
    %v9270 = vadd.f32 %v9221, %v9269
    %9271 = vmatmul.bf16.gmra.mxu0 %v2010
    %v9272 = vpop.f32.mrf.mxu0
    %v9273 = vadd.f32 %v9224, %v9272
    %v9274 = vpop.f32.mrf.mxu0
    %v9275 = vadd.f32 %v9226, %v9274
    %9276 = vmatmul.bf16.gmra.mxu0 %v2037
    %v9277 = vpop.f32.mrf.mxu0
    %v9278 = vadd.f32 %v9229, %v9277
    %v9279 = vpop.f32.mrf.mxu0
    %v9280 = vadd.f32 %v9231, %v9279
    %9281 = vmatmul.bf16.gmra.mxu0 %v2064
    %v9282 = vpop.f32.mrf.mxu0
    %v9283 = vadd.f32 %v9234, %v9282
    %v9284 = vpop.f32.mrf.mxu0
    %v9285 = vadd.f32 %v9236, %v9284
    %9286 = vmatmul.bf16.gmra.mxu0 %v2091
    %v9287 = vpop.f32.mrf.mxu0
    %v9288 = vadd.f32 %v9239, %v9287
    %v9289 = vpop.f32.mrf.mxu0
    %v9290 = vadd.f32 %v9241, %v9289
    %9291 = vmatmul.bf16.gmra.mxu0 %v2118
    %v9292 = vpop.f32.mrf.mxu0
    %v9293 = vadd.f32 %v9244, %v9292
    %v9294 = vpop.f32.mrf.mxu0
    %v9295 = vadd.f32 %v9246, %v9294
    %9296 = vmatmul.bf16.gmra.mxu0 %v2145
    %v9297 = vpop.f32.mrf.mxu0
    %v9298 = vadd.f32 %v9249, %v9297
    %v9299 = vpop.f32.mrf.mxu0
    %v9300 = vadd.f32 %v9251, %v9299
    %9301 = vmatmul.bf16.gmra.mxu0 %v2172
    %v9302 = vpop.f32.mrf.mxu0
    %v9303 = vadd.f32 %v9254, %v9302
    %v9304 = vpop.f32.mrf.mxu0
    %v9305 = vadd.f32 %v9256, %v9304
    %9306 = vdwg.mxu0
    %9307 = vmatpush.bf16.msra.mxu0 %v5843
    %9308 = vmatpush.bf16.msra.mxu0 %v5839
    %9309 = vmatpush.bf16.msra.mxu0 %v5835
    %9310 = vmatpush.bf16.msra.mxu0 %v5831
    %9311 = vmatpush.bf16.msra.mxu0 %v5827
    %9312 = vmatpush.bf16.msra.mxu0 %v5823
    %9313 = vmatpush.bf16.msra.mxu0 %v5819
    %9314 = vmatpush.bf16.msra.mxu0 %v5815
    %9315 = vmatmul.bf16.gmra.mxu0 %v1984
    %v9316 = vpop.f32.mrf.mxu0
    %v9317 = vadd.f32 %v9268, %v9316
    %v9318 = vpop.f32.mrf.mxu0
    %v9319 = vadd.f32 %v9270, %v9318
    %9320 = vmatmul.bf16.gmra.mxu0 %v2011
    %v9321 = vpop.f32.mrf.mxu0
    %v9322 = vadd.f32 %v9273, %v9321
    %v9323 = vpop.f32.mrf.mxu0
    %v9324 = vadd.f32 %v9275, %v9323
    %9325 = vmatmul.bf16.gmra.mxu0 %v2038
    %v9326 = vpop.f32.mrf.mxu0
    %v9327 = vadd.f32 %v9278, %v9326
    %v9328 = vpop.f32.mrf.mxu0
    %v9329 = vadd.f32 %v9280, %v9328
    %9330 = vmatmul.bf16.gmra.mxu0 %v2065
    %v9331 = vpop.f32.mrf.mxu0
    %v9332 = vadd.f32 %v9283, %v9331
    %v9333 = vpop.f32.mrf.mxu0
    %v9334 = vadd.f32 %v9285, %v9333
    %9335 = vmatmul.bf16.gmra.mxu0 %v2092
    %v9336 = vpop.f32.mrf.mxu0
    %v9337 = vadd.f32 %v9288, %v9336
    %v9338 = vpop.f32.mrf.mxu0
    %v9339 = vadd.f32 %v9290, %v9338
    %9340 = vmatmul.bf16.gmra.mxu0 %v2119
    %v9341 = vpop.f32.mrf.mxu0
    %v9342 = vadd.f32 %v9293, %v9341
    %v9343 = vpop.f32.mrf.mxu0
    %v9344 = vadd.f32 %v9295, %v9343
    %9345 = vmatmul.bf16.gmra.mxu0 %v2146
    %v9346 = vpop.f32.mrf.mxu0
    %v9347 = vadd.f32 %v9298, %v9346
    %v9348 = vpop.f32.mrf.mxu0
    %v9349 = vadd.f32 %v9300, %v9348
    %9350 = vmatmul.bf16.gmra.mxu0 %v2173
    %v9351 = vpop.f32.mrf.mxu0
    %v9352 = vadd.f32 %v9303, %v9351
    %v9353 = vpop.f32.mrf.mxu0
    %v9354 = vadd.f32 %v9305, %v9353
    %9355 = vdwg.mxu0
    %9356 = vmatpush.bf16.msra.mxu0 %v5012
    %9357 = vmatpush.bf16.msra.mxu0 %v5008
    %9358 = vmatpush.bf16.msra.mxu0 %v5004
    %9359 = vmatpush.bf16.msra.mxu0 %v5000
    %9360 = vmatpush.bf16.msra.mxu0 %v4996
    %9361 = vmatpush.bf16.msra.mxu0 %v4992
    %9362 = vmatpush.bf16.msra.mxu0 %v4988
    %9363 = vmatpush.bf16.msra.mxu0 %v4984
    %9364 = vmatmul.bf16.gmra.mxu0 %v1958
    %v9365 = vpop.f32.mrf.mxu0
    %v9366 = vadd.f32 0.0, %v9365
    %v9367 = vpop.f32.mrf.mxu0
    %v9368 = vadd.f32 0.0, %v9367
    %9369 = vmatmul.bf16.gmra.mxu0 %v1985
    %v9370 = vpop.f32.mrf.mxu0
    %v9371 = vadd.f32 0.0, %v9370
    %v9372 = vpop.f32.mrf.mxu0
    %v9373 = vadd.f32 0.0, %v9372
    %9374 = vmatmul.bf16.gmra.mxu0 %v2012
    %v9375 = vpop.f32.mrf.mxu0
    %v9376 = vadd.f32 0.0, %v9375
    %v9377 = vpop.f32.mrf.mxu0
    %v9378 = vadd.f32 0.0, %v9377
    %9379 = vmatmul.bf16.gmra.mxu0 %v2039
    %v9380 = vpop.f32.mrf.mxu0
    %v9381 = vadd.f32 0.0, %v9380
    %v9382 = vpop.f32.mrf.mxu0
    %v9383 = vadd.f32 0.0, %v9382
    %9384 = vmatmul.bf16.gmra.mxu0 %v2066
    %v9385 = vpop.f32.mrf.mxu0
    %v9386 = vadd.f32 0.0, %v9385
    %v9387 = vpop.f32.mrf.mxu0
    %v9388 = vadd.f32 0.0, %v9387
    %9389 = vmatmul.bf16.gmra.mxu0 %v2093
    %v9390 = vpop.f32.mrf.mxu0
    %v9391 = vadd.f32 0.0, %v9390
    %v9392 = vpop.f32.mrf.mxu0
    %v9393 = vadd.f32 0.0, %v9392
    %9394 = vmatmul.bf16.gmra.mxu0 %v2120
    %v9395 = vpop.f32.mrf.mxu0
    %v9396 = vadd.f32 0.0, %v9395
    %v9397 = vpop.f32.mrf.mxu0
    %v9398 = vadd.f32 0.0, %v9397
    %9399 = vmatmul.bf16.gmra.mxu0 %v2147
    %v9400 = vpop.f32.mrf.mxu0
    %v9401 = vadd.f32 0.0, %v9400
    %v9402 = vpop.f32.mrf.mxu0
    %v9403 = vadd.f32 0.0, %v9402
    %9404 = vdwg.mxu0
    %9405 = vmatpush.bf16.msra.mxu0 %v5044
    %9406 = vmatpush.bf16.msra.mxu0 %v5040
    %9407 = vmatpush.bf16.msra.mxu0 %v5036
    %9408 = vmatpush.bf16.msra.mxu0 %v5032
    %9409 = vmatpush.bf16.msra.mxu0 %v5028
    %9410 = vmatpush.bf16.msra.mxu0 %v5024
    %9411 = vmatpush.bf16.msra.mxu0 %v5020
    %9412 = vmatpush.bf16.msra.mxu0 %v5016
    %9413 = vmatmul.bf16.gmra.mxu0 %v1959
    %v9414 = vpop.f32.mrf.mxu0
    %v9415 = vadd.f32 %v9366, %v9414
    %v9416 = vpop.f32.mrf.mxu0
    %v9417 = vadd.f32 %v9368, %v9416
    %9418 = vmatmul.bf16.gmra.mxu0 %v1986
    %v9419 = vpop.f32.mrf.mxu0
    %v9420 = vadd.f32 %v9371, %v9419
    %v9421 = vpop.f32.mrf.mxu0
    %v9422 = vadd.f32 %v9373, %v9421
    %9423 = vmatmul.bf16.gmra.mxu0 %v2013
    %v9424 = vpop.f32.mrf.mxu0
    %v9425 = vadd.f32 %v9376, %v9424
    %v9426 = vpop.f32.mrf.mxu0
    %v9427 = vadd.f32 %v9378, %v9426
    %9428 = vmatmul.bf16.gmra.mxu0 %v2040
    %v9429 = vpop.f32.mrf.mxu0
    %v9430 = vadd.f32 %v9381, %v9429
    %v9431 = vpop.f32.mrf.mxu0
    %v9432 = vadd.f32 %v9383, %v9431
    %9433 = vmatmul.bf16.gmra.mxu0 %v2067
    %v9434 = vpop.f32.mrf.mxu0
    %v9435 = vadd.f32 %v9386, %v9434
    %v9436 = vpop.f32.mrf.mxu0
    %v9437 = vadd.f32 %v9388, %v9436
    %9438 = vmatmul.bf16.gmra.mxu0 %v2094
    %v9439 = vpop.f32.mrf.mxu0
    %v9440 = vadd.f32 %v9391, %v9439
    %v9441 = vpop.f32.mrf.mxu0
    %v9442 = vadd.f32 %v9393, %v9441
    %9443 = vmatmul.bf16.gmra.mxu0 %v2121
    %v9444 = vpop.f32.mrf.mxu0
    %v9445 = vadd.f32 %v9396, %v9444
    %v9446 = vpop.f32.mrf.mxu0
    %v9447 = vadd.f32 %v9398, %v9446
    %9448 = vmatmul.bf16.gmra.mxu0 %v2148
    %v9449 = vpop.f32.mrf.mxu0
    %v9450 = vadd.f32 %v9401, %v9449
    %v9451 = vpop.f32.mrf.mxu0
    %v9452 = vadd.f32 %v9403, %v9451
    %9453 = vdwg.mxu0
    %9454 = vmatpush.bf16.msra.mxu0 %v5076
    %9455 = vmatpush.bf16.msra.mxu0 %v5072
    %9456 = vmatpush.bf16.msra.mxu0 %v5068
    %9457 = vmatpush.bf16.msra.mxu0 %v5064
    %9458 = vmatpush.bf16.msra.mxu0 %v5060
    %9459 = vmatpush.bf16.msra.mxu0 %v5056
    %9460 = vmatpush.bf16.msra.mxu0 %v5052
    %9461 = vmatpush.bf16.msra.mxu0 %v5048
    %9462 = vmatmul.bf16.gmra.mxu0 %v1960
    %v9463 = vpop.f32.mrf.mxu0
    %v9464 = vadd.f32 %v9415, %v9463
    %v9465 = vpop.f32.mrf.mxu0
    %v9466 = vadd.f32 %v9417, %v9465
    %9467 = vmatmul.bf16.gmra.mxu0 %v1987
    %v9468 = vpop.f32.mrf.mxu0
    %v9469 = vadd.f32 %v9420, %v9468
    %v9470 = vpop.f32.mrf.mxu0
    %v9471 = vadd.f32 %v9422, %v9470
    %9472 = vmatmul.bf16.gmra.mxu0 %v2014
    %v9473 = vpop.f32.mrf.mxu0
    %v9474 = vadd.f32 %v9425, %v9473
    %v9475 = vpop.f32.mrf.mxu0
    %v9476 = vadd.f32 %v9427, %v9475
    %9477 = vmatmul.bf16.gmra.mxu0 %v2041
    %v9478 = vpop.f32.mrf.mxu0
    %v9479 = vadd.f32 %v9430, %v9478
    %v9480 = vpop.f32.mrf.mxu0
    %v9481 = vadd.f32 %v9432, %v9480
    %9482 = vmatmul.bf16.gmra.mxu0 %v2068
    %v9483 = vpop.f32.mrf.mxu0
    %v9484 = vadd.f32 %v9435, %v9483
    %v9485 = vpop.f32.mrf.mxu0
    %v9486 = vadd.f32 %v9437, %v9485
    %9487 = vmatmul.bf16.gmra.mxu0 %v2095
    %v9488 = vpop.f32.mrf.mxu0
    %v9489 = vadd.f32 %v9440, %v9488
    %v9490 = vpop.f32.mrf.mxu0
    %v9491 = vadd.f32 %v9442, %v9490
    %9492 = vmatmul.bf16.gmra.mxu0 %v2122
    %v9493 = vpop.f32.mrf.mxu0
    %v9494 = vadd.f32 %v9445, %v9493
    %v9495 = vpop.f32.mrf.mxu0
    %v9496 = vadd.f32 %v9447, %v9495
    %9497 = vmatmul.bf16.gmra.mxu0 %v2149
    %v9498 = vpop.f32.mrf.mxu0
    %v9499 = vadd.f32 %v9450, %v9498
    %v9500 = vpop.f32.mrf.mxu0
    %v9501 = vadd.f32 %v9452, %v9500
    %9502 = vdwg.mxu0
    %9503 = vmatpush.bf16.msra.mxu0 %v5108
    %9504 = vmatpush.bf16.msra.mxu0 %v5104
    %9505 = vmatpush.bf16.msra.mxu0 %v5100
    %9506 = vmatpush.bf16.msra.mxu0 %v5096
    %9507 = vmatpush.bf16.msra.mxu0 %v5092
    %9508 = vmatpush.bf16.msra.mxu0 %v5088
    %9509 = vmatpush.bf16.msra.mxu0 %v5084
    %9510 = vmatpush.bf16.msra.mxu0 %v5080
    %9511 = vmatmul.bf16.gmra.mxu0 %v1961
    %v9512 = vpop.f32.mrf.mxu0
    %v9513 = vadd.f32 %v9464, %v9512
    %v9514 = vpop.f32.mrf.mxu0
    %v9515 = vadd.f32 %v9466, %v9514
    %9516 = vmatmul.bf16.gmra.mxu0 %v1988
    %v9517 = vpop.f32.mrf.mxu0
    %v9518 = vadd.f32 %v9469, %v9517
    %v9519 = vpop.f32.mrf.mxu0
    %v9520 = vadd.f32 %v9471, %v9519
    %9521 = vmatmul.bf16.gmra.mxu0 %v2015
    %v9522 = vpop.f32.mrf.mxu0
    %v9523 = vadd.f32 %v9474, %v9522
    %v9524 = vpop.f32.mrf.mxu0
    %v9525 = vadd.f32 %v9476, %v9524
    %9526 = vmatmul.bf16.gmra.mxu0 %v2042
    %v9527 = vpop.f32.mrf.mxu0
    %v9528 = vadd.f32 %v9479, %v9527
    %v9529 = vpop.f32.mrf.mxu0
    %v9530 = vadd.f32 %v9481, %v9529
    %9531 = vmatmul.bf16.gmra.mxu0 %v2069
    %v9532 = vpop.f32.mrf.mxu0
    %v9533 = vadd.f32 %v9484, %v9532
    %v9534 = vpop.f32.mrf.mxu0
    %v9535 = vadd.f32 %v9486, %v9534
    %9536 = vmatmul.bf16.gmra.mxu0 %v2096
    %v9537 = vpop.f32.mrf.mxu0
    %v9538 = vadd.f32 %v9489, %v9537
    %v9539 = vpop.f32.mrf.mxu0
    %v9540 = vadd.f32 %v9491, %v9539
    %9541 = vmatmul.bf16.gmra.mxu0 %v2123
    %v9542 = vpop.f32.mrf.mxu0
    %v9543 = vadd.f32 %v9494, %v9542
    %v9544 = vpop.f32.mrf.mxu0
    %v9545 = vadd.f32 %v9496, %v9544
    %9546 = vmatmul.bf16.gmra.mxu0 %v2150
    %v9547 = vpop.f32.mrf.mxu0
    %v9548 = vadd.f32 %v9499, %v9547
    %v9549 = vpop.f32.mrf.mxu0
    %v9550 = vadd.f32 %v9501, %v9549
    %9551 = vdwg.mxu0
    %9552 = vmatpush.bf16.msra.mxu0 %v5140
    %9553 = vmatpush.bf16.msra.mxu0 %v5136
    %9554 = vmatpush.bf16.msra.mxu0 %v5132
    %9555 = vmatpush.bf16.msra.mxu0 %v5128
    %9556 = vmatpush.bf16.msra.mxu0 %v5124
    %9557 = vmatpush.bf16.msra.mxu0 %v5120
    %9558 = vmatpush.bf16.msra.mxu0 %v5116
    %9559 = vmatpush.bf16.msra.mxu0 %v5112
    %9560 = vmatmul.bf16.gmra.mxu0 %v1962
    %v9561 = vpop.f32.mrf.mxu0
    %v9562 = vadd.f32 %v9513, %v9561
    %v9563 = vpop.f32.mrf.mxu0
    %v9564 = vadd.f32 %v9515, %v9563
    %9565 = vmatmul.bf16.gmra.mxu0 %v1989
    %v9566 = vpop.f32.mrf.mxu0
    %v9567 = vadd.f32 %v9518, %v9566
    %v9568 = vpop.f32.mrf.mxu0
    %v9569 = vadd.f32 %v9520, %v9568
    %9570 = vmatmul.bf16.gmra.mxu0 %v2016
    %v9571 = vpop.f32.mrf.mxu0
    %v9572 = vadd.f32 %v9523, %v9571
    %v9573 = vpop.f32.mrf.mxu0
    %v9574 = vadd.f32 %v9525, %v9573
    %9575 = vmatmul.bf16.gmra.mxu0 %v2043
    %v9576 = vpop.f32.mrf.mxu0
    %v9577 = vadd.f32 %v9528, %v9576
    %v9578 = vpop.f32.mrf.mxu0
    %v9579 = vadd.f32 %v9530, %v9578
    %9580 = vmatmul.bf16.gmra.mxu0 %v2070
    %v9581 = vpop.f32.mrf.mxu0
    %v9582 = vadd.f32 %v9533, %v9581
    %v9583 = vpop.f32.mrf.mxu0
    %v9584 = vadd.f32 %v9535, %v9583
    %9585 = vmatmul.bf16.gmra.mxu0 %v2097
    %v9586 = vpop.f32.mrf.mxu0
    %v9587 = vadd.f32 %v9538, %v9586
    %v9588 = vpop.f32.mrf.mxu0
    %v9589 = vadd.f32 %v9540, %v9588
    %9590 = vmatmul.bf16.gmra.mxu0 %v2124
    %v9591 = vpop.f32.mrf.mxu0
    %v9592 = vadd.f32 %v9543, %v9591
    %v9593 = vpop.f32.mrf.mxu0
    %v9594 = vadd.f32 %v9545, %v9593
    %9595 = vmatmul.bf16.gmra.mxu0 %v2151
    %v9596 = vpop.f32.mrf.mxu0
    %v9597 = vadd.f32 %v9548, %v9596
    %v9598 = vpop.f32.mrf.mxu0
    %v9599 = vadd.f32 %v9550, %v9598
    %9600 = vdwg.mxu0
    %9601 = vmatpush.bf16.msra.mxu0 %v5172
    %9602 = vmatpush.bf16.msra.mxu0 %v5168
    %9603 = vmatpush.bf16.msra.mxu0 %v5164
    %9604 = vmatpush.bf16.msra.mxu0 %v5160
    %9605 = vmatpush.bf16.msra.mxu0 %v5156
    %9606 = vmatpush.bf16.msra.mxu0 %v5152
    %9607 = vmatpush.bf16.msra.mxu0 %v5148
    %9608 = vmatpush.bf16.msra.mxu0 %v5144
    %9609 = vmatmul.bf16.gmra.mxu0 %v1963
    %v9610 = vpop.f32.mrf.mxu0
    %v9611 = vadd.f32 %v9562, %v9610
    %v9612 = vpop.f32.mrf.mxu0
    %v9613 = vadd.f32 %v9564, %v9612
    %9614 = vmatmul.bf16.gmra.mxu0 %v1990
    %v9615 = vpop.f32.mrf.mxu0
    %v9616 = vadd.f32 %v9567, %v9615
    %v9617 = vpop.f32.mrf.mxu0
    %v9618 = vadd.f32 %v9569, %v9617
    %9619 = vmatmul.bf16.gmra.mxu0 %v2017
    %v9620 = vpop.f32.mrf.mxu0
    %v9621 = vadd.f32 %v9572, %v9620
    %v9622 = vpop.f32.mrf.mxu0
    %v9623 = vadd.f32 %v9574, %v9622
    %9624 = vmatmul.bf16.gmra.mxu0 %v2044
    %v9625 = vpop.f32.mrf.mxu0
    %v9626 = vadd.f32 %v9577, %v9625
    %v9627 = vpop.f32.mrf.mxu0
    %v9628 = vadd.f32 %v9579, %v9627
    %9629 = vmatmul.bf16.gmra.mxu0 %v2071
    %v9630 = vpop.f32.mrf.mxu0
    %v9631 = vadd.f32 %v9582, %v9630
    %v9632 = vpop.f32.mrf.mxu0
    %v9633 = vadd.f32 %v9584, %v9632
    %9634 = vmatmul.bf16.gmra.mxu0 %v2098
    %v9635 = vpop.f32.mrf.mxu0
    %v9636 = vadd.f32 %v9587, %v9635
    %v9637 = vpop.f32.mrf.mxu0
    %v9638 = vadd.f32 %v9589, %v9637
    %9639 = vmatmul.bf16.gmra.mxu0 %v2125
    %v9640 = vpop.f32.mrf.mxu0
    %v9641 = vadd.f32 %v9592, %v9640
    %v9642 = vpop.f32.mrf.mxu0
    %v9643 = vadd.f32 %v9594, %v9642
    %9644 = vmatmul.bf16.gmra.mxu0 %v2152
    %v9645 = vpop.f32.mrf.mxu0
    %v9646 = vadd.f32 %v9597, %v9645
    %v9647 = vpop.f32.mrf.mxu0
    %v9648 = vadd.f32 %v9599, %v9647
    %9649 = vdwg.mxu0
    %9650 = vmatpush.bf16.msra.mxu0 %v5204
    %9651 = vmatpush.bf16.msra.mxu0 %v5200
    %9652 = vmatpush.bf16.msra.mxu0 %v5196
    %9653 = vmatpush.bf16.msra.mxu0 %v5192
    %9654 = vmatpush.bf16.msra.mxu0 %v5188
    %9655 = vmatpush.bf16.msra.mxu0 %v5184
    %9656 = vmatpush.bf16.msra.mxu0 %v5180
    %9657 = vmatpush.bf16.msra.mxu0 %v5176
    %9658 = vmatmul.bf16.gmra.mxu0 %v1964
    %v9659 = vpop.f32.mrf.mxu0
    %v9660 = vadd.f32 %v9611, %v9659
    %v9661 = vpop.f32.mrf.mxu0
    %v9662 = vadd.f32 %v9613, %v9661
    %9663 = vmatmul.bf16.gmra.mxu0 %v1991
    %v9664 = vpop.f32.mrf.mxu0
    %v9665 = vadd.f32 %v9616, %v9664
    %v9666 = vpop.f32.mrf.mxu0
    %v9667 = vadd.f32 %v9618, %v9666
    %9668 = vmatmul.bf16.gmra.mxu0 %v2018
    %v9669 = vpop.f32.mrf.mxu0
    %v9670 = vadd.f32 %v9621, %v9669
    %v9671 = vpop.f32.mrf.mxu0
    %v9672 = vadd.f32 %v9623, %v9671
    %9673 = vmatmul.bf16.gmra.mxu0 %v2045
    %v9674 = vpop.f32.mrf.mxu0
    %v9675 = vadd.f32 %v9626, %v9674
    %v9676 = vpop.f32.mrf.mxu0
    %v9677 = vadd.f32 %v9628, %v9676
    %9678 = vmatmul.bf16.gmra.mxu0 %v2072
    %v9679 = vpop.f32.mrf.mxu0
    %v9680 = vadd.f32 %v9631, %v9679
    %v9681 = vpop.f32.mrf.mxu0
    %v9682 = vadd.f32 %v9633, %v9681
    %9683 = vmatmul.bf16.gmra.mxu0 %v2099
    %v9684 = vpop.f32.mrf.mxu0
    %v9685 = vadd.f32 %v9636, %v9684
    %v9686 = vpop.f32.mrf.mxu0
    %v9687 = vadd.f32 %v9638, %v9686
    %9688 = vmatmul.bf16.gmra.mxu0 %v2126
    %v9689 = vpop.f32.mrf.mxu0
    %v9690 = vadd.f32 %v9641, %v9689
    %v9691 = vpop.f32.mrf.mxu0
    %v9692 = vadd.f32 %v9643, %v9691
    %9693 = vmatmul.bf16.gmra.mxu0 %v2153
    %v9694 = vpop.f32.mrf.mxu0
    %v9695 = vadd.f32 %v9646, %v9694
    %v9696 = vpop.f32.mrf.mxu0
    %v9697 = vadd.f32 %v9648, %v9696
    %9698 = vdwg.mxu0
    %9699 = vmatpush.bf16.msra.mxu0 %v5236
    %9700 = vmatpush.bf16.msra.mxu0 %v5232
    %9701 = vmatpush.bf16.msra.mxu0 %v5228
    %9702 = vmatpush.bf16.msra.mxu0 %v5224
    %9703 = vmatpush.bf16.msra.mxu0 %v5220
    %9704 = vmatpush.bf16.msra.mxu0 %v5216
    %9705 = vmatpush.bf16.msra.mxu0 %v5212
    %9706 = vmatpush.bf16.msra.mxu0 %v5208
    %9707 = vmatmul.bf16.gmra.mxu0 %v1965
    %v9708 = vpop.f32.mrf.mxu0
    %v9709 = vadd.f32 %v9660, %v9708
    %v9710 = vpop.f32.mrf.mxu0
    %v9711 = vadd.f32 %v9662, %v9710
    %9712 = vmatmul.bf16.gmra.mxu0 %v1992
    %v9713 = vpop.f32.mrf.mxu0
    %v9714 = vadd.f32 %v9665, %v9713
    %v9715 = vpop.f32.mrf.mxu0
    %v9716 = vadd.f32 %v9667, %v9715
    %9717 = vmatmul.bf16.gmra.mxu0 %v2019
    %v9718 = vpop.f32.mrf.mxu0
    %v9719 = vadd.f32 %v9670, %v9718
    %v9720 = vpop.f32.mrf.mxu0
    %v9721 = vadd.f32 %v9672, %v9720
    %9722 = vmatmul.bf16.gmra.mxu0 %v2046
    %v9723 = vpop.f32.mrf.mxu0
    %v9724 = vadd.f32 %v9675, %v9723
    %v9725 = vpop.f32.mrf.mxu0
    %v9726 = vadd.f32 %v9677, %v9725
    %9727 = vmatmul.bf16.gmra.mxu0 %v2073
    %v9728 = vpop.f32.mrf.mxu0
    %v9729 = vadd.f32 %v9680, %v9728
    %v9730 = vpop.f32.mrf.mxu0
    %v9731 = vadd.f32 %v9682, %v9730
    %9732 = vmatmul.bf16.gmra.mxu0 %v2100
    %v9733 = vpop.f32.mrf.mxu0
    %v9734 = vadd.f32 %v9685, %v9733
    %v9735 = vpop.f32.mrf.mxu0
    %v9736 = vadd.f32 %v9687, %v9735
    %9737 = vmatmul.bf16.gmra.mxu0 %v2127
    %v9738 = vpop.f32.mrf.mxu0
    %v9739 = vadd.f32 %v9690, %v9738
    %v9740 = vpop.f32.mrf.mxu0
    %v9741 = vadd.f32 %v9692, %v9740
    %9742 = vmatmul.bf16.gmra.mxu0 %v2154
    %v9743 = vpop.f32.mrf.mxu0
    %v9744 = vadd.f32 %v9695, %v9743
    %v9745 = vpop.f32.mrf.mxu0
    %v9746 = vadd.f32 %v9697, %v9745
    %9747 = vdwg.mxu0
    %9748 = vmatpush.bf16.msra.mxu0 %v5268
    %9749 = vmatpush.bf16.msra.mxu0 %v5264
    %9750 = vmatpush.bf16.msra.mxu0 %v5260
    %9751 = vmatpush.bf16.msra.mxu0 %v5256
    %9752 = vmatpush.bf16.msra.mxu0 %v5252
    %9753 = vmatpush.bf16.msra.mxu0 %v5248
    %9754 = vmatpush.bf16.msra.mxu0 %v5244
    %9755 = vmatpush.bf16.msra.mxu0 %v5240
    %9756 = vmatmul.bf16.gmra.mxu0 %v1966
    %v9757 = vpop.f32.mrf.mxu0
    %v9758 = vadd.f32 %v9709, %v9757
    %v9759 = vpop.f32.mrf.mxu0
    %v9760 = vadd.f32 %v9711, %v9759
    %9761 = vmatmul.bf16.gmra.mxu0 %v1993
    %v9762 = vpop.f32.mrf.mxu0
    %v9763 = vadd.f32 %v9714, %v9762
    %v9764 = vpop.f32.mrf.mxu0
    %v9765 = vadd.f32 %v9716, %v9764
    %9766 = vmatmul.bf16.gmra.mxu0 %v2020
    %v9767 = vpop.f32.mrf.mxu0
    %v9768 = vadd.f32 %v9719, %v9767
    %v9769 = vpop.f32.mrf.mxu0
    %v9770 = vadd.f32 %v9721, %v9769
    %9771 = vmatmul.bf16.gmra.mxu0 %v2047
    %v9772 = vpop.f32.mrf.mxu0
    %v9773 = vadd.f32 %v9724, %v9772
    %v9774 = vpop.f32.mrf.mxu0
    %v9775 = vadd.f32 %v9726, %v9774
    %9776 = vmatmul.bf16.gmra.mxu0 %v2074
    %v9777 = vpop.f32.mrf.mxu0
    %v9778 = vadd.f32 %v9729, %v9777
    %v9779 = vpop.f32.mrf.mxu0
    %v9780 = vadd.f32 %v9731, %v9779
    %9781 = vmatmul.bf16.gmra.mxu0 %v2101
    %v9782 = vpop.f32.mrf.mxu0
    %v9783 = vadd.f32 %v9734, %v9782
    %v9784 = vpop.f32.mrf.mxu0
    %v9785 = vadd.f32 %v9736, %v9784
    %9786 = vmatmul.bf16.gmra.mxu0 %v2128
    %v9787 = vpop.f32.mrf.mxu0
    %v9788 = vadd.f32 %v9739, %v9787
    %v9789 = vpop.f32.mrf.mxu0
    %v9790 = vadd.f32 %v9741, %v9789
    %9791 = vmatmul.bf16.gmra.mxu0 %v2155
    %v9792 = vpop.f32.mrf.mxu0
    %v9793 = vadd.f32 %v9744, %v9792
    %v9794 = vpop.f32.mrf.mxu0
    %v9795 = vadd.f32 %v9746, %v9794
    %9796 = vdwg.mxu0
    %9797 = vmatpush.bf16.msra.mxu0 %v5300
    %9798 = vmatpush.bf16.msra.mxu0 %v5296
    %9799 = vmatpush.bf16.msra.mxu0 %v5292
    %9800 = vmatpush.bf16.msra.mxu0 %v5288
    %9801 = vmatpush.bf16.msra.mxu0 %v5284
    %9802 = vmatpush.bf16.msra.mxu0 %v5280
    %9803 = vmatpush.bf16.msra.mxu0 %v5276
    %9804 = vmatpush.bf16.msra.mxu0 %v5272
    %9805 = vmatmul.bf16.gmra.mxu0 %v1967
    %v9806 = vpop.f32.mrf.mxu0
    %v9807 = vadd.f32 %v9758, %v9806
    %v9808 = vpop.f32.mrf.mxu0
    %v9809 = vadd.f32 %v9760, %v9808
    %9810 = vmatmul.bf16.gmra.mxu0 %v1994
    %v9811 = vpop.f32.mrf.mxu0
    %v9812 = vadd.f32 %v9763, %v9811
    %v9813 = vpop.f32.mrf.mxu0
    %v9814 = vadd.f32 %v9765, %v9813
    %9815 = vmatmul.bf16.gmra.mxu0 %v2021
    %v9816 = vpop.f32.mrf.mxu0
    %v9817 = vadd.f32 %v9768, %v9816
    %v9818 = vpop.f32.mrf.mxu0
    %v9819 = vadd.f32 %v9770, %v9818
    %9820 = vmatmul.bf16.gmra.mxu0 %v2048
    %v9821 = vpop.f32.mrf.mxu0
    %v9822 = vadd.f32 %v9773, %v9821
    %v9823 = vpop.f32.mrf.mxu0
    %v9824 = vadd.f32 %v9775, %v9823
    %9825 = vmatmul.bf16.gmra.mxu0 %v2075
    %v9826 = vpop.f32.mrf.mxu0
    %v9827 = vadd.f32 %v9778, %v9826
    %v9828 = vpop.f32.mrf.mxu0
    %v9829 = vadd.f32 %v9780, %v9828
    %9830 = vmatmul.bf16.gmra.mxu0 %v2102
    %v9831 = vpop.f32.mrf.mxu0
    %v9832 = vadd.f32 %v9783, %v9831
    %v9833 = vpop.f32.mrf.mxu0
    %v9834 = vadd.f32 %v9785, %v9833
    %9835 = vmatmul.bf16.gmra.mxu0 %v2129
    %v9836 = vpop.f32.mrf.mxu0
    %v9837 = vadd.f32 %v9788, %v9836
    %v9838 = vpop.f32.mrf.mxu0
    %v9839 = vadd.f32 %v9790, %v9838
    %9840 = vmatmul.bf16.gmra.mxu0 %v2156
    %v9841 = vpop.f32.mrf.mxu0
    %v9842 = vadd.f32 %v9793, %v9841
    %v9843 = vpop.f32.mrf.mxu0
    %v9844 = vadd.f32 %v9795, %v9843
    %9845 = vdwg.mxu0
    %9846 = vmatpush.bf16.msra.mxu0 %v5332
    %9847 = vmatpush.bf16.msra.mxu0 %v5328
    %9848 = vmatpush.bf16.msra.mxu0 %v5324
    %9849 = vmatpush.bf16.msra.mxu0 %v5320
    %9850 = vmatpush.bf16.msra.mxu0 %v5316
    %9851 = vmatpush.bf16.msra.mxu0 %v5312
    %9852 = vmatpush.bf16.msra.mxu0 %v5308
    %9853 = vmatpush.bf16.msra.mxu0 %v5304
    %9854 = vmatmul.bf16.gmra.mxu0 %v1968
    %v9855 = vpop.f32.mrf.mxu0
    %v9856 = vadd.f32 %v9807, %v9855
    %v9857 = vpop.f32.mrf.mxu0
    %v9858 = vadd.f32 %v9809, %v9857
    %9859 = vmatmul.bf16.gmra.mxu0 %v1995
    %v9860 = vpop.f32.mrf.mxu0
    %v9861 = vadd.f32 %v9812, %v9860
    %v9862 = vpop.f32.mrf.mxu0
    %v9863 = vadd.f32 %v9814, %v9862
    %9864 = vmatmul.bf16.gmra.mxu0 %v2022
    %v9865 = vpop.f32.mrf.mxu0
    %v9866 = vadd.f32 %v9817, %v9865
    %v9867 = vpop.f32.mrf.mxu0
    %v9868 = vadd.f32 %v9819, %v9867
    %9869 = vmatmul.bf16.gmra.mxu0 %v2049
    %v9870 = vpop.f32.mrf.mxu0
    %v9871 = vadd.f32 %v9822, %v9870
    %v9872 = vpop.f32.mrf.mxu0
    %v9873 = vadd.f32 %v9824, %v9872
    %9874 = vmatmul.bf16.gmra.mxu0 %v2076
    %v9875 = vpop.f32.mrf.mxu0
    %v9876 = vadd.f32 %v9827, %v9875
    %v9877 = vpop.f32.mrf.mxu0
    %v9878 = vadd.f32 %v9829, %v9877
    %9879 = vmatmul.bf16.gmra.mxu0 %v2103
    %v9880 = vpop.f32.mrf.mxu0
    %v9881 = vadd.f32 %v9832, %v9880
    %v9882 = vpop.f32.mrf.mxu0
    %v9883 = vadd.f32 %v9834, %v9882
    %9884 = vmatmul.bf16.gmra.mxu0 %v2130
    %v9885 = vpop.f32.mrf.mxu0
    %v9886 = vadd.f32 %v9837, %v9885
    %v9887 = vpop.f32.mrf.mxu0
    %v9888 = vadd.f32 %v9839, %v9887
    %9889 = vmatmul.bf16.gmra.mxu0 %v2157
    %v9890 = vpop.f32.mrf.mxu0
    %v9891 = vadd.f32 %v9842, %v9890
    %v9892 = vpop.f32.mrf.mxu0
    %v9893 = vadd.f32 %v9844, %v9892
    %9894 = vdwg.mxu0
    %9895 = vmatpush.bf16.msra.mxu0 %v5364
    %9896 = vmatpush.bf16.msra.mxu0 %v5360
    %9897 = vmatpush.bf16.msra.mxu0 %v5356
    %9898 = vmatpush.bf16.msra.mxu0 %v5352
    %9899 = vmatpush.bf16.msra.mxu0 %v5348
    %9900 = vmatpush.bf16.msra.mxu0 %v5344
    %9901 = vmatpush.bf16.msra.mxu0 %v5340
    %9902 = vmatpush.bf16.msra.mxu0 %v5336
    %9903 = vmatmul.bf16.gmra.mxu0 %v1969
    %v9904 = vpop.f32.mrf.mxu0
    %v9905 = vadd.f32 %v9856, %v9904
    %v9906 = vpop.f32.mrf.mxu0
    %v9907 = vadd.f32 %v9858, %v9906
    %9908 = vmatmul.bf16.gmra.mxu0 %v1996
    %v9909 = vpop.f32.mrf.mxu0
    %v9910 = vadd.f32 %v9861, %v9909
    %v9911 = vpop.f32.mrf.mxu0
    %v9912 = vadd.f32 %v9863, %v9911
    %9913 = vmatmul.bf16.gmra.mxu0 %v2023
    %v9914 = vpop.f32.mrf.mxu0
    %v9915 = vadd.f32 %v9866, %v9914
    %v9916 = vpop.f32.mrf.mxu0
    %v9917 = vadd.f32 %v9868, %v9916
    %9918 = vmatmul.bf16.gmra.mxu0 %v2050
    %v9919 = vpop.f32.mrf.mxu0
    %v9920 = vadd.f32 %v9871, %v9919
    %v9921 = vpop.f32.mrf.mxu0
    %v9922 = vadd.f32 %v9873, %v9921
    %9923 = vmatmul.bf16.gmra.mxu0 %v2077
    %v9924 = vpop.f32.mrf.mxu0
    %v9925 = vadd.f32 %v9876, %v9924
    %v9926 = vpop.f32.mrf.mxu0
    %v9927 = vadd.f32 %v9878, %v9926
    %9928 = vmatmul.bf16.gmra.mxu0 %v2104
    %v9929 = vpop.f32.mrf.mxu0
    %v9930 = vadd.f32 %v9881, %v9929
    %v9931 = vpop.f32.mrf.mxu0
    %v9932 = vadd.f32 %v9883, %v9931
    %9933 = vmatmul.bf16.gmra.mxu0 %v2131
    %v9934 = vpop.f32.mrf.mxu0
    %v9935 = vadd.f32 %v9886, %v9934
    %v9936 = vpop.f32.mrf.mxu0
    %v9937 = vadd.f32 %v9888, %v9936
    %9938 = vmatmul.bf16.gmra.mxu0 %v2158
    %v9939 = vpop.f32.mrf.mxu0
    %v9940 = vadd.f32 %v9891, %v9939
    %v9941 = vpop.f32.mrf.mxu0
    %v9942 = vadd.f32 %v9893, %v9941
    %9943 = vdwg.mxu0
    %9944 = vmatpush.bf16.msra.mxu0 %v5396
    %9945 = vmatpush.bf16.msra.mxu0 %v5392
    %9946 = vmatpush.bf16.msra.mxu0 %v5388
    %9947 = vmatpush.bf16.msra.mxu0 %v5384
    %9948 = vmatpush.bf16.msra.mxu0 %v5380
    %9949 = vmatpush.bf16.msra.mxu0 %v5376
    %9950 = vmatpush.bf16.msra.mxu0 %v5372
    %9951 = vmatpush.bf16.msra.mxu0 %v5368
    %9952 = vmatmul.bf16.gmra.mxu0 %v1970
    %v9953 = vpop.f32.mrf.mxu0
    %v9954 = vadd.f32 %v9905, %v9953
    %v9955 = vpop.f32.mrf.mxu0
    %v9956 = vadd.f32 %v9907, %v9955
    %9957 = vmatmul.bf16.gmra.mxu0 %v1997
    %v9958 = vpop.f32.mrf.mxu0
    %v9959 = vadd.f32 %v9910, %v9958
    %v9960 = vpop.f32.mrf.mxu0
    %v9961 = vadd.f32 %v9912, %v9960
    %9962 = vmatmul.bf16.gmra.mxu0 %v2024
    %v9963 = vpop.f32.mrf.mxu0
    %v9964 = vadd.f32 %v9915, %v9963
    %v9965 = vpop.f32.mrf.mxu0
    %v9966 = vadd.f32 %v9917, %v9965
    %9967 = vmatmul.bf16.gmra.mxu0 %v2051
    %v9968 = vpop.f32.mrf.mxu0
    %v9969 = vadd.f32 %v9920, %v9968
    %v9970 = vpop.f32.mrf.mxu0
    %v9971 = vadd.f32 %v9922, %v9970
    %9972 = vmatmul.bf16.gmra.mxu0 %v2078
    %v9973 = vpop.f32.mrf.mxu0
    %v9974 = vadd.f32 %v9925, %v9973
    %v9975 = vpop.f32.mrf.mxu0
    %v9976 = vadd.f32 %v9927, %v9975
    %9977 = vmatmul.bf16.gmra.mxu0 %v2105
    %v9978 = vpop.f32.mrf.mxu0
    %v9979 = vadd.f32 %v9930, %v9978
    %v9980 = vpop.f32.mrf.mxu0
    %v9981 = vadd.f32 %v9932, %v9980
    %9982 = vmatmul.bf16.gmra.mxu0 %v2132
    %v9983 = vpop.f32.mrf.mxu0
    %v9984 = vadd.f32 %v9935, %v9983
    %v9985 = vpop.f32.mrf.mxu0
    %v9986 = vadd.f32 %v9937, %v9985
    %9987 = vmatmul.bf16.gmra.mxu0 %v2159
    %v9988 = vpop.f32.mrf.mxu0
    %v9989 = vadd.f32 %v9940, %v9988
    %v9990 = vpop.f32.mrf.mxu0
    %v9991 = vadd.f32 %v9942, %v9990
    %9992 = vdwg.mxu0
    %9993 = vmatpush.bf16.msra.mxu0 %v5428
    %9994 = vmatpush.bf16.msra.mxu0 %v5424
    %9995 = vmatpush.bf16.msra.mxu0 %v5420
    %9996 = vmatpush.bf16.msra.mxu0 %v5416
    %9997 = vmatpush.bf16.msra.mxu0 %v5412
    %9998 = vmatpush.bf16.msra.mxu0 %v5408
    %9999 = vmatpush.bf16.msra.mxu0 %v5404
    %10000 = vmatpush.bf16.msra.mxu0 %v5400
    %10001 = vmatmul.bf16.gmra.mxu0 %v1971
    %v10002 = vpop.f32.mrf.mxu0
    %v10003 = vadd.f32 %v9954, %v10002
    %v10004 = vpop.f32.mrf.mxu0
    %v10005 = vadd.f32 %v9956, %v10004
    %10006 = vmatmul.bf16.gmra.mxu0 %v1998
    %v10007 = vpop.f32.mrf.mxu0
    %v10008 = vadd.f32 %v9959, %v10007
    %v10009 = vpop.f32.mrf.mxu0
    %v10010 = vadd.f32 %v9961, %v10009
    %10011 = vmatmul.bf16.gmra.mxu0 %v2025
    %v10012 = vpop.f32.mrf.mxu0
    %v10013 = vadd.f32 %v9964, %v10012
    %v10014 = vpop.f32.mrf.mxu0
    %v10015 = vadd.f32 %v9966, %v10014
    %10016 = vmatmul.bf16.gmra.mxu0 %v2052
    %v10017 = vpop.f32.mrf.mxu0
    %v10018 = vadd.f32 %v9969, %v10017
    %v10019 = vpop.f32.mrf.mxu0
    %v10020 = vadd.f32 %v9971, %v10019
    %10021 = vmatmul.bf16.gmra.mxu0 %v2079
    %v10022 = vpop.f32.mrf.mxu0
    %v10023 = vadd.f32 %v9974, %v10022
    %v10024 = vpop.f32.mrf.mxu0
    %v10025 = vadd.f32 %v9976, %v10024
    %10026 = vmatmul.bf16.gmra.mxu0 %v2106
    %v10027 = vpop.f32.mrf.mxu0
    %v10028 = vadd.f32 %v9979, %v10027
    %v10029 = vpop.f32.mrf.mxu0
    %v10030 = vadd.f32 %v9981, %v10029
    %10031 = vmatmul.bf16.gmra.mxu0 %v2133
    %v10032 = vpop.f32.mrf.mxu0
    %v10033 = vadd.f32 %v9984, %v10032
    %v10034 = vpop.f32.mrf.mxu0
    %v10035 = vadd.f32 %v9986, %v10034
    %10036 = vmatmul.bf16.gmra.mxu0 %v2160
    %v10037 = vpop.f32.mrf.mxu0
    %v10038 = vadd.f32 %v9989, %v10037
    %v10039 = vpop.f32.mrf.mxu0
    %v10040 = vadd.f32 %v9991, %v10039
    %10041 = vdwg.mxu0
    %10042 = vmatpush.bf16.msra.mxu0 %v5460
    %10043 = vmatpush.bf16.msra.mxu0 %v5456
    %10044 = vmatpush.bf16.msra.mxu0 %v5452
    %10045 = vmatpush.bf16.msra.mxu0 %v5448
    %10046 = vmatpush.bf16.msra.mxu0 %v5444
    %10047 = vmatpush.bf16.msra.mxu0 %v5440
    %10048 = vmatpush.bf16.msra.mxu0 %v5436
    %10049 = vmatpush.bf16.msra.mxu0 %v5432
    %10050 = vmatmul.bf16.gmra.mxu0 %v1972
    %v10051 = vpop.f32.mrf.mxu0
    %v10052 = vadd.f32 %v10003, %v10051
    %v10053 = vpop.f32.mrf.mxu0
    %v10054 = vadd.f32 %v10005, %v10053
    %10055 = vmatmul.bf16.gmra.mxu0 %v1999
    %v10056 = vpop.f32.mrf.mxu0
    %v10057 = vadd.f32 %v10008, %v10056
    %v10058 = vpop.f32.mrf.mxu0
    %v10059 = vadd.f32 %v10010, %v10058
    %10060 = vmatmul.bf16.gmra.mxu0 %v2026
    %v10061 = vpop.f32.mrf.mxu0
    %v10062 = vadd.f32 %v10013, %v10061
    %v10063 = vpop.f32.mrf.mxu0
    %v10064 = vadd.f32 %v10015, %v10063
    %10065 = vmatmul.bf16.gmra.mxu0 %v2053
    %v10066 = vpop.f32.mrf.mxu0
    %v10067 = vadd.f32 %v10018, %v10066
    %v10068 = vpop.f32.mrf.mxu0
    %v10069 = vadd.f32 %v10020, %v10068
    %10070 = vmatmul.bf16.gmra.mxu0 %v2080
    %v10071 = vpop.f32.mrf.mxu0
    %v10072 = vadd.f32 %v10023, %v10071
    %v10073 = vpop.f32.mrf.mxu0
    %v10074 = vadd.f32 %v10025, %v10073
    %10075 = vmatmul.bf16.gmra.mxu0 %v2107
    %v10076 = vpop.f32.mrf.mxu0
    %v10077 = vadd.f32 %v10028, %v10076
    %v10078 = vpop.f32.mrf.mxu0
    %v10079 = vadd.f32 %v10030, %v10078
    %10080 = vmatmul.bf16.gmra.mxu0 %v2134
    %v10081 = vpop.f32.mrf.mxu0
    %v10082 = vadd.f32 %v10033, %v10081
    %v10083 = vpop.f32.mrf.mxu0
    %v10084 = vadd.f32 %v10035, %v10083
    %10085 = vmatmul.bf16.gmra.mxu0 %v2161
    %v10086 = vpop.f32.mrf.mxu0
    %v10087 = vadd.f32 %v10038, %v10086
    %v10088 = vpop.f32.mrf.mxu0
    %v10089 = vadd.f32 %v10040, %v10088
    %10090 = vdwg.mxu0
    %10091 = vmatpush.bf16.msra.mxu0 %v5492
    %10092 = vmatpush.bf16.msra.mxu0 %v5488
    %10093 = vmatpush.bf16.msra.mxu0 %v5484
    %10094 = vmatpush.bf16.msra.mxu0 %v5480
    %10095 = vmatpush.bf16.msra.mxu0 %v5476
    %10096 = vmatpush.bf16.msra.mxu0 %v5472
    %10097 = vmatpush.bf16.msra.mxu0 %v5468
    %10098 = vmatpush.bf16.msra.mxu0 %v5464
    %10099 = vmatmul.bf16.gmra.mxu0 %v1973
    %v10100 = vpop.f32.mrf.mxu0
    %v10101 = vadd.f32 %v10052, %v10100
    %v10102 = vpop.f32.mrf.mxu0
    %v10103 = vadd.f32 %v10054, %v10102
    %10104 = vmatmul.bf16.gmra.mxu0 %v2000
    %v10105 = vpop.f32.mrf.mxu0
    %v10106 = vadd.f32 %v10057, %v10105
    %v10107 = vpop.f32.mrf.mxu0
    %v10108 = vadd.f32 %v10059, %v10107
    %10109 = vmatmul.bf16.gmra.mxu0 %v2027
    %v10110 = vpop.f32.mrf.mxu0
    %v10111 = vadd.f32 %v10062, %v10110
    %v10112 = vpop.f32.mrf.mxu0
    %v10113 = vadd.f32 %v10064, %v10112
    %10114 = vmatmul.bf16.gmra.mxu0 %v2054
    %v10115 = vpop.f32.mrf.mxu0
    %v10116 = vadd.f32 %v10067, %v10115
    %v10117 = vpop.f32.mrf.mxu0
    %v10118 = vadd.f32 %v10069, %v10117
    %10119 = vmatmul.bf16.gmra.mxu0 %v2081
    %v10120 = vpop.f32.mrf.mxu0
    %v10121 = vadd.f32 %v10072, %v10120
    %v10122 = vpop.f32.mrf.mxu0
    %v10123 = vadd.f32 %v10074, %v10122
    %10124 = vmatmul.bf16.gmra.mxu0 %v2108
    %v10125 = vpop.f32.mrf.mxu0
    %v10126 = vadd.f32 %v10077, %v10125
    %v10127 = vpop.f32.mrf.mxu0
    %v10128 = vadd.f32 %v10079, %v10127
    %10129 = vmatmul.bf16.gmra.mxu0 %v2135
    %v10130 = vpop.f32.mrf.mxu0
    %v10131 = vadd.f32 %v10082, %v10130
    %v10132 = vpop.f32.mrf.mxu0
    %v10133 = vadd.f32 %v10084, %v10132
    %10134 = vmatmul.bf16.gmra.mxu0 %v2162
    %v10135 = vpop.f32.mrf.mxu0
    %v10136 = vadd.f32 %v10087, %v10135
    %v10137 = vpop.f32.mrf.mxu0
    %v10138 = vadd.f32 %v10089, %v10137
    %10139 = vdwg.mxu0
    %10140 = vmatpush.bf16.msra.mxu0 %v5524
    %10141 = vmatpush.bf16.msra.mxu0 %v5520
    %10142 = vmatpush.bf16.msra.mxu0 %v5516
    %10143 = vmatpush.bf16.msra.mxu0 %v5512
    %10144 = vmatpush.bf16.msra.mxu0 %v5508
    %10145 = vmatpush.bf16.msra.mxu0 %v5504
    %10146 = vmatpush.bf16.msra.mxu0 %v5500
    %10147 = vmatpush.bf16.msra.mxu0 %v5496
    %10148 = vmatmul.bf16.gmra.mxu0 %v1974
    %v10149 = vpop.f32.mrf.mxu0
    %v10150 = vadd.f32 %v10101, %v10149
    %v10151 = vpop.f32.mrf.mxu0
    %v10152 = vadd.f32 %v10103, %v10151
    %10153 = vmatmul.bf16.gmra.mxu0 %v2001
    %v10154 = vpop.f32.mrf.mxu0
    %v10155 = vadd.f32 %v10106, %v10154
    %v10156 = vpop.f32.mrf.mxu0
    %v10157 = vadd.f32 %v10108, %v10156
    %10158 = vmatmul.bf16.gmra.mxu0 %v2028
    %v10159 = vpop.f32.mrf.mxu0
    %v10160 = vadd.f32 %v10111, %v10159
    %v10161 = vpop.f32.mrf.mxu0
    %v10162 = vadd.f32 %v10113, %v10161
    %10163 = vmatmul.bf16.gmra.mxu0 %v2055
    %v10164 = vpop.f32.mrf.mxu0
    %v10165 = vadd.f32 %v10116, %v10164
    %v10166 = vpop.f32.mrf.mxu0
    %v10167 = vadd.f32 %v10118, %v10166
    %10168 = vmatmul.bf16.gmra.mxu0 %v2082
    %v10169 = vpop.f32.mrf.mxu0
    %v10170 = vadd.f32 %v10121, %v10169
    %v10171 = vpop.f32.mrf.mxu0
    %v10172 = vadd.f32 %v10123, %v10171
    %10173 = vmatmul.bf16.gmra.mxu0 %v2109
    %v10174 = vpop.f32.mrf.mxu0
    %v10175 = vadd.f32 %v10126, %v10174
    %v10176 = vpop.f32.mrf.mxu0
    %v10177 = vadd.f32 %v10128, %v10176
    %10178 = vmatmul.bf16.gmra.mxu0 %v2136
    %v10179 = vpop.f32.mrf.mxu0
    %v10180 = vadd.f32 %v10131, %v10179
    %v10181 = vpop.f32.mrf.mxu0
    %v10182 = vadd.f32 %v10133, %v10181
    %10183 = vmatmul.bf16.gmra.mxu0 %v2163
    %v10184 = vpop.f32.mrf.mxu0
    %v10185 = vadd.f32 %v10136, %v10184
    %v10186 = vpop.f32.mrf.mxu0
    %v10187 = vadd.f32 %v10138, %v10186
    %10188 = vdwg.mxu0
    %10189 = vmatpush.bf16.msra.mxu0 %v5556
    %10190 = vmatpush.bf16.msra.mxu0 %v5552
    %10191 = vmatpush.bf16.msra.mxu0 %v5548
    %10192 = vmatpush.bf16.msra.mxu0 %v5544
    %10193 = vmatpush.bf16.msra.mxu0 %v5540
    %10194 = vmatpush.bf16.msra.mxu0 %v5536
    %10195 = vmatpush.bf16.msra.mxu0 %v5532
    %10196 = vmatpush.bf16.msra.mxu0 %v5528
    %10197 = vmatmul.bf16.gmra.mxu0 %v1975
    %v10198 = vpop.f32.mrf.mxu0
    %v10199 = vadd.f32 %v10150, %v10198
    %v10200 = vpop.f32.mrf.mxu0
    %v10201 = vadd.f32 %v10152, %v10200
    %10202 = vmatmul.bf16.gmra.mxu0 %v2002
    %v10203 = vpop.f32.mrf.mxu0
    %v10204 = vadd.f32 %v10155, %v10203
    %v10205 = vpop.f32.mrf.mxu0
    %v10206 = vadd.f32 %v10157, %v10205
    %10207 = vmatmul.bf16.gmra.mxu0 %v2029
    %v10208 = vpop.f32.mrf.mxu0
    %v10209 = vadd.f32 %v10160, %v10208
    %v10210 = vpop.f32.mrf.mxu0
    %v10211 = vadd.f32 %v10162, %v10210
    %10212 = vmatmul.bf16.gmra.mxu0 %v2056
    %v10213 = vpop.f32.mrf.mxu0
    %v10214 = vadd.f32 %v10165, %v10213
    %v10215 = vpop.f32.mrf.mxu0
    %v10216 = vadd.f32 %v10167, %v10215
    %10217 = vmatmul.bf16.gmra.mxu0 %v2083
    %v10218 = vpop.f32.mrf.mxu0
    %v10219 = vadd.f32 %v10170, %v10218
    %v10220 = vpop.f32.mrf.mxu0
    %v10221 = vadd.f32 %v10172, %v10220
    %10222 = vmatmul.bf16.gmra.mxu0 %v2110
    %v10223 = vpop.f32.mrf.mxu0
    %v10224 = vadd.f32 %v10175, %v10223
    %v10225 = vpop.f32.mrf.mxu0
    %v10226 = vadd.f32 %v10177, %v10225
    %10227 = vmatmul.bf16.gmra.mxu0 %v2137
    %v10228 = vpop.f32.mrf.mxu0
    %v10229 = vadd.f32 %v10180, %v10228
    %v10230 = vpop.f32.mrf.mxu0
    %v10231 = vadd.f32 %v10182, %v10230
    %10232 = vmatmul.bf16.gmra.mxu0 %v2164
    %v10233 = vpop.f32.mrf.mxu0
    %v10234 = vadd.f32 %v10185, %v10233
    %v10235 = vpop.f32.mrf.mxu0
    %v10236 = vadd.f32 %v10187, %v10235
    %10237 = vdwg.mxu0
    %10238 = vmatpush.bf16.msra.mxu0 %v5588
    %10239 = vmatpush.bf16.msra.mxu0 %v5584
    %10240 = vmatpush.bf16.msra.mxu0 %v5580
    %10241 = vmatpush.bf16.msra.mxu0 %v5576
    %10242 = vmatpush.bf16.msra.mxu0 %v5572
    %10243 = vmatpush.bf16.msra.mxu0 %v5568
    %10244 = vmatpush.bf16.msra.mxu0 %v5564
    %10245 = vmatpush.bf16.msra.mxu0 %v5560
    %10246 = vmatmul.bf16.gmra.mxu0 %v1976
    %v10247 = vpop.f32.mrf.mxu0
    %v10248 = vadd.f32 %v10199, %v10247
    %v10249 = vpop.f32.mrf.mxu0
    %v10250 = vadd.f32 %v10201, %v10249
    %10251 = vmatmul.bf16.gmra.mxu0 %v2003
    %v10252 = vpop.f32.mrf.mxu0
    %v10253 = vadd.f32 %v10204, %v10252
    %v10254 = vpop.f32.mrf.mxu0
    %v10255 = vadd.f32 %v10206, %v10254
    %10256 = vmatmul.bf16.gmra.mxu0 %v2030
    %v10257 = vpop.f32.mrf.mxu0
    %v10258 = vadd.f32 %v10209, %v10257
    %v10259 = vpop.f32.mrf.mxu0
    %v10260 = vadd.f32 %v10211, %v10259
    %10261 = vmatmul.bf16.gmra.mxu0 %v2057
    %v10262 = vpop.f32.mrf.mxu0
    %v10263 = vadd.f32 %v10214, %v10262
    %v10264 = vpop.f32.mrf.mxu0
    %v10265 = vadd.f32 %v10216, %v10264
    %10266 = vmatmul.bf16.gmra.mxu0 %v2084
    %v10267 = vpop.f32.mrf.mxu0
    %v10268 = vadd.f32 %v10219, %v10267
    %v10269 = vpop.f32.mrf.mxu0
    %v10270 = vadd.f32 %v10221, %v10269
    %10271 = vmatmul.bf16.gmra.mxu0 %v2111
    %v10272 = vpop.f32.mrf.mxu0
    %v10273 = vadd.f32 %v10224, %v10272
    %v10274 = vpop.f32.mrf.mxu0
    %v10275 = vadd.f32 %v10226, %v10274
    %10276 = vmatmul.bf16.gmra.mxu0 %v2138
    %v10277 = vpop.f32.mrf.mxu0
    %v10278 = vadd.f32 %v10229, %v10277
    %v10279 = vpop.f32.mrf.mxu0
    %v10280 = vadd.f32 %v10231, %v10279
    %10281 = vmatmul.bf16.gmra.mxu0 %v2165
    %v10282 = vpop.f32.mrf.mxu0
    %v10283 = vadd.f32 %v10234, %v10282
    %v10284 = vpop.f32.mrf.mxu0
    %v10285 = vadd.f32 %v10236, %v10284
    %10286 = vdwg.mxu0
    %10287 = vmatpush.bf16.msra.mxu0 %v5620
    %10288 = vmatpush.bf16.msra.mxu0 %v5616
    %10289 = vmatpush.bf16.msra.mxu0 %v5612
    %10290 = vmatpush.bf16.msra.mxu0 %v5608
    %10291 = vmatpush.bf16.msra.mxu0 %v5604
    %10292 = vmatpush.bf16.msra.mxu0 %v5600
    %10293 = vmatpush.bf16.msra.mxu0 %v5596
    %10294 = vmatpush.bf16.msra.mxu0 %v5592
    %10295 = vmatmul.bf16.gmra.mxu0 %v1977
    %v10296 = vpop.f32.mrf.mxu0
    %v10297 = vadd.f32 %v10248, %v10296
    %v10298 = vpop.f32.mrf.mxu0
    %v10299 = vadd.f32 %v10250, %v10298
    %10300 = vmatmul.bf16.gmra.mxu0 %v2004
    %v10301 = vpop.f32.mrf.mxu0
    %v10302 = vadd.f32 %v10253, %v10301
    %v10303 = vpop.f32.mrf.mxu0
    %v10304 = vadd.f32 %v10255, %v10303
    %10305 = vmatmul.bf16.gmra.mxu0 %v2031
    %v10306 = vpop.f32.mrf.mxu0
    %v10307 = vadd.f32 %v10258, %v10306
    %v10308 = vpop.f32.mrf.mxu0
    %v10309 = vadd.f32 %v10260, %v10308
    %10310 = vmatmul.bf16.gmra.mxu0 %v2058
    %v10311 = vpop.f32.mrf.mxu0
    %v10312 = vadd.f32 %v10263, %v10311
    %v10313 = vpop.f32.mrf.mxu0
    %v10314 = vadd.f32 %v10265, %v10313
    %10315 = vmatmul.bf16.gmra.mxu0 %v2085
    %v10316 = vpop.f32.mrf.mxu0
    %v10317 = vadd.f32 %v10268, %v10316
    %v10318 = vpop.f32.mrf.mxu0
    %v10319 = vadd.f32 %v10270, %v10318
    %10320 = vmatmul.bf16.gmra.mxu0 %v2112
    %v10321 = vpop.f32.mrf.mxu0
    %v10322 = vadd.f32 %v10273, %v10321
    %v10323 = vpop.f32.mrf.mxu0
    %v10324 = vadd.f32 %v10275, %v10323
    %10325 = vmatmul.bf16.gmra.mxu0 %v2139
    %v10326 = vpop.f32.mrf.mxu0
    %v10327 = vadd.f32 %v10278, %v10326
    %v10328 = vpop.f32.mrf.mxu0
    %v10329 = vadd.f32 %v10280, %v10328
    %10330 = vmatmul.bf16.gmra.mxu0 %v2166
    %v10331 = vpop.f32.mrf.mxu0
    %v10332 = vadd.f32 %v10283, %v10331
    %v10333 = vpop.f32.mrf.mxu0
    %v10334 = vadd.f32 %v10285, %v10333
    %10335 = vdwg.mxu0
    %10336 = vmatpush.bf16.msra.mxu0 %v5652
    %10337 = vmatpush.bf16.msra.mxu0 %v5648
    %10338 = vmatpush.bf16.msra.mxu0 %v5644
    %10339 = vmatpush.bf16.msra.mxu0 %v5640
    %10340 = vmatpush.bf16.msra.mxu0 %v5636
    %10341 = vmatpush.bf16.msra.mxu0 %v5632
    %10342 = vmatpush.bf16.msra.mxu0 %v5628
    %10343 = vmatpush.bf16.msra.mxu0 %v5624
    %10344 = vmatmul.bf16.gmra.mxu0 %v1978
    %v10345 = vpop.f32.mrf.mxu0
    %v10346 = vadd.f32 %v10297, %v10345
    %v10347 = vpop.f32.mrf.mxu0
    %v10348 = vadd.f32 %v10299, %v10347
    %10349 = vmatmul.bf16.gmra.mxu0 %v2005
    %v10350 = vpop.f32.mrf.mxu0
    %v10351 = vadd.f32 %v10302, %v10350
    %v10352 = vpop.f32.mrf.mxu0
    %v10353 = vadd.f32 %v10304, %v10352
    %10354 = vmatmul.bf16.gmra.mxu0 %v2032
    %v10355 = vpop.f32.mrf.mxu0
    %v10356 = vadd.f32 %v10307, %v10355
    %v10357 = vpop.f32.mrf.mxu0
    %v10358 = vadd.f32 %v10309, %v10357
    %10359 = vmatmul.bf16.gmra.mxu0 %v2059
    %v10360 = vpop.f32.mrf.mxu0
    %v10361 = vadd.f32 %v10312, %v10360
    %v10362 = vpop.f32.mrf.mxu0
    %v10363 = vadd.f32 %v10314, %v10362
    %10364 = vmatmul.bf16.gmra.mxu0 %v2086
    %v10365 = vpop.f32.mrf.mxu0
    %v10366 = vadd.f32 %v10317, %v10365
    %v10367 = vpop.f32.mrf.mxu0
    %v10368 = vadd.f32 %v10319, %v10367
    %10369 = vmatmul.bf16.gmra.mxu0 %v2113
    %v10370 = vpop.f32.mrf.mxu0
    %v10371 = vadd.f32 %v10322, %v10370
    %v10372 = vpop.f32.mrf.mxu0
    %v10373 = vadd.f32 %v10324, %v10372
    %10374 = vmatmul.bf16.gmra.mxu0 %v2140
    %v10375 = vpop.f32.mrf.mxu0
    %v10376 = vadd.f32 %v10327, %v10375
    %v10377 = vpop.f32.mrf.mxu0
    %v10378 = vadd.f32 %v10329, %v10377
    %10379 = vmatmul.bf16.gmra.mxu0 %v2167
    %v10380 = vpop.f32.mrf.mxu0
    %v10381 = vadd.f32 %v10332, %v10380
    %v10382 = vpop.f32.mrf.mxu0
    %v10383 = vadd.f32 %v10334, %v10382
    %10384 = vdwg.mxu0
    %10385 = vmatpush.bf16.msra.mxu0 %v5684
    %10386 = vmatpush.bf16.msra.mxu0 %v5680
    %10387 = vmatpush.bf16.msra.mxu0 %v5676
    %10388 = vmatpush.bf16.msra.mxu0 %v5672
    %10389 = vmatpush.bf16.msra.mxu0 %v5668
    %10390 = vmatpush.bf16.msra.mxu0 %v5664
    %10391 = vmatpush.bf16.msra.mxu0 %v5660
    %10392 = vmatpush.bf16.msra.mxu0 %v5656
    %10393 = vmatmul.bf16.gmra.mxu0 %v1979
    %v10394 = vpop.f32.mrf.mxu0
    %v10395 = vadd.f32 %v10346, %v10394
    %v10396 = vpop.f32.mrf.mxu0
    %v10397 = vadd.f32 %v10348, %v10396
    %10398 = vmatmul.bf16.gmra.mxu0 %v2006
    %v10399 = vpop.f32.mrf.mxu0
    %v10400 = vadd.f32 %v10351, %v10399
    %v10401 = vpop.f32.mrf.mxu0
    %v10402 = vadd.f32 %v10353, %v10401
    %10403 = vmatmul.bf16.gmra.mxu0 %v2033
    %v10404 = vpop.f32.mrf.mxu0
    %v10405 = vadd.f32 %v10356, %v10404
    %v10406 = vpop.f32.mrf.mxu0
    %v10407 = vadd.f32 %v10358, %v10406
    %10408 = vmatmul.bf16.gmra.mxu0 %v2060
    %v10409 = vpop.f32.mrf.mxu0
    %v10410 = vadd.f32 %v10361, %v10409
    %v10411 = vpop.f32.mrf.mxu0
    %v10412 = vadd.f32 %v10363, %v10411
    %10413 = vmatmul.bf16.gmra.mxu0 %v2087
    %v10414 = vpop.f32.mrf.mxu0
    %v10415 = vadd.f32 %v10366, %v10414
    %v10416 = vpop.f32.mrf.mxu0
    %v10417 = vadd.f32 %v10368, %v10416
    %10418 = vmatmul.bf16.gmra.mxu0 %v2114
    %v10419 = vpop.f32.mrf.mxu0
    %v10420 = vadd.f32 %v10371, %v10419
    %v10421 = vpop.f32.mrf.mxu0
    %v10422 = vadd.f32 %v10373, %v10421
    %10423 = vmatmul.bf16.gmra.mxu0 %v2141
    %v10424 = vpop.f32.mrf.mxu0
    %v10425 = vadd.f32 %v10376, %v10424
    %v10426 = vpop.f32.mrf.mxu0
    %v10427 = vadd.f32 %v10378, %v10426
    %10428 = vmatmul.bf16.gmra.mxu0 %v2168
    %v10429 = vpop.f32.mrf.mxu0
    %v10430 = vadd.f32 %v10381, %v10429
    %v10431 = vpop.f32.mrf.mxu0
    %v10432 = vadd.f32 %v10383, %v10431
    %10433 = vdwg.mxu0
    %10434 = vmatpush.bf16.msra.mxu0 %v5716
    %10435 = vmatpush.bf16.msra.mxu0 %v5712
    %10436 = vmatpush.bf16.msra.mxu0 %v5708
    %10437 = vmatpush.bf16.msra.mxu0 %v5704
    %10438 = vmatpush.bf16.msra.mxu0 %v5700
    %10439 = vmatpush.bf16.msra.mxu0 %v5696
    %10440 = vmatpush.bf16.msra.mxu0 %v5692
    %10441 = vmatpush.bf16.msra.mxu0 %v5688
    %10442 = vmatmul.bf16.gmra.mxu0 %v1980
    %v10443 = vpop.f32.mrf.mxu0
    %v10444 = vadd.f32 %v10395, %v10443
    %v10445 = vpop.f32.mrf.mxu0
    %v10446 = vadd.f32 %v10397, %v10445
    %10447 = vmatmul.bf16.gmra.mxu0 %v2007
    %v10448 = vpop.f32.mrf.mxu0
    %v10449 = vadd.f32 %v10400, %v10448
    %v10450 = vpop.f32.mrf.mxu0
    %v10451 = vadd.f32 %v10402, %v10450
    %10452 = vmatmul.bf16.gmra.mxu0 %v2034
    %v10453 = vpop.f32.mrf.mxu0
    %v10454 = vadd.f32 %v10405, %v10453
    %v10455 = vpop.f32.mrf.mxu0
    %v10456 = vadd.f32 %v10407, %v10455
    %10457 = vmatmul.bf16.gmra.mxu0 %v2061
    %v10458 = vpop.f32.mrf.mxu0
    %v10459 = vadd.f32 %v10410, %v10458
    %v10460 = vpop.f32.mrf.mxu0
    %v10461 = vadd.f32 %v10412, %v10460
    %10462 = vmatmul.bf16.gmra.mxu0 %v2088
    %v10463 = vpop.f32.mrf.mxu0
    %v10464 = vadd.f32 %v10415, %v10463
    %v10465 = vpop.f32.mrf.mxu0
    %v10466 = vadd.f32 %v10417, %v10465
    %10467 = vmatmul.bf16.gmra.mxu0 %v2115
    %v10468 = vpop.f32.mrf.mxu0
    %v10469 = vadd.f32 %v10420, %v10468
    %v10470 = vpop.f32.mrf.mxu0
    %v10471 = vadd.f32 %v10422, %v10470
    %10472 = vmatmul.bf16.gmra.mxu0 %v2142
    %v10473 = vpop.f32.mrf.mxu0
    %v10474 = vadd.f32 %v10425, %v10473
    %v10475 = vpop.f32.mrf.mxu0
    %v10476 = vadd.f32 %v10427, %v10475
    %10477 = vmatmul.bf16.gmra.mxu0 %v2169
    %v10478 = vpop.f32.mrf.mxu0
    %v10479 = vadd.f32 %v10430, %v10478
    %v10480 = vpop.f32.mrf.mxu0
    %v10481 = vadd.f32 %v10432, %v10480
    %10482 = vdwg.mxu0
    %10483 = vmatpush.bf16.msra.mxu0 %v5748
    %10484 = vmatpush.bf16.msra.mxu0 %v5744
    %10485 = vmatpush.bf16.msra.mxu0 %v5740
    %10486 = vmatpush.bf16.msra.mxu0 %v5736
    %10487 = vmatpush.bf16.msra.mxu0 %v5732
    %10488 = vmatpush.bf16.msra.mxu0 %v5728
    %10489 = vmatpush.bf16.msra.mxu0 %v5724
    %10490 = vmatpush.bf16.msra.mxu0 %v5720
    %10491 = vmatmul.bf16.gmra.mxu0 %v1981
    %v10492 = vpop.f32.mrf.mxu0
    %v10493 = vadd.f32 %v10444, %v10492
    %v10494 = vpop.f32.mrf.mxu0
    %v10495 = vadd.f32 %v10446, %v10494
    %10496 = vmatmul.bf16.gmra.mxu0 %v2008
    %v10497 = vpop.f32.mrf.mxu0
    %v10498 = vadd.f32 %v10449, %v10497
    %v10499 = vpop.f32.mrf.mxu0
    %v10500 = vadd.f32 %v10451, %v10499
    %10501 = vmatmul.bf16.gmra.mxu0 %v2035
    %v10502 = vpop.f32.mrf.mxu0
    %v10503 = vadd.f32 %v10454, %v10502
    %v10504 = vpop.f32.mrf.mxu0
    %v10505 = vadd.f32 %v10456, %v10504
    %10506 = vmatmul.bf16.gmra.mxu0 %v2062
    %v10507 = vpop.f32.mrf.mxu0
    %v10508 = vadd.f32 %v10459, %v10507
    %v10509 = vpop.f32.mrf.mxu0
    %v10510 = vadd.f32 %v10461, %v10509
    %10511 = vmatmul.bf16.gmra.mxu0 %v2089
    %v10512 = vpop.f32.mrf.mxu0
    %v10513 = vadd.f32 %v10464, %v10512
    %v10514 = vpop.f32.mrf.mxu0
    %v10515 = vadd.f32 %v10466, %v10514
    %10516 = vmatmul.bf16.gmra.mxu0 %v2116
    %v10517 = vpop.f32.mrf.mxu0
    %v10518 = vadd.f32 %v10469, %v10517
    %v10519 = vpop.f32.mrf.mxu0
    %v10520 = vadd.f32 %v10471, %v10519
    %10521 = vmatmul.bf16.gmra.mxu0 %v2143
    %v10522 = vpop.f32.mrf.mxu0
    %v10523 = vadd.f32 %v10474, %v10522
    %v10524 = vpop.f32.mrf.mxu0
    %v10525 = vadd.f32 %v10476, %v10524
    %10526 = vmatmul.bf16.gmra.mxu0 %v2170
    %v10527 = vpop.f32.mrf.mxu0
    %v10528 = vadd.f32 %v10479, %v10527
    %v10529 = vpop.f32.mrf.mxu0
    %v10530 = vadd.f32 %v10481, %v10529
    %10531 = vdwg.mxu0
    %10532 = vmatpush.bf16.msra.mxu0 %v5780
    %10533 = vmatpush.bf16.msra.mxu0 %v5776
    %10534 = vmatpush.bf16.msra.mxu0 %v5772
    %10535 = vmatpush.bf16.msra.mxu0 %v5768
    %10536 = vmatpush.bf16.msra.mxu0 %v5764
    %10537 = vmatpush.bf16.msra.mxu0 %v5760
    %10538 = vmatpush.bf16.msra.mxu0 %v5756
    %10539 = vmatpush.bf16.msra.mxu0 %v5752
    %10540 = vmatmul.bf16.gmra.mxu0 %v1982
    %v10541 = vpop.f32.mrf.mxu0
    %v10542 = vadd.f32 %v10493, %v10541
    %v10543 = vpop.f32.mrf.mxu0
    %v10544 = vadd.f32 %v10495, %v10543
    %10545 = vmatmul.bf16.gmra.mxu0 %v2009
    %v10546 = vpop.f32.mrf.mxu0
    %v10547 = vadd.f32 %v10498, %v10546
    %v10548 = vpop.f32.mrf.mxu0
    %v10549 = vadd.f32 %v10500, %v10548
    %10550 = vmatmul.bf16.gmra.mxu0 %v2036
    %v10551 = vpop.f32.mrf.mxu0
    %v10552 = vadd.f32 %v10503, %v10551
    %v10553 = vpop.f32.mrf.mxu0
    %v10554 = vadd.f32 %v10505, %v10553
    %10555 = vmatmul.bf16.gmra.mxu0 %v2063
    %v10556 = vpop.f32.mrf.mxu0
    %v10557 = vadd.f32 %v10508, %v10556
    %v10558 = vpop.f32.mrf.mxu0
    %v10559 = vadd.f32 %v10510, %v10558
    %10560 = vmatmul.bf16.gmra.mxu0 %v2090
    %v10561 = vpop.f32.mrf.mxu0
    %v10562 = vadd.f32 %v10513, %v10561
    %v10563 = vpop.f32.mrf.mxu0
    %v10564 = vadd.f32 %v10515, %v10563
    %10565 = vmatmul.bf16.gmra.mxu0 %v2117
    %v10566 = vpop.f32.mrf.mxu0
    %v10567 = vadd.f32 %v10518, %v10566
    %v10568 = vpop.f32.mrf.mxu0
    %v10569 = vadd.f32 %v10520, %v10568
    %10570 = vmatmul.bf16.gmra.mxu0 %v2144
    %v10571 = vpop.f32.mrf.mxu0
    %v10572 = vadd.f32 %v10523, %v10571
    %v10573 = vpop.f32.mrf.mxu0
    %v10574 = vadd.f32 %v10525, %v10573
    %10575 = vmatmul.bf16.gmra.mxu0 %v2171
    %v10576 = vpop.f32.mrf.mxu0
    %v10577 = vadd.f32 %v10528, %v10576
    %v10578 = vpop.f32.mrf.mxu0
    %v10579 = vadd.f32 %v10530, %v10578
    %10580 = vdwg.mxu0
    %10581 = vmatpush.bf16.msra.mxu0 %v5812
    %10582 = vmatpush.bf16.msra.mxu0 %v5808
    %10583 = vmatpush.bf16.msra.mxu0 %v5804
    %10584 = vmatpush.bf16.msra.mxu0 %v5800
    %10585 = vmatpush.bf16.msra.mxu0 %v5796
    %10586 = vmatpush.bf16.msra.mxu0 %v5792
    %10587 = vmatpush.bf16.msra.mxu0 %v5788
    %10588 = vmatpush.bf16.msra.mxu0 %v5784
    %10589 = vmatmul.bf16.gmra.mxu0 %v1983
    %v10590 = vpop.f32.mrf.mxu0
    %v10591 = vadd.f32 %v10542, %v10590
    %v10592 = vpop.f32.mrf.mxu0
    %v10593 = vadd.f32 %v10544, %v10592
    %10594 = vmatmul.bf16.gmra.mxu0 %v2010
    %v10595 = vpop.f32.mrf.mxu0
    %v10596 = vadd.f32 %v10547, %v10595
    %v10597 = vpop.f32.mrf.mxu0
    %v10598 = vadd.f32 %v10549, %v10597
    %10599 = vmatmul.bf16.gmra.mxu0 %v2037
    %v10600 = vpop.f32.mrf.mxu0
    %v10601 = vadd.f32 %v10552, %v10600
    %v10602 = vpop.f32.mrf.mxu0
    %v10603 = vadd.f32 %v10554, %v10602
    %10604 = vmatmul.bf16.gmra.mxu0 %v2064
    %v10605 = vpop.f32.mrf.mxu0
    %v10606 = vadd.f32 %v10557, %v10605
    %v10607 = vpop.f32.mrf.mxu0
    %v10608 = vadd.f32 %v10559, %v10607
    %10609 = vmatmul.bf16.gmra.mxu0 %v2091
    %v10610 = vpop.f32.mrf.mxu0
    %v10611 = vadd.f32 %v10562, %v10610
    %v10612 = vpop.f32.mrf.mxu0
    %v10613 = vadd.f32 %v10564, %v10612
    %10614 = vmatmul.bf16.gmra.mxu0 %v2118
    %v10615 = vpop.f32.mrf.mxu0
    %v10616 = vadd.f32 %v10567, %v10615
    %v10617 = vpop.f32.mrf.mxu0
    %v10618 = vadd.f32 %v10569, %v10617
    %10619 = vmatmul.bf16.gmra.mxu0 %v2145
    %v10620 = vpop.f32.mrf.mxu0
    %v10621 = vadd.f32 %v10572, %v10620
    %v10622 = vpop.f32.mrf.mxu0
    %v10623 = vadd.f32 %v10574, %v10622
    %10624 = vmatmul.bf16.gmra.mxu0 %v2172
    %v10625 = vpop.f32.mrf.mxu0
    %v10626 = vadd.f32 %v10577, %v10625
    %v10627 = vpop.f32.mrf.mxu0
    %v10628 = vadd.f32 %v10579, %v10627
    %10629 = vdwg.mxu0
    %10630 = vmatpush.bf16.msra.mxu0 %v5844
    %10631 = vmatpush.bf16.msra.mxu0 %v5840
    %10632 = vmatpush.bf16.msra.mxu0 %v5836
    %10633 = vmatpush.bf16.msra.mxu0 %v5832
    %10634 = vmatpush.bf16.msra.mxu0 %v5828
    %10635 = vmatpush.bf16.msra.mxu0 %v5824
    %10636 = vmatpush.bf16.msra.mxu0 %v5820
    %10637 = vmatpush.bf16.msra.mxu0 %v5816
    %10638 = vmatmul.bf16.gmra.mxu0 %v1984
    %v10639 = vpop.f32.mrf.mxu0
    %v10640 = vadd.f32 %v10591, %v10639
    %v10641 = vpop.f32.mrf.mxu0
    %v10642 = vadd.f32 %v10593, %v10641
    %10643 = vmatmul.bf16.gmra.mxu0 %v2011
    %v10644 = vpop.f32.mrf.mxu0
    %v10645 = vadd.f32 %v10596, %v10644
    %v10646 = vpop.f32.mrf.mxu0
    %v10647 = vadd.f32 %v10598, %v10646
    %10648 = vmatmul.bf16.gmra.mxu0 %v2038
    %v10649 = vpop.f32.mrf.mxu0
    %v10650 = vadd.f32 %v10601, %v10649
    %v10651 = vpop.f32.mrf.mxu0
    %v10652 = vadd.f32 %v10603, %v10651
    %10653 = vmatmul.bf16.gmra.mxu0 %v2065
    %v10654 = vpop.f32.mrf.mxu0
    %v10655 = vadd.f32 %v10606, %v10654
    %v10656 = vpop.f32.mrf.mxu0
    %v10657 = vadd.f32 %v10608, %v10656
    %10658 = vmatmul.bf16.gmra.mxu0 %v2092
    %v10659 = vpop.f32.mrf.mxu0
    %v10660 = vadd.f32 %v10611, %v10659
    %v10661 = vpop.f32.mrf.mxu0
    %v10662 = vadd.f32 %v10613, %v10661
    %10663 = vmatmul.bf16.gmra.mxu0 %v2119
    %v10664 = vpop.f32.mrf.mxu0
    %v10665 = vadd.f32 %v10616, %v10664
    %v10666 = vpop.f32.mrf.mxu0
    %v10667 = vadd.f32 %v10618, %v10666
    %10668 = vmatmul.bf16.gmra.mxu0 %v2146
    %v10669 = vpop.f32.mrf.mxu0
    %v10670 = vadd.f32 %v10621, %v10669
    %v10671 = vpop.f32.mrf.mxu0
    %v10672 = vadd.f32 %v10623, %v10671
    %10673 = vmatmul.bf16.gmra.mxu0 %v2173
    %v10674 = vpop.f32.mrf.mxu0
    %v10675 = vadd.f32 %v10626, %v10674
    %v10676 = vpop.f32.mrf.mxu0
    %v10677 = vadd.f32 %v10628, %v10676
    %10678 = vdwg.mxu0
    %10679 = vmatpush.bf16.msra.mxu0 %v5013
    %10680 = vmatpush.bf16.msra.mxu0 %v5009
    %10681 = vmatpush.bf16.msra.mxu0 %v5005
    %10682 = vmatpush.bf16.msra.mxu0 %v5001
    %10683 = vmatpush.bf16.msra.mxu0 %v4997
    %10684 = vmatpush.bf16.msra.mxu0 %v4993
    %10685 = vmatpush.bf16.msra.mxu0 %v4989
    %10686 = vmatpush.bf16.msra.mxu0 %v4985
    %10687 = vmatmul.bf16.gmra.mxu0 %v1958
    %v10688 = vpop.f32.mrf.mxu0
    %v10689 = vadd.f32 0.0, %v10688
    %v10690 = vpop.f32.mrf.mxu0
    %v10691 = vadd.f32 0.0, %v10690
    %10692 = vmatmul.bf16.gmra.mxu0 %v1985
    %v10693 = vpop.f32.mrf.mxu0
    %v10694 = vadd.f32 0.0, %v10693
    %v10695 = vpop.f32.mrf.mxu0
    %v10696 = vadd.f32 0.0, %v10695
    %10697 = vmatmul.bf16.gmra.mxu0 %v2012
    %v10698 = vpop.f32.mrf.mxu0
    %v10699 = vadd.f32 0.0, %v10698
    %v10700 = vpop.f32.mrf.mxu0
    %v10701 = vadd.f32 0.0, %v10700
    %10702 = vmatmul.bf16.gmra.mxu0 %v2039
    %v10703 = vpop.f32.mrf.mxu0
    %v10704 = vadd.f32 0.0, %v10703
    %v10705 = vpop.f32.mrf.mxu0
    %v10706 = vadd.f32 0.0, %v10705
    %10707 = vmatmul.bf16.gmra.mxu0 %v2066
    %v10708 = vpop.f32.mrf.mxu0
    %v10709 = vadd.f32 0.0, %v10708
    %v10710 = vpop.f32.mrf.mxu0
    %v10711 = vadd.f32 0.0, %v10710
    %10712 = vmatmul.bf16.gmra.mxu0 %v2093
    %v10713 = vpop.f32.mrf.mxu0
    %v10714 = vadd.f32 0.0, %v10713
    %v10715 = vpop.f32.mrf.mxu0
    %v10716 = vadd.f32 0.0, %v10715
    %10717 = vmatmul.bf16.gmra.mxu0 %v2120
    %v10718 = vpop.f32.mrf.mxu0
    %v10719 = vadd.f32 0.0, %v10718
    %v10720 = vpop.f32.mrf.mxu0
    %v10721 = vadd.f32 0.0, %v10720
    %10722 = vmatmul.bf16.gmra.mxu0 %v2147
    %v10723 = vpop.f32.mrf.mxu0
    %v10724 = vadd.f32 0.0, %v10723
    %v10725 = vpop.f32.mrf.mxu0
    %v10726 = vadd.f32 0.0, %v10725
    %10727 = vdwg.mxu0
    %10728 = vmatpush.bf16.msra.mxu0 %v5045
    %10729 = vmatpush.bf16.msra.mxu0 %v5041
    %10730 = vmatpush.bf16.msra.mxu0 %v5037
    %10731 = vmatpush.bf16.msra.mxu0 %v5033
    %10732 = vmatpush.bf16.msra.mxu0 %v5029
    %10733 = vmatpush.bf16.msra.mxu0 %v5025
    %10734 = vmatpush.bf16.msra.mxu0 %v5021
    %10735 = vmatpush.bf16.msra.mxu0 %v5017
    %10736 = vmatmul.bf16.gmra.mxu0 %v1959
    %v10737 = vpop.f32.mrf.mxu0
    %v10738 = vadd.f32 %v10689, %v10737
    %v10739 = vpop.f32.mrf.mxu0
    %v10740 = vadd.f32 %v10691, %v10739
    %10741 = vmatmul.bf16.gmra.mxu0 %v1986
    %v10742 = vpop.f32.mrf.mxu0
    %v10743 = vadd.f32 %v10694, %v10742
    %v10744 = vpop.f32.mrf.mxu0
    %v10745 = vadd.f32 %v10696, %v10744
    %10746 = vmatmul.bf16.gmra.mxu0 %v2013
    %v10747 = vpop.f32.mrf.mxu0
    %v10748 = vadd.f32 %v10699, %v10747
    %v10749 = vpop.f32.mrf.mxu0
    %v10750 = vadd.f32 %v10701, %v10749
    %10751 = vmatmul.bf16.gmra.mxu0 %v2040
    %v10752 = vpop.f32.mrf.mxu0
    %v10753 = vadd.f32 %v10704, %v10752
    %v10754 = vpop.f32.mrf.mxu0
    %v10755 = vadd.f32 %v10706, %v10754
    %10756 = vmatmul.bf16.gmra.mxu0 %v2067
    %v10757 = vpop.f32.mrf.mxu0
    %v10758 = vadd.f32 %v10709, %v10757
    %v10759 = vpop.f32.mrf.mxu0
    %v10760 = vadd.f32 %v10711, %v10759
    %10761 = vmatmul.bf16.gmra.mxu0 %v2094
    %v10762 = vpop.f32.mrf.mxu0
    %v10763 = vadd.f32 %v10714, %v10762
    %v10764 = vpop.f32.mrf.mxu0
    %v10765 = vadd.f32 %v10716, %v10764
    %10766 = vmatmul.bf16.gmra.mxu0 %v2121
    %v10767 = vpop.f32.mrf.mxu0
    %v10768 = vadd.f32 %v10719, %v10767
    %v10769 = vpop.f32.mrf.mxu0
    %v10770 = vadd.f32 %v10721, %v10769
    %10771 = vmatmul.bf16.gmra.mxu0 %v2148
    %v10772 = vpop.f32.mrf.mxu0
    %v10773 = vadd.f32 %v10724, %v10772
    %v10774 = vpop.f32.mrf.mxu0
    %v10775 = vadd.f32 %v10726, %v10774
    %10776 = vdwg.mxu0
    %10777 = vmatpush.bf16.msra.mxu0 %v5077
    %10778 = vmatpush.bf16.msra.mxu0 %v5073
    %10779 = vmatpush.bf16.msra.mxu0 %v5069
    %10780 = vmatpush.bf16.msra.mxu0 %v5065
    %10781 = vmatpush.bf16.msra.mxu0 %v5061
    %10782 = vmatpush.bf16.msra.mxu0 %v5057
    %10783 = vmatpush.bf16.msra.mxu0 %v5053
    %10784 = vmatpush.bf16.msra.mxu0 %v5049
    %10785 = vmatmul.bf16.gmra.mxu0 %v1960
    %v10786 = vpop.f32.mrf.mxu0
    %v10787 = vadd.f32 %v10738, %v10786
    %v10788 = vpop.f32.mrf.mxu0
    %v10789 = vadd.f32 %v10740, %v10788
    %10790 = vmatmul.bf16.gmra.mxu0 %v1987
    %v10791 = vpop.f32.mrf.mxu0
    %v10792 = vadd.f32 %v10743, %v10791
    %v10793 = vpop.f32.mrf.mxu0
    %v10794 = vadd.f32 %v10745, %v10793
    %10795 = vmatmul.bf16.gmra.mxu0 %v2014
    %v10796 = vpop.f32.mrf.mxu0
    %v10797 = vadd.f32 %v10748, %v10796
    %v10798 = vpop.f32.mrf.mxu0
    %v10799 = vadd.f32 %v10750, %v10798
    %10800 = vmatmul.bf16.gmra.mxu0 %v2041
    %v10801 = vpop.f32.mrf.mxu0
    %v10802 = vadd.f32 %v10753, %v10801
    %v10803 = vpop.f32.mrf.mxu0
    %v10804 = vadd.f32 %v10755, %v10803
    %10805 = vmatmul.bf16.gmra.mxu0 %v2068
    %v10806 = vpop.f32.mrf.mxu0
    %v10807 = vadd.f32 %v10758, %v10806
    %v10808 = vpop.f32.mrf.mxu0
    %v10809 = vadd.f32 %v10760, %v10808
    %10810 = vmatmul.bf16.gmra.mxu0 %v2095
    %v10811 = vpop.f32.mrf.mxu0
    %v10812 = vadd.f32 %v10763, %v10811
    %v10813 = vpop.f32.mrf.mxu0
    %v10814 = vadd.f32 %v10765, %v10813
    %10815 = vmatmul.bf16.gmra.mxu0 %v2122
    %v10816 = vpop.f32.mrf.mxu0
    %v10817 = vadd.f32 %v10768, %v10816
    %v10818 = vpop.f32.mrf.mxu0
    %v10819 = vadd.f32 %v10770, %v10818
    %10820 = vmatmul.bf16.gmra.mxu0 %v2149
    %v10821 = vpop.f32.mrf.mxu0
    %v10822 = vadd.f32 %v10773, %v10821
    %v10823 = vpop.f32.mrf.mxu0
    %v10824 = vadd.f32 %v10775, %v10823
    %10825 = vdwg.mxu0
    %10826 = vmatpush.bf16.msra.mxu0 %v5109
    %10827 = vmatpush.bf16.msra.mxu0 %v5105
    %10828 = vmatpush.bf16.msra.mxu0 %v5101
    %10829 = vmatpush.bf16.msra.mxu0 %v5097
    %10830 = vmatpush.bf16.msra.mxu0 %v5093
    %10831 = vmatpush.bf16.msra.mxu0 %v5089
    %10832 = vmatpush.bf16.msra.mxu0 %v5085
    %10833 = vmatpush.bf16.msra.mxu0 %v5081
    %10834 = vmatmul.bf16.gmra.mxu0 %v1961
    %v10835 = vpop.f32.mrf.mxu0
    %v10836 = vadd.f32 %v10787, %v10835
    %v10837 = vpop.f32.mrf.mxu0
    %v10838 = vadd.f32 %v10789, %v10837
    %10839 = vmatmul.bf16.gmra.mxu0 %v1988
    %v10840 = vpop.f32.mrf.mxu0
    %v10841 = vadd.f32 %v10792, %v10840
    %v10842 = vpop.f32.mrf.mxu0
    %v10843 = vadd.f32 %v10794, %v10842
    %10844 = vmatmul.bf16.gmra.mxu0 %v2015
    %v10845 = vpop.f32.mrf.mxu0
    %v10846 = vadd.f32 %v10797, %v10845
    %v10847 = vpop.f32.mrf.mxu0
    %v10848 = vadd.f32 %v10799, %v10847
    %10849 = vmatmul.bf16.gmra.mxu0 %v2042
    %v10850 = vpop.f32.mrf.mxu0
    %v10851 = vadd.f32 %v10802, %v10850
    %v10852 = vpop.f32.mrf.mxu0
    %v10853 = vadd.f32 %v10804, %v10852
    %10854 = vmatmul.bf16.gmra.mxu0 %v2069
    %v10855 = vpop.f32.mrf.mxu0
    %v10856 = vadd.f32 %v10807, %v10855
    %v10857 = vpop.f32.mrf.mxu0
    %v10858 = vadd.f32 %v10809, %v10857
    %10859 = vmatmul.bf16.gmra.mxu0 %v2096
    %v10860 = vpop.f32.mrf.mxu0
    %v10861 = vadd.f32 %v10812, %v10860
    %v10862 = vpop.f32.mrf.mxu0
    %v10863 = vadd.f32 %v10814, %v10862
    %10864 = vmatmul.bf16.gmra.mxu0 %v2123
    %v10865 = vpop.f32.mrf.mxu0
    %v10866 = vadd.f32 %v10817, %v10865
    %v10867 = vpop.f32.mrf.mxu0
    %v10868 = vadd.f32 %v10819, %v10867
    %10869 = vmatmul.bf16.gmra.mxu0 %v2150
    %v10870 = vpop.f32.mrf.mxu0
    %v10871 = vadd.f32 %v10822, %v10870
    %v10872 = vpop.f32.mrf.mxu0
    %v10873 = vadd.f32 %v10824, %v10872
    %10874 = vdwg.mxu0
    %10875 = vmatpush.bf16.msra.mxu0 %v5141
    %10876 = vmatpush.bf16.msra.mxu0 %v5137
    %10877 = vmatpush.bf16.msra.mxu0 %v5133
    %10878 = vmatpush.bf16.msra.mxu0 %v5129
    %10879 = vmatpush.bf16.msra.mxu0 %v5125
    %10880 = vmatpush.bf16.msra.mxu0 %v5121
    %10881 = vmatpush.bf16.msra.mxu0 %v5117
    %10882 = vmatpush.bf16.msra.mxu0 %v5113
    %10883 = vmatmul.bf16.gmra.mxu0 %v1962
    %v10884 = vpop.f32.mrf.mxu0
    %v10885 = vadd.f32 %v10836, %v10884
    %v10886 = vpop.f32.mrf.mxu0
    %v10887 = vadd.f32 %v10838, %v10886
    %10888 = vmatmul.bf16.gmra.mxu0 %v1989
    %v10889 = vpop.f32.mrf.mxu0
    %v10890 = vadd.f32 %v10841, %v10889
    %v10891 = vpop.f32.mrf.mxu0
    %v10892 = vadd.f32 %v10843, %v10891
    %10893 = vmatmul.bf16.gmra.mxu0 %v2016
    %v10894 = vpop.f32.mrf.mxu0
    %v10895 = vadd.f32 %v10846, %v10894
    %v10896 = vpop.f32.mrf.mxu0
    %v10897 = vadd.f32 %v10848, %v10896
    %10898 = vmatmul.bf16.gmra.mxu0 %v2043
    %v10899 = vpop.f32.mrf.mxu0
    %v10900 = vadd.f32 %v10851, %v10899
    %v10901 = vpop.f32.mrf.mxu0
    %v10902 = vadd.f32 %v10853, %v10901
    %10903 = vmatmul.bf16.gmra.mxu0 %v2070
    %v10904 = vpop.f32.mrf.mxu0
    %v10905 = vadd.f32 %v10856, %v10904
    %v10906 = vpop.f32.mrf.mxu0
    %v10907 = vadd.f32 %v10858, %v10906
    %10908 = vmatmul.bf16.gmra.mxu0 %v2097
    %v10909 = vpop.f32.mrf.mxu0
    %v10910 = vadd.f32 %v10861, %v10909
    %v10911 = vpop.f32.mrf.mxu0
    %v10912 = vadd.f32 %v10863, %v10911
    %10913 = vmatmul.bf16.gmra.mxu0 %v2124
    %v10914 = vpop.f32.mrf.mxu0
    %v10915 = vadd.f32 %v10866, %v10914
    %v10916 = vpop.f32.mrf.mxu0
    %v10917 = vadd.f32 %v10868, %v10916
    %10918 = vmatmul.bf16.gmra.mxu0 %v2151
    %v10919 = vpop.f32.mrf.mxu0
    %v10920 = vadd.f32 %v10871, %v10919
    %v10921 = vpop.f32.mrf.mxu0
    %v10922 = vadd.f32 %v10873, %v10921
    %10923 = vdwg.mxu0
    %10924 = vmatpush.bf16.msra.mxu0 %v5173
    %10925 = vmatpush.bf16.msra.mxu0 %v5169
    %10926 = vmatpush.bf16.msra.mxu0 %v5165
    %10927 = vmatpush.bf16.msra.mxu0 %v5161
    %10928 = vmatpush.bf16.msra.mxu0 %v5157
    %10929 = vmatpush.bf16.msra.mxu0 %v5153
    %10930 = vmatpush.bf16.msra.mxu0 %v5149
    %10931 = vmatpush.bf16.msra.mxu0 %v5145
    %10932 = vmatmul.bf16.gmra.mxu0 %v1963
    %v10933 = vpop.f32.mrf.mxu0
    %v10934 = vadd.f32 %v10885, %v10933
    %v10935 = vpop.f32.mrf.mxu0
    %v10936 = vadd.f32 %v10887, %v10935
    %10937 = vmatmul.bf16.gmra.mxu0 %v1990
    %v10938 = vpop.f32.mrf.mxu0
    %v10939 = vadd.f32 %v10890, %v10938
    %v10940 = vpop.f32.mrf.mxu0
    %v10941 = vadd.f32 %v10892, %v10940
    %10942 = vmatmul.bf16.gmra.mxu0 %v2017
    %v10943 = vpop.f32.mrf.mxu0
    %v10944 = vadd.f32 %v10895, %v10943
    %v10945 = vpop.f32.mrf.mxu0
    %v10946 = vadd.f32 %v10897, %v10945
    %10947 = vmatmul.bf16.gmra.mxu0 %v2044
    %v10948 = vpop.f32.mrf.mxu0
    %v10949 = vadd.f32 %v10900, %v10948
    %v10950 = vpop.f32.mrf.mxu0
    %v10951 = vadd.f32 %v10902, %v10950
    %10952 = vmatmul.bf16.gmra.mxu0 %v2071
    %v10953 = vpop.f32.mrf.mxu0
    %v10954 = vadd.f32 %v10905, %v10953
    %v10955 = vpop.f32.mrf.mxu0
    %v10956 = vadd.f32 %v10907, %v10955
    %10957 = vmatmul.bf16.gmra.mxu0 %v2098
    %v10958 = vpop.f32.mrf.mxu0
    %v10959 = vadd.f32 %v10910, %v10958
    %v10960 = vpop.f32.mrf.mxu0
    %v10961 = vadd.f32 %v10912, %v10960
    %10962 = vmatmul.bf16.gmra.mxu0 %v2125
    %v10963 = vpop.f32.mrf.mxu0
    %v10964 = vadd.f32 %v10915, %v10963
    %v10965 = vpop.f32.mrf.mxu0
    %v10966 = vadd.f32 %v10917, %v10965
    %10967 = vmatmul.bf16.gmra.mxu0 %v2152
    %v10968 = vpop.f32.mrf.mxu0
    %v10969 = vadd.f32 %v10920, %v10968
    %v10970 = vpop.f32.mrf.mxu0
    %v10971 = vadd.f32 %v10922, %v10970
    %10972 = vdwg.mxu0
    %10973 = vmatpush.bf16.msra.mxu0 %v5205
    %10974 = vmatpush.bf16.msra.mxu0 %v5201
    %10975 = vmatpush.bf16.msra.mxu0 %v5197
    %10976 = vmatpush.bf16.msra.mxu0 %v5193
    %10977 = vmatpush.bf16.msra.mxu0 %v5189
    %10978 = vmatpush.bf16.msra.mxu0 %v5185
    %10979 = vmatpush.bf16.msra.mxu0 %v5181
    %10980 = vmatpush.bf16.msra.mxu0 %v5177
    %10981 = vmatmul.bf16.gmra.mxu0 %v1964
    %v10982 = vpop.f32.mrf.mxu0
    %v10983 = vadd.f32 %v10934, %v10982
    %v10984 = vpop.f32.mrf.mxu0
    %v10985 = vadd.f32 %v10936, %v10984
    %10986 = vmatmul.bf16.gmra.mxu0 %v1991
    %v10987 = vpop.f32.mrf.mxu0
    %v10988 = vadd.f32 %v10939, %v10987
    %v10989 = vpop.f32.mrf.mxu0
    %v10990 = vadd.f32 %v10941, %v10989
    %10991 = vmatmul.bf16.gmra.mxu0 %v2018
    %v10992 = vpop.f32.mrf.mxu0
    %v10993 = vadd.f32 %v10944, %v10992
    %v10994 = vpop.f32.mrf.mxu0
    %v10995 = vadd.f32 %v10946, %v10994
    %10996 = vmatmul.bf16.gmra.mxu0 %v2045
    %v10997 = vpop.f32.mrf.mxu0
    %v10998 = vadd.f32 %v10949, %v10997
    %v10999 = vpop.f32.mrf.mxu0
    %v11000 = vadd.f32 %v10951, %v10999
    %11001 = vmatmul.bf16.gmra.mxu0 %v2072
    %v11002 = vpop.f32.mrf.mxu0
    %v11003 = vadd.f32 %v10954, %v11002
    %v11004 = vpop.f32.mrf.mxu0
    %v11005 = vadd.f32 %v10956, %v11004
    %11006 = vmatmul.bf16.gmra.mxu0 %v2099
    %v11007 = vpop.f32.mrf.mxu0
    %v11008 = vadd.f32 %v10959, %v11007
    %v11009 = vpop.f32.mrf.mxu0
    %v11010 = vadd.f32 %v10961, %v11009
    %11011 = vmatmul.bf16.gmra.mxu0 %v2126
    %v11012 = vpop.f32.mrf.mxu0
    %v11013 = vadd.f32 %v10964, %v11012
    %v11014 = vpop.f32.mrf.mxu0
    %v11015 = vadd.f32 %v10966, %v11014
    %11016 = vmatmul.bf16.gmra.mxu0 %v2153
    %v11017 = vpop.f32.mrf.mxu0
    %v11018 = vadd.f32 %v10969, %v11017
    %v11019 = vpop.f32.mrf.mxu0
    %v11020 = vadd.f32 %v10971, %v11019
    %11021 = vdwg.mxu0
    %11022 = vmatpush.bf16.msra.mxu0 %v5237
    %11023 = vmatpush.bf16.msra.mxu0 %v5233
    %11024 = vmatpush.bf16.msra.mxu0 %v5229
    %11025 = vmatpush.bf16.msra.mxu0 %v5225
    %11026 = vmatpush.bf16.msra.mxu0 %v5221
    %11027 = vmatpush.bf16.msra.mxu0 %v5217
    %11028 = vmatpush.bf16.msra.mxu0 %v5213
    %11029 = vmatpush.bf16.msra.mxu0 %v5209
    %11030 = vmatmul.bf16.gmra.mxu0 %v1965
    %v11031 = vpop.f32.mrf.mxu0
    %v11032 = vadd.f32 %v10983, %v11031
    %v11033 = vpop.f32.mrf.mxu0
    %v11034 = vadd.f32 %v10985, %v11033
    %11035 = vmatmul.bf16.gmra.mxu0 %v1992
    %v11036 = vpop.f32.mrf.mxu0
    %v11037 = vadd.f32 %v10988, %v11036
    %v11038 = vpop.f32.mrf.mxu0
    %v11039 = vadd.f32 %v10990, %v11038
    %11040 = vmatmul.bf16.gmra.mxu0 %v2019
    %v11041 = vpop.f32.mrf.mxu0
    %v11042 = vadd.f32 %v10993, %v11041
    %v11043 = vpop.f32.mrf.mxu0
    %v11044 = vadd.f32 %v10995, %v11043
    %11045 = vmatmul.bf16.gmra.mxu0 %v2046
    %v11046 = vpop.f32.mrf.mxu0
    %v11047 = vadd.f32 %v10998, %v11046
    %v11048 = vpop.f32.mrf.mxu0
    %v11049 = vadd.f32 %v11000, %v11048
    %11050 = vmatmul.bf16.gmra.mxu0 %v2073
    %v11051 = vpop.f32.mrf.mxu0
    %v11052 = vadd.f32 %v11003, %v11051
    %v11053 = vpop.f32.mrf.mxu0
    %v11054 = vadd.f32 %v11005, %v11053
    %11055 = vmatmul.bf16.gmra.mxu0 %v2100
    %v11056 = vpop.f32.mrf.mxu0
    %v11057 = vadd.f32 %v11008, %v11056
    %v11058 = vpop.f32.mrf.mxu0
    %v11059 = vadd.f32 %v11010, %v11058
    %11060 = vmatmul.bf16.gmra.mxu0 %v2127
    %v11061 = vpop.f32.mrf.mxu0
    %v11062 = vadd.f32 %v11013, %v11061
    %v11063 = vpop.f32.mrf.mxu0
    %v11064 = vadd.f32 %v11015, %v11063
    %11065 = vmatmul.bf16.gmra.mxu0 %v2154
    %v11066 = vpop.f32.mrf.mxu0
    %v11067 = vadd.f32 %v11018, %v11066
    %v11068 = vpop.f32.mrf.mxu0
    %v11069 = vadd.f32 %v11020, %v11068
    %11070 = vdwg.mxu0
    %11071 = vmatpush.bf16.msra.mxu0 %v5269
    %11072 = vmatpush.bf16.msra.mxu0 %v5265
    %11073 = vmatpush.bf16.msra.mxu0 %v5261
    %11074 = vmatpush.bf16.msra.mxu0 %v5257
    %11075 = vmatpush.bf16.msra.mxu0 %v5253
    %11076 = vmatpush.bf16.msra.mxu0 %v5249
    %11077 = vmatpush.bf16.msra.mxu0 %v5245
    %11078 = vmatpush.bf16.msra.mxu0 %v5241
    %11079 = vmatmul.bf16.gmra.mxu0 %v1966
    %v11080 = vpop.f32.mrf.mxu0
    %v11081 = vadd.f32 %v11032, %v11080
    %v11082 = vpop.f32.mrf.mxu0
    %v11083 = vadd.f32 %v11034, %v11082
    %11084 = vmatmul.bf16.gmra.mxu0 %v1993
    %v11085 = vpop.f32.mrf.mxu0
    %v11086 = vadd.f32 %v11037, %v11085
    %v11087 = vpop.f32.mrf.mxu0
    %v11088 = vadd.f32 %v11039, %v11087
    %11089 = vmatmul.bf16.gmra.mxu0 %v2020
    %v11090 = vpop.f32.mrf.mxu0
    %v11091 = vadd.f32 %v11042, %v11090
    %v11092 = vpop.f32.mrf.mxu0
    %v11093 = vadd.f32 %v11044, %v11092
    %11094 = vmatmul.bf16.gmra.mxu0 %v2047
    %v11095 = vpop.f32.mrf.mxu0
    %v11096 = vadd.f32 %v11047, %v11095
    %v11097 = vpop.f32.mrf.mxu0
    %v11098 = vadd.f32 %v11049, %v11097
    %11099 = vmatmul.bf16.gmra.mxu0 %v2074
    %v11100 = vpop.f32.mrf.mxu0
    %v11101 = vadd.f32 %v11052, %v11100
    %v11102 = vpop.f32.mrf.mxu0
    %v11103 = vadd.f32 %v11054, %v11102
    %11104 = vmatmul.bf16.gmra.mxu0 %v2101
    %v11105 = vpop.f32.mrf.mxu0
    %v11106 = vadd.f32 %v11057, %v11105
    %v11107 = vpop.f32.mrf.mxu0
    %v11108 = vadd.f32 %v11059, %v11107
    %11109 = vmatmul.bf16.gmra.mxu0 %v2128
    %v11110 = vpop.f32.mrf.mxu0
    %v11111 = vadd.f32 %v11062, %v11110
    %v11112 = vpop.f32.mrf.mxu0
    %v11113 = vadd.f32 %v11064, %v11112
    %11114 = vmatmul.bf16.gmra.mxu0 %v2155
    %v11115 = vpop.f32.mrf.mxu0
    %v11116 = vadd.f32 %v11067, %v11115
    %v11117 = vpop.f32.mrf.mxu0
    %v11118 = vadd.f32 %v11069, %v11117
    %11119 = vdwg.mxu0
    %11120 = vmatpush.bf16.msra.mxu0 %v5301
    %11121 = vmatpush.bf16.msra.mxu0 %v5297
    %11122 = vmatpush.bf16.msra.mxu0 %v5293
    %11123 = vmatpush.bf16.msra.mxu0 %v5289
    %11124 = vmatpush.bf16.msra.mxu0 %v5285
    %11125 = vmatpush.bf16.msra.mxu0 %v5281
    %11126 = vmatpush.bf16.msra.mxu0 %v5277
    %11127 = vmatpush.bf16.msra.mxu0 %v5273
    %11128 = vmatmul.bf16.gmra.mxu0 %v1967
    %v11129 = vpop.f32.mrf.mxu0
    %v11130 = vadd.f32 %v11081, %v11129
    %v11131 = vpop.f32.mrf.mxu0
    %v11132 = vadd.f32 %v11083, %v11131
    %11133 = vmatmul.bf16.gmra.mxu0 %v1994
    %v11134 = vpop.f32.mrf.mxu0
    %v11135 = vadd.f32 %v11086, %v11134
    %v11136 = vpop.f32.mrf.mxu0
    %v11137 = vadd.f32 %v11088, %v11136
    %11138 = vmatmul.bf16.gmra.mxu0 %v2021
    %v11139 = vpop.f32.mrf.mxu0
    %v11140 = vadd.f32 %v11091, %v11139
    %v11141 = vpop.f32.mrf.mxu0
    %v11142 = vadd.f32 %v11093, %v11141
    %11143 = vmatmul.bf16.gmra.mxu0 %v2048
    %v11144 = vpop.f32.mrf.mxu0
    %v11145 = vadd.f32 %v11096, %v11144
    %v11146 = vpop.f32.mrf.mxu0
    %v11147 = vadd.f32 %v11098, %v11146
    %11148 = vmatmul.bf16.gmra.mxu0 %v2075
    %v11149 = vpop.f32.mrf.mxu0
    %v11150 = vadd.f32 %v11101, %v11149
    %v11151 = vpop.f32.mrf.mxu0
    %v11152 = vadd.f32 %v11103, %v11151
    %11153 = vmatmul.bf16.gmra.mxu0 %v2102
    %v11154 = vpop.f32.mrf.mxu0
    %v11155 = vadd.f32 %v11106, %v11154
    %v11156 = vpop.f32.mrf.mxu0
    %v11157 = vadd.f32 %v11108, %v11156
    %11158 = vmatmul.bf16.gmra.mxu0 %v2129
    %v11159 = vpop.f32.mrf.mxu0
    %v11160 = vadd.f32 %v11111, %v11159
    %v11161 = vpop.f32.mrf.mxu0
    %v11162 = vadd.f32 %v11113, %v11161
    %11163 = vmatmul.bf16.gmra.mxu0 %v2156
    %v11164 = vpop.f32.mrf.mxu0
    %v11165 = vadd.f32 %v11116, %v11164
    %v11166 = vpop.f32.mrf.mxu0
    %v11167 = vadd.f32 %v11118, %v11166
    %11168 = vdwg.mxu0
    %11169 = vmatpush.bf16.msra.mxu0 %v5333
    %11170 = vmatpush.bf16.msra.mxu0 %v5329
    %11171 = vmatpush.bf16.msra.mxu0 %v5325
    %11172 = vmatpush.bf16.msra.mxu0 %v5321
    %11173 = vmatpush.bf16.msra.mxu0 %v5317
    %11174 = vmatpush.bf16.msra.mxu0 %v5313
    %11175 = vmatpush.bf16.msra.mxu0 %v5309
    %11176 = vmatpush.bf16.msra.mxu0 %v5305
    %11177 = vmatmul.bf16.gmra.mxu0 %v1968
    %v11178 = vpop.f32.mrf.mxu0
    %v11179 = vadd.f32 %v11130, %v11178
    %v11180 = vpop.f32.mrf.mxu0
    %v11181 = vadd.f32 %v11132, %v11180
    %11182 = vmatmul.bf16.gmra.mxu0 %v1995
    %v11183 = vpop.f32.mrf.mxu0
    %v11184 = vadd.f32 %v11135, %v11183
    %v11185 = vpop.f32.mrf.mxu0
    %v11186 = vadd.f32 %v11137, %v11185
    %11187 = vmatmul.bf16.gmra.mxu0 %v2022
    %v11188 = vpop.f32.mrf.mxu0
    %v11189 = vadd.f32 %v11140, %v11188
    %v11190 = vpop.f32.mrf.mxu0
    %v11191 = vadd.f32 %v11142, %v11190
    %11192 = vmatmul.bf16.gmra.mxu0 %v2049
    %v11193 = vpop.f32.mrf.mxu0
    %v11194 = vadd.f32 %v11145, %v11193
    %v11195 = vpop.f32.mrf.mxu0
    %v11196 = vadd.f32 %v11147, %v11195
    %11197 = vmatmul.bf16.gmra.mxu0 %v2076
    %v11198 = vpop.f32.mrf.mxu0
    %v11199 = vadd.f32 %v11150, %v11198
    %v11200 = vpop.f32.mrf.mxu0
    %v11201 = vadd.f32 %v11152, %v11200
    %11202 = vmatmul.bf16.gmra.mxu0 %v2103
    %v11203 = vpop.f32.mrf.mxu0
    %v11204 = vadd.f32 %v11155, %v11203
    %v11205 = vpop.f32.mrf.mxu0
    %v11206 = vadd.f32 %v11157, %v11205
    %11207 = vmatmul.bf16.gmra.mxu0 %v2130
    %v11208 = vpop.f32.mrf.mxu0
    %v11209 = vadd.f32 %v11160, %v11208
    %v11210 = vpop.f32.mrf.mxu0
    %v11211 = vadd.f32 %v11162, %v11210
    %11212 = vmatmul.bf16.gmra.mxu0 %v2157
    %v11213 = vpop.f32.mrf.mxu0
    %v11214 = vadd.f32 %v11165, %v11213
    %v11215 = vpop.f32.mrf.mxu0
    %v11216 = vadd.f32 %v11167, %v11215
    %11217 = vdwg.mxu0
    %11218 = vmatpush.bf16.msra.mxu0 %v5365
    %11219 = vmatpush.bf16.msra.mxu0 %v5361
    %11220 = vmatpush.bf16.msra.mxu0 %v5357
    %11221 = vmatpush.bf16.msra.mxu0 %v5353
    %11222 = vmatpush.bf16.msra.mxu0 %v5349
    %11223 = vmatpush.bf16.msra.mxu0 %v5345
    %11224 = vmatpush.bf16.msra.mxu0 %v5341
    %11225 = vmatpush.bf16.msra.mxu0 %v5337
    %11226 = vmatmul.bf16.gmra.mxu0 %v1969
    %v11227 = vpop.f32.mrf.mxu0
    %v11228 = vadd.f32 %v11179, %v11227
    %v11229 = vpop.f32.mrf.mxu0
    %v11230 = vadd.f32 %v11181, %v11229
    %11231 = vmatmul.bf16.gmra.mxu0 %v1996
    %v11232 = vpop.f32.mrf.mxu0
    %v11233 = vadd.f32 %v11184, %v11232
    %v11234 = vpop.f32.mrf.mxu0
    %v11235 = vadd.f32 %v11186, %v11234
    %11236 = vmatmul.bf16.gmra.mxu0 %v2023
    %v11237 = vpop.f32.mrf.mxu0
    %v11238 = vadd.f32 %v11189, %v11237
    %v11239 = vpop.f32.mrf.mxu0
    %v11240 = vadd.f32 %v11191, %v11239
    %11241 = vmatmul.bf16.gmra.mxu0 %v2050
    %v11242 = vpop.f32.mrf.mxu0
    %v11243 = vadd.f32 %v11194, %v11242
    %v11244 = vpop.f32.mrf.mxu0
    %v11245 = vadd.f32 %v11196, %v11244
    %11246 = vmatmul.bf16.gmra.mxu0 %v2077
    %v11247 = vpop.f32.mrf.mxu0
    %v11248 = vadd.f32 %v11199, %v11247
    %v11249 = vpop.f32.mrf.mxu0
    %v11250 = vadd.f32 %v11201, %v11249
    %11251 = vmatmul.bf16.gmra.mxu0 %v2104
    %v11252 = vpop.f32.mrf.mxu0
    %v11253 = vadd.f32 %v11204, %v11252
    %v11254 = vpop.f32.mrf.mxu0
    %v11255 = vadd.f32 %v11206, %v11254
    %11256 = vmatmul.bf16.gmra.mxu0 %v2131
    %v11257 = vpop.f32.mrf.mxu0
    %v11258 = vadd.f32 %v11209, %v11257
    %v11259 = vpop.f32.mrf.mxu0
    %v11260 = vadd.f32 %v11211, %v11259
    %11261 = vmatmul.bf16.gmra.mxu0 %v2158
    %v11262 = vpop.f32.mrf.mxu0
    %v11263 = vadd.f32 %v11214, %v11262
    %v11264 = vpop.f32.mrf.mxu0
    %v11265 = vadd.f32 %v11216, %v11264
    %11266 = vdwg.mxu0
    %11267 = vmatpush.bf16.msra.mxu0 %v5397
    %11268 = vmatpush.bf16.msra.mxu0 %v5393
    %11269 = vmatpush.bf16.msra.mxu0 %v5389
    %11270 = vmatpush.bf16.msra.mxu0 %v5385
    %11271 = vmatpush.bf16.msra.mxu0 %v5381
    %11272 = vmatpush.bf16.msra.mxu0 %v5377
    %11273 = vmatpush.bf16.msra.mxu0 %v5373
    %11274 = vmatpush.bf16.msra.mxu0 %v5369
    %11275 = vmatmul.bf16.gmra.mxu0 %v1970
    %v11276 = vpop.f32.mrf.mxu0
    %v11277 = vadd.f32 %v11228, %v11276
    %v11278 = vpop.f32.mrf.mxu0
    %v11279 = vadd.f32 %v11230, %v11278
    %11280 = vmatmul.bf16.gmra.mxu0 %v1997
    %v11281 = vpop.f32.mrf.mxu0
    %v11282 = vadd.f32 %v11233, %v11281
    %v11283 = vpop.f32.mrf.mxu0
    %v11284 = vadd.f32 %v11235, %v11283
    %11285 = vmatmul.bf16.gmra.mxu0 %v2024
    %v11286 = vpop.f32.mrf.mxu0
    %v11287 = vadd.f32 %v11238, %v11286
    %v11288 = vpop.f32.mrf.mxu0
    %v11289 = vadd.f32 %v11240, %v11288
    %11290 = vmatmul.bf16.gmra.mxu0 %v2051
    %v11291 = vpop.f32.mrf.mxu0
    %v11292 = vadd.f32 %v11243, %v11291
    %v11293 = vpop.f32.mrf.mxu0
    %v11294 = vadd.f32 %v11245, %v11293
    %11295 = vmatmul.bf16.gmra.mxu0 %v2078
    %v11296 = vpop.f32.mrf.mxu0
    %v11297 = vadd.f32 %v11248, %v11296
    %v11298 = vpop.f32.mrf.mxu0
    %v11299 = vadd.f32 %v11250, %v11298
    %11300 = vmatmul.bf16.gmra.mxu0 %v2105
    %v11301 = vpop.f32.mrf.mxu0
    %v11302 = vadd.f32 %v11253, %v11301
    %v11303 = vpop.f32.mrf.mxu0
    %v11304 = vadd.f32 %v11255, %v11303
    %11305 = vmatmul.bf16.gmra.mxu0 %v2132
    %v11306 = vpop.f32.mrf.mxu0
    %v11307 = vadd.f32 %v11258, %v11306
    %v11308 = vpop.f32.mrf.mxu0
    %v11309 = vadd.f32 %v11260, %v11308
    %11310 = vmatmul.bf16.gmra.mxu0 %v2159
    %v11311 = vpop.f32.mrf.mxu0
    %v11312 = vadd.f32 %v11263, %v11311
    %v11313 = vpop.f32.mrf.mxu0
    %v11314 = vadd.f32 %v11265, %v11313
    %11315 = vdwg.mxu0
    %11316 = vmatpush.bf16.msra.mxu0 %v5429
    %11317 = vmatpush.bf16.msra.mxu0 %v5425
    %11318 = vmatpush.bf16.msra.mxu0 %v5421
    %11319 = vmatpush.bf16.msra.mxu0 %v5417
    %11320 = vmatpush.bf16.msra.mxu0 %v5413
    %11321 = vmatpush.bf16.msra.mxu0 %v5409
    %11322 = vmatpush.bf16.msra.mxu0 %v5405
    %11323 = vmatpush.bf16.msra.mxu0 %v5401
    %11324 = vmatmul.bf16.gmra.mxu0 %v1971
    %v11325 = vpop.f32.mrf.mxu0
    %v11326 = vadd.f32 %v11277, %v11325
    %v11327 = vpop.f32.mrf.mxu0
    %v11328 = vadd.f32 %v11279, %v11327
    %11329 = vmatmul.bf16.gmra.mxu0 %v1998
    %v11330 = vpop.f32.mrf.mxu0
    %v11331 = vadd.f32 %v11282, %v11330
    %v11332 = vpop.f32.mrf.mxu0
    %v11333 = vadd.f32 %v11284, %v11332
    %11334 = vmatmul.bf16.gmra.mxu0 %v2025
    %v11335 = vpop.f32.mrf.mxu0
    %v11336 = vadd.f32 %v11287, %v11335
    %v11337 = vpop.f32.mrf.mxu0
    %v11338 = vadd.f32 %v11289, %v11337
    %11339 = vmatmul.bf16.gmra.mxu0 %v2052
    %v11340 = vpop.f32.mrf.mxu0
    %v11341 = vadd.f32 %v11292, %v11340
    %v11342 = vpop.f32.mrf.mxu0
    %v11343 = vadd.f32 %v11294, %v11342
    %11344 = vmatmul.bf16.gmra.mxu0 %v2079
    %v11345 = vpop.f32.mrf.mxu0
    %v11346 = vadd.f32 %v11297, %v11345
    %v11347 = vpop.f32.mrf.mxu0
    %v11348 = vadd.f32 %v11299, %v11347
    %11349 = vmatmul.bf16.gmra.mxu0 %v2106
    %v11350 = vpop.f32.mrf.mxu0
    %v11351 = vadd.f32 %v11302, %v11350
    %v11352 = vpop.f32.mrf.mxu0
    %v11353 = vadd.f32 %v11304, %v11352
    %11354 = vmatmul.bf16.gmra.mxu0 %v2133
    %v11355 = vpop.f32.mrf.mxu0
    %v11356 = vadd.f32 %v11307, %v11355
    %v11357 = vpop.f32.mrf.mxu0
    %v11358 = vadd.f32 %v11309, %v11357
    %11359 = vmatmul.bf16.gmra.mxu0 %v2160
    %v11360 = vpop.f32.mrf.mxu0
    %v11361 = vadd.f32 %v11312, %v11360
    %v11362 = vpop.f32.mrf.mxu0
    %v11363 = vadd.f32 %v11314, %v11362
    %11364 = vdwg.mxu0
    %11365 = vmatpush.bf16.msra.mxu0 %v5461
    %11366 = vmatpush.bf16.msra.mxu0 %v5457
    %11367 = vmatpush.bf16.msra.mxu0 %v5453
    %11368 = vmatpush.bf16.msra.mxu0 %v5449
    %11369 = vmatpush.bf16.msra.mxu0 %v5445
    %11370 = vmatpush.bf16.msra.mxu0 %v5441
    %11371 = vmatpush.bf16.msra.mxu0 %v5437
    %11372 = vmatpush.bf16.msra.mxu0 %v5433
    %11373 = vmatmul.bf16.gmra.mxu0 %v1972
    %v11374 = vpop.f32.mrf.mxu0
    %v11375 = vadd.f32 %v11326, %v11374
    %v11376 = vpop.f32.mrf.mxu0
    %v11377 = vadd.f32 %v11328, %v11376
    %11378 = vmatmul.bf16.gmra.mxu0 %v1999
    %v11379 = vpop.f32.mrf.mxu0
    %v11380 = vadd.f32 %v11331, %v11379
    %v11381 = vpop.f32.mrf.mxu0
    %v11382 = vadd.f32 %v11333, %v11381
    %11383 = vmatmul.bf16.gmra.mxu0 %v2026
    %v11384 = vpop.f32.mrf.mxu0
    %v11385 = vadd.f32 %v11336, %v11384
    %v11386 = vpop.f32.mrf.mxu0
    %v11387 = vadd.f32 %v11338, %v11386
    %11388 = vmatmul.bf16.gmra.mxu0 %v2053
    %v11389 = vpop.f32.mrf.mxu0
    %v11390 = vadd.f32 %v11341, %v11389
    %v11391 = vpop.f32.mrf.mxu0
    %v11392 = vadd.f32 %v11343, %v11391
    %11393 = vmatmul.bf16.gmra.mxu0 %v2080
    %v11394 = vpop.f32.mrf.mxu0
    %v11395 = vadd.f32 %v11346, %v11394
    %v11396 = vpop.f32.mrf.mxu0
    %v11397 = vadd.f32 %v11348, %v11396
    %11398 = vmatmul.bf16.gmra.mxu0 %v2107
    %v11399 = vpop.f32.mrf.mxu0
    %v11400 = vadd.f32 %v11351, %v11399
    %v11401 = vpop.f32.mrf.mxu0
    %v11402 = vadd.f32 %v11353, %v11401
    %11403 = vmatmul.bf16.gmra.mxu0 %v2134
    %v11404 = vpop.f32.mrf.mxu0
    %v11405 = vadd.f32 %v11356, %v11404
    %v11406 = vpop.f32.mrf.mxu0
    %v11407 = vadd.f32 %v11358, %v11406
    %11408 = vmatmul.bf16.gmra.mxu0 %v2161
    %v11409 = vpop.f32.mrf.mxu0
    %v11410 = vadd.f32 %v11361, %v11409
    %v11411 = vpop.f32.mrf.mxu0
    %v11412 = vadd.f32 %v11363, %v11411
    %11413 = vdwg.mxu0
    %11414 = vmatpush.bf16.msra.mxu0 %v5493
    %11415 = vmatpush.bf16.msra.mxu0 %v5489
    %11416 = vmatpush.bf16.msra.mxu0 %v5485
    %11417 = vmatpush.bf16.msra.mxu0 %v5481
    %11418 = vmatpush.bf16.msra.mxu0 %v5477
    %11419 = vmatpush.bf16.msra.mxu0 %v5473
    %11420 = vmatpush.bf16.msra.mxu0 %v5469
    %11421 = vmatpush.bf16.msra.mxu0 %v5465
    %11422 = vmatmul.bf16.gmra.mxu0 %v1973
    %v11423 = vpop.f32.mrf.mxu0
    %v11424 = vadd.f32 %v11375, %v11423
    %v11425 = vpop.f32.mrf.mxu0
    %v11426 = vadd.f32 %v11377, %v11425
    %11427 = vmatmul.bf16.gmra.mxu0 %v2000
    %v11428 = vpop.f32.mrf.mxu0
    %v11429 = vadd.f32 %v11380, %v11428
    %v11430 = vpop.f32.mrf.mxu0
    %v11431 = vadd.f32 %v11382, %v11430
    %11432 = vmatmul.bf16.gmra.mxu0 %v2027
    %v11433 = vpop.f32.mrf.mxu0
    %v11434 = vadd.f32 %v11385, %v11433
    %v11435 = vpop.f32.mrf.mxu0
    %v11436 = vadd.f32 %v11387, %v11435
    %11437 = vmatmul.bf16.gmra.mxu0 %v2054
    %v11438 = vpop.f32.mrf.mxu0
    %v11439 = vadd.f32 %v11390, %v11438
    %v11440 = vpop.f32.mrf.mxu0
    %v11441 = vadd.f32 %v11392, %v11440
    %11442 = vmatmul.bf16.gmra.mxu0 %v2081
    %v11443 = vpop.f32.mrf.mxu0
    %v11444 = vadd.f32 %v11395, %v11443
    %v11445 = vpop.f32.mrf.mxu0
    %v11446 = vadd.f32 %v11397, %v11445
    %11447 = vmatmul.bf16.gmra.mxu0 %v2108
    %v11448 = vpop.f32.mrf.mxu0
    %v11449 = vadd.f32 %v11400, %v11448
    %v11450 = vpop.f32.mrf.mxu0
    %v11451 = vadd.f32 %v11402, %v11450
    %11452 = vmatmul.bf16.gmra.mxu0 %v2135
    %v11453 = vpop.f32.mrf.mxu0
    %v11454 = vadd.f32 %v11405, %v11453
    %v11455 = vpop.f32.mrf.mxu0
    %v11456 = vadd.f32 %v11407, %v11455
    %11457 = vmatmul.bf16.gmra.mxu0 %v2162
    %v11458 = vpop.f32.mrf.mxu0
    %v11459 = vadd.f32 %v11410, %v11458
    %v11460 = vpop.f32.mrf.mxu0
    %v11461 = vadd.f32 %v11412, %v11460
    %11462 = vdwg.mxu0
    %11463 = vmatpush.bf16.msra.mxu0 %v5525
    %11464 = vmatpush.bf16.msra.mxu0 %v5521
    %11465 = vmatpush.bf16.msra.mxu0 %v5517
    %11466 = vmatpush.bf16.msra.mxu0 %v5513
    %11467 = vmatpush.bf16.msra.mxu0 %v5509
    %11468 = vmatpush.bf16.msra.mxu0 %v5505
    %11469 = vmatpush.bf16.msra.mxu0 %v5501
    %11470 = vmatpush.bf16.msra.mxu0 %v5497
    %11471 = vmatmul.bf16.gmra.mxu0 %v1974
    %v11472 = vpop.f32.mrf.mxu0
    %v11473 = vadd.f32 %v11424, %v11472
    %v11474 = vpop.f32.mrf.mxu0
    %v11475 = vadd.f32 %v11426, %v11474
    %11476 = vmatmul.bf16.gmra.mxu0 %v2001
    %v11477 = vpop.f32.mrf.mxu0
    %v11478 = vadd.f32 %v11429, %v11477
    %v11479 = vpop.f32.mrf.mxu0
    %v11480 = vadd.f32 %v11431, %v11479
    %11481 = vmatmul.bf16.gmra.mxu0 %v2028
    %v11482 = vpop.f32.mrf.mxu0
    %v11483 = vadd.f32 %v11434, %v11482
    %v11484 = vpop.f32.mrf.mxu0
    %v11485 = vadd.f32 %v11436, %v11484
    %11486 = vmatmul.bf16.gmra.mxu0 %v2055
    %v11487 = vpop.f32.mrf.mxu0
    %v11488 = vadd.f32 %v11439, %v11487
    %v11489 = vpop.f32.mrf.mxu0
    %v11490 = vadd.f32 %v11441, %v11489
    %11491 = vmatmul.bf16.gmra.mxu0 %v2082
    %v11492 = vpop.f32.mrf.mxu0
    %v11493 = vadd.f32 %v11444, %v11492
    %v11494 = vpop.f32.mrf.mxu0
    %v11495 = vadd.f32 %v11446, %v11494
    %11496 = vmatmul.bf16.gmra.mxu0 %v2109
    %v11497 = vpop.f32.mrf.mxu0
    %v11498 = vadd.f32 %v11449, %v11497
    %v11499 = vpop.f32.mrf.mxu0
    %v11500 = vadd.f32 %v11451, %v11499
    %11501 = vmatmul.bf16.gmra.mxu0 %v2136
    %v11502 = vpop.f32.mrf.mxu0
    %v11503 = vadd.f32 %v11454, %v11502
    %v11504 = vpop.f32.mrf.mxu0
    %v11505 = vadd.f32 %v11456, %v11504
    %11506 = vmatmul.bf16.gmra.mxu0 %v2163
    %v11507 = vpop.f32.mrf.mxu0
    %v11508 = vadd.f32 %v11459, %v11507
    %v11509 = vpop.f32.mrf.mxu0
    %v11510 = vadd.f32 %v11461, %v11509
    %11511 = vdwg.mxu0
    %11512 = vmatpush.bf16.msra.mxu0 %v5557
    %11513 = vmatpush.bf16.msra.mxu0 %v5553
    %11514 = vmatpush.bf16.msra.mxu0 %v5549
    %11515 = vmatpush.bf16.msra.mxu0 %v5545
    %11516 = vmatpush.bf16.msra.mxu0 %v5541
    %11517 = vmatpush.bf16.msra.mxu0 %v5537
    %11518 = vmatpush.bf16.msra.mxu0 %v5533
    %11519 = vmatpush.bf16.msra.mxu0 %v5529
    %11520 = vmatmul.bf16.gmra.mxu0 %v1975
    %v11521 = vpop.f32.mrf.mxu0
    %v11522 = vadd.f32 %v11473, %v11521
    %v11523 = vpop.f32.mrf.mxu0
    %v11524 = vadd.f32 %v11475, %v11523
    %11525 = vmatmul.bf16.gmra.mxu0 %v2002
    %v11526 = vpop.f32.mrf.mxu0
    %v11527 = vadd.f32 %v11478, %v11526
    %v11528 = vpop.f32.mrf.mxu0
    %v11529 = vadd.f32 %v11480, %v11528
    %11530 = vmatmul.bf16.gmra.mxu0 %v2029
    %v11531 = vpop.f32.mrf.mxu0
    %v11532 = vadd.f32 %v11483, %v11531
    %v11533 = vpop.f32.mrf.mxu0
    %v11534 = vadd.f32 %v11485, %v11533
    %11535 = vmatmul.bf16.gmra.mxu0 %v2056
    %v11536 = vpop.f32.mrf.mxu0
    %v11537 = vadd.f32 %v11488, %v11536
    %v11538 = vpop.f32.mrf.mxu0
    %v11539 = vadd.f32 %v11490, %v11538
    %11540 = vmatmul.bf16.gmra.mxu0 %v2083
    %v11541 = vpop.f32.mrf.mxu0
    %v11542 = vadd.f32 %v11493, %v11541
    %v11543 = vpop.f32.mrf.mxu0
    %v11544 = vadd.f32 %v11495, %v11543
    %11545 = vmatmul.bf16.gmra.mxu0 %v2110
    %v11546 = vpop.f32.mrf.mxu0
    %v11547 = vadd.f32 %v11498, %v11546
    %v11548 = vpop.f32.mrf.mxu0
    %v11549 = vadd.f32 %v11500, %v11548
    %11550 = vmatmul.bf16.gmra.mxu0 %v2137
    %v11551 = vpop.f32.mrf.mxu0
    %v11552 = vadd.f32 %v11503, %v11551
    %v11553 = vpop.f32.mrf.mxu0
    %v11554 = vadd.f32 %v11505, %v11553
    %11555 = vmatmul.bf16.gmra.mxu0 %v2164
    %v11556 = vpop.f32.mrf.mxu0
    %v11557 = vadd.f32 %v11508, %v11556
    %v11558 = vpop.f32.mrf.mxu0
    %v11559 = vadd.f32 %v11510, %v11558
    %11560 = vdwg.mxu0
    %11561 = vmatpush.bf16.msra.mxu0 %v5589
    %11562 = vmatpush.bf16.msra.mxu0 %v5585
    %11563 = vmatpush.bf16.msra.mxu0 %v5581
    %11564 = vmatpush.bf16.msra.mxu0 %v5577
    %11565 = vmatpush.bf16.msra.mxu0 %v5573
    %11566 = vmatpush.bf16.msra.mxu0 %v5569
    %11567 = vmatpush.bf16.msra.mxu0 %v5565
    %11568 = vmatpush.bf16.msra.mxu0 %v5561
    %11569 = vmatmul.bf16.gmra.mxu0 %v1976
    %v11570 = vpop.f32.mrf.mxu0
    %v11571 = vadd.f32 %v11522, %v11570
    %v11572 = vpop.f32.mrf.mxu0
    %v11573 = vadd.f32 %v11524, %v11572
    %11574 = vmatmul.bf16.gmra.mxu0 %v2003
    %v11575 = vpop.f32.mrf.mxu0
    %v11576 = vadd.f32 %v11527, %v11575
    %v11577 = vpop.f32.mrf.mxu0
    %v11578 = vadd.f32 %v11529, %v11577
    %11579 = vmatmul.bf16.gmra.mxu0 %v2030
    %v11580 = vpop.f32.mrf.mxu0
    %v11581 = vadd.f32 %v11532, %v11580
    %v11582 = vpop.f32.mrf.mxu0
    %v11583 = vadd.f32 %v11534, %v11582
    %11584 = vmatmul.bf16.gmra.mxu0 %v2057
    %v11585 = vpop.f32.mrf.mxu0
    %v11586 = vadd.f32 %v11537, %v11585
    %v11587 = vpop.f32.mrf.mxu0
    %v11588 = vadd.f32 %v11539, %v11587
    %11589 = vmatmul.bf16.gmra.mxu0 %v2084
    %v11590 = vpop.f32.mrf.mxu0
    %v11591 = vadd.f32 %v11542, %v11590
    %v11592 = vpop.f32.mrf.mxu0
    %v11593 = vadd.f32 %v11544, %v11592
    %11594 = vmatmul.bf16.gmra.mxu0 %v2111
    %v11595 = vpop.f32.mrf.mxu0
    %v11596 = vadd.f32 %v11547, %v11595
    %v11597 = vpop.f32.mrf.mxu0
    %v11598 = vadd.f32 %v11549, %v11597
    %11599 = vmatmul.bf16.gmra.mxu0 %v2138
    %v11600 = vpop.f32.mrf.mxu0
    %v11601 = vadd.f32 %v11552, %v11600
    %v11602 = vpop.f32.mrf.mxu0
    %v11603 = vadd.f32 %v11554, %v11602
    %11604 = vmatmul.bf16.gmra.mxu0 %v2165
    %v11605 = vpop.f32.mrf.mxu0
    %v11606 = vadd.f32 %v11557, %v11605
    %v11607 = vpop.f32.mrf.mxu0
    %v11608 = vadd.f32 %v11559, %v11607
    %11609 = vdwg.mxu0
    %11610 = vmatpush.bf16.msra.mxu0 %v5621
    %11611 = vmatpush.bf16.msra.mxu0 %v5617
    %11612 = vmatpush.bf16.msra.mxu0 %v5613
    %11613 = vmatpush.bf16.msra.mxu0 %v5609
    %11614 = vmatpush.bf16.msra.mxu0 %v5605
    %11615 = vmatpush.bf16.msra.mxu0 %v5601
    %11616 = vmatpush.bf16.msra.mxu0 %v5597
    %11617 = vmatpush.bf16.msra.mxu0 %v5593
    %11618 = vmatmul.bf16.gmra.mxu0 %v1977
    %v11619 = vpop.f32.mrf.mxu0
    %v11620 = vadd.f32 %v11571, %v11619
    %v11621 = vpop.f32.mrf.mxu0
    %v11622 = vadd.f32 %v11573, %v11621
    %11623 = vmatmul.bf16.gmra.mxu0 %v2004
    %v11624 = vpop.f32.mrf.mxu0
    %v11625 = vadd.f32 %v11576, %v11624
    %v11626 = vpop.f32.mrf.mxu0
    %v11627 = vadd.f32 %v11578, %v11626
    %11628 = vmatmul.bf16.gmra.mxu0 %v2031
    %v11629 = vpop.f32.mrf.mxu0
    %v11630 = vadd.f32 %v11581, %v11629
    %v11631 = vpop.f32.mrf.mxu0
    %v11632 = vadd.f32 %v11583, %v11631
    %11633 = vmatmul.bf16.gmra.mxu0 %v2058
    %v11634 = vpop.f32.mrf.mxu0
    %v11635 = vadd.f32 %v11586, %v11634
    %v11636 = vpop.f32.mrf.mxu0
    %v11637 = vadd.f32 %v11588, %v11636
    %11638 = vmatmul.bf16.gmra.mxu0 %v2085
    %v11639 = vpop.f32.mrf.mxu0
    %v11640 = vadd.f32 %v11591, %v11639
    %v11641 = vpop.f32.mrf.mxu0
    %v11642 = vadd.f32 %v11593, %v11641
    %11643 = vmatmul.bf16.gmra.mxu0 %v2112
    %v11644 = vpop.f32.mrf.mxu0
    %v11645 = vadd.f32 %v11596, %v11644
    %v11646 = vpop.f32.mrf.mxu0
    %v11647 = vadd.f32 %v11598, %v11646
    %11648 = vmatmul.bf16.gmra.mxu0 %v2139
    %v11649 = vpop.f32.mrf.mxu0
    %v11650 = vadd.f32 %v11601, %v11649
    %v11651 = vpop.f32.mrf.mxu0
    %v11652 = vadd.f32 %v11603, %v11651
    %11653 = vmatmul.bf16.gmra.mxu0 %v2166
    %v11654 = vpop.f32.mrf.mxu0
    %v11655 = vadd.f32 %v11606, %v11654
    %v11656 = vpop.f32.mrf.mxu0
    %v11657 = vadd.f32 %v11608, %v11656
    %11658 = vdwg.mxu0
    %11659 = vmatpush.bf16.msra.mxu0 %v5653
    %11660 = vmatpush.bf16.msra.mxu0 %v5649
    %11661 = vmatpush.bf16.msra.mxu0 %v5645
    %11662 = vmatpush.bf16.msra.mxu0 %v5641
    %11663 = vmatpush.bf16.msra.mxu0 %v5637
    %11664 = vmatpush.bf16.msra.mxu0 %v5633
    %11665 = vmatpush.bf16.msra.mxu0 %v5629
    %11666 = vmatpush.bf16.msra.mxu0 %v5625
    %11667 = vmatmul.bf16.gmra.mxu0 %v1978
    %v11668 = vpop.f32.mrf.mxu0
    %v11669 = vadd.f32 %v11620, %v11668
    %v11670 = vpop.f32.mrf.mxu0
    %v11671 = vadd.f32 %v11622, %v11670
    %11672 = vmatmul.bf16.gmra.mxu0 %v2005
    %v11673 = vpop.f32.mrf.mxu0
    %v11674 = vadd.f32 %v11625, %v11673
    %v11675 = vpop.f32.mrf.mxu0
    %v11676 = vadd.f32 %v11627, %v11675
    %11677 = vmatmul.bf16.gmra.mxu0 %v2032
    %v11678 = vpop.f32.mrf.mxu0
    %v11679 = vadd.f32 %v11630, %v11678
    %v11680 = vpop.f32.mrf.mxu0
    %v11681 = vadd.f32 %v11632, %v11680
    %11682 = vmatmul.bf16.gmra.mxu0 %v2059
    %v11683 = vpop.f32.mrf.mxu0
    %v11684 = vadd.f32 %v11635, %v11683
    %v11685 = vpop.f32.mrf.mxu0
    %v11686 = vadd.f32 %v11637, %v11685
    %11687 = vmatmul.bf16.gmra.mxu0 %v2086
    %v11688 = vpop.f32.mrf.mxu0
    %v11689 = vadd.f32 %v11640, %v11688
    %v11690 = vpop.f32.mrf.mxu0
    %v11691 = vadd.f32 %v11642, %v11690
    %11692 = vmatmul.bf16.gmra.mxu0 %v2113
    %v11693 = vpop.f32.mrf.mxu0
    %v11694 = vadd.f32 %v11645, %v11693
    %v11695 = vpop.f32.mrf.mxu0
    %v11696 = vadd.f32 %v11647, %v11695
    %11697 = vmatmul.bf16.gmra.mxu0 %v2140
    %v11698 = vpop.f32.mrf.mxu0
    %v11699 = vadd.f32 %v11650, %v11698
    %v11700 = vpop.f32.mrf.mxu0
    %v11701 = vadd.f32 %v11652, %v11700
    %11702 = vmatmul.bf16.gmra.mxu0 %v2167
    %v11703 = vpop.f32.mrf.mxu0
    %v11704 = vadd.f32 %v11655, %v11703
    %v11705 = vpop.f32.mrf.mxu0
    %v11706 = vadd.f32 %v11657, %v11705
    %11707 = vdwg.mxu0
    %11708 = vmatpush.bf16.msra.mxu0 %v5685
    %11709 = vmatpush.bf16.msra.mxu0 %v5681
    %11710 = vmatpush.bf16.msra.mxu0 %v5677
    %11711 = vmatpush.bf16.msra.mxu0 %v5673
    %11712 = vmatpush.bf16.msra.mxu0 %v5669
    %11713 = vmatpush.bf16.msra.mxu0 %v5665
    %11714 = vmatpush.bf16.msra.mxu0 %v5661
    %11715 = vmatpush.bf16.msra.mxu0 %v5657
    %11716 = vmatmul.bf16.gmra.mxu0 %v1979
    %v11717 = vpop.f32.mrf.mxu0
    %v11718 = vadd.f32 %v11669, %v11717
    %v11719 = vpop.f32.mrf.mxu0
    %v11720 = vadd.f32 %v11671, %v11719
    %11721 = vmatmul.bf16.gmra.mxu0 %v2006
    %v11722 = vpop.f32.mrf.mxu0
    %v11723 = vadd.f32 %v11674, %v11722
    %v11724 = vpop.f32.mrf.mxu0
    %v11725 = vadd.f32 %v11676, %v11724
    %11726 = vmatmul.bf16.gmra.mxu0 %v2033
    %v11727 = vpop.f32.mrf.mxu0
    %v11728 = vadd.f32 %v11679, %v11727
    %v11729 = vpop.f32.mrf.mxu0
    %v11730 = vadd.f32 %v11681, %v11729
    %11731 = vmatmul.bf16.gmra.mxu0 %v2060
    %v11732 = vpop.f32.mrf.mxu0
    %v11733 = vadd.f32 %v11684, %v11732
    %v11734 = vpop.f32.mrf.mxu0
    %v11735 = vadd.f32 %v11686, %v11734
    %11736 = vmatmul.bf16.gmra.mxu0 %v2087
    %v11737 = vpop.f32.mrf.mxu0
    %v11738 = vadd.f32 %v11689, %v11737
    %v11739 = vpop.f32.mrf.mxu0
    %v11740 = vadd.f32 %v11691, %v11739
    %11741 = vmatmul.bf16.gmra.mxu0 %v2114
    %v11742 = vpop.f32.mrf.mxu0
    %v11743 = vadd.f32 %v11694, %v11742
    %v11744 = vpop.f32.mrf.mxu0
    %v11745 = vadd.f32 %v11696, %v11744
    %11746 = vmatmul.bf16.gmra.mxu0 %v2141
    %v11747 = vpop.f32.mrf.mxu0
    %v11748 = vadd.f32 %v11699, %v11747
    %v11749 = vpop.f32.mrf.mxu0
    %v11750 = vadd.f32 %v11701, %v11749
    %11751 = vmatmul.bf16.gmra.mxu0 %v2168
    %v11752 = vpop.f32.mrf.mxu0
    %v11753 = vadd.f32 %v11704, %v11752
    %v11754 = vpop.f32.mrf.mxu0
    %v11755 = vadd.f32 %v11706, %v11754
    %11756 = vdwg.mxu0
    %11757 = vmatpush.bf16.msra.mxu0 %v5717
    %11758 = vmatpush.bf16.msra.mxu0 %v5713
    %11759 = vmatpush.bf16.msra.mxu0 %v5709
    %11760 = vmatpush.bf16.msra.mxu0 %v5705
    %11761 = vmatpush.bf16.msra.mxu0 %v5701
    %11762 = vmatpush.bf16.msra.mxu0 %v5697
    %11763 = vmatpush.bf16.msra.mxu0 %v5693
    %11764 = vmatpush.bf16.msra.mxu0 %v5689
    %11765 = vmatmul.bf16.gmra.mxu0 %v1980
    %v11766 = vpop.f32.mrf.mxu0
    %v11767 = vadd.f32 %v11718, %v11766
    %v11768 = vpop.f32.mrf.mxu0
    %v11769 = vadd.f32 %v11720, %v11768
    %11770 = vmatmul.bf16.gmra.mxu0 %v2007
    %v11771 = vpop.f32.mrf.mxu0
    %v11772 = vadd.f32 %v11723, %v11771
    %v11773 = vpop.f32.mrf.mxu0
    %v11774 = vadd.f32 %v11725, %v11773
    %11775 = vmatmul.bf16.gmra.mxu0 %v2034
    %v11776 = vpop.f32.mrf.mxu0
    %v11777 = vadd.f32 %v11728, %v11776
    %v11778 = vpop.f32.mrf.mxu0
    %v11779 = vadd.f32 %v11730, %v11778
    %11780 = vmatmul.bf16.gmra.mxu0 %v2061
    %v11781 = vpop.f32.mrf.mxu0
    %v11782 = vadd.f32 %v11733, %v11781
    %v11783 = vpop.f32.mrf.mxu0
    %v11784 = vadd.f32 %v11735, %v11783
    %11785 = vmatmul.bf16.gmra.mxu0 %v2088
    %v11786 = vpop.f32.mrf.mxu0
    %v11787 = vadd.f32 %v11738, %v11786
    %v11788 = vpop.f32.mrf.mxu0
    %v11789 = vadd.f32 %v11740, %v11788
    %11790 = vmatmul.bf16.gmra.mxu0 %v2115
    %v11791 = vpop.f32.mrf.mxu0
    %v11792 = vadd.f32 %v11743, %v11791
    %v11793 = vpop.f32.mrf.mxu0
    %v11794 = vadd.f32 %v11745, %v11793
    %11795 = vmatmul.bf16.gmra.mxu0 %v2142
    %v11796 = vpop.f32.mrf.mxu0
    %v11797 = vadd.f32 %v11748, %v11796
    %v11798 = vpop.f32.mrf.mxu0
    %v11799 = vadd.f32 %v11750, %v11798
    %11800 = vmatmul.bf16.gmra.mxu0 %v2169
    %v11801 = vpop.f32.mrf.mxu0
    %v11802 = vadd.f32 %v11753, %v11801
    %v11803 = vpop.f32.mrf.mxu0
    %v11804 = vadd.f32 %v11755, %v11803
    %11805 = vdwg.mxu0
    %11806 = vmatpush.bf16.msra.mxu0 %v5749
    %11807 = vmatpush.bf16.msra.mxu0 %v5745
    %11808 = vmatpush.bf16.msra.mxu0 %v5741
    %11809 = vmatpush.bf16.msra.mxu0 %v5737
    %11810 = vmatpush.bf16.msra.mxu0 %v5733
    %11811 = vmatpush.bf16.msra.mxu0 %v5729
    %11812 = vmatpush.bf16.msra.mxu0 %v5725
    %11813 = vmatpush.bf16.msra.mxu0 %v5721
    %11814 = vmatmul.bf16.gmra.mxu0 %v1981
    %v11815 = vpop.f32.mrf.mxu0
    %v11816 = vadd.f32 %v11767, %v11815
    %v11817 = vpop.f32.mrf.mxu0
    %v11818 = vadd.f32 %v11769, %v11817
    %11819 = vmatmul.bf16.gmra.mxu0 %v2008
    %v11820 = vpop.f32.mrf.mxu0
    %v11821 = vadd.f32 %v11772, %v11820
    %v11822 = vpop.f32.mrf.mxu0
    %v11823 = vadd.f32 %v11774, %v11822
    %11824 = vmatmul.bf16.gmra.mxu0 %v2035
    %v11825 = vpop.f32.mrf.mxu0
    %v11826 = vadd.f32 %v11777, %v11825
    %v11827 = vpop.f32.mrf.mxu0
    %v11828 = vadd.f32 %v11779, %v11827
    %11829 = vmatmul.bf16.gmra.mxu0 %v2062
    %v11830 = vpop.f32.mrf.mxu0
    %v11831 = vadd.f32 %v11782, %v11830
    %v11832 = vpop.f32.mrf.mxu0
    %v11833 = vadd.f32 %v11784, %v11832
    %11834 = vmatmul.bf16.gmra.mxu0 %v2089
    %v11835 = vpop.f32.mrf.mxu0
    %v11836 = vadd.f32 %v11787, %v11835
    %v11837 = vpop.f32.mrf.mxu0
    %v11838 = vadd.f32 %v11789, %v11837
    %11839 = vmatmul.bf16.gmra.mxu0 %v2116
    %v11840 = vpop.f32.mrf.mxu0
    %v11841 = vadd.f32 %v11792, %v11840
    %v11842 = vpop.f32.mrf.mxu0
    %v11843 = vadd.f32 %v11794, %v11842
    %11844 = vmatmul.bf16.gmra.mxu0 %v2143
    %v11845 = vpop.f32.mrf.mxu0
    %v11846 = vadd.f32 %v11797, %v11845
    %v11847 = vpop.f32.mrf.mxu0
    %v11848 = vadd.f32 %v11799, %v11847
    %11849 = vmatmul.bf16.gmra.mxu0 %v2170
    %v11850 = vpop.f32.mrf.mxu0
    %v11851 = vadd.f32 %v11802, %v11850
    %v11852 = vpop.f32.mrf.mxu0
    %v11853 = vadd.f32 %v11804, %v11852
    %11854 = vdwg.mxu0
    %11855 = vmatpush.bf16.msra.mxu0 %v5781
    %11856 = vmatpush.bf16.msra.mxu0 %v5777
    %11857 = vmatpush.bf16.msra.mxu0 %v5773
    %11858 = vmatpush.bf16.msra.mxu0 %v5769
    %11859 = vmatpush.bf16.msra.mxu0 %v5765
    %11860 = vmatpush.bf16.msra.mxu0 %v5761
    %11861 = vmatpush.bf16.msra.mxu0 %v5757
    %11862 = vmatpush.bf16.msra.mxu0 %v5753
    %11863 = vmatmul.bf16.gmra.mxu0 %v1982
    %v11864 = vpop.f32.mrf.mxu0
    %v11865 = vadd.f32 %v11816, %v11864
    %v11866 = vpop.f32.mrf.mxu0
    %v11867 = vadd.f32 %v11818, %v11866
    %11868 = vmatmul.bf16.gmra.mxu0 %v2009
    %v11869 = vpop.f32.mrf.mxu0
    %v11870 = vadd.f32 %v11821, %v11869
    %v11871 = vpop.f32.mrf.mxu0
    %v11872 = vadd.f32 %v11823, %v11871
    %11873 = vmatmul.bf16.gmra.mxu0 %v2036
    %v11874 = vpop.f32.mrf.mxu0
    %v11875 = vadd.f32 %v11826, %v11874
    %v11876 = vpop.f32.mrf.mxu0
    %v11877 = vadd.f32 %v11828, %v11876
    %11878 = vmatmul.bf16.gmra.mxu0 %v2063
    %v11879 = vpop.f32.mrf.mxu0
    %v11880 = vadd.f32 %v11831, %v11879
    %v11881 = vpop.f32.mrf.mxu0
    %v11882 = vadd.f32 %v11833, %v11881
    %11883 = vmatmul.bf16.gmra.mxu0 %v2090
    %v11884 = vpop.f32.mrf.mxu0
    %v11885 = vadd.f32 %v11836, %v11884
    %v11886 = vpop.f32.mrf.mxu0
    %v11887 = vadd.f32 %v11838, %v11886
    %11888 = vmatmul.bf16.gmra.mxu0 %v2117
    %v11889 = vpop.f32.mrf.mxu0
    %v11890 = vadd.f32 %v11841, %v11889
    %v11891 = vpop.f32.mrf.mxu0
    %v11892 = vadd.f32 %v11843, %v11891
    %11893 = vmatmul.bf16.gmra.mxu0 %v2144
    %v11894 = vpop.f32.mrf.mxu0
    %v11895 = vadd.f32 %v11846, %v11894
    %v11896 = vpop.f32.mrf.mxu0
    %v11897 = vadd.f32 %v11848, %v11896
    %11898 = vmatmul.bf16.gmra.mxu0 %v2171
    %v11899 = vpop.f32.mrf.mxu0
    %v11900 = vadd.f32 %v11851, %v11899
    %v11901 = vpop.f32.mrf.mxu0
    %v11902 = vadd.f32 %v11853, %v11901
    %11903 = vdwg.mxu0
    %11904 = vmatpush.bf16.msra.mxu0 %v5813
    %11905 = vmatpush.bf16.msra.mxu0 %v5809
    %11906 = vmatpush.bf16.msra.mxu0 %v5805
    %11907 = vmatpush.bf16.msra.mxu0 %v5801
    %11908 = vmatpush.bf16.msra.mxu0 %v5797
    %11909 = vmatpush.bf16.msra.mxu0 %v5793
    %11910 = vmatpush.bf16.msra.mxu0 %v5789
    %11911 = vmatpush.bf16.msra.mxu0 %v5785
    %11912 = vmatmul.bf16.gmra.mxu0 %v1983
    %v11913 = vpop.f32.mrf.mxu0
    %v11914 = vadd.f32 %v11865, %v11913
    %v11915 = vpop.f32.mrf.mxu0
    %v11916 = vadd.f32 %v11867, %v11915
    %11917 = vmatmul.bf16.gmra.mxu0 %v2010
    %v11918 = vpop.f32.mrf.mxu0
    %v11919 = vadd.f32 %v11870, %v11918
    %v11920 = vpop.f32.mrf.mxu0
    %v11921 = vadd.f32 %v11872, %v11920
    %11922 = vmatmul.bf16.gmra.mxu0 %v2037
    %v11923 = vpop.f32.mrf.mxu0
    %v11924 = vadd.f32 %v11875, %v11923
    %v11925 = vpop.f32.mrf.mxu0
    %v11926 = vadd.f32 %v11877, %v11925
    %11927 = vmatmul.bf16.gmra.mxu0 %v2064
    %v11928 = vpop.f32.mrf.mxu0
    %v11929 = vadd.f32 %v11880, %v11928
    %v11930 = vpop.f32.mrf.mxu0
    %v11931 = vadd.f32 %v11882, %v11930
    %11932 = vmatmul.bf16.gmra.mxu0 %v2091
    %v11933 = vpop.f32.mrf.mxu0
    %v11934 = vadd.f32 %v11885, %v11933
    %v11935 = vpop.f32.mrf.mxu0
    %v11936 = vadd.f32 %v11887, %v11935
    %11937 = vmatmul.bf16.gmra.mxu0 %v2118
    %v11938 = vpop.f32.mrf.mxu0
    %v11939 = vadd.f32 %v11890, %v11938
    %v11940 = vpop.f32.mrf.mxu0
    %v11941 = vadd.f32 %v11892, %v11940
    %11942 = vmatmul.bf16.gmra.mxu0 %v2145
    %v11943 = vpop.f32.mrf.mxu0
    %v11944 = vadd.f32 %v11895, %v11943
    %v11945 = vpop.f32.mrf.mxu0
    %v11946 = vadd.f32 %v11897, %v11945
    %11947 = vmatmul.bf16.gmra.mxu0 %v2172
    %v11948 = vpop.f32.mrf.mxu0
    %v11949 = vadd.f32 %v11900, %v11948
    %v11950 = vpop.f32.mrf.mxu0
    %v11951 = vadd.f32 %v11902, %v11950
    %11952 = vdwg.mxu0
    %11953 = vmatpush.bf16.msra.mxu0 %v5845
    %11954 = vmatpush.bf16.msra.mxu0 %v5841
    %11955 = vmatpush.bf16.msra.mxu0 %v5837
    %11956 = vmatpush.bf16.msra.mxu0 %v5833
    %11957 = vmatpush.bf16.msra.mxu0 %v5829
    %11958 = vmatpush.bf16.msra.mxu0 %v5825
    %11959 = vmatpush.bf16.msra.mxu0 %v5821
    %11960 = vmatpush.bf16.msra.mxu0 %v5817
    %11961 = vmatmul.bf16.gmra.mxu0 %v1984
    %v11962 = vpop.f32.mrf.mxu0
    %v11963 = vadd.f32 %v11914, %v11962
    %v11964 = vpop.f32.mrf.mxu0
    %v11965 = vadd.f32 %v11916, %v11964
    %11966 = vmatmul.bf16.gmra.mxu0 %v2011
    %v11967 = vpop.f32.mrf.mxu0
    %v11968 = vadd.f32 %v11919, %v11967
    %v11969 = vpop.f32.mrf.mxu0
    %v11970 = vadd.f32 %v11921, %v11969
    %11971 = vmatmul.bf16.gmra.mxu0 %v2038
    %v11972 = vpop.f32.mrf.mxu0
    %v11973 = vadd.f32 %v11924, %v11972
    %v11974 = vpop.f32.mrf.mxu0
    %v11975 = vadd.f32 %v11926, %v11974
    %11976 = vmatmul.bf16.gmra.mxu0 %v2065
    %v11977 = vpop.f32.mrf.mxu0
    %v11978 = vadd.f32 %v11929, %v11977
    %v11979 = vpop.f32.mrf.mxu0
    %v11980 = vadd.f32 %v11931, %v11979
    %11981 = vmatmul.bf16.gmra.mxu0 %v2092
    %v11982 = vpop.f32.mrf.mxu0
    %v11983 = vadd.f32 %v11934, %v11982
    %v11984 = vpop.f32.mrf.mxu0
    %v11985 = vadd.f32 %v11936, %v11984
    %11986 = vmatmul.bf16.gmra.mxu0 %v2119
    %v11987 = vpop.f32.mrf.mxu0
    %v11988 = vadd.f32 %v11939, %v11987
    %v11989 = vpop.f32.mrf.mxu0
    %v11990 = vadd.f32 %v11941, %v11989
    %11991 = vmatmul.bf16.gmra.mxu0 %v2146
    %v11992 = vpop.f32.mrf.mxu0
    %v11993 = vadd.f32 %v11944, %v11992
    %v11994 = vpop.f32.mrf.mxu0
    %v11995 = vadd.f32 %v11946, %v11994
    %11996 = vmatmul.bf16.gmra.mxu0 %v2173
    %v11997 = vpop.f32.mrf.mxu0
    %v11998 = vadd.f32 %v11949, %v11997
    %v11999 = vpop.f32.mrf.mxu0
    %v12000 = vadd.f32 %v11951, %v11999
    %12001 = vdwg.mxu0
    %v12002 = vadd.f32 %v150, %v7994
    %v12003 = vadd.f32 %v151, %v9317
    %v12004 = vadd.f32 %v152, %v10640
    %v12005 = vadd.f32 %v153, %v11963
    %v12006 = vadd.f32 %v154, %v7996
    %v12007 = vadd.f32 %v155, %v9319
    %v12008 = vadd.f32 %v156, %v10642
    %v12009 = vadd.f32 %v157, %v11965
    %v12010 = vadd.f32 %v158, %v7999
    %v12011 = vadd.f32 %v159, %v9322
    %v12012 = vadd.f32 %v160, %v10645
    %v12013 = vadd.f32 %v161, %v11968
    %v12014 = vadd.f32 %v162, %v8001
    %v12015 = vadd.f32 %v163, %v9324
    %v12016 = vadd.f32 %v164, %v10647
    %v12017 = vadd.f32 %v165, %v11970
    %v12018 = vadd.f32 %v166, %v8004
    %v12019 = vadd.f32 %v167, %v9327
    %v12020 = vadd.f32 %v168, %v10650
    %v12021 = vadd.f32 %v169, %v11973
    %v12022 = vadd.f32 %v170, %v8006
    %v12023 = vadd.f32 %v171, %v9329
    %v12024 = vadd.f32 %v172, %v10652
    %v12025 = vadd.f32 %v173, %v11975
    %v12026 = vadd.f32 %v174, %v8009
    %v12027 = vadd.f32 %v175, %v9332
    %v12028 = vadd.f32 %v176, %v10655
    %v12029 = vadd.f32 %v177, %v11978
    %v12030 = vadd.f32 %v178, %v8011
    %v12031 = vadd.f32 %v179, %v9334
    %v12032 = vadd.f32 %v180, %v10657
    %v12033 = vadd.f32 %v181, %v11980
    %v12034 = vadd.f32 %v182, %v8014
    %v12035 = vadd.f32 %v183, %v9337
    %v12036 = vadd.f32 %v184, %v10660
    %v12037 = vadd.f32 %v185, %v11983
    %v12038 = vadd.f32 %v186, %v8016
    %v12039 = vadd.f32 %v187, %v9339
    %v12040 = vadd.f32 %v188, %v10662
    %v12041 = vadd.f32 %v189, %v11985
    %v12042 = vadd.f32 %v190, %v8019
    %v12043 = vadd.f32 %v191, %v9342
    %v12044 = vadd.f32 %v192, %v10665
    %v12045 = vadd.f32 %v193, %v11988
    %v12046 = vadd.f32 %v194, %v8021
    %v12047 = vadd.f32 %v195, %v9344
    %v12048 = vadd.f32 %v196, %v10667
    %v12049 = vadd.f32 %v197, %v11990
    %v12050 = vadd.f32 %v198, %v8024
    %v12051 = vadd.f32 %v199, %v9347
    %v12052 = vadd.f32 %v200, %v10670
    %v12053 = vadd.f32 %v201, %v11993
    %v12054 = vadd.f32 %v202, %v8026
    %v12055 = vadd.f32 %v203, %v9349
    %v12056 = vadd.f32 %v204, %v10672
    %v12057 = vadd.f32 %v205, %v11995
    %v12058 = vadd.f32 %v206, %v8029
    %v12059 = vadd.f32 %v207, %v9352
    %v12060 = vadd.f32 %v208, %v10675
    %v12061 = vadd.f32 %v209, %v11998
    %v12062 = vadd.f32 %v210, %v8031
    %v12063 = vadd.f32 %v211, %v9354
    %v12064 = vadd.f32 %v212, %v10677
    %v12065 = vadd.f32 %v213, %v12000
    %12066 = vst [vmem:[#allocation2] sm:$0xff] %v12002
    %12067 = vst [vmem:[#allocation2 + $0x8] sm:$0xff] %v12003
    %12068 = vst [vmem:[#allocation2 + $0x10] sm:$0xff] %v12004
    %12069 = vst [vmem:[#allocation2 + $0x18] sm:$0xff] %v12005
    %12070 = vst [vmem:[#allocation2 + $0x20] sm:$0xff] %v12006
    %12071 = vst [vmem:[#allocation2 + $0x28] sm:$0xff] %v12007
    %12072 = vst [vmem:[#allocation2 + $0x30] sm:$0xff] %v12008
    %12073 = vst [vmem:[#allocation2 + $0x38] sm:$0xff] %v12009
    %12074 = vst [vmem:[#allocation2 + $0x40] sm:$0xff] %v12010
    %12075 = vst [vmem:[#allocation2 + $0x48] sm:$0xff] %v12011
    %12076 = vst [vmem:[#allocation2 + $0x50] sm:$0xff] %v12012
    %12077 = vst [vmem:[#allocation2 + $0x58] sm:$0xff] %v12013
    %12078 = vst [vmem:[#allocation2 + $0x60] sm:$0xff] %v12014
    %12079 = vst [vmem:[#allocation2 + $0x68] sm:$0xff] %v12015
    %12080 = vst [vmem:[#allocation2 + $0x70] sm:$0xff] %v12016
    %12081 = vst [vmem:[#allocation2 + $0x78] sm:$0xff] %v12017
    %12082 = vst [vmem:[#allocation2 + $0x80] sm:$0xff] %v12018
    %12083 = vst [vmem:[#allocation2 + $0x88] sm:$0xff] %v12019
    %12084 = vst [vmem:[#allocation2 + $0x90] sm:$0xff] %v12020
    %12085 = vst [vmem:[#allocation2 + $0x98] sm:$0xff] %v12021
    %12086 = vst [vmem:[#allocation2 + $0xa0] sm:$0xff] %v12022
    %12087 = vst [vmem:[#allocation2 + $0xa8] sm:$0xff] %v12023
    %12088 = vst [vmem:[#allocation2 + $0xb0] sm:$0xff] %v12024
    %12089 = vst [vmem:[#allocation2 + $0xb8] sm:$0xff] %v12025
    %12090 = vst [vmem:[#allocation2 + $0xc0] sm:$0xff] %v12026
    %12091 = vst [vmem:[#allocation2 + $0xc8] sm:$0xff] %v12027
    %12092 = vst [vmem:[#allocation2 + $0xd0] sm:$0xff] %v12028
    %12093 = vst [vmem:[#allocation2 + $0xd8] sm:$0xff] %v12029
    %12094 = vst [vmem:[#allocation2 + $0xe0] sm:$0xff] %v12030
    %12095 = vst [vmem:[#allocation2 + $0xe8] sm:$0xff] %v12031
    %12096 = vst [vmem:[#allocation2 + $0xf0] sm:$0xff] %v12032
    %12097 = vst [vmem:[#allocation2 + $0xf8] sm:$0xff] %v12033
    %12098 = vst [vmem:[#allocation2 + $0x100] sm:$0xff] %v12034
    %12099 = vst [vmem:[#allocation2 + $0x108] sm:$0xff] %v12035
    %12100 = vst [vmem:[#allocation2 + $0x110] sm:$0xff] %v12036
    %12101 = vst [vmem:[#allocation2 + $0x118] sm:$0xff] %v12037
    %12102 = vst [vmem:[#allocation2 + $0x120] sm:$0xff] %v12038
    %12103 = vst [vmem:[#allocation2 + $0x128] sm:$0xff] %v12039
    %12104 = vst [vmem:[#allocation2 + $0x130] sm:$0xff] %v12040
    %12105 = vst [vmem:[#allocation2 + $0x138] sm:$0xff] %v12041
    %12106 = vst [vmem:[#allocation2 + $0x140] sm:$0xff] %v12042
    %12107 = vst [vmem:[#allocation2 + $0x148] sm:$0xff] %v12043
    %12108 = vst [vmem:[#allocation2 + $0x150] sm:$0xff] %v12044
    %12109 = vst [vmem:[#allocation2 + $0x158] sm:$0xff] %v12045
    %12110 = vst [vmem:[#allocation2 + $0x160] sm:$0xff] %v12046
    %12111 = vst [vmem:[#allocation2 + $0x168] sm:$0xff] %v12047
    %12112 = vst [vmem:[#allocation2 + $0x170] sm:$0xff] %v12048
    %12113 = vst [vmem:[#allocation2 + $0x178] sm:$0xff] %v12049
    %12114 = vst [vmem:[#allocation2 + $0x180] sm:$0xff] %v12050
    %12115 = vst [vmem:[#allocation2 + $0x188] sm:$0xff] %v12051
    %12116 = vst [vmem:[#allocation2 + $0x190] sm:$0xff] %v12052
    %12117 = vst [vmem:[#allocation2 + $0x198] sm:$0xff] %v12053
    %12118 = vst [vmem:[#allocation2 + $0x1a0] sm:$0xff] %v12054
    %12119 = vst [vmem:[#allocation2 + $0x1a8] sm:$0xff] %v12055
    %12120 = vst [vmem:[#allocation2 + $0x1b0] sm:$0xff] %v12056
    %12121 = vst [vmem:[#allocation2 + $0x1b8] sm:$0xff] %v12057
    %12122 = vst [vmem:[#allocation2 + $0x1c0] sm:$0xff] %v12058
    %12123 = vst [vmem:[#allocation2 + $0x1c8] sm:$0xff] %v12059
    %12124 = vst [vmem:[#allocation2 + $0x1d0] sm:$0xff] %v12060
    %12125 = vst [vmem:[#allocation2 + $0x1d8] sm:$0xff] %v12061
    %12126 = vst [vmem:[#allocation2 + $0x1e0] sm:$0xff] %v12062
    %12127 = vst [vmem:[#allocation2 + $0x1e8] sm:$0xff] %v12063
    %12128 = vst [vmem:[#allocation2 + $0x1f0] sm:$0xff] %v12064
    %12129 = vst [vmem:[#allocation2 + $0x1f8] sm:$0xff] %v12065
    // Predicated region
    $region38: #{tpu_custom_call.1} parent=1 // pred_check
      %p12130 = pneg %p82
    $region39: #{tpu_custom_call.1} parent=1 // pred_check_branch
      %12132 = sbr.rel (%p12130) target = $region41
    $region40: #{tpu_custom_call.1} parent=1 // pred_region
      %v12133 = vld [vmem:[#allocation2] sm:$0xff]
      %v12134 = vld [vmem:[#allocation2 + $0x8] sm:$0xff]
      %v12135 = vld [vmem:[#allocation2 + $0x10] sm:$0xff]
      %v12136 = vld [vmem:[#allocation2 + $0x18] sm:$0xff]
      %v12137 = vld [vmem:[#allocation2 + $0x20] sm:$0xff]
      %v12138 = vld [vmem:[#allocation2 + $0x28] sm:$0xff]
      %v12139 = vld [vmem:[#allocation2 + $0x30] sm:$0xff]
      %v12140 = vld [vmem:[#allocation2 + $0x38] sm:$0xff]
      %v12141 = vld [vmem:[#allocation2 + $0x40] sm:$0xff]
      %v12142 = vld [vmem:[#allocation2 + $0x48] sm:$0xff]
      %v12143 = vld [vmem:[#allocation2 + $0x50] sm:$0xff]
      %v12144 = vld [vmem:[#allocation2 + $0x58] sm:$0xff]
      %v12145 = vld [vmem:[#allocation2 + $0x60] sm:$0xff]
      %v12146 = vld [vmem:[#allocation2 + $0x68] sm:$0xff]
      %v12147 = vld [vmem:[#allocation2 + $0x70] sm:$0xff]
      %v12148 = vld [vmem:[#allocation2 + $0x78] sm:$0xff]
      %v12149 = vld [vmem:[#allocation2 + $0x80] sm:$0xff]
      %v12150 = vld [vmem:[#allocation2 + $0x88] sm:$0xff]
      %v12151 = vld [vmem:[#allocation2 + $0x90] sm:$0xff]
      %v12152 = vld [vmem:[#allocation2 + $0x98] sm:$0xff]
      %v12153 = vld [vmem:[#allocation2 + $0xa0] sm:$0xff]
      %v12154 = vld [vmem:[#allocation2 + $0xa8] sm:$0xff]
      %v12155 = vld [vmem:[#allocation2 + $0xb0] sm:$0xff]
      %v12156 = vld [vmem:[#allocation2 + $0xb8] sm:$0xff]
      %v12157 = vld [vmem:[#allocation2 + $0xc0] sm:$0xff]
      %v12158 = vld [vmem:[#allocation2 + $0xc8] sm:$0xff]
      %v12159 = vld [vmem:[#allocation2 + $0xd0] sm:$0xff]
      %v12160 = vld [vmem:[#allocation2 + $0xd8] sm:$0xff]
      %v12161 = vld [vmem:[#allocation2 + $0xe0] sm:$0xff]
      %v12162 = vld [vmem:[#allocation2 + $0xe8] sm:$0xff]
      %v12163 = vld [vmem:[#allocation2 + $0xf0] sm:$0xff]
      %v12164 = vld [vmem:[#allocation2 + $0xf8] sm:$0xff]
      %v12165 = vld [vmem:[#allocation2 + $0x100] sm:$0xff]
      %v12166 = vld [vmem:[#allocation2 + $0x108] sm:$0xff]
      %v12167 = vld [vmem:[#allocation2 + $0x110] sm:$0xff]
      %v12168 = vld [vmem:[#allocation2 + $0x118] sm:$0xff]
      %v12169 = vld [vmem:[#allocation2 + $0x120] sm:$0xff]
      %v12170 = vld [vmem:[#allocation2 + $0x128] sm:$0xff]
      %v12171 = vld [vmem:[#allocation2 + $0x130] sm:$0xff]
      %v12172 = vld [vmem:[#allocation2 + $0x138] sm:$0xff]
      %v12173 = vld [vmem:[#allocation2 + $0x140] sm:$0xff]
      %v12174 = vld [vmem:[#allocation2 + $0x148] sm:$0xff]
      %v12175 = vld [vmem:[#allocation2 + $0x150] sm:$0xff]
      %v12176 = vld [vmem:[#allocation2 + $0x158] sm:$0xff]
      %v12177 = vld [vmem:[#allocation2 + $0x160] sm:$0xff]
      %v12178 = vld [vmem:[#allocation2 + $0x168] sm:$0xff]
      %v12179 = vld [vmem:[#allocation2 + $0x170] sm:$0xff]
      %v12180 = vld [vmem:[#allocation2 + $0x178] sm:$0xff]
      %v12181 = vld [vmem:[#allocation2 + $0x180] sm:$0xff]
      %v12182 = vld [vmem:[#allocation2 + $0x188] sm:$0xff]
      %v12183 = vld [vmem:[#allocation2 + $0x190] sm:$0xff]
      %v12184 = vld [vmem:[#allocation2 + $0x198] sm:$0xff]
      %v12185 = vld [vmem:[#allocation2 + $0x1a0] sm:$0xff]
      %v12186 = vld [vmem:[#allocation2 + $0x1a8] sm:$0xff]
      %v12187 = vld [vmem:[#allocation2 + $0x1b0] sm:$0xff]
      %v12188 = vld [vmem:[#allocation2 + $0x1b8] sm:$0xff]
      %v12189 = vld [vmem:[#allocation2 + $0x1c0] sm:$0xff]
      %v12190 = vld [vmem:[#allocation2 + $0x1c8] sm:$0xff]
      %v12191 = vld [vmem:[#allocation2 + $0x1d0] sm:$0xff]
      %v12192 = vld [vmem:[#allocation2 + $0x1d8] sm:$0xff]
      %v12193 = vld [vmem:[#allocation2 + $0x1e0] sm:$0xff]
      %v12194 = vld [vmem:[#allocation2 + $0x1e8] sm:$0xff]
      %v12195 = vld [vmem:[#allocation2 + $0x1f0] sm:$0xff]
      %v12196 = vld [vmem:[#allocation2 + $0x1f8] sm:$0xff]
      %v12197 = vld [vmem:[#allocation8] sm:$0xf]
      %v12199 = vperm.slane %v12197, 0
      %v12200 = vperm.slane %v12197, 1
      %v12201 = vperm.slane %v12197, 2
      %v12202 = vperm.slane %v12197, 3
      %v12207 = vadd.f32 %v12133, %v12199
      %v12208 = vadd.f32 %v12134, %v12200
      %v12209 = vadd.f32 %v12135, %v12201
      %v12210 = vadd.f32 %v12136, %v12202
      %v12211 = vadd.f32 %v12137, %v12199
      %v12212 = vadd.f32 %v12138, %v12200
      %v12213 = vadd.f32 %v12139, %v12201
      %v12214 = vadd.f32 %v12140, %v12202
      %v12215 = vadd.f32 %v12141, %v12199
      %v12216 = vadd.f32 %v12142, %v12200
      %v12217 = vadd.f32 %v12143, %v12201
      %v12218 = vadd.f32 %v12144, %v12202
      %v12219 = vadd.f32 %v12145, %v12199
      %v12220 = vadd.f32 %v12146, %v12200
      %v12221 = vadd.f32 %v12147, %v12201
      %v12222 = vadd.f32 %v12148, %v12202
      %v12223 = vadd.f32 %v12149, %v12199
      %v12224 = vadd.f32 %v12150, %v12200
      %v12225 = vadd.f32 %v12151, %v12201
      %v12226 = vadd.f32 %v12152, %v12202
      %v12227 = vadd.f32 %v12153, %v12199
      %v12228 = vadd.f32 %v12154, %v12200
      %v12229 = vadd.f32 %v12155, %v12201
      %v12230 = vadd.f32 %v12156, %v12202
      %v12231 = vadd.f32 %v12157, %v12199
      %v12232 = vadd.f32 %v12158, %v12200
      %v12233 = vadd.f32 %v12159, %v12201
      %v12234 = vadd.f32 %v12160, %v12202
      %v12235 = vadd.f32 %v12161, %v12199
      %v12236 = vadd.f32 %v12162, %v12200
      %v12237 = vadd.f32 %v12163, %v12201
      %v12238 = vadd.f32 %v12164, %v12202
      %v12239 = vadd.f32 %v12165, %v12199
      %v12240 = vadd.f32 %v12166, %v12200
      %v12241 = vadd.f32 %v12167, %v12201
      %v12242 = vadd.f32 %v12168, %v12202
      %v12243 = vadd.f32 %v12169, %v12199
      %v12244 = vadd.f32 %v12170, %v12200
      %v12245 = vadd.f32 %v12171, %v12201
      %v12246 = vadd.f32 %v12172, %v12202
      %v12247 = vadd.f32 %v12173, %v12199
      %v12248 = vadd.f32 %v12174, %v12200
      %v12249 = vadd.f32 %v12175, %v12201
      %v12250 = vadd.f32 %v12176, %v12202
      %v12251 = vadd.f32 %v12177, %v12199
      %v12252 = vadd.f32 %v12178, %v12200
      %v12253 = vadd.f32 %v12179, %v12201
      %v12254 = vadd.f32 %v12180, %v12202
      %v12255 = vadd.f32 %v12181, %v12199
      %v12256 = vadd.f32 %v12182, %v12200
      %v12257 = vadd.f32 %v12183, %v12201
      %v12258 = vadd.f32 %v12184, %v12202
      %v12259 = vadd.f32 %v12185, %v12199
      %v12260 = vadd.f32 %v12186, %v12200
      %v12261 = vadd.f32 %v12187, %v12201
      %v12262 = vadd.f32 %v12188, %v12202
      %v12263 = vadd.f32 %v12189, %v12199
      %v12264 = vadd.f32 %v12190, %v12200
      %v12265 = vadd.f32 %v12191, %v12201
      %v12266 = vadd.f32 %v12192, %v12202
      %v12267 = vadd.f32 %v12193, %v12199
      %v12268 = vadd.f32 %v12194, %v12200
      %v12269 = vadd.f32 %v12195, %v12201
      %v12270 = vadd.f32 %v12196, %v12202
      %v12271 = vxor.u32 %v12207, 2147483648
      %v12272 = vxor.u32 %v12211, 2147483648
      %v12273 = vxor.u32 %v12215, 2147483648
      %v12274 = vxor.u32 %v12219, 2147483648
      %v12275 = vxor.u32 %v12223, 2147483648
      %v12276 = vxor.u32 %v12227, 2147483648
      %v12277 = vxor.u32 %v12231, 2147483648
      %v12278 = vxor.u32 %v12235, 2147483648
      %v12279 = vxor.u32 %v12239, 2147483648
      %v12280 = vxor.u32 %v12243, 2147483648
      %v12281 = vxor.u32 %v12247, 2147483648
      %v12282 = vxor.u32 %v12251, 2147483648
      %v12283 = vxor.u32 %v12255, 2147483648
      %v12284 = vxor.u32 %v12259, 2147483648
      %v12285 = vxor.u32 %v12263, 2147483648
      %v12286 = vxor.u32 %v12267, 2147483648
      %v12287 = vmul.f32 %v12271, 1.442695
      %v12288 = vpow.pop %v12287
      %v12289 = vmul.f32 %v12272, 1.442695
      %v12290 = vpow.pop %v12289
      %v12291 = vmul.f32 %v12273, 1.442695
      %v12292 = vpow.pop %v12291
      %v12293 = vmul.f32 %v12274, 1.442695
      %v12294 = vpow.pop %v12293
      %v12295 = vmul.f32 %v12275, 1.442695
      %v12296 = vpow.pop %v12295
      %v12297 = vmul.f32 %v12276, 1.442695
      %v12298 = vpow.pop %v12297
      %v12299 = vmul.f32 %v12277, 1.442695
      %v12300 = vpow.pop %v12299
      %v12301 = vmul.f32 %v12278, 1.442695
      %v12302 = vpow.pop %v12301
      %v12303 = vmul.f32 %v12279, 1.442695
      %v12304 = vpow.pop %v12303
      %v12305 = vmul.f32 %v12280, 1.442695
      %v12306 = vpow.pop %v12305
      %v12307 = vmul.f32 %v12281, 1.442695
      %v12308 = vpow.pop %v12307
      %v12309 = vmul.f32 %v12282, 1.442695
      %v12310 = vpow.pop %v12309
      %v12311 = vmul.f32 %v12283, 1.442695
      %v12312 = vpow.pop %v12311
      %v12313 = vmul.f32 %v12284, 1.442695
      %v12314 = vpow.pop %v12313
      %v12315 = vmul.f32 %v12285, 1.442695
      %v12316 = vpow.pop %v12315
      %v12317 = vmul.f32 %v12286, 1.442695
      %v12318 = vpow.pop %v12317
      %v12319 = vadd.f32 %v12288, 1.0
      %v12320 = vadd.f32 %v12290, 1.0
      %v12321 = vadd.f32 %v12292, 1.0
      %v12322 = vadd.f32 %v12294, 1.0
      %v12323 = vadd.f32 %v12296, 1.0
      %v12324 = vadd.f32 %v12298, 1.0
      %v12325 = vadd.f32 %v12300, 1.0
      %v12326 = vadd.f32 %v12302, 1.0
      %v12327 = vadd.f32 %v12304, 1.0
      %v12328 = vadd.f32 %v12306, 1.0
      %v12329 = vadd.f32 %v12308, 1.0
      %v12330 = vadd.f32 %v12310, 1.0
      %v12331 = vadd.f32 %v12312, 1.0
      %v12332 = vadd.f32 %v12314, 1.0
      %v12333 = vadd.f32 %v12316, 1.0
      %v12334 = vadd.f32 %v12318, 1.0
      %v12335 = vrcp.pop %v12319
      %v12336 = vmul.f32 %v12319, %v12335
      %v12337 = vsub.f32 1.0, %v12336
      %v12338 = vmul.f32 %v12335, %v12337
      %v12339 = vadd.f32 %v12335, %v12338
      %vm12340 = vweird.f32 %v12319
      %vm12341 = vweird.f32 %v12335
      %vm12342 = vmor %vm12340, %vm12341
      %v12343 = vsel %vm12342, %v12335, %v12339
      %v12344 = vand.u32 2147483647, %v12319
      %vm12345 = vcmp.eq.f32.partialorder %v12344, 8.507059e+37
      %v12346 = vand.u32 %v12319, 2147483648
      %v12347 = vor.u32 1.1754944e-38, %v12346
      %v12348 = vsel %vm12345, %v12347, %v12343
      %v12349 = vmul.f32 1.0, %v12348
      %v12350 = vrcp.pop %v12320
      %v12351 = vmul.f32 %v12320, %v12350
      %v12352 = vsub.f32 1.0, %v12351
      %v12353 = vmul.f32 %v12350, %v12352
      %v12354 = vadd.f32 %v12350, %v12353
      %vm12355 = vweird.f32 %v12320
      %vm12356 = vweird.f32 %v12350
      %vm12357 = vmor %vm12355, %vm12356
      %v12358 = vsel %vm12357, %v12350, %v12354
      %v12359 = vand.u32 2147483647, %v12320
      %vm12360 = vcmp.eq.f32.partialorder %v12359, 8.507059e+37
      %v12361 = vand.u32 %v12320, 2147483648
      %v12362 = vor.u32 1.1754944e-38, %v12361
      %v12363 = vsel %vm12360, %v12362, %v12358
      %v12364 = vmul.f32 1.0, %v12363
      %v12365 = vrcp.pop %v12321
      %v12366 = vmul.f32 %v12321, %v12365
      %v12367 = vsub.f32 1.0, %v12366
      %v12368 = vmul.f32 %v12365, %v12367
      %v12369 = vadd.f32 %v12365, %v12368
      %vm12370 = vweird.f32 %v12321
      %vm12371 = vweird.f32 %v12365
      %vm12372 = vmor %vm12370, %vm12371
      %v12373 = vsel %vm12372, %v12365, %v12369
      %v12374 = vand.u32 2147483647, %v12321
      %vm12375 = vcmp.eq.f32.partialorder %v12374, 8.507059e+37
      %v12376 = vand.u32 %v12321, 2147483648
      %v12377 = vor.u32 1.1754944e-38, %v12376
      %v12378 = vsel %vm12375, %v12377, %v12373
      %v12379 = vmul.f32 1.0, %v12378
      %v12380 = vrcp.pop %v12322
      %v12381 = vmul.f32 %v12322, %v12380
      %v12382 = vsub.f32 1.0, %v12381
      %v12383 = vmul.f32 %v12380, %v12382
      %v12384 = vadd.f32 %v12380, %v12383
      %vm12385 = vweird.f32 %v12322
      %vm12386 = vweird.f32 %v12380
      %vm12387 = vmor %vm12385, %vm12386
      %v12388 = vsel %vm12387, %v12380, %v12384
      %v12389 = vand.u32 2147483647, %v12322
      %vm12390 = vcmp.eq.f32.partialorder %v12389, 8.507059e+37
      %v12391 = vand.u32 %v12322, 2147483648
      %v12392 = vor.u32 1.1754944e-38, %v12391
      %v12393 = vsel %vm12390, %v12392, %v12388
      %v12394 = vmul.f32 1.0, %v12393
      %v12395 = vrcp.pop %v12323
      %v12396 = vmul.f32 %v12323, %v12395
      %v12397 = vsub.f32 1.0, %v12396
      %v12398 = vmul.f32 %v12395, %v12397
      %v12399 = vadd.f32 %v12395, %v12398
      %vm12400 = vweird.f32 %v12323
      %vm12401 = vweird.f32 %v12395
      %vm12402 = vmor %vm12400, %vm12401
      %v12403 = vsel %vm12402, %v12395, %v12399
      %v12404 = vand.u32 2147483647, %v12323
      %vm12405 = vcmp.eq.f32.partialorder %v12404, 8.507059e+37
      %v12406 = vand.u32 %v12323, 2147483648
      %v12407 = vor.u32 1.1754944e-38, %v12406
      %v12408 = vsel %vm12405, %v12407, %v12403
      %v12409 = vmul.f32 1.0, %v12408
      %v12410 = vrcp.pop %v12324
      %v12411 = vmul.f32 %v12324, %v12410
      %v12412 = vsub.f32 1.0, %v12411
      %v12413 = vmul.f32 %v12410, %v12412
      %v12414 = vadd.f32 %v12410, %v12413
      %vm12415 = vweird.f32 %v12324
      %vm12416 = vweird.f32 %v12410
      %vm12417 = vmor %vm12415, %vm12416
      %v12418 = vsel %vm12417, %v12410, %v12414
      %v12419 = vand.u32 2147483647, %v12324
      %vm12420 = vcmp.eq.f32.partialorder %v12419, 8.507059e+37
      %v12421 = vand.u32 %v12324, 2147483648
      %v12422 = vor.u32 1.1754944e-38, %v12421
      %v12423 = vsel %vm12420, %v12422, %v12418
      %v12424 = vmul.f32 1.0, %v12423
      %v12425 = vrcp.pop %v12325
      %v12426 = vmul.f32 %v12325, %v12425
      %v12427 = vsub.f32 1.0, %v12426
      %v12428 = vmul.f32 %v12425, %v12427
      %v12429 = vadd.f32 %v12425, %v12428
      %vm12430 = vweird.f32 %v12325
      %vm12431 = vweird.f32 %v12425
      %vm12432 = vmor %vm12430, %vm12431
      %v12433 = vsel %vm12432, %v12425, %v12429
      %v12434 = vand.u32 2147483647, %v12325
      %vm12435 = vcmp.eq.f32.partialorder %v12434, 8.507059e+37
      %v12436 = vand.u32 %v12325, 2147483648
      %v12437 = vor.u32 1.1754944e-38, %v12436
      %v12438 = vsel %vm12435, %v12437, %v12433
      %v12439 = vmul.f32 1.0, %v12438
      %v12440 = vrcp.pop %v12326
      %v12441 = vmul.f32 %v12326, %v12440
      %v12442 = vsub.f32 1.0, %v12441
      %v12443 = vmul.f32 %v12440, %v12442
      %v12444 = vadd.f32 %v12440, %v12443
      %vm12445 = vweird.f32 %v12326
      %vm12446 = vweird.f32 %v12440
      %vm12447 = vmor %vm12445, %vm12446
      %v12448 = vsel %vm12447, %v12440, %v12444
      %v12449 = vand.u32 2147483647, %v12326
      %vm12450 = vcmp.eq.f32.partialorder %v12449, 8.507059e+37
      %v12451 = vand.u32 %v12326, 2147483648
      %v12452 = vor.u32 1.1754944e-38, %v12451
      %v12453 = vsel %vm12450, %v12452, %v12448
      %v12454 = vmul.f32 1.0, %v12453
      %v12455 = vrcp.pop %v12327
      %v12456 = vmul.f32 %v12327, %v12455
      %v12457 = vsub.f32 1.0, %v12456
      %v12458 = vmul.f32 %v12455, %v12457
      %v12459 = vadd.f32 %v12455, %v12458
      %vm12460 = vweird.f32 %v12327
      %vm12461 = vweird.f32 %v12455
      %vm12462 = vmor %vm12460, %vm12461
      %v12463 = vsel %vm12462, %v12455, %v12459
      %v12464 = vand.u32 2147483647, %v12327
      %vm12465 = vcmp.eq.f32.partialorder %v12464, 8.507059e+37
      %v12466 = vand.u32 %v12327, 2147483648
      %v12467 = vor.u32 1.1754944e-38, %v12466
      %v12468 = vsel %vm12465, %v12467, %v12463
      %v12469 = vmul.f32 1.0, %v12468
      %v12470 = vrcp.pop %v12328
      %v12471 = vmul.f32 %v12328, %v12470
      %v12472 = vsub.f32 1.0, %v12471
      %v12473 = vmul.f32 %v12470, %v12472
      %v12474 = vadd.f32 %v12470, %v12473
      %vm12475 = vweird.f32 %v12328
      %vm12476 = vweird.f32 %v12470
      %vm12477 = vmor %vm12475, %vm12476
      %v12478 = vsel %vm12477, %v12470, %v12474
      %v12479 = vand.u32 2147483647, %v12328
      %vm12480 = vcmp.eq.f32.partialorder %v12479, 8.507059e+37
      %v12481 = vand.u32 %v12328, 2147483648
      %v12482 = vor.u32 1.1754944e-38, %v12481
      %v12483 = vsel %vm12480, %v12482, %v12478
      %v12484 = vmul.f32 1.0, %v12483
      %v12485 = vrcp.pop %v12329
      %v12486 = vmul.f32 %v12329, %v12485
      %v12487 = vsub.f32 1.0, %v12486
      %v12488 = vmul.f32 %v12485, %v12487
      %v12489 = vadd.f32 %v12485, %v12488
      %vm12490 = vweird.f32 %v12329
      %vm12491 = vweird.f32 %v12485
      %vm12492 = vmor %vm12490, %vm12491
      %v12493 = vsel %vm12492, %v12485, %v12489
      %v12494 = vand.u32 2147483647, %v12329
      %vm12495 = vcmp.eq.f32.partialorder %v12494, 8.507059e+37
      %v12496 = vand.u32 %v12329, 2147483648
      %v12497 = vor.u32 1.1754944e-38, %v12496
      %v12498 = vsel %vm12495, %v12497, %v12493
      %v12499 = vmul.f32 1.0, %v12498
      %v12500 = vrcp.pop %v12330
      %v12501 = vmul.f32 %v12330, %v12500
      %v12502 = vsub.f32 1.0, %v12501
      %v12503 = vmul.f32 %v12500, %v12502
      %v12504 = vadd.f32 %v12500, %v12503
      %vm12505 = vweird.f32 %v12330
      %vm12506 = vweird.f32 %v12500
      %vm12507 = vmor %vm12505, %vm12506
      %v12508 = vsel %vm12507, %v12500, %v12504
      %v12509 = vand.u32 2147483647, %v12330
      %vm12510 = vcmp.eq.f32.partialorder %v12509, 8.507059e+37
      %v12511 = vand.u32 %v12330, 2147483648
      %v12512 = vor.u32 1.1754944e-38, %v12511
      %v12513 = vsel %vm12510, %v12512, %v12508
      %v12514 = vmul.f32 1.0, %v12513
      %v12515 = vrcp.pop %v12331
      %v12516 = vmul.f32 %v12331, %v12515
      %v12517 = vsub.f32 1.0, %v12516
      %v12518 = vmul.f32 %v12515, %v12517
      %v12519 = vadd.f32 %v12515, %v12518
      %vm12520 = vweird.f32 %v12331
      %vm12521 = vweird.f32 %v12515
      %vm12522 = vmor %vm12520, %vm12521
      %v12523 = vsel %vm12522, %v12515, %v12519
      %v12524 = vand.u32 2147483647, %v12331
      %vm12525 = vcmp.eq.f32.partialorder %v12524, 8.507059e+37
      %v12526 = vand.u32 %v12331, 2147483648
      %v12527 = vor.u32 1.1754944e-38, %v12526
      %v12528 = vsel %vm12525, %v12527, %v12523
      %v12529 = vmul.f32 1.0, %v12528
      %v12530 = vrcp.pop %v12332
      %v12531 = vmul.f32 %v12332, %v12530
      %v12532 = vsub.f32 1.0, %v12531
      %v12533 = vmul.f32 %v12530, %v12532
      %v12534 = vadd.f32 %v12530, %v12533
      %vm12535 = vweird.f32 %v12332
      %vm12536 = vweird.f32 %v12530
      %vm12537 = vmor %vm12535, %vm12536
      %v12538 = vsel %vm12537, %v12530, %v12534
      %v12539 = vand.u32 2147483647, %v12332
      %vm12540 = vcmp.eq.f32.partialorder %v12539, 8.507059e+37
      %v12541 = vand.u32 %v12332, 2147483648
      %v12542 = vor.u32 1.1754944e-38, %v12541
      %v12543 = vsel %vm12540, %v12542, %v12538
      %v12544 = vmul.f32 1.0, %v12543
      %v12545 = vrcp.pop %v12333
      %v12546 = vmul.f32 %v12333, %v12545
      %v12547 = vsub.f32 1.0, %v12546
      %v12548 = vmul.f32 %v12545, %v12547
      %v12549 = vadd.f32 %v12545, %v12548
      %vm12550 = vweird.f32 %v12333
      %vm12551 = vweird.f32 %v12545
      %vm12552 = vmor %vm12550, %vm12551
      %v12553 = vsel %vm12552, %v12545, %v12549
      %v12554 = vand.u32 2147483647, %v12333
      %vm12555 = vcmp.eq.f32.partialorder %v12554, 8.507059e+37
      %v12556 = vand.u32 %v12333, 2147483648
      %v12557 = vor.u32 1.1754944e-38, %v12556
      %v12558 = vsel %vm12555, %v12557, %v12553
      %v12559 = vmul.f32 1.0, %v12558
      %v12560 = vrcp.pop %v12334
      %v12561 = vmul.f32 %v12334, %v12560
      %v12562 = vsub.f32 1.0, %v12561
      %v12563 = vmul.f32 %v12560, %v12562
      %v12564 = vadd.f32 %v12560, %v12563
      %vm12565 = vweird.f32 %v12334
      %vm12566 = vweird.f32 %v12560
      %vm12567 = vmor %vm12565, %vm12566
      %v12568 = vsel %vm12567, %v12560, %v12564
      %v12569 = vand.u32 2147483647, %v12334
      %vm12570 = vcmp.eq.f32.partialorder %v12569, 8.507059e+37
      %v12571 = vand.u32 %v12334, 2147483648
      %v12572 = vor.u32 1.1754944e-38, %v12571
      %v12573 = vsel %vm12570, %v12572, %v12568
      %v12574 = vmul.f32 1.0, %v12573
      %v12575 = vxor.u32 %v12208, 2147483648
      %v12576 = vxor.u32 %v12212, 2147483648
      %v12577 = vxor.u32 %v12216, 2147483648
      %v12578 = vxor.u32 %v12220, 2147483648
      %v12579 = vxor.u32 %v12224, 2147483648
      %v12580 = vxor.u32 %v12228, 2147483648
      %v12581 = vxor.u32 %v12232, 2147483648
      %v12582 = vxor.u32 %v12236, 2147483648
      %v12583 = vxor.u32 %v12240, 2147483648
      %v12584 = vxor.u32 %v12244, 2147483648
      %v12585 = vxor.u32 %v12248, 2147483648
      %v12586 = vxor.u32 %v12252, 2147483648
      %v12587 = vxor.u32 %v12256, 2147483648
      %v12588 = vxor.u32 %v12260, 2147483648
      %v12589 = vxor.u32 %v12264, 2147483648
      %v12590 = vxor.u32 %v12268, 2147483648
      %v12591 = vmul.f32 %v12575, 1.442695
      %v12592 = vpow.pop %v12591
      %v12593 = vmul.f32 %v12576, 1.442695
      %v12594 = vpow.pop %v12593
      %v12595 = vmul.f32 %v12577, 1.442695
      %v12596 = vpow.pop %v12595
      %v12597 = vmul.f32 %v12578, 1.442695
      %v12598 = vpow.pop %v12597
      %v12599 = vmul.f32 %v12579, 1.442695
      %v12600 = vpow.pop %v12599
      %v12601 = vmul.f32 %v12580, 1.442695
      %v12602 = vpow.pop %v12601
      %v12603 = vmul.f32 %v12581, 1.442695
      %v12604 = vpow.pop %v12603
      %v12605 = vmul.f32 %v12582, 1.442695
      %v12606 = vpow.pop %v12605
      %v12607 = vmul.f32 %v12583, 1.442695
      %v12608 = vpow.pop %v12607
      %v12609 = vmul.f32 %v12584, 1.442695
      %v12610 = vpow.pop %v12609
      %v12611 = vmul.f32 %v12585, 1.442695
      %v12612 = vpow.pop %v12611
      %v12613 = vmul.f32 %v12586, 1.442695
      %v12614 = vpow.pop %v12613
      %v12615 = vmul.f32 %v12587, 1.442695
      %v12616 = vpow.pop %v12615
      %v12617 = vmul.f32 %v12588, 1.442695
      %v12618 = vpow.pop %v12617
      %v12619 = vmul.f32 %v12589, 1.442695
      %v12620 = vpow.pop %v12619
      %v12621 = vmul.f32 %v12590, 1.442695
      %v12622 = vpow.pop %v12621
      %v12623 = vadd.f32 %v12592, 1.0
      %v12624 = vadd.f32 %v12594, 1.0
      %v12625 = vadd.f32 %v12596, 1.0
      %v12626 = vadd.f32 %v12598, 1.0
      %v12627 = vadd.f32 %v12600, 1.0
      %v12628 = vadd.f32 %v12602, 1.0
      %v12629 = vadd.f32 %v12604, 1.0
      %v12630 = vadd.f32 %v12606, 1.0
      %v12631 = vadd.f32 %v12608, 1.0
      %v12632 = vadd.f32 %v12610, 1.0
      %v12633 = vadd.f32 %v12612, 1.0
      %v12634 = vadd.f32 %v12614, 1.0
      %v12635 = vadd.f32 %v12616, 1.0
      %v12636 = vadd.f32 %v12618, 1.0
      %v12637 = vadd.f32 %v12620, 1.0
      %v12638 = vadd.f32 %v12622, 1.0
      %v12639 = vrcp.pop %v12623
      %v12640 = vmul.f32 %v12623, %v12639
      %v12641 = vsub.f32 1.0, %v12640
      %v12642 = vmul.f32 %v12639, %v12641
      %v12643 = vadd.f32 %v12639, %v12642
      %vm12644 = vweird.f32 %v12623
      %vm12645 = vweird.f32 %v12639
      %vm12646 = vmor %vm12644, %vm12645
      %v12647 = vsel %vm12646, %v12639, %v12643
      %v12648 = vand.u32 2147483647, %v12623
      %vm12649 = vcmp.eq.f32.partialorder %v12648, 8.507059e+37
      %v12650 = vand.u32 %v12623, 2147483648
      %v12651 = vor.u32 1.1754944e-38, %v12650
      %v12652 = vsel %vm12649, %v12651, %v12647
      %v12653 = vmul.f32 1.0, %v12652
      %v12654 = vrcp.pop %v12624
      %v12655 = vmul.f32 %v12624, %v12654
      %v12656 = vsub.f32 1.0, %v12655
      %v12657 = vmul.f32 %v12654, %v12656
      %v12658 = vadd.f32 %v12654, %v12657
      %vm12659 = vweird.f32 %v12624
      %vm12660 = vweird.f32 %v12654
      %vm12661 = vmor %vm12659, %vm12660
      %v12662 = vsel %vm12661, %v12654, %v12658
      %v12663 = vand.u32 2147483647, %v12624
      %vm12664 = vcmp.eq.f32.partialorder %v12663, 8.507059e+37
      %v12665 = vand.u32 %v12624, 2147483648
      %v12666 = vor.u32 1.1754944e-38, %v12665
      %v12667 = vsel %vm12664, %v12666, %v12662
      %v12668 = vmul.f32 1.0, %v12667
      %v12669 = vrcp.pop %v12625
      %v12670 = vmul.f32 %v12625, %v12669
      %v12671 = vsub.f32 1.0, %v12670
      %v12672 = vmul.f32 %v12669, %v12671
      %v12673 = vadd.f32 %v12669, %v12672
      %vm12674 = vweird.f32 %v12625
      %vm12675 = vweird.f32 %v12669
      %vm12676 = vmor %vm12674, %vm12675
      %v12677 = vsel %vm12676, %v12669, %v12673
      %v12678 = vand.u32 2147483647, %v12625
      %vm12679 = vcmp.eq.f32.partialorder %v12678, 8.507059e+37
      %v12680 = vand.u32 %v12625, 2147483648
      %v12681 = vor.u32 1.1754944e-38, %v12680
      %v12682 = vsel %vm12679, %v12681, %v12677
      %v12683 = vmul.f32 1.0, %v12682
      %v12684 = vrcp.pop %v12626
      %v12685 = vmul.f32 %v12626, %v12684
      %v12686 = vsub.f32 1.0, %v12685
      %v12687 = vmul.f32 %v12684, %v12686
      %v12688 = vadd.f32 %v12684, %v12687
      %vm12689 = vweird.f32 %v12626
      %vm12690 = vweird.f32 %v12684
      %vm12691 = vmor %vm12689, %vm12690
      %v12692 = vsel %vm12691, %v12684, %v12688
      %v12693 = vand.u32 2147483647, %v12626
      %vm12694 = vcmp.eq.f32.partialorder %v12693, 8.507059e+37
      %v12695 = vand.u32 %v12626, 2147483648
      %v12696 = vor.u32 1.1754944e-38, %v12695
      %v12697 = vsel %vm12694, %v12696, %v12692
      %v12698 = vmul.f32 1.0, %v12697
      %v12699 = vrcp.pop %v12627
      %v12700 = vmul.f32 %v12627, %v12699
      %v12701 = vsub.f32 1.0, %v12700
      %v12702 = vmul.f32 %v12699, %v12701
      %v12703 = vadd.f32 %v12699, %v12702
      %vm12704 = vweird.f32 %v12627
      %vm12705 = vweird.f32 %v12699
      %vm12706 = vmor %vm12704, %vm12705
      %v12707 = vsel %vm12706, %v12699, %v12703
      %v12708 = vand.u32 2147483647, %v12627
      %vm12709 = vcmp.eq.f32.partialorder %v12708, 8.507059e+37
      %v12710 = vand.u32 %v12627, 2147483648
      %v12711 = vor.u32 1.1754944e-38, %v12710
      %v12712 = vsel %vm12709, %v12711, %v12707
      %v12713 = vmul.f32 1.0, %v12712
      %v12714 = vrcp.pop %v12628
      %v12715 = vmul.f32 %v12628, %v12714
      %v12716 = vsub.f32 1.0, %v12715
      %v12717 = vmul.f32 %v12714, %v12716
      %v12718 = vadd.f32 %v12714, %v12717
      %vm12719 = vweird.f32 %v12628
      %vm12720 = vweird.f32 %v12714
      %vm12721 = vmor %vm12719, %vm12720
      %v12722 = vsel %vm12721, %v12714, %v12718
      %v12723 = vand.u32 2147483647, %v12628
      %vm12724 = vcmp.eq.f32.partialorder %v12723, 8.507059e+37
      %v12725 = vand.u32 %v12628, 2147483648
      %v12726 = vor.u32 1.1754944e-38, %v12725
      %v12727 = vsel %vm12724, %v12726, %v12722
      %v12728 = vmul.f32 1.0, %v12727
      %v12729 = vrcp.pop %v12629
      %v12730 = vmul.f32 %v12629, %v12729
      %v12731 = vsub.f32 1.0, %v12730
      %v12732 = vmul.f32 %v12729, %v12731
      %v12733 = vadd.f32 %v12729, %v12732
      %vm12734 = vweird.f32 %v12629
      %vm12735 = vweird.f32 %v12729
      %vm12736 = vmor %vm12734, %vm12735
      %v12737 = vsel %vm12736, %v12729, %v12733
      %v12738 = vand.u32 2147483647, %v12629
      %vm12739 = vcmp.eq.f32.partialorder %v12738, 8.507059e+37
      %v12740 = vand.u32 %v12629, 2147483648
      %v12741 = vor.u32 1.1754944e-38, %v12740
      %v12742 = vsel %vm12739, %v12741, %v12737
      %v12743 = vmul.f32 1.0, %v12742
      %v12744 = vrcp.pop %v12630
      %v12745 = vmul.f32 %v12630, %v12744
      %v12746 = vsub.f32 1.0, %v12745
      %v12747 = vmul.f32 %v12744, %v12746
      %v12748 = vadd.f32 %v12744, %v12747
      %vm12749 = vweird.f32 %v12630
      %vm12750 = vweird.f32 %v12744
      %vm12751 = vmor %vm12749, %vm12750
      %v12752 = vsel %vm12751, %v12744, %v12748
      %v12753 = vand.u32 2147483647, %v12630
      %vm12754 = vcmp.eq.f32.partialorder %v12753, 8.507059e+37
      %v12755 = vand.u32 %v12630, 2147483648
      %v12756 = vor.u32 1.1754944e-38, %v12755
      %v12757 = vsel %vm12754, %v12756, %v12752
      %v12758 = vmul.f32 1.0, %v12757
      %v12759 = vrcp.pop %v12631
      %v12760 = vmul.f32 %v12631, %v12759
      %v12761 = vsub.f32 1.0, %v12760
      %v12762 = vmul.f32 %v12759, %v12761
      %v12763 = vadd.f32 %v12759, %v12762
      %vm12764 = vweird.f32 %v12631
      %vm12765 = vweird.f32 %v12759
      %vm12766 = vmor %vm12764, %vm12765
      %v12767 = vsel %vm12766, %v12759, %v12763
      %v12768 = vand.u32 2147483647, %v12631
      %vm12769 = vcmp.eq.f32.partialorder %v12768, 8.507059e+37
      %v12770 = vand.u32 %v12631, 2147483648
      %v12771 = vor.u32 1.1754944e-38, %v12770
      %v12772 = vsel %vm12769, %v12771, %v12767
      %v12773 = vmul.f32 1.0, %v12772
      %v12774 = vrcp.pop %v12632
      %v12775 = vmul.f32 %v12632, %v12774
      %v12776 = vsub.f32 1.0, %v12775
      %v12777 = vmul.f32 %v12774, %v12776
      %v12778 = vadd.f32 %v12774, %v12777
      %vm12779 = vweird.f32 %v12632
      %vm12780 = vweird.f32 %v12774
      %vm12781 = vmor %vm12779, %vm12780
      %v12782 = vsel %vm12781, %v12774, %v12778
      %v12783 = vand.u32 2147483647, %v12632
      %vm12784 = vcmp.eq.f32.partialorder %v12783, 8.507059e+37
      %v12785 = vand.u32 %v12632, 2147483648
      %v12786 = vor.u32 1.1754944e-38, %v12785
      %v12787 = vsel %vm12784, %v12786, %v12782
      %v12788 = vmul.f32 1.0, %v12787
      %v12789 = vrcp.pop %v12633
      %v12790 = vmul.f32 %v12633, %v12789
      %v12791 = vsub.f32 1.0, %v12790
      %v12792 = vmul.f32 %v12789, %v12791
      %v12793 = vadd.f32 %v12789, %v12792
      %vm12794 = vweird.f32 %v12633
      %vm12795 = vweird.f32 %v12789
      %vm12796 = vmor %vm12794, %vm12795
      %v12797 = vsel %vm12796, %v12789, %v12793
      %v12798 = vand.u32 2147483647, %v12633
      %vm12799 = vcmp.eq.f32.partialorder %v12798, 8.507059e+37
      %v12800 = vand.u32 %v12633, 2147483648
      %v12801 = vor.u32 1.1754944e-38, %v12800
      %v12802 = vsel %vm12799, %v12801, %v12797
      %v12803 = vmul.f32 1.0, %v12802
      %v12804 = vrcp.pop %v12634
      %v12805 = vmul.f32 %v12634, %v12804
      %v12806 = vsub.f32 1.0, %v12805
      %v12807 = vmul.f32 %v12804, %v12806
      %v12808 = vadd.f32 %v12804, %v12807
      %vm12809 = vweird.f32 %v12634
      %vm12810 = vweird.f32 %v12804
      %vm12811 = vmor %vm12809, %vm12810
      %v12812 = vsel %vm12811, %v12804, %v12808
      %v12813 = vand.u32 2147483647, %v12634
      %vm12814 = vcmp.eq.f32.partialorder %v12813, 8.507059e+37
      %v12815 = vand.u32 %v12634, 2147483648
      %v12816 = vor.u32 1.1754944e-38, %v12815
      %v12817 = vsel %vm12814, %v12816, %v12812
      %v12818 = vmul.f32 1.0, %v12817
      %v12819 = vrcp.pop %v12635
      %v12820 = vmul.f32 %v12635, %v12819
      %v12821 = vsub.f32 1.0, %v12820
      %v12822 = vmul.f32 %v12819, %v12821
      %v12823 = vadd.f32 %v12819, %v12822
      %vm12824 = vweird.f32 %v12635
      %vm12825 = vweird.f32 %v12819
      %vm12826 = vmor %vm12824, %vm12825
      %v12827 = vsel %vm12826, %v12819, %v12823
      %v12828 = vand.u32 2147483647, %v12635
      %vm12829 = vcmp.eq.f32.partialorder %v12828, 8.507059e+37
      %v12830 = vand.u32 %v12635, 2147483648
      %v12831 = vor.u32 1.1754944e-38, %v12830
      %v12832 = vsel %vm12829, %v12831, %v12827
      %v12833 = vmul.f32 1.0, %v12832
      %v12834 = vrcp.pop %v12636
      %v12835 = vmul.f32 %v12636, %v12834
      %v12836 = vsub.f32 1.0, %v12835
      %v12837 = vmul.f32 %v12834, %v12836
      %v12838 = vadd.f32 %v12834, %v12837
      %vm12839 = vweird.f32 %v12636
      %vm12840 = vweird.f32 %v12834
      %vm12841 = vmor %vm12839, %vm12840
      %v12842 = vsel %vm12841, %v12834, %v12838
      %v12843 = vand.u32 2147483647, %v12636
      %vm12844 = vcmp.eq.f32.partialorder %v12843, 8.507059e+37
      %v12845 = vand.u32 %v12636, 2147483648
      %v12846 = vor.u32 1.1754944e-38, %v12845
      %v12847 = vsel %vm12844, %v12846, %v12842
      %v12848 = vmul.f32 1.0, %v12847
      %v12849 = vrcp.pop %v12637
      %v12850 = vmul.f32 %v12637, %v12849
      %v12851 = vsub.f32 1.0, %v12850
      %v12852 = vmul.f32 %v12849, %v12851
      %v12853 = vadd.f32 %v12849, %v12852
      %vm12854 = vweird.f32 %v12637
      %vm12855 = vweird.f32 %v12849
      %vm12856 = vmor %vm12854, %vm12855
      %v12857 = vsel %vm12856, %v12849, %v12853
      %v12858 = vand.u32 2147483647, %v12637
      %vm12859 = vcmp.eq.f32.partialorder %v12858, 8.507059e+37
      %v12860 = vand.u32 %v12637, 2147483648
      %v12861 = vor.u32 1.1754944e-38, %v12860
      %v12862 = vsel %vm12859, %v12861, %v12857
      %v12863 = vmul.f32 1.0, %v12862
      %v12864 = vrcp.pop %v12638
      %v12865 = vmul.f32 %v12638, %v12864
      %v12866 = vsub.f32 1.0, %v12865
      %v12867 = vmul.f32 %v12864, %v12866
      %v12868 = vadd.f32 %v12864, %v12867
      %vm12869 = vweird.f32 %v12638
      %vm12870 = vweird.f32 %v12864
      %vm12871 = vmor %vm12869, %vm12870
      %v12872 = vsel %vm12871, %v12864, %v12868
      %v12873 = vand.u32 2147483647, %v12638
      %vm12874 = vcmp.eq.f32.partialorder %v12873, 8.507059e+37
      %v12875 = vand.u32 %v12638, 2147483648
      %v12876 = vor.u32 1.1754944e-38, %v12875
      %v12877 = vsel %vm12874, %v12876, %v12872
      %v12878 = vmul.f32 1.0, %v12877
      %v12879 = vxor.u32 %v12209, 2147483648
      %v12880 = vxor.u32 %v12213, 2147483648
      %v12881 = vxor.u32 %v12217, 2147483648
      %v12882 = vxor.u32 %v12221, 2147483648
      %v12883 = vxor.u32 %v12225, 2147483648
      %v12884 = vxor.u32 %v12229, 2147483648
      %v12885 = vxor.u32 %v12233, 2147483648
      %v12886 = vxor.u32 %v12237, 2147483648
      %v12887 = vxor.u32 %v12241, 2147483648
      %v12888 = vxor.u32 %v12245, 2147483648
      %v12889 = vxor.u32 %v12249, 2147483648
      %v12890 = vxor.u32 %v12253, 2147483648
      %v12891 = vxor.u32 %v12257, 2147483648
      %v12892 = vxor.u32 %v12261, 2147483648
      %v12893 = vxor.u32 %v12265, 2147483648
      %v12894 = vxor.u32 %v12269, 2147483648
      %v12895 = vmul.f32 %v12879, 1.442695
      %v12896 = vpow.pop %v12895
      %v12897 = vmul.f32 %v12880, 1.442695
      %v12898 = vpow.pop %v12897
      %v12899 = vmul.f32 %v12881, 1.442695
      %v12900 = vpow.pop %v12899
      %v12901 = vmul.f32 %v12882, 1.442695
      %v12902 = vpow.pop %v12901
      %v12903 = vmul.f32 %v12883, 1.442695
      %v12904 = vpow.pop %v12903
      %v12905 = vmul.f32 %v12884, 1.442695
      %v12906 = vpow.pop %v12905
      %v12907 = vmul.f32 %v12885, 1.442695
      %v12908 = vpow.pop %v12907
      %v12909 = vmul.f32 %v12886, 1.442695
      %v12910 = vpow.pop %v12909
      %v12911 = vmul.f32 %v12887, 1.442695
      %v12912 = vpow.pop %v12911
      %v12913 = vmul.f32 %v12888, 1.442695
      %v12914 = vpow.pop %v12913
      %v12915 = vmul.f32 %v12889, 1.442695
      %v12916 = vpow.pop %v12915
      %v12917 = vmul.f32 %v12890, 1.442695
      %v12918 = vpow.pop %v12917
      %v12919 = vmul.f32 %v12891, 1.442695
      %v12920 = vpow.pop %v12919
      %v12921 = vmul.f32 %v12892, 1.442695
      %v12922 = vpow.pop %v12921
      %v12923 = vmul.f32 %v12893, 1.442695
      %v12924 = vpow.pop %v12923
      %v12925 = vmul.f32 %v12894, 1.442695
      %v12926 = vpow.pop %v12925
      %v12927 = vadd.f32 %v12896, 1.0
      %v12928 = vadd.f32 %v12898, 1.0
      %v12929 = vadd.f32 %v12900, 1.0
      %v12930 = vadd.f32 %v12902, 1.0
      %v12931 = vadd.f32 %v12904, 1.0
      %v12932 = vadd.f32 %v12906, 1.0
      %v12933 = vadd.f32 %v12908, 1.0
      %v12934 = vadd.f32 %v12910, 1.0
      %v12935 = vadd.f32 %v12912, 1.0
      %v12936 = vadd.f32 %v12914, 1.0
      %v12937 = vadd.f32 %v12916, 1.0
      %v12938 = vadd.f32 %v12918, 1.0
      %v12939 = vadd.f32 %v12920, 1.0
      %v12940 = vadd.f32 %v12922, 1.0
      %v12941 = vadd.f32 %v12924, 1.0
      %v12942 = vadd.f32 %v12926, 1.0
      %v12943 = vrcp.pop %v12927
      %v12944 = vmul.f32 %v12927, %v12943
      %v12945 = vsub.f32 1.0, %v12944
      %v12946 = vmul.f32 %v12943, %v12945
      %v12947 = vadd.f32 %v12943, %v12946
      %vm12948 = vweird.f32 %v12927
      %vm12949 = vweird.f32 %v12943
      %vm12950 = vmor %vm12948, %vm12949
      %v12951 = vsel %vm12950, %v12943, %v12947
      %v12952 = vand.u32 2147483647, %v12927
      %vm12953 = vcmp.eq.f32.partialorder %v12952, 8.507059e+37
      %v12954 = vand.u32 %v12927, 2147483648
      %v12955 = vor.u32 1.1754944e-38, %v12954
      %v12956 = vsel %vm12953, %v12955, %v12951
      %v12957 = vmul.f32 1.0, %v12956
      %v12958 = vrcp.pop %v12928
      %v12959 = vmul.f32 %v12928, %v12958
      %v12960 = vsub.f32 1.0, %v12959
      %v12961 = vmul.f32 %v12958, %v12960
      %v12962 = vadd.f32 %v12958, %v12961
      %vm12963 = vweird.f32 %v12928
      %vm12964 = vweird.f32 %v12958
      %vm12965 = vmor %vm12963, %vm12964
      %v12966 = vsel %vm12965, %v12958, %v12962
      %v12967 = vand.u32 2147483647, %v12928
      %vm12968 = vcmp.eq.f32.partialorder %v12967, 8.507059e+37
      %v12969 = vand.u32 %v12928, 2147483648
      %v12970 = vor.u32 1.1754944e-38, %v12969
      %v12971 = vsel %vm12968, %v12970, %v12966
      %v12972 = vmul.f32 1.0, %v12971
      %v12973 = vrcp.pop %v12929
      %v12974 = vmul.f32 %v12929, %v12973
      %v12975 = vsub.f32 1.0, %v12974
      %v12976 = vmul.f32 %v12973, %v12975
      %v12977 = vadd.f32 %v12973, %v12976
      %vm12978 = vweird.f32 %v12929
      %vm12979 = vweird.f32 %v12973
      %vm12980 = vmor %vm12978, %vm12979
      %v12981 = vsel %vm12980, %v12973, %v12977
      %v12982 = vand.u32 2147483647, %v12929
      %vm12983 = vcmp.eq.f32.partialorder %v12982, 8.507059e+37
      %v12984 = vand.u32 %v12929, 2147483648
      %v12985 = vor.u32 1.1754944e-38, %v12984
      %v12986 = vsel %vm12983, %v12985, %v12981
      %v12987 = vmul.f32 1.0, %v12986
      %v12988 = vrcp.pop %v12930
      %v12989 = vmul.f32 %v12930, %v12988
      %v12990 = vsub.f32 1.0, %v12989
      %v12991 = vmul.f32 %v12988, %v12990
      %v12992 = vadd.f32 %v12988, %v12991
      %vm12993 = vweird.f32 %v12930
      %vm12994 = vweird.f32 %v12988
      %vm12995 = vmor %vm12993, %vm12994
      %v12996 = vsel %vm12995, %v12988, %v12992
      %v12997 = vand.u32 2147483647, %v12930
      %vm12998 = vcmp.eq.f32.partialorder %v12997, 8.507059e+37
      %v12999 = vand.u32 %v12930, 2147483648
      %v13000 = vor.u32 1.1754944e-38, %v12999
      %v13001 = vsel %vm12998, %v13000, %v12996
      %v13002 = vmul.f32 1.0, %v13001
      %v13003 = vrcp.pop %v12931
      %v13004 = vmul.f32 %v12931, %v13003
      %v13005 = vsub.f32 1.0, %v13004
      %v13006 = vmul.f32 %v13003, %v13005
      %v13007 = vadd.f32 %v13003, %v13006
      %vm13008 = vweird.f32 %v12931
      %vm13009 = vweird.f32 %v13003
      %vm13010 = vmor %vm13008, %vm13009
      %v13011 = vsel %vm13010, %v13003, %v13007
      %v13012 = vand.u32 2147483647, %v12931
      %vm13013 = vcmp.eq.f32.partialorder %v13012, 8.507059e+37
      %v13014 = vand.u32 %v12931, 2147483648
      %v13015 = vor.u32 1.1754944e-38, %v13014
      %v13016 = vsel %vm13013, %v13015, %v13011
      %v13017 = vmul.f32 1.0, %v13016
      %v13018 = vrcp.pop %v12932
      %v13019 = vmul.f32 %v12932, %v13018
      %v13020 = vsub.f32 1.0, %v13019
      %v13021 = vmul.f32 %v13018, %v13020
      %v13022 = vadd.f32 %v13018, %v13021
      %vm13023 = vweird.f32 %v12932
      %vm13024 = vweird.f32 %v13018
      %vm13025 = vmor %vm13023, %vm13024
      %v13026 = vsel %vm13025, %v13018, %v13022
      %v13027 = vand.u32 2147483647, %v12932
      %vm13028 = vcmp.eq.f32.partialorder %v13027, 8.507059e+37
      %v13029 = vand.u32 %v12932, 2147483648
      %v13030 = vor.u32 1.1754944e-38, %v13029
      %v13031 = vsel %vm13028, %v13030, %v13026
      %v13032 = vmul.f32 1.0, %v13031
      %v13033 = vrcp.pop %v12933
      %v13034 = vmul.f32 %v12933, %v13033
      %v13035 = vsub.f32 1.0, %v13034
      %v13036 = vmul.f32 %v13033, %v13035
      %v13037 = vadd.f32 %v13033, %v13036
      %vm13038 = vweird.f32 %v12933
      %vm13039 = vweird.f32 %v13033
      %vm13040 = vmor %vm13038, %vm13039
      %v13041 = vsel %vm13040, %v13033, %v13037
      %v13042 = vand.u32 2147483647, %v12933
      %vm13043 = vcmp.eq.f32.partialorder %v13042, 8.507059e+37
      %v13044 = vand.u32 %v12933, 2147483648
      %v13045 = vor.u32 1.1754944e-38, %v13044
      %v13046 = vsel %vm13043, %v13045, %v13041
      %v13047 = vmul.f32 1.0, %v13046
      %v13048 = vrcp.pop %v12934
      %v13049 = vmul.f32 %v12934, %v13048
      %v13050 = vsub.f32 1.0, %v13049
      %v13051 = vmul.f32 %v13048, %v13050
      %v13052 = vadd.f32 %v13048, %v13051
      %vm13053 = vweird.f32 %v12934
      %vm13054 = vweird.f32 %v13048
      %vm13055 = vmor %vm13053, %vm13054
      %v13056 = vsel %vm13055, %v13048, %v13052
      %v13057 = vand.u32 2147483647, %v12934
      %vm13058 = vcmp.eq.f32.partialorder %v13057, 8.507059e+37
      %v13059 = vand.u32 %v12934, 2147483648
      %v13060 = vor.u32 1.1754944e-38, %v13059
      %v13061 = vsel %vm13058, %v13060, %v13056
      %v13062 = vmul.f32 1.0, %v13061
      %v13063 = vrcp.pop %v12935
      %v13064 = vmul.f32 %v12935, %v13063
      %v13065 = vsub.f32 1.0, %v13064
      %v13066 = vmul.f32 %v13063, %v13065
      %v13067 = vadd.f32 %v13063, %v13066
      %vm13068 = vweird.f32 %v12935
      %vm13069 = vweird.f32 %v13063
      %vm13070 = vmor %vm13068, %vm13069
      %v13071 = vsel %vm13070, %v13063, %v13067
      %v13072 = vand.u32 2147483647, %v12935
      %vm13073 = vcmp.eq.f32.partialorder %v13072, 8.507059e+37
      %v13074 = vand.u32 %v12935, 2147483648
      %v13075 = vor.u32 1.1754944e-38, %v13074
      %v13076 = vsel %vm13073, %v13075, %v13071
      %v13077 = vmul.f32 1.0, %v13076
      %v13078 = vrcp.pop %v12936
      %v13079 = vmul.f32 %v12936, %v13078
      %v13080 = vsub.f32 1.0, %v13079
      %v13081 = vmul.f32 %v13078, %v13080
      %v13082 = vadd.f32 %v13078, %v13081
      %vm13083 = vweird.f32 %v12936
      %vm13084 = vweird.f32 %v13078
      %vm13085 = vmor %vm13083, %vm13084
      %v13086 = vsel %vm13085, %v13078, %v13082
      %v13087 = vand.u32 2147483647, %v12936
      %vm13088 = vcmp.eq.f32.partialorder %v13087, 8.507059e+37
      %v13089 = vand.u32 %v12936, 2147483648
      %v13090 = vor.u32 1.1754944e-38, %v13089
      %v13091 = vsel %vm13088, %v13090, %v13086
      %v13092 = vmul.f32 1.0, %v13091
      %v13093 = vrcp.pop %v12937
      %v13094 = vmul.f32 %v12937, %v13093
      %v13095 = vsub.f32 1.0, %v13094
      %v13096 = vmul.f32 %v13093, %v13095
      %v13097 = vadd.f32 %v13093, %v13096
      %vm13098 = vweird.f32 %v12937
      %vm13099 = vweird.f32 %v13093
      %vm13100 = vmor %vm13098, %vm13099
      %v13101 = vsel %vm13100, %v13093, %v13097
      %v13102 = vand.u32 2147483647, %v12937
      %vm13103 = vcmp.eq.f32.partialorder %v13102, 8.507059e+37
      %v13104 = vand.u32 %v12937, 2147483648
      %v13105 = vor.u32 1.1754944e-38, %v13104
      %v13106 = vsel %vm13103, %v13105, %v13101
      %v13107 = vmul.f32 1.0, %v13106
      %v13108 = vrcp.pop %v12938
      %v13109 = vmul.f32 %v12938, %v13108
      %v13110 = vsub.f32 1.0, %v13109
      %v13111 = vmul.f32 %v13108, %v13110
      %v13112 = vadd.f32 %v13108, %v13111
      %vm13113 = vweird.f32 %v12938
      %vm13114 = vweird.f32 %v13108
      %vm13115 = vmor %vm13113, %vm13114
      %v13116 = vsel %vm13115, %v13108, %v13112
      %v13117 = vand.u32 2147483647, %v12938
      %vm13118 = vcmp.eq.f32.partialorder %v13117, 8.507059e+37
      %v13119 = vand.u32 %v12938, 2147483648
      %v13120 = vor.u32 1.1754944e-38, %v13119
      %v13121 = vsel %vm13118, %v13120, %v13116
      %v13122 = vmul.f32 1.0, %v13121
      %v13123 = vrcp.pop %v12939
      %v13124 = vmul.f32 %v12939, %v13123
      %v13125 = vsub.f32 1.0, %v13124
      %v13126 = vmul.f32 %v13123, %v13125
      %v13127 = vadd.f32 %v13123, %v13126
      %vm13128 = vweird.f32 %v12939
      %vm13129 = vweird.f32 %v13123
      %vm13130 = vmor %vm13128, %vm13129
      %v13131 = vsel %vm13130, %v13123, %v13127
      %v13132 = vand.u32 2147483647, %v12939
      %vm13133 = vcmp.eq.f32.partialorder %v13132, 8.507059e+37
      %v13134 = vand.u32 %v12939, 2147483648
      %v13135 = vor.u32 1.1754944e-38, %v13134
      %v13136 = vsel %vm13133, %v13135, %v13131
      %v13137 = vmul.f32 1.0, %v13136
      %v13138 = vrcp.pop %v12940
      %v13139 = vmul.f32 %v12940, %v13138
      %v13140 = vsub.f32 1.0, %v13139
      %v13141 = vmul.f32 %v13138, %v13140
      %v13142 = vadd.f32 %v13138, %v13141
      %vm13143 = vweird.f32 %v12940
      %vm13144 = vweird.f32 %v13138
      %vm13145 = vmor %vm13143, %vm13144
      %v13146 = vsel %vm13145, %v13138, %v13142
      %v13147 = vand.u32 2147483647, %v12940
      %vm13148 = vcmp.eq.f32.partialorder %v13147, 8.507059e+37
      %v13149 = vand.u32 %v12940, 2147483648
      %v13150 = vor.u32 1.1754944e-38, %v13149
      %v13151 = vsel %vm13148, %v13150, %v13146
      %v13152 = vmul.f32 1.0, %v13151
      %v13153 = vrcp.pop %v12941
      %v13154 = vmul.f32 %v12941, %v13153
      %v13155 = vsub.f32 1.0, %v13154
      %v13156 = vmul.f32 %v13153, %v13155
      %v13157 = vadd.f32 %v13153, %v13156
      %vm13158 = vweird.f32 %v12941
      %vm13159 = vweird.f32 %v13153
      %vm13160 = vmor %vm13158, %vm13159
      %v13161 = vsel %vm13160, %v13153, %v13157
      %v13162 = vand.u32 2147483647, %v12941
      %vm13163 = vcmp.eq.f32.partialorder %v13162, 8.507059e+37
      %v13164 = vand.u32 %v12941, 2147483648
      %v13165 = vor.u32 1.1754944e-38, %v13164
      %v13166 = vsel %vm13163, %v13165, %v13161
      %v13167 = vmul.f32 1.0, %v13166
      %v13168 = vrcp.pop %v12942
      %v13169 = vmul.f32 %v12942, %v13168
      %v13170 = vsub.f32 1.0, %v13169
      %v13171 = vmul.f32 %v13168, %v13170
      %v13172 = vadd.f32 %v13168, %v13171
      %vm13173 = vweird.f32 %v12942
      %vm13174 = vweird.f32 %v13168
      %vm13175 = vmor %vm13173, %vm13174
      %v13176 = vsel %vm13175, %v13168, %v13172
      %v13177 = vand.u32 2147483647, %v12942
      %vm13178 = vcmp.eq.f32.partialorder %v13177, 8.507059e+37
      %v13179 = vand.u32 %v12942, 2147483648
      %v13180 = vor.u32 1.1754944e-38, %v13179
      %v13181 = vsel %vm13178, %v13180, %v13176
      %v13182 = vmul.f32 1.0, %v13181
      %v13183 = vtanh.pop %v12210
      %v13184 = vtanh.pop %v12214
      %v13185 = vtanh.pop %v12218
      %v13186 = vtanh.pop %v12222
      %v13187 = vtanh.pop %v12226
      %v13188 = vtanh.pop %v12230
      %v13189 = vtanh.pop %v12234
      %v13190 = vtanh.pop %v12238
      %v13191 = vtanh.pop %v12242
      %v13192 = vtanh.pop %v12246
      %v13193 = vtanh.pop %v12250
      %v13194 = vtanh.pop %v12254
      %v13195 = vtanh.pop %v12258
      %v13196 = vtanh.pop %v12262
      %v13197 = vtanh.pop %v12266
      %v13198 = vtanh.pop %v12270
      %v13199 = vld [vmem:[#allocation9] sm:$0xff]
      %v13200 = vld [vmem:[#allocation9 + $0x8] sm:$0xff]
      %v13201 = vld [vmem:[#allocation9 + $0x10] sm:$0xff]
      %v13202 = vld [vmem:[#allocation9 + $0x18] sm:$0xff]
      %v13203 = vld [vmem:[#allocation9 + $0x20] sm:$0xff]
      %v13204 = vld [vmem:[#allocation9 + $0x28] sm:$0xff]
      %v13205 = vld [vmem:[#allocation9 + $0x30] sm:$0xff]
      %v13206 = vld [vmem:[#allocation9 + $0x38] sm:$0xff]
      %v13207 = vld [vmem:[#allocation9 + $0x40] sm:$0xff]
      %v13208 = vld [vmem:[#allocation9 + $0x48] sm:$0xff]
      %v13209 = vld [vmem:[#allocation9 + $0x50] sm:$0xff]
      %v13210 = vld [vmem:[#allocation9 + $0x58] sm:$0xff]
      %v13211 = vld [vmem:[#allocation9 + $0x60] sm:$0xff]
      %v13212 = vld [vmem:[#allocation9 + $0x68] sm:$0xff]
      %v13213 = vld [vmem:[#allocation9 + $0x70] sm:$0xff]
      %v13214 = vld [vmem:[#allocation9 + $0x78] sm:$0xff]
      %v13215 = vmul.f32 %v12653, %v13199
      %v13216 = vmul.f32 %v12668, %v13200
      %v13217 = vmul.f32 %v12683, %v13201
      %v13218 = vmul.f32 %v12698, %v13202
      %v13219 = vmul.f32 %v12713, %v13203
      %v13220 = vmul.f32 %v12728, %v13204
      %v13221 = vmul.f32 %v12743, %v13205
      %v13222 = vmul.f32 %v12758, %v13206
      %v13223 = vmul.f32 %v12773, %v13207
      %v13224 = vmul.f32 %v12788, %v13208
      %v13225 = vmul.f32 %v12803, %v13209
      %v13226 = vmul.f32 %v12818, %v13210
      %v13227 = vmul.f32 %v12833, %v13211
      %v13228 = vmul.f32 %v12848, %v13212
      %v13229 = vmul.f32 %v12863, %v13213
      %v13230 = vmul.f32 %v12878, %v13214
      %v13231 = vmul.f32 %v12349, %v13183
      %v13232 = vmul.f32 %v12364, %v13184
      %v13233 = vmul.f32 %v12379, %v13185
      %v13234 = vmul.f32 %v12394, %v13186
      %v13235 = vmul.f32 %v12409, %v13187
      %v13236 = vmul.f32 %v12424, %v13188
      %v13237 = vmul.f32 %v12439, %v13189
      %v13238 = vmul.f32 %v12454, %v13190
      %v13239 = vmul.f32 %v12469, %v13191
      %v13240 = vmul.f32 %v12484, %v13192
      %v13241 = vmul.f32 %v12499, %v13193
      %v13242 = vmul.f32 %v12514, %v13194
      %v13243 = vmul.f32 %v12529, %v13195
      %v13244 = vmul.f32 %v12544, %v13196
      %v13245 = vmul.f32 %v12559, %v13197
      %v13246 = vmul.f32 %v12574, %v13198
      %v13247 = vadd.f32 %v13215, %v13231
      %v13248 = vadd.f32 %v13216, %v13232
      %v13249 = vadd.f32 %v13217, %v13233
      %v13250 = vadd.f32 %v13218, %v13234
      %v13251 = vadd.f32 %v13219, %v13235
      %v13252 = vadd.f32 %v13220, %v13236
      %v13253 = vadd.f32 %v13221, %v13237
      %v13254 = vadd.f32 %v13222, %v13238
      %v13255 = vadd.f32 %v13223, %v13239
      %v13256 = vadd.f32 %v13224, %v13240
      %v13257 = vadd.f32 %v13225, %v13241
      %v13258 = vadd.f32 %v13226, %v13242
      %v13259 = vadd.f32 %v13227, %v13243
      %v13260 = vadd.f32 %v13228, %v13244
      %v13261 = vadd.f32 %v13229, %v13245
      %v13262 = vadd.f32 %v13230, %v13246
      %v13263 = vtanh.pop %v13247
      %v13264 = vtanh.pop %v13248
      %v13265 = vtanh.pop %v13249
      %v13266 = vtanh.pop %v13250
      %v13267 = vtanh.pop %v13251
      %v13268 = vtanh.pop %v13252
      %v13269 = vtanh.pop %v13253
      %v13270 = vtanh.pop %v13254
      %v13271 = vtanh.pop %v13255
      %v13272 = vtanh.pop %v13256
      %v13273 = vtanh.pop %v13257
      %v13274 = vtanh.pop %v13258
      %v13275 = vtanh.pop %v13259
      %v13276 = vtanh.pop %v13260
      %v13277 = vtanh.pop %v13261
      %v13278 = vtanh.pop %v13262
      %v13279 = vmul.f32 %v12957, %v13263
      %v13280 = vmul.f32 %v12972, %v13264
      %v13281 = vmul.f32 %v12987, %v13265
      %v13282 = vmul.f32 %v13002, %v13266
      %v13283 = vmul.f32 %v13017, %v13267
      %v13284 = vmul.f32 %v13032, %v13268
      %v13285 = vmul.f32 %v13047, %v13269
      %v13286 = vmul.f32 %v13062, %v13270
      %v13287 = vmul.f32 %v13077, %v13271
      %v13288 = vmul.f32 %v13092, %v13272
      %v13289 = vmul.f32 %v13107, %v13273
      %v13290 = vmul.f32 %v13122, %v13274
      %v13291 = vmul.f32 %v13137, %v13275
      %v13292 = vmul.f32 %v13152, %v13276
      %v13293 = vmul.f32 %v13167, %v13277
      %v13294 = vmul.f32 %v13182, %v13278
      %13295 = vst [vmem:[#allocation11] sm:$0xff] %v13279
      %13296 = vst [vmem:[#allocation11 + $0x8] sm:$0xff] %v13280
      %13297 = vst [vmem:[#allocation11 + $0x10] sm:$0xff] %v13281
      %13298 = vst [vmem:[#allocation11 + $0x18] sm:$0xff] %v13282
      %13299 = vst [vmem:[#allocation11 + $0x20] sm:$0xff] %v13283
      %13300 = vst [vmem:[#allocation11 + $0x28] sm:$0xff] %v13284
      %13301 = vst [vmem:[#allocation11 + $0x30] sm:$0xff] %v13285
      %13302 = vst [vmem:[#allocation11 + $0x38] sm:$0xff] %v13286
      %13303 = vst [vmem:[#allocation11 + $0x40] sm:$0xff] %v13287
      %13304 = vst [vmem:[#allocation11 + $0x48] sm:$0xff] %v13288
      %13305 = vst [vmem:[#allocation11 + $0x50] sm:$0xff] %v13289
      %13306 = vst [vmem:[#allocation11 + $0x58] sm:$0xff] %v13290
      %13307 = vst [vmem:[#allocation11 + $0x60] sm:$0xff] %v13291
      %13308 = vst [vmem:[#allocation11 + $0x68] sm:$0xff] %v13292
      %13309 = vst [vmem:[#allocation11 + $0x70] sm:$0xff] %v13293
      %13310 = vst [vmem:[#allocation11 + $0x78] sm:$0xff] %v13294
      %13311 = vst [vmem:[#allocation12] sm:$0xff] %v13247
      %13312 = vst [vmem:[#allocation12 + $0x8] sm:$0xff] %v13248
      %13313 = vst [vmem:[#allocation12 + $0x10] sm:$0xff] %v13249
      %13314 = vst [vmem:[#allocation12 + $0x18] sm:$0xff] %v13250
      %13315 = vst [vmem:[#allocation12 + $0x20] sm:$0xff] %v13251
      %13316 = vst [vmem:[#allocation12 + $0x28] sm:$0xff] %v13252
      %13317 = vst [vmem:[#allocation12 + $0x30] sm:$0xff] %v13253
      %13318 = vst [vmem:[#allocation12 + $0x38] sm:$0xff] %v13254
      %13319 = vst [vmem:[#allocation12 + $0x40] sm:$0xff] %v13255
      %13320 = vst [vmem:[#allocation12 + $0x48] sm:$0xff] %v13256
      %13321 = vst [vmem:[#allocation12 + $0x50] sm:$0xff] %v13257
      %13322 = vst [vmem:[#allocation12 + $0x58] sm:$0xff] %v13258
      %13323 = vst [vmem:[#allocation12 + $0x60] sm:$0xff] %v13259
      %13324 = vst [vmem:[#allocation12 + $0x68] sm:$0xff] %v13260
      %13325 = vst [vmem:[#allocation12 + $0x70] sm:$0xff] %v13261
      %13326 = vst [vmem:[#allocation12 + $0x78] sm:$0xff] %v13262
    $region41: #{tpu_custom_call.1} parent=1 // pred_fallthru
      _
    // Predicated region
    $region42: #{tpu_custom_call.1} parent=1 // pred_check
      _
    $region43: #{tpu_custom_call.1} parent=1 // pred_check_branch
      %13328 = sbr.rel (0) target = $region45
    $region44: #{tpu_custom_call.1} parent=1 // pred_region
      %13330 = vsyncadd [#allocation5], 0
      %s13331 = sshll.u32 [#allocation11], 4
      %s13332 = int_to_ptr.vmem [resolvable:$true] %s13331
      %s13333 = sshll.u32 %s4, 4
      %s13334 = int_to_ptr.hbm [resolvable:$true] %s13333
      %13339 = dma.vmem_to_hbm [thread:$0]  %s13332, 2048, %s13334, [#allocation5], 128, 128, 8
    $region45: #{tpu_custom_call.1} parent=1 // pred_fallthru
      _
    // Predicated region
    $region46: #{tpu_custom_call.1} parent=1 // pred_check
      _
    $region47: #{tpu_custom_call.1} parent=1 // pred_check_branch
      %13341 = sbr.rel (0) target = $region49
    $region48: #{tpu_custom_call.1} parent=1 // pred_region
      %13343 = vsyncadd [#allocation13], 0
      %s13344 = sshll.u32 [#allocation12], 4
      %s13345 = int_to_ptr.vmem [resolvable:$true] %s13344
      %s13346 = sshll.u32 %s5, 4
      %s13347 = int_to_ptr.hbm [resolvable:$true] %s13346
      %13352 = dma.vmem_to_hbm [thread:$0]  %s13345, 2048, %s13347, [#allocation13], 128, 128, 8
    $region49: #{tpu_custom_call.1} parent=1 // pred_fallthru
      _
    // Predicated region
    $region50: #{tpu_custom_call.1} parent=1 // pred_check
      _
    $region51: #{tpu_custom_call.1} parent=1 // pred_check_branch
      %13354 = sbr.rel (0) target = $region53
    $region52: #{tpu_custom_call.1} parent=1 // pred_region
      %13356 = dma.done [#allocation5], 2048
    $region53: #{tpu_custom_call.1} parent=1 // pred_fallthru
      _
    // Predicated region
    $region54: #{tpu_custom_call.1} parent=1 // pred_check
      _
    $region55: #{tpu_custom_call.1} parent=1 // pred_check_branch
      %13358 = sbr.rel (0) target = $region57
    $region56: #{tpu_custom_call.1} parent=1 // pred_region
      %13360 = dma.done [#allocation13], 2048
    $region57: #{tpu_custom_call.1} parent=1 // pred_fallthru
      _
    %13361 = vsyncpa [#allocation4], 1
    %13362 = vsyncpa [#allocation7], 1
    %13363 = vsyncpa [#allocation10], 1
    %13364 = vsyncpa [#allocation5], 1
    %13365 = vsyncpa [#allocation13], 1

</llo_original>
